<compile_context>
chip_gen: v7x
topology: tpu7x:2x2x1
jax: 0.10.0
libtpu: 0.0.40
codegen_flags: <defaults>
</compile_context>

<pallas_src>
import jax
import jax.numpy as jnp
import numpy as np
from jax.experimental import pallas as pl
from jax.experimental.pallas import tpu as pltpu


LANE = 128
K_BRANCH_IN = 84 + 30 + 6 + 21      # 141 raw branch-input features
K_BRANCH_PAD = 256                  # lane-aligned padded slab width
K_BRANCH_OUT = 128 + 128 + 64 + 64  # 384 = fc_combined input width
HIDDEN = 1024


def _round_up(x, m):
    return (x + m - 1) // m * m


def choose_out_tiling(output_size):
    """Lane-aligned padded output width and N tile size for fc_output."""
    n_pad_lane = _round_up(output_size, LANE)
    # tn=2560 -> grid of 2 for the default output_size=5000: even per-TC split
    # on v7x, few big steps on v6e; VMEM cost covered by vmem_limit_bytes.
    tn = min(2560, n_pad_lane)
    n_pad = _round_up(n_pad_lane, tn)
    return n_pad, tn


# ----------------------------------------------------------------------------
# Pallas kernel: 2-matmul trunk + one fc_output N tile per grid step.
# ----------------------------------------------------------------------------
def splendor_kernel(
    x_ref,                     # (B, 256)  packed [cards|nobles|tokens|other] inputs
    wbr_ref, bbr_ref,          # (256, 384) block-diag fused branch weights, (1, 384)
    wcmb_ref, bcmb_ref,        # (384, 1024) bf16 fc_combined weight, (1, 1024) bias
    wout_ref, bout_ref,        # (1024, tn) bf16 fc_output weight tile, (1, tn) bias
    out_ref,                   # (B, tn)
):
    bf16 = jnp.bfloat16

    def dot(a, b):
        return jnp.dot(a, b, preferred_element_type=jnp.float32)

    # Trunk (recomputed per tile; 2 matmuls, hides under the weight-tile DMA).
    branches = jnp.maximum(dot(x_ref[...], wbr_ref[...]) + bbr_ref[...], 0.0)   # (B,384)
    comb = jnp.maximum(
        dot(branches.astype(bf16), wcmb_ref[...]) + bcmb_ref[...], 0.0)          # (B,1024)

    # fc_output: one lane-aligned N tile per grid step (pipelined weight stream).
    out_ref[...] = dot(comb.astype(bf16), wout_ref[...]) + bout_ref[...]


# ----------------------------------------------------------------------------
# Parameter construction (deterministic, torch-style uniform init shapes).
# ----------------------------------------------------------------------------
def init_params(key, output_size):
    ks = jax.random.split(key, 18)

    def uni(k, shape, fan_in):
        bound = 1.0 / np.sqrt(fan_in)
        return jax.random.uniform(k, shape, jnp.float32, -bound, bound)

    p = {}
    p["conv1_w"] = uni(ks[0], (16, 3, 1, 7), 3 * 1 * 7)
    p["conv1_b"] = uni(ks[1], (16,), 3 * 1 * 7)
    p["conv2_w"] = uni(ks[2], (32, 16, 4, 1), 16 * 4 * 1)
    p["conv2_b"] = uni(ks[3], (32,), 16 * 4 * 1)
    p["fc_cards_w"] = uni(ks[4], (128, 32), 32)
    p["fc_cards_b"] = uni(ks[5], (128,), 32)
    p["fc_nobles_w"] = uni(ks[6], (128, 30), 30)
    p["fc_nobles_b"] = uni(ks[7], (128,), 30)
    p["fc_tokens_w"] = uni(ks[8], (64, 6), 6)
    p["fc_tokens_b"] = uni(ks[9], (64,), 6)
    p["conv_other_w"] = uni(ks[10], (16, 3, 7), 3 * 7)
    p["conv_other_b"] = uni(ks[11], (16,), 3 * 7)
    p["fc_other_w"] = uni(ks[12], (64, 16), 16)
    p["fc_other_b"] = uni(ks[13], (64,), 16)
    p["fc_combined_w"] = uni(ks[14], (1024, 384), 384)
    p["fc_combined_b"] = uni(ks[15], (1024,), 384)
    p["fc_output_w"] = uni(ks[16], (output_size, 1024), 1024)
    p["fc_output_b"] = uni(ks[17], (output_size,), 1024)
    return p


def pack_params(p, output_size):
    """Fuse the activation-free linear chains and block-diagonalize the branches."""
    bf16 = jnp.bfloat16
    n_pad, _ = choose_out_tiling(output_size)

    # --- cards chain: conv1_cards -> conv2_cards -> fc_cards (no ReLU between)
    # conv1_cards (kernel (1,7) over W=7): per card-row h a 21->16 matmul; as a
    # block-diagonal (84,64) matrix its output index is h*16 + oc.
    w1f = p["conv1_w"].reshape(16, 21).T                      # (21,16), in idx c*7+w
    w1_big = jnp.zeros((84, 64), jnp.float32)
    for h in range(4):
        w1_big = w1_big.at[h * 21:(h + 1) * 21, h * 16:(h + 1) * 16].set(w1f)
    b1_big = jnp.tile(p["conv1_b"], 4)                        # (64,) idx h*16+oc
    # conv2_cards (kernel (4,1) over H=4): consumes index h*16 + ic.
    w2 = jnp.transpose(p["conv2_w"][:, :, :, 0], (2, 1, 0)).reshape(64, 32)
    wc = p["fc_cards_w"].T                                    # (32,128)
    w_cards = w1_big @ w2 @ wc                                # (84,128)
    b_cards = (b1_big @ w2 + p["conv2_b"]) @ wc + p["fc_cards_b"]   # (128,)

    # --- other chain: conv_other -> fc_other (no ReLU between)
    woc = p["conv_other_w"].reshape(16, 21).T                 # (21,16), in idx c*7+l
    wo = p["fc_other_w"].T                                    # (16,64)
    w_other = woc @ wo                                        # (21,64)
    b_other = p["conv_other_b"] @ wo + p["fc_other_b"]        # (64,)

    # --- block-diagonal branch matrix: one (256,384) matmul produces the
    #     fc_combined input [cards | nobles | tokens | other] directly.
    w_branch = jnp.zeros((K_BRANCH_PAD, K_BRANCH_OUT), jnp.float32)
    w_branch = w_branch.at[0:84, 0:128].set(w_cards)
    w_branch = w_branch.at[84:114, 128:256].set(p["fc_nobles_w"].T)
    w_branch = w_branch.at[114:120, 256:320].set(p["fc_tokens_w"].T)
    w_branch = w_branch.at[120:141, 320:384].set(w_other)
    b_branch = jnp.concatenate(
        [b_cards, p["fc_nobles_b"], p["fc_tokens_b"], b_other]).reshape(1, -1)

    # --- fc_combined (bf16 storage, f32 accumulation)
    wcmb = p["fc_combined_w"].T.astype(bf16)                  # (384,1024)
    bcmb = p["fc_combined_b"].reshape(1, -1)

    # --- fc_output: bf16 weight, padded to a lane-aligned multiple of the N tile
    out_size = p["fc_output_w"].shape[0]
    wout = jnp.zeros((HIDDEN, n_pad), bf16)
    wout = wout.at[:, :out_size].set(p["fc_output_w"].T.astype(bf16))
    bout = jnp.zeros((1, n_pad), jnp.float32)
    bout = bout.at[:, :out_size].set(p["fc_output_b"].reshape(1, -1))

    return (w_branch, b_branch, wcmb, bcmb, wout, bout)


# ----------------------------------------------------------------------------
# Wrapper: input packing (glue) + gridded pallas_call.
# ----------------------------------------------------------------------------
def splendor_forward(x1, x2, x3, x4, packed, output_size):
    B = x1.shape[0]
    # x1: (B,3,4,7) NCHW -> (B,4,3,7) -> (B,84)   [index h*21 + c*7 + w]
    x1f = jnp.transpose(x1, (0, 2, 1, 3)).reshape(B, 84)
    x2f = x2.reshape(B, 30)                       # torch .view order
    x3f = x3                                      # (B, 6)
    x4f = x4.reshape(B, 21)                       # [index c*7 + l]
    x_slab = jnp.concatenate([x1f, x2f, x3f, x4f], axis=1)          # (B, 141)
    x_slab = jnp.pad(x_slab, ((0, 0), (0, K_BRANCH_PAD - K_BRANCH_IN)))

    n_pad, tn = choose_out_tiling(output_size)
    w_branch, b_branch, wcmb, bcmb, wout, bout = packed
    assert wout.shape == (HIDDEN, n_pad) and n_pad % tn == 0
    grid = (n_pad // tn,)

    def _const(shape):
        # full-extent block, constant index map -> VMEM-resident across the grid
        return pl.BlockSpec(shape, lambda j: (0,) * len(shape))

    in_specs = [
        _const(x_slab.shape),
        _const(w_branch.shape),
        _const(b_branch.shape),
        _const(wcmb.shape),
        _const(bcmb.shape),
        pl.BlockSpec((HIDDEN, tn), lambda j: (0, j)),   # fc_output weight tile
        pl.BlockSpec((1, tn), lambda j: (0, j)),        # fc_output bias tile
    ]
    out_specs = pl.BlockSpec((B, tn), lambda j: (0, j))

    # Advisory cost estimate (nominal forward FLOPs / operand bytes).
    flops = 2 * B * (K_BRANCH_PAD * K_BRANCH_OUT
                     + K_BRANCH_OUT * HIDDEN
                     + HIDDEN * n_pad)
    operands = (x_slab, w_branch, b_branch, wcmb, bcmb, wout, bout)
    bytes_accessed = sum(int(np.prod(a.shape)) * a.dtype.itemsize for a in operands)
    bytes_accessed += B * n_pad * 4

    out = pl.pallas_call(
        splendor_kernel,
        out_shape=jax.ShapeDtypeStruct((B, n_pad), jnp.float32),
        grid=grid,
        in_specs=in_specs,
        out_specs=out_specs,
        compiler_params=pltpu.CompilerParams(
            dimension_semantics=("parallel",),
            # 32 MiB scoped VMEM: default on v6e/v7x, explicit raise needed on
            # v5e (16 MiB default) for the 2x5 MB double-buffered weight tile.
            vmem_limit_bytes=32 * 1024 * 1024,
        ),
        cost_estimate=pl.CostEstimate(
            flops=flops, transcendentals=0, bytes_accessed=bytes_accessed),
    )(x_slab, w_branch, b_branch, wcmb, bcmb, wout, bout)

    return out[:, :output_size]


# Pure-JAX reference (torch-order math, serial branch chains in f32; mirrors
# the kernel's bf16 storage of the two big weight matrices so the comparison
# is tight).
def reference_forward(x1, x2, x3, x4, p):
    bf16 = jnp.bfloat16
    B = x1.shape[0]
    w1f = p["conv1_w"].reshape(16, 21)
    y1 = jnp.einsum("bhk,ok->bho",
                    jnp.transpose(x1, (0, 2, 1, 3)).reshape(B, 4, 21),
                    w1f) + p["conv1_b"]                          # (B, 4, 16)
    y2 = jnp.einsum("bho,poh->bp", y1,
                    p["conv2_w"][:, :, :, 0]) + p["conv2_b"]     # (B, 32)
    cards = jax.nn.relu(y2 @ p["fc_cards_w"].T + p["fc_cards_b"])
    nobles = jax.nn.relu(x2.reshape(B, 30) @ p["fc_nobles_w"].T + p["fc_nobles_b"])
    tokens = jax.nn.relu(x3 @ p["fc_tokens_w"].T + p["fc_tokens_b"])
    o4 = x4.reshape(B, 21) @ p["conv_other_w"].reshape(16, 21).T + p["conv_other_b"]
    other = jax.nn.relu(o4 @ p["fc_other_w"].T + p["fc_other_b"])
    cat = jnp.concatenate([cards, nobles, tokens, other], axis=1)
    comb = jnp.dot(cat.astype(bf16), p["fc_combined_w"].T.astype(bf16),
                   preferred_element_type=jnp.float32) + p["fc_combined_b"]
    comb = jax.nn.relu(comb)
    return jnp.dot(comb.astype(bf16), p["fc_output_w"].T.astype(bf16),
                   preferred_element_type=jnp.float32) + p["fc_output_b"]


if __name__ == "__main__":
    OUTPUT_SIZE = 5000   # module default; padded to 5120 internally
    B = 32

    key = jax.random.PRNGKey(0)
    k_in, k_par = jax.random.split(key)
    k1, k2, k3, k4 = jax.random.split(k_in, 4)

    x1 = jax.random.uniform(k1, (B, 3, 4, 7), jnp.float32)
    x2 = jax.random.uniform(k2, (B, 5, 6), jnp.float32)
    x3 = jax.random.uniform(k3, (B, 6), jnp.float32)
    x4 = jax.random.uniform(k4, (B, 3, 7), jnp.float32)

    params = init_params(k_par, OUTPUT_SIZE)
    packed = pack_params(params, OUTPUT_SIZE)

    out = splendor_forward(x1, x2, x3, x4, packed, OUTPUT_SIZE)
    out = jax.block_until_ready(out)

    ref = jax.block_until_ready(reference_forward(x1, x2, x3, x4, params))
    assert out.shape == (B, OUTPUT_SIZE)
    np.testing.assert_allclose(np.asarray(out), np.asarray(ref),
                               rtol=5e-3, atol=5e-3)

    print("KERNEL_OK")
</pallas_src>

<mosaic_0001>
module attributes {stable_mosaic.version = 11 : i64} {
  func.func @splendor_kernel(%arg0: i32, %arg1: memref<32x256xf32, #tpu.memory_space<vmem>>, %arg2: memref<256x384xf32, #tpu.memory_space<vmem>>, %arg3: memref<1x384xf32, #tpu.memory_space<vmem>>, %arg4: memref<384x1024xbf16, #tpu.memory_space<vmem>>, %arg5: memref<1x1024xf32, #tpu.memory_space<vmem>>, %arg6: memref<1024x2560xbf16, #tpu.memory_space<vmem>>, %arg7: memref<1x2560xf32, #tpu.memory_space<vmem>>, %arg8: memref<32x2560xf32, #tpu.memory_space<vmem>>) attributes {dimension_semantics = [#tpu.dimension_semantics<parallel>], iteration_bounds = array<i64: 2>, scalar_prefetch = 0 : i64, scratch_operands = 0 : i64, tpu.core_type = #tpu.core_type<tc>, window_params = [{pipeline_mode = #tpu.pipeline_mode<synchronous>, transform_indices = @transform_0, window_bounds = array<i64: 32, 256>}, {pipeline_mode = #tpu.pipeline_mode<synchronous>, transform_indices = @transform_1, window_bounds = array<i64: 256, 384>}, {pipeline_mode = #tpu.pipeline_mode<synchronous>, transform_indices = @transform_2, window_bounds = array<i64: 1, 384>}, {pipeline_mode = #tpu.pipeline_mode<synchronous>, transform_indices = @transform_3, window_bounds = array<i64: 384, 1024>}, {pipeline_mode = #tpu.pipeline_mode<synchronous>, transform_indices = @transform_4, window_bounds = array<i64: 1, 1024>}, {transform_indices = @transform_5, window_bounds = array<i64: 1024, 2560>}, {transform_indices = @transform_6, window_bounds = array<i64: 1, 2560>}, {transform_indices = @transform_7, window_bounds = array<i64: 32, 2560>}]} {
    %c0 = arith.constant 0 : index
    %c0_0 = arith.constant 0 : index
    %0 = vector.load %arg1[%c0, %c0_0] : memref<32x256xf32, #tpu.memory_space<vmem>>, vector<32x256xf32>
    %c0_1 = arith.constant 0 : index
    %c0_2 = arith.constant 0 : index
    %1 = vector.load %arg2[%c0_1, %c0_2] : memref<256x384xf32, #tpu.memory_space<vmem>>, vector<256x384xf32>
    %cst = arith.constant dense<0.000000e+00> : vector<32x384xf32>
    %2 = tpu.matmul %0, %1, %cst {dimension_numbers = #tpu.dot_dimension_numbers<[1], [0], [0], [1], [0, 0, 1, 1], [], []>} : vector<32x256xf32>, vector<256x384xf32>, vector<32x384xf32> -> vector<32x384xf32>
    %c0_3 = arith.constant 0 : index
    %c0_4 = arith.constant 0 : index
    %3 = vector.load %arg3[%c0_3, %c0_4] : memref<1x384xf32, #tpu.memory_space<vmem>>, vector<1x384xf32>
    %4 = vector.broadcast %3 : vector<1x384xf32> to vector<32x384xf32>
    %5 = arith.addf %2, %4 : vector<32x384xf32>
    %cst_5 = arith.constant 0.000000e+00 : f32
    %6 = vector.broadcast %cst_5 : f32 to vector<32x384xf32>
    %7 = arith.maximumf %5, %6 : vector<32x384xf32>
    %8 = arith.truncf %7 : vector<32x384xf32> to vector<32x384xbf16>
    %c0_6 = arith.constant 0 : index
    %c0_7 = arith.constant 0 : index
    %9 = vector.load %arg4[%c0_6, %c0_7] : memref<384x1024xbf16, #tpu.memory_space<vmem>>, vector<384x1024xbf16>
    %cst_8 = arith.constant dense<0.000000e+00> : vector<32x1024xf32>
    %10 = tpu.matmul %8, %9, %cst_8 {dimension_numbers = #tpu.dot_dimension_numbers<[1], [0], [0], [1], [0, 0, 1, 1], [], []>} : vector<32x384xbf16>, vector<384x1024xbf16>, vector<32x1024xf32> -> vector<32x1024xf32>
    %c0_9 = arith.constant 0 : index
    %c0_10 = arith.constant 0 : index
    %11 = vector.load %arg5[%c0_9, %c0_10] : memref<1x1024xf32, #tpu.memory_space<vmem>>, vector<1x1024xf32>
    %12 = vector.broadcast %11 : vector<1x1024xf32> to vector<32x1024xf32>
    %13 = arith.addf %10, %12 : vector<32x1024xf32>
    %cst_11 = arith.constant 0.000000e+00 : f32
    %14 = vector.broadcast %cst_11 : f32 to vector<32x1024xf32>
    %15 = arith.maximumf %13, %14 : vector<32x1024xf32>
    %16 = arith.truncf %15 : vector<32x1024xf32> to vector<32x1024xbf16>
    %c0_12 = arith.constant 0 : index
    %c0_13 = arith.constant 0 : index
    %17 = vector.load %arg6[%c0_12, %c0_13] : memref<1024x2560xbf16, #tpu.memory_space<vmem>>, vector<1024x2560xbf16>
    %cst_14 = arith.constant dense<0.000000e+00> : vector<32x2560xf32>
    %18 = tpu.matmul %16, %17, %cst_14 {dimension_numbers = #tpu.dot_dimension_numbers<[1], [0], [0], [1], [0, 0, 1, 1], [], []>} : vector<32x1024xbf16>, vector<1024x2560xbf16>, vector<32x2560xf32> -> vector<32x2560xf32>
    %c0_15 = arith.constant 0 : index
    %c0_16 = arith.constant 0 : index
    %19 = vector.load %arg7[%c0_15, %c0_16] : memref<1x2560xf32, #tpu.memory_space<vmem>>, vector<1x2560xf32>
    %20 = vector.broadcast %19 : vector<1x2560xf32> to vector<32x2560xf32>
    %21 = arith.addf %18, %20 : vector<32x2560xf32>
    %c0_17 = arith.constant 0 : index
    %c0_18 = arith.constant 0 : index
    %22 = vector.load %arg8[%c0_17, %c0_18] : memref<32x2560xf32, #tpu.memory_space<vmem>>, vector<32x2560xf32>
    tpu.vector_store %arg8[%c0_17, %c0_18], %21 {strides = array<i32>} : memref<32x2560xf32, #tpu.memory_space<vmem>>, vector<32x2560xf32>,
    return
  }
  func.func @transform_0(%arg0: i32) -> (i32, i32) {
    %c0_i32 = arith.constant 0 : i32
    %c0_i32_0 = arith.constant 0 : i32
    %c0_i32_1 = arith.constant 0 : i32
    return %c0_i32, %c0_i32_0 : i32, i32
  }
  func.func @transform_1(%arg0: i32) -> (i32, i32) {
    %c0_i32 = arith.constant 0 : i32
    %c0_i32_0 = arith.constant 0 : i32
    %c0_i32_1 = arith.constant 0 : i32
    return %c0_i32, %c0_i32_0 : i32, i32
  }
  func.func @transform_2(%arg0: i32) -> (i32, i32) {
    %c0_i32 = arith.constant 0 : i32
    %c0_i32_0 = arith.constant 0 : i32
    %c0_i32_1 = arith.constant 0 : i32
    return %c0_i32, %c0_i32_0 : i32, i32
  }
  func.func @transform_3(%arg0: i32) -> (i32, i32) {
    %c0_i32 = arith.constant 0 : i32
    %c0_i32_0 = arith.constant 0 : i32
    %c0_i32_1 = arith.constant 0 : i32
    return %c0_i32, %c0_i32_0 : i32, i32
  }
  func.func @transform_4(%arg0: i32) -> (i32, i32) {
    %c0_i32 = arith.constant 0 : i32
    %c0_i32_0 = arith.constant 0 : i32
    %c0_i32_1 = arith.constant 0 : i32
    return %c0_i32, %c0_i32_0 : i32, i32
  }
  func.func @transform_5(%arg0: i32) -> (i32, i32) {
    %c0_i32 = arith.constant 0 : i32
    %c0_i32_0 = arith.constant 0 : i32
    return %c0_i32, %arg0 : i32, i32
  }
  func.func @transform_6(%arg0: i32) -> (i32, i32) {
    %c0_i32 = arith.constant 0 : i32
    %c0_i32_0 = arith.constant 0 : i32
    return %c0_i32, %arg0 : i32, i32
  }
  func.func @transform_7(%arg0: i32) -> (i32, i32) {
    %c0_i32 = arith.constant 0 : i32
    %c0_i32_0 = arith.constant 0 : i32
    return %c0_i32, %arg0 : i32, i32
  }
}

</mosaic_0001>

<llo_original>
// kernel: tpu_custom_call.1
$region0: #{tpu_custom_call.1}
  #allocation0 [shape = 'u32[]', space=smem, size = 0x4, offset = 0x4, fixed_abs, tag = 'smem constant byte address 0x4 - core index']
  #allocation1 [shape = 'u32[144,128]{1,0:T(1,128)}', space=vmem, size = 0x12000, scoped, tag = 'internal scratch']
  %s0 = inlined_call_operand.hbm [shape: f32[32,256], index: 0, kind: input, shape index: {}]
  %s1 = inlined_call_operand.hbm [shape: f32[256,384], index: 1, kind: input, shape index: {}]
  %s2 = inlined_call_operand.hbm [shape: f32[1,384], index: 2, kind: input, shape index: {}]
  %s3 = inlined_call_operand.hbm [shape: bf16[384,1024], index: 3, kind: input, shape index: {}]
  %s4 = inlined_call_operand.hbm [shape: f32[1,1024], index: 4, kind: input, shape index: {}]
  %s5 = inlined_call_operand.hbm [shape: bf16[1024,5120], index: 5, kind: input, shape index: {}]
  %s6 = inlined_call_operand.hbm [shape: f32[1,5120], index: 6, kind: input, shape index: {}]
  %s7 = inlined_call_operand.hbm [shape: f32[32,5120], index: 7, kind: output, shape index: {}]
  %s8 = sld [smem:[#allocation0]]
  $region89: #{tpu_custom_call.1} parent=0
    _
  %s10 = ssub.s32 1, %s8
  %s11 = scalar_select 0, %s10, %s8
  $region1: #{tpu_custom_call.1} parent=0
    #allocation2 [shape = 'u8[32768]{0}', space=vmem, size = 0x8000, scoped, tag = 'input window, operand 0, single buffered']
    #allocation3 [shape = 's32[2]{0}', space=sflag, size = 0x8, scoped, tag = 'scoped memory for tpu_custom_call.1']
    #allocation4 [shape = 's32[2]{0}', space=sflag, size = 0x8, scoped, tag = 'scoped memory for tpu_custom_call.1']
    #allocation5 [shape = 'u8[393216]{0}', space=vmem, size = 0x60000, scoped, tag = 'input window, operand 1, single buffered']
    #allocation6 [shape = 's32[1]{0}', space=sflag, size = 0x4, scoped, tag = 'scoped memory for tpu_custom_call.1']
    #allocation7 [shape = 'u8[1536]{0}', space=vmem, size = 0x800, scoped, tag = 'input window, operand 2, single buffered']
    #allocation8 [shape = 'u8[786432]{0}', space=vmem, size = 0xc0000, scoped, tag = 'input window, operand 3, single buffered']
    #allocation9 [shape = 's32[1]{0}', space=sflag, size = 0x4, scoped, tag = 'scoped memory for tpu_custom_call.1']
    #allocation10 [shape = 'u8[4096]{0}', space=vmem, size = 0x1000, scoped, tag = 'input window, operand 4, single buffered']
    #allocation11 [shape = 'u8[10485760]{0}', space=vmem, size = 0xa00000, scoped, tag = 'input window, operand 5']
    #allocation12 [shape = 's32[2]{0}', space=sflag, size = 0x8, scoped, tag = 'scoped memory for tpu_custom_call.1']
    #allocation13 [shape = 'u8[20480]{0}', space=vmem, size = 0x5000, scoped, tag = 'input window, operand 6']
    #allocation14 [shape = 'u8[655360]{0}', space=vmem, size = 0xa0000, scoped, tag = 'output window, operand 0']
    %12 = vsyncpa [#allocation3], 0
    %13 = vsyncpa [#allocation6], 0
    %14 = vsyncpa [#allocation9], 0
    %15 = vsyncpa [#allocation12], 0
    %s16 = scalar_lea.sflag [#allocation12], 1
    %17 = vsyncpa %s16, 0
    %18 = vsyncpa [#allocation4], 0
    %s19 = scalar_lea.sflag [#allocation4], 1
    %20 = vsyncpa %s19, 0
    loop: start=0, step=1, limit=4
    $region2: #{tpu_custom_call.1} parent=1 // loop_pre_header
      _
    $region3: #{tpu_custom_call.1} parent=1 // loop_header
      %s22 = sphi 0, %s26
      %p23 = scmp.ge.s32.totalorder %s22, 4
      %s30 = sphi 0, %s30
      %s32 = sphi 0, %s30
      %s33 = sphi 0, %s32
      %s47 = sphi 0, %s33
      %s51 = sphi 0, %s51
      %s53 = sphi 0, %s51
      %s54 = sphi 0, %s53
      %s68 = sphi 0, %s54
      %s72 = sphi 0, %s72
      %s74 = sphi 0, %s72
      %s75 = sphi 0, %s74
      %s89 = sphi 0, %s75
      %s93 = sphi 0, %s93
      %s95 = sphi 0, %s93
      %s96 = sphi 0, %s95
      %s110 = sphi 0, %s96
      %s114 = sphi 0, %s114
      %s116 = sphi 0, %s114
      %s117 = sphi 0, %s116
      %s131 = sphi 0, %s117
      %s137 = sphi 0, %s139
      %s140 = sphi 0, %s137
      %s141 = sphi 0, %s140
      %s157 = sphi 0, %s141
      %s163 = sphi 0, %s165
      %s166 = sphi 0, %s163
      %s167 = sphi 0, %s166
      %s183 = sphi 0, %s167
      %s189 = sphi 0, %s191
      %s192 = sphi 0, %s189
      %s193 = sphi 0, %s192
      %s209 = sphi 0, %s193
    $region4: #{tpu_custom_call.1} parent=1 // loop_header_branch
      %25 = sbr.rel (%p23) target = $region8
    $region5: #{tpu_custom_call.1} parent=1 // loop_body
      %s27 = ssub.s32 %s22, 1
      %s28 = ssub.s32 %s22, 2
      %s29 = sadd.s32 %s22, 1
      %s31 = sadd.s32 %s30, 1
      %p34 = scmp.eq.s32.totalorder %s22, 1
      %p35 = scmp.ne.s32.totalorder %s30, %s32
      %p36 = scmp.eq.s32.totalorder %s22, 0
      %p37 = por %p35, %p36
      %p38 = scmp.ne.s32.totalorder %s30, %s32
      %p39 = scmp.eq.s32.totalorder %s27, 1
      %p40 = por %p38, %p39
      %p41 = scmp.ne.s32.totalorder %s32, %s33
      %p42 = scmp.eq.s32.totalorder %s27, 0
      %p43 = por %p41, %p42
      %p44 = scmp.ne.s32.totalorder %s32, %s33
      %p45 = scmp.eq.s32.totalorder %s28, 1
      %p46 = por %p44, %p45
      %p48 = scmp.ne.s32.totalorder %s33, %s47
      %p49 = scmp.eq.s32.totalorder %s28, 0
      %p50 = por %p48, %p49
      %s52 = sadd.s32 %s51, 1
      %p55 = scmp.eq.s32.totalorder %s22, 1
      %p56 = scmp.ne.s32.totalorder %s51, %s53
      %p57 = scmp.eq.s32.totalorder %s22, 0
      %p58 = por %p56, %p57
      %p59 = scmp.ne.s32.totalorder %s51, %s53
      %p60 = scmp.eq.s32.totalorder %s27, 1
      %p61 = por %p59, %p60
      %p62 = scmp.ne.s32.totalorder %s53, %s54
      %p63 = scmp.eq.s32.totalorder %s27, 0
      %p64 = por %p62, %p63
      %p65 = scmp.ne.s32.totalorder %s53, %s54
      %p66 = scmp.eq.s32.totalorder %s28, 1
      %p67 = por %p65, %p66
      %p69 = scmp.ne.s32.totalorder %s54, %s68
      %p70 = scmp.eq.s32.totalorder %s28, 0
      %p71 = por %p69, %p70
      %s73 = sadd.s32 %s72, 1
      %p76 = scmp.eq.s32.totalorder %s22, 1
      %p77 = scmp.ne.s32.totalorder %s72, %s74
      %p78 = scmp.eq.s32.totalorder %s22, 0
      %p79 = por %p77, %p78
      %p80 = scmp.ne.s32.totalorder %s72, %s74
      %p81 = scmp.eq.s32.totalorder %s27, 1
      %p82 = por %p80, %p81
      %p83 = scmp.ne.s32.totalorder %s74, %s75
      %p84 = scmp.eq.s32.totalorder %s27, 0
      %p85 = por %p83, %p84
      %p86 = scmp.ne.s32.totalorder %s74, %s75
      %p87 = scmp.eq.s32.totalorder %s28, 1
      %p88 = por %p86, %p87
      %p90 = scmp.ne.s32.totalorder %s75, %s89
      %p91 = scmp.eq.s32.totalorder %s28, 0
      %p92 = por %p90, %p91
      %s94 = sadd.s32 %s93, 1
      %p97 = scmp.eq.s32.totalorder %s22, 1
      %p98 = scmp.ne.s32.totalorder %s93, %s95
      %p99 = scmp.eq.s32.totalorder %s22, 0
      %p100 = por %p98, %p99
      %p101 = scmp.ne.s32.totalorder %s93, %s95
      %p102 = scmp.eq.s32.totalorder %s27, 1
      %p103 = por %p101, %p102
      %p104 = scmp.ne.s32.totalorder %s95, %s96
      %p105 = scmp.eq.s32.totalorder %s27, 0
      %p106 = por %p104, %p105
      %p107 = scmp.ne.s32.totalorder %s95, %s96
      %p108 = scmp.eq.s32.totalorder %s28, 1
      %p109 = por %p107, %p108
      %p111 = scmp.ne.s32.totalorder %s96, %s110
      %p112 = scmp.eq.s32.totalorder %s28, 0
      %p113 = por %p111, %p112
      %s115 = sadd.s32 %s114, 1
      %p118 = scmp.eq.s32.totalorder %s22, 1
      %p119 = scmp.ne.s32.totalorder %s114, %s116
      %p120 = scmp.eq.s32.totalorder %s22, 0
      %p121 = por %p119, %p120
      %p122 = scmp.ne.s32.totalorder %s114, %s116
      %p123 = scmp.eq.s32.totalorder %s27, 1
      %p124 = por %p122, %p123
      %p125 = scmp.ne.s32.totalorder %s116, %s117
      %p126 = scmp.eq.s32.totalorder %s27, 0
      %p127 = por %p125, %p126
      %p128 = scmp.ne.s32.totalorder %s116, %s117
      %p129 = scmp.eq.s32.totalorder %s28, 1
      %p130 = por %p128, %p129
      %p132 = scmp.ne.s32.totalorder %s117, %s131
      %p133 = scmp.eq.s32.totalorder %s28, 0
      %p134 = por %p132, %p133
      %s135 = ssub.s32 %s22, %s29
      %p136 = scmp.eq.s32.totalorder %s135, 0
      %s138 = sadd.s32 %s137, 1
      %s139 = scalar_select %p136, %s137, %s138
      %p142 = pneg %p136
      %p143 = scmp.eq.s32.totalorder %s22, 1
      %p144 = por %p142, %p143
      %p145 = scmp.ne.s32.totalorder %s137, %s140
      %p146 = scmp.eq.s32.totalorder %s22, 0
      %p147 = por %p145, %p146
      %p148 = scmp.ne.s32.totalorder %s137, %s140
      %p149 = scmp.eq.s32.totalorder %s27, 1
      %p150 = por %p148, %p149
      %p151 = scmp.ne.s32.totalorder %s140, %s141
      %p152 = scmp.eq.s32.totalorder %s27, 0
      %p153 = por %p151, %p152
      %p154 = scmp.ne.s32.totalorder %s140, %s141
      %p155 = scmp.eq.s32.totalorder %s28, 1
      %p156 = por %p154, %p155
      %p158 = scmp.ne.s32.totalorder %s141, %s157
      %p159 = scmp.eq.s32.totalorder %s28, 0
      %p160 = por %p158, %p159
      %s161 = ssub.s32 %s22, %s29
      %p162 = scmp.eq.s32.totalorder %s161, 0
      %s164 = sadd.s32 %s163, 1
      %s165 = scalar_select %p162, %s163, %s164
      %p168 = pneg %p162
      %p169 = scmp.eq.s32.totalorder %s22, 1
      %p170 = por %p168, %p169
      %p171 = scmp.ne.s32.totalorder %s163, %s166
      %p172 = scmp.eq.s32.totalorder %s22, 0
      %p173 = por %p171, %p172
      %p174 = scmp.ne.s32.totalorder %s163, %s166
      %p175 = scmp.eq.s32.totalorder %s27, 1
      %p176 = por %p174, %p175
      %p177 = scmp.ne.s32.totalorder %s166, %s167
      %p178 = scmp.eq.s32.totalorder %s27, 0
      %p179 = por %p177, %p178
      %p180 = scmp.ne.s32.totalorder %s166, %s167
      %p181 = scmp.eq.s32.totalorder %s28, 1
      %p182 = por %p180, %p181
      %p184 = scmp.ne.s32.totalorder %s167, %s183
      %p185 = scmp.eq.s32.totalorder %s28, 0
      %p186 = por %p184, %p185
      %s187 = ssub.s32 %s22, %s29
      %p188 = scmp.eq.s32.totalorder %s187, 0
      %s190 = sadd.s32 %s189, 1
      %s191 = scalar_select %p188, %s189, %s190
      %p194 = pneg %p188
      %p195 = scmp.eq.s32.totalorder %s22, 1
      %p196 = por %p194, %p195
      %p197 = scmp.ne.s32.totalorder %s189, %s192
      %p198 = scmp.eq.s32.totalorder %s22, 0
      %p199 = por %p197, %p198
      %p200 = scmp.ne.s32.totalorder %s189, %s192
      %p201 = scmp.eq.s32.totalorder %s27, 1
      %p202 = por %p200, %p201
      %p203 = scmp.ne.s32.totalorder %s192, %s193
      %p204 = scmp.eq.s32.totalorder %s27, 0
      %p205 = por %p203, %p204
      %p206 = scmp.ne.s32.totalorder %s192, %s193
      %p207 = scmp.eq.s32.totalorder %s28, 1
      %p208 = por %p206, %p207
      %p210 = scmp.ne.s32.totalorder %s193, %s209
      %p211 = scmp.eq.s32.totalorder %s28, 0
      %p212 = por %p210, %p211
      %p213 = scmp.le.s32.totalorder 1, %s22
      %p214 = scmp.lt.s32.totalorder %s22, 3
      %p215 = pnand %p213, %p214
      %p216 = pneg %p215
      // Predicated region
      $region9: #{tpu_custom_call.1} parent=5 // pred_check
        _
      $region10: #{tpu_custom_call.1} parent=5 // pred_check_branch
        %218 = sbr.rel (%p215) target = $region12
      $region11: #{tpu_custom_call.1} parent=5 // pred_region
        %s219 = ssub.s32 %s22, 1
        // Predicated region
        $region13: #{tpu_custom_call.1} parent=11 // pred_check
          %p220 = pneg %p43
        $region14: #{tpu_custom_call.1} parent=11 // pred_check_branch
          %222 = sbr.rel (%p220) target = $region16
        $region15: #{tpu_custom_call.1} parent=11 // pred_region
          %s224 = ssub.s32 1024, 1024
          %225 = vsyncadd [#allocation3], %s224
          %s226 = sshll.u32 [#allocation2], 4
          %s227 = int_to_ptr.vmem [resolvable:$true] %s226
          %232 = dma.hbm_to_vmem [thread:$0]  %s0, 1024, %s227, [#allocation3], 256, 256, 16
        $region16: #{tpu_custom_call.1} parent=11 // pred_fallthru
          _
        // Predicated region
        $region17: #{tpu_custom_call.1} parent=11 // pred_check
          %p233 = pneg %p64
        $region18: #{tpu_custom_call.1} parent=11 // pred_check_branch
          %235 = sbr.rel (%p233) target = $region20
        $region19: #{tpu_custom_call.1} parent=11 // pred_region
          %s237 = ssub.s32 12288, 12288
          %238 = vsyncadd [#allocation6], %s237
          %s239 = sshll.u32 [#allocation5], 4
          %s240 = int_to_ptr.vmem [resolvable:$true] %s239
          %245 = dma.hbm_to_vmem [thread:$0]  %s1, 12288, %s240, [#allocation6], 384, 384, 24
        $region20: #{tpu_custom_call.1} parent=11 // pred_fallthru
          _
        // Predicated region
        $region21: #{tpu_custom_call.1} parent=11 // pred_check
          %p246 = pneg %p85
        $region22: #{tpu_custom_call.1} parent=11 // pred_check_branch
          %248 = sbr.rel (%p246) target = $region24
        $region23: #{tpu_custom_call.1} parent=11 // pred_region
          %s250 = ssub.s32 48, 48
          %251 = vsyncadd [#allocation6], %s250
          %s253 = sshll.u32 [#allocation7], 4
          %s254 = int_to_ptr.vmem [resolvable:$true] %s253
          %256 = dma.hbm_to_vmem [thread:$0]  %s2, 48, %s254, [#allocation6]
        $region24: #{tpu_custom_call.1} parent=11 // pred_fallthru
          _
        // Predicated region
        $region25: #{tpu_custom_call.1} parent=11 // pred_check
          %p257 = pneg %p106
        $region26: #{tpu_custom_call.1} parent=11 // pred_check_branch
          %259 = sbr.rel (%p257) target = $region28
        $region27: #{tpu_custom_call.1} parent=11 // pred_region
          %s261 = ssub.s32 24576, 24576
          %262 = vsyncadd [#allocation9], %s261
          %s263 = sshll.u32 [#allocation8], 4
          %s264 = int_to_ptr.vmem [resolvable:$true] %s263
          %269 = dma.hbm_to_vmem [thread:$0]  %s3, 24576, %s264, [#allocation9], 512, 512, 32
        $region28: #{tpu_custom_call.1} parent=11 // pred_fallthru
          _
        // Predicated region
        $region29: #{tpu_custom_call.1} parent=11 // pred_check
          %p270 = pneg %p127
        $region30: #{tpu_custom_call.1} parent=11 // pred_check_branch
          %272 = sbr.rel (%p270) target = $region32
        $region31: #{tpu_custom_call.1} parent=11 // pred_region
          %s274 = ssub.s32 128, 128
          %275 = vsyncadd [#allocation9], %s274
          %s277 = sshll.u32 [#allocation10], 4
          %s278 = int_to_ptr.vmem [resolvable:$true] %s277
          %280 = dma.hbm_to_vmem [thread:$0]  %s4, 128, %s278, [#allocation9]
        $region32: #{tpu_custom_call.1} parent=11 // pred_fallthru
          _
      $region12: #{tpu_custom_call.1} parent=5 // pred_fallthru
        _
      %p281 = scmp.lt.s32.totalorder %s22, 2
      // Predicated region
      $region33: #{tpu_custom_call.1} parent=5 // pred_check
        %p282 = pneg %p281
      $region34: #{tpu_custom_call.1} parent=5 // pred_check_branch
        %284 = sbr.rel (%p282) target = $region36
      $region35: #{tpu_custom_call.1} parent=5 // pred_region
        // Predicated region
        $region37: #{tpu_custom_call.1} parent=35 // pred_check
          %p285 = pneg %p147
        $region38: #{tpu_custom_call.1} parent=35 // pred_check_branch
          %287 = sbr.rel (%p285) target = $region40
        $region39: #{tpu_custom_call.1} parent=35 // pred_region
          %s288 = sand.u32 %s22, 1
          %s289 = scalar_lea.sflag [#allocation12], %s288
          %s290 = sand.u32 %s137, 1
          %s291 = smul.addr %s290, 10240
          %s292 = scalar_lea.vmem [#allocation11], %s291
          %s293 = smul.u32 20, %s22
          %s295 = ssub.s32 163840, 163840
          %296 = vsyncadd %s289, %s295
          %s297 = smul.addr %s293, 64
          %s298 = scalar_lea.hbm %s5, %s297
          %s299 = sshll.u32 %s292, 4
          %s300 = int_to_ptr.vmem [resolvable:$true] %s299
          %305 = dma.hbm_to_vmem [thread:$0]  %s298, 163840, %s300, %s289, 2560, 1280, 80
        $region40: #{tpu_custom_call.1} parent=35 // pred_fallthru
          _
        // Predicated region
        $region41: #{tpu_custom_call.1} parent=35 // pred_check
          %p306 = pneg %p173
        $region42: #{tpu_custom_call.1} parent=35 // pred_check_branch
          %308 = sbr.rel (%p306) target = $region44
        $region43: #{tpu_custom_call.1} parent=35 // pred_region
          %s309 = sand.u32 %s22, 1
          %s310 = scalar_lea.sflag [#allocation12], %s309
          %s311 = sand.u32 %s163, 1
          %s312 = smul.addr %s311, 20
          %s313 = scalar_lea.vmem [#allocation13], %s312
          %s314 = smul.u32 20, %s22
          %s316 = ssub.s32 320, 320
          %317 = vsyncadd %s310, %s316
          %s318 = smul.addr %s314, 16
          %s319 = scalar_lea.hbm %s6, %s318
          %s321 = sshll.u32 %s313, 4
          %s322 = int_to_ptr.vmem [resolvable:$true] %s321
          %324 = dma.hbm_to_vmem [thread:$0]  %s319, 320, %s322, %s310
        $region44: #{tpu_custom_call.1} parent=35 // pred_fallthru
          _
      $region36: #{tpu_custom_call.1} parent=5 // pred_fallthru
        _
      %p325 = scmp.le.s32.totalorder 1, %s22
      %p326 = scmp.lt.s32.totalorder %s22, 3
      %p327 = pnand %p325, %p326
      %p328 = pneg %p327
      // Predicated region
      $region45: #{tpu_custom_call.1} parent=5 // pred_check
        _
      $region46: #{tpu_custom_call.1} parent=5 // pred_check_branch
        %330 = sbr.rel (%p327) target = $region48
      $region47: #{tpu_custom_call.1} parent=5 // pred_region
        %s331 = ssub.s32 %s22, 1
        // Predicated region
        $region49: #{tpu_custom_call.1} parent=47 // pred_check
          %p332 = pneg %p43
        $region50: #{tpu_custom_call.1} parent=47 // pred_check_branch
          %334 = sbr.rel (%p332) target = $region52
        $region51: #{tpu_custom_call.1} parent=47 // pred_region
          %335 = dma.done [#allocation3], 1024
        $region52: #{tpu_custom_call.1} parent=47 // pred_fallthru
          _
        // Predicated region
        $region53: #{tpu_custom_call.1} parent=47 // pred_check
          %p336 = pneg %p64
        $region54: #{tpu_custom_call.1} parent=47 // pred_check_branch
          %338 = sbr.rel (%p336) target = $region56
        $region55: #{tpu_custom_call.1} parent=47 // pred_region
          %339 = dma.done [#allocation6], 12288
        $region56: #{tpu_custom_call.1} parent=47 // pred_fallthru
          _
        // Predicated region
        $region57: #{tpu_custom_call.1} parent=47 // pred_check
          %p340 = pneg %p85
        $region58: #{tpu_custom_call.1} parent=47 // pred_check_branch
          %342 = sbr.rel (%p340) target = $region60
        $region59: #{tpu_custom_call.1} parent=47 // pred_region
          %343 = dma.done [#allocation6], 48
        $region60: #{tpu_custom_call.1} parent=47 // pred_fallthru
          _
        // Predicated region
        $region61: #{tpu_custom_call.1} parent=47 // pred_check
          %p344 = pneg %p106
        $region62: #{tpu_custom_call.1} parent=47 // pred_check_branch
          %346 = sbr.rel (%p344) target = $region64
        $region63: #{tpu_custom_call.1} parent=47 // pred_region
          %347 = dma.done [#allocation9], 24576
        $region64: #{tpu_custom_call.1} parent=47 // pred_fallthru
          _
        // Predicated region
        $region65: #{tpu_custom_call.1} parent=47 // pred_check
          %p348 = pneg %p127
        $region66: #{tpu_custom_call.1} parent=47 // pred_check_branch
          %350 = sbr.rel (%p348) target = $region68
        $region67: #{tpu_custom_call.1} parent=47 // pred_region
          %351 = dma.done [#allocation9], 128
        $region68: #{tpu_custom_call.1} parent=47 // pred_fallthru
          _
        %s352 = sand.u32 %s27, 1
        %s353 = scalar_lea.sflag [#allocation12], %s352
        %s354 = sand.u32 %s140, 1
        %s355 = smul.addr %s354, 10240
        %s356 = scalar_lea.vmem [#allocation11], %s355
        // Predicated region
        $region69: #{tpu_custom_call.1} parent=47 // pred_check
          %p357 = pneg %p153
        $region70: #{tpu_custom_call.1} parent=47 // pred_check_branch
          %359 = sbr.rel (%p357) target = $region72
        $region71: #{tpu_custom_call.1} parent=47 // pred_region
          %360 = dma.done %s353, 163840
        $region72: #{tpu_custom_call.1} parent=47 // pred_fallthru
          _
        %s361 = sand.u32 %s27, 1
        %s362 = scalar_lea.sflag [#allocation12], %s361
        %s363 = sand.u32 %s166, 1
        %s364 = smul.addr %s363, 20
        %s365 = scalar_lea.vmem [#allocation13], %s364
        // Predicated region
        $region73: #{tpu_custom_call.1} parent=47 // pred_check
          %p366 = pneg %p179
        $region74: #{tpu_custom_call.1} parent=47 // pred_check_branch
          %368 = sbr.rel (%p366) target = $region76
        $region75: #{tpu_custom_call.1} parent=47 // pred_region
          %369 = dma.done %s362, 320
        $region76: #{tpu_custom_call.1} parent=47 // pred_fallthru
          _
        %p370 = pneg %p43
        %p371 = pneg %p40
        %p372 = pneg %p64
        %p373 = pneg %p61
        %p374 = pneg %p85
        %p375 = pneg %p82
        %p376 = pneg %p106
        %p377 = pneg %p103
        %p378 = pneg %p127
        %p379 = pneg %p124
        %s380 = sand.u32 %s27, 1
        %s381 = scalar_lea.sflag [#allocation12], %s380
        %s382 = sand.u32 %s140, 1
        %s383 = smul.addr %s382, 10240
        %s384 = scalar_lea.vmem [#allocation11], %s383
        %p385 = pneg %p153
        %p386 = pneg %p150
        %s387 = sand.u32 %s27, 1
        %s388 = scalar_lea.sflag [#allocation12], %s387
        %s389 = sand.u32 %s166, 1
        %s390 = smul.addr %s389, 20
        %s391 = scalar_lea.vmem [#allocation13], %s390
        %p392 = pneg %p179
        %p393 = pneg %p176
        %p394 = pneg %p205
        %p395 = pneg %p202
        %s396 = sand.u32 %s192, 1
        %s397 = scalar_lea.sflag [#allocation4], %s396
        %s398 = sand.u32 %s192, 1
        %s399 = smul.addr %s398, 640
        %s400 = scalar_lea.vmem [#allocation14], %s399
        %s401 = smul.u32 20, %s27
        %s402 = smul.u32 20, %s27
        %s403 = smul.u32 20, %s27
        %v405 = vld [vmem:[#allocation2] sm:$0xff]
        %v406 = vld [vmem:[#allocation2 + $0x8] sm:$0xff]
        %v407 = vld [vmem:[#allocation2 + $0x10] sm:$0xff]
        %v408 = vld [vmem:[#allocation2 + $0x18] sm:$0xff]
        %v409 = vld [vmem:[#allocation2 + $0x20] sm:$0xff]
        %v410 = vld [vmem:[#allocation2 + $0x28] sm:$0xff]
        %v411 = vld [vmem:[#allocation2 + $0x30] sm:$0xff]
        %v412 = vld [vmem:[#allocation2 + $0x38] sm:$0xff]
        %v413 = vld [vmem:[#allocation5] sm:$0xff]
        %v414 = vld [vmem:[#allocation5 + $0x8] sm:$0xff]
        %v415 = vld [vmem:[#allocation5 + $0x10] sm:$0xff]
        %v416 = vld [vmem:[#allocation5 + $0x18] sm:$0xff]
        %v417 = vld [vmem:[#allocation5 + $0x20] sm:$0xff]
        %v418 = vld [vmem:[#allocation5 + $0x28] sm:$0xff]
        %v419 = vld [vmem:[#allocation5 + $0x30] sm:$0xff]
        %v420 = vld [vmem:[#allocation5 + $0x38] sm:$0xff]
        %v421 = vld [vmem:[#allocation5 + $0x40] sm:$0xff]
        %v422 = vld [vmem:[#allocation5 + $0x48] sm:$0xff]
        %v423 = vld [vmem:[#allocation5 + $0x50] sm:$0xff]
        %v424 = vld [vmem:[#allocation5 + $0x58] sm:$0xff]
        %v425 = vld [vmem:[#allocation5 + $0x60] sm:$0xff]
        %v426 = vld [vmem:[#allocation5 + $0x68] sm:$0xff]
        %v427 = vld [vmem:[#allocation5 + $0x70] sm:$0xff]
        %v428 = vld [vmem:[#allocation5 + $0x78] sm:$0xff]
        %v429 = vld [vmem:[#allocation5 + $0x80] sm:$0xff]
        %v430 = vld [vmem:[#allocation5 + $0x88] sm:$0xff]
        %v431 = vld [vmem:[#allocation5 + $0x90] sm:$0xff]
        %v432 = vld [vmem:[#allocation5 + $0x98] sm:$0xff]
        %v433 = vld [vmem:[#allocation5 + $0xa0] sm:$0xff]
        %v434 = vld [vmem:[#allocation5 + $0xa8] sm:$0xff]
        %v435 = vld [vmem:[#allocation5 + $0xb0] sm:$0xff]
        %v436 = vld [vmem:[#allocation5 + $0xb8] sm:$0xff]
        %v437 = vld [vmem:[#allocation5 + $0xc0] sm:$0xff]
        %v438 = vld [vmem:[#allocation5 + $0xc8] sm:$0xff]
        %v439 = vld [vmem:[#allocation5 + $0xd0] sm:$0xff]
        %v440 = vld [vmem:[#allocation5 + $0xd8] sm:$0xff]
        %v441 = vld [vmem:[#allocation5 + $0xe0] sm:$0xff]
        %v442 = vld [vmem:[#allocation5 + $0xe8] sm:$0xff]
        %v443 = vld [vmem:[#allocation5 + $0xf0] sm:$0xff]
        %v444 = vld [vmem:[#allocation5 + $0xf8] sm:$0xff]
        %v445 = vld [vmem:[#allocation5 + $0x100] sm:$0xff]
        %v446 = vld [vmem:[#allocation5 + $0x108] sm:$0xff]
        %v447 = vld [vmem:[#allocation5 + $0x110] sm:$0xff]
        %v448 = vld [vmem:[#allocation5 + $0x118] sm:$0xff]
        %v449 = vld [vmem:[#allocation5 + $0x120] sm:$0xff]
        %v450 = vld [vmem:[#allocation5 + $0x128] sm:$0xff]
        %v451 = vld [vmem:[#allocation5 + $0x130] sm:$0xff]
        %v452 = vld [vmem:[#allocation5 + $0x138] sm:$0xff]
        %v453 = vld [vmem:[#allocation5 + $0x140] sm:$0xff]
        %v454 = vld [vmem:[#allocation5 + $0x148] sm:$0xff]
        %v455 = vld [vmem:[#allocation5 + $0x150] sm:$0xff]
        %v456 = vld [vmem:[#allocation5 + $0x158] sm:$0xff]
        %v457 = vld [vmem:[#allocation5 + $0x160] sm:$0xff]
        %v458 = vld [vmem:[#allocation5 + $0x168] sm:$0xff]
        %v459 = vld [vmem:[#allocation5 + $0x170] sm:$0xff]
        %v460 = vld [vmem:[#allocation5 + $0x178] sm:$0xff]
        %v461 = vld [vmem:[#allocation5 + $0x180] sm:$0xff]
        %v462 = vld [vmem:[#allocation5 + $0x188] sm:$0xff]
        %v463 = vld [vmem:[#allocation5 + $0x190] sm:$0xff]
        %v464 = vld [vmem:[#allocation5 + $0x198] sm:$0xff]
        %v465 = vld [vmem:[#allocation5 + $0x1a0] sm:$0xff]
        %v466 = vld [vmem:[#allocation5 + $0x1a8] sm:$0xff]
        %v467 = vld [vmem:[#allocation5 + $0x1b0] sm:$0xff]
        %v468 = vld [vmem:[#allocation5 + $0x1b8] sm:$0xff]
        %v469 = vld [vmem:[#allocation5 + $0x1c0] sm:$0xff]
        %v470 = vld [vmem:[#allocation5 + $0x1c8] sm:$0xff]
        %v471 = vld [vmem:[#allocation5 + $0x1d0] sm:$0xff]
        %v472 = vld [vmem:[#allocation5 + $0x1d8] sm:$0xff]
        %v473 = vld [vmem:[#allocation5 + $0x1e0] sm:$0xff]
        %v474 = vld [vmem:[#allocation5 + $0x1e8] sm:$0xff]
        %v475 = vld [vmem:[#allocation5 + $0x1f0] sm:$0xff]
        %v476 = vld [vmem:[#allocation5 + $0x1f8] sm:$0xff]
        %v477 = vld [vmem:[#allocation5 + $0x200] sm:$0xff]
        %v478 = vld [vmem:[#allocation5 + $0x208] sm:$0xff]
        %v479 = vld [vmem:[#allocation5 + $0x210] sm:$0xff]
        %v480 = vld [vmem:[#allocation5 + $0x218] sm:$0xff]
        %v481 = vld [vmem:[#allocation5 + $0x220] sm:$0xff]
        %v482 = vld [vmem:[#allocation5 + $0x228] sm:$0xff]
        %v483 = vld [vmem:[#allocation5 + $0x230] sm:$0xff]
        %v484 = vld [vmem:[#allocation5 + $0x238] sm:$0xff]
        %v485 = vld [vmem:[#allocation5 + $0x240] sm:$0xff]
        %v486 = vld [vmem:[#allocation5 + $0x248] sm:$0xff]
        %v487 = vld [vmem:[#allocation5 + $0x250] sm:$0xff]
        %v488 = vld [vmem:[#allocation5 + $0x258] sm:$0xff]
        %v489 = vld [vmem:[#allocation5 + $0x260] sm:$0xff]
        %v490 = vld [vmem:[#allocation5 + $0x268] sm:$0xff]
        %v491 = vld [vmem:[#allocation5 + $0x270] sm:$0xff]
        %v492 = vld [vmem:[#allocation5 + $0x278] sm:$0xff]
        %v493 = vld [vmem:[#allocation5 + $0x280] sm:$0xff]
        %v494 = vld [vmem:[#allocation5 + $0x288] sm:$0xff]
        %v495 = vld [vmem:[#allocation5 + $0x290] sm:$0xff]
        %v496 = vld [vmem:[#allocation5 + $0x298] sm:$0xff]
        %v497 = vld [vmem:[#allocation5 + $0x2a0] sm:$0xff]
        %v498 = vld [vmem:[#allocation5 + $0x2a8] sm:$0xff]
        %v499 = vld [vmem:[#allocation5 + $0x2b0] sm:$0xff]
        %v500 = vld [vmem:[#allocation5 + $0x2b8] sm:$0xff]
        %v501 = vld [vmem:[#allocation5 + $0x2c0] sm:$0xff]
        %v502 = vld [vmem:[#allocation5 + $0x2c8] sm:$0xff]
        %v503 = vld [vmem:[#allocation5 + $0x2d0] sm:$0xff]
        %v504 = vld [vmem:[#allocation5 + $0x2d8] sm:$0xff]
        %v505 = vld [vmem:[#allocation5 + $0x2e0] sm:$0xff]
        %v506 = vld [vmem:[#allocation5 + $0x2e8] sm:$0xff]
        %v507 = vld [vmem:[#allocation5 + $0x2f0] sm:$0xff]
        %v508 = vld [vmem:[#allocation5 + $0x2f8] sm:$0xff]
        %v509 = vld [vmem:[#allocation7] sm:$0x7]
        %v511 = vlaneseq
        %v512 = vshrl.u32 %v511, 7
        %v513 = vsub.s32 0, %v512
        %v514 = vrot.slane %v509, %v513
        %v515 = vlaneseq
        %v516 = vshrl.u32 %v515, 7
        %v517 = vsub.s32 1, %v516
        %v518 = vrot.slane %v509, %v517
        %v519 = vlaneseq
        %v520 = vshrl.u32 %v519, 7
        %v521 = vsub.s32 2, %v520
        %v522 = vrot.slane %v509, %v521
        %526 = vmatprep.subr.mxu0 %v414
        %527 = vmatpush1.msra.mxu0 %v413
        %528 = vmatprep.subr.mxu0 %v417
        %529 = vmatpush1.msra.mxu0 %v416
        %530 = vmatprep.subr.mxu0 %v420
        %531 = vmatpush1.msra.mxu0 %v419
        %532 = vmatprep.subr.mxu0 %v423
        %533 = vmatpush1.msra.mxu0 %v422
        %534 = vmatprep.subr.mxu0 %v426
        %535 = vmatpush1.msra.mxu0 %v425
        %536 = vmatprep.subr.mxu0 %v429
        %537 = vmatpush1.msra.mxu0 %v428
        %538 = vmatprep.subr.mxu0 %v432
        %539 = vmatpush1.msra.mxu0 %v431
        %540 = vmatprep.subr.mxu0 %v435
        %541 = vmatpush1.msra.mxu0 %v434
        %542 = vmatprep.subr.mxu0 %v438
        %543 = vmatpush1.msra.mxu0 %v437
        %544 = vmatprep.subr.mxu0 %v441
        %545 = vmatpush1.msra.mxu0 %v440
        %546 = vmatprep.subr.mxu0 %v444
        %547 = vmatpush1.msra.mxu0 %v443
        %548 = vmatprep.subr.mxu0 %v447
        %549 = vmatpush1.msra.mxu0 %v446
        %550 = vmatprep.subr.mxu0 %v450
        %551 = vmatpush1.msra.mxu0 %v449
        %552 = vmatprep.subr.mxu0 %v453
        %553 = vmatpush1.msra.mxu0 %v452
        %554 = vmatprep.subr.mxu0 %v456
        %555 = vmatpush1.msra.mxu0 %v455
        %556 = vmatprep.subr.mxu0 %v459
        %557 = vmatpush1.msra.mxu0 %v458
        %558 = vmatprep.subr.mxu0 %v462
        %559 = vmatpush1.msra.mxu0 %v461
        %560 = vmatprep.subr.mxu0 %v465
        %561 = vmatpush1.msra.mxu0 %v464
        %562 = vmatprep.subr.mxu0 %v468
        %563 = vmatpush1.msra.mxu0 %v467
        %564 = vmatprep.subr.mxu0 %v471
        %565 = vmatpush1.msra.mxu0 %v470
        %566 = vmatprep.subr.mxu0 %v474
        %567 = vmatpush1.msra.mxu0 %v473
        %568 = vmatprep.subr.mxu0 %v477
        %569 = vmatpush1.msra.mxu0 %v476
        %570 = vmatprep.subr.mxu0 %v480
        %571 = vmatpush1.msra.mxu0 %v479
        %572 = vmatprep.subr.mxu0 %v483
        %573 = vmatpush1.msra.mxu0 %v482
        %574 = vmatprep.subr.mxu0 %v486
        %575 = vmatpush1.msra.mxu0 %v485
        %576 = vmatprep.subr.mxu0 %v489
        %577 = vmatpush1.msra.mxu0 %v488
        %578 = vmatprep.subr.mxu0 %v492
        %579 = vmatpush1.msra.mxu0 %v491
        %580 = vmatprep.subr.mxu0 %v495
        %581 = vmatpush1.msra.mxu0 %v494
        %582 = vmatprep.subr.mxu0 %v498
        %583 = vmatpush1.msra.mxu0 %v497
        %584 = vmatprep.subr.mxu0 %v501
        %585 = vmatpush1.msra.mxu0 %v500
        %586 = vmatprep.subr.mxu0 %v504
        %587 = vmatpush1.msra.mxu0 %v503
        %588 = vmatprep.subr.mxu0 %v507
        %589 = vmatpush1.msra.mxu0 %v506
        %590 = vmatprep.mubr.f32.mxu0 %v406
        %591 = vmatmul.mubr.f32.gmra.mrb[0].mxu0 %v405
        %v592 = vpop.f32.mrb[0].mxu0
        %v593 = vadd.f32 %v514, %v592
        %v594 = vpop.f32.mrb[0].mxu0
        %v595 = vadd.f32 %v518, %v594
        %596 = vmatprep.mubr.f32.mxu0 %v408
        %597 = vmatmul.mubr.f32.gmra.mrb[0].mxu0 %v407
        %v598 = vpop.f32.mrb[0].mxu0
        %v599 = vadd.f32 %v514, %v598
        %v600 = vpop.f32.mrb[0].mxu0
        %v601 = vadd.f32 %v518, %v600
        %602 = vmatprep.mubr.f32.mxu0 %v410
        %603 = vmatmul.mubr.f32.gmra.mrb[0].mxu0 %v409
        %v604 = vpop.f32.mrb[0].mxu0
        %v605 = vadd.f32 %v514, %v604
        %v606 = vpop.f32.mrb[0].mxu0
        %v607 = vadd.f32 %v518, %v606
        %608 = vmatprep.mubr.f32.mxu0 %v412
        %609 = vmatmul.mubr.f32.gmra.mrb[0].mxu0 %v411
        %v610 = vpop.f32.mrb[0].mxu0
        %v611 = vadd.f32 %v514, %v610
        %v612 = vpop.f32.mrb[0].mxu0
        %v613 = vadd.f32 %v518, %v612
        %614 = vdwg.mxu0
        %615 = vmatprep.subr.mxu0 0.0
        %616 = vmatpush1.msra.mxu0 %v415
        %617 = vmatprep.subr.mxu0 0.0
        %618 = vmatpush1.msra.mxu0 %v418
        %619 = vmatprep.subr.mxu0 0.0
        %620 = vmatpush1.msra.mxu0 %v421
        %621 = vmatprep.subr.mxu0 0.0
        %622 = vmatpush1.msra.mxu0 %v424
        %623 = vmatprep.subr.mxu0 0.0
        %624 = vmatpush1.msra.mxu0 %v427
        %625 = vmatprep.subr.mxu0 0.0
        %626 = vmatpush1.msra.mxu0 %v430
        %627 = vmatprep.subr.mxu0 0.0
        %628 = vmatpush1.msra.mxu0 %v433
        %629 = vmatprep.subr.mxu0 0.0
        %630 = vmatpush1.msra.mxu0 %v436
        %631 = vmatprep.subr.mxu0 0.0
        %632 = vmatpush1.msra.mxu0 %v439
        %633 = vmatprep.subr.mxu0 0.0
        %634 = vmatpush1.msra.mxu0 %v442
        %635 = vmatprep.subr.mxu0 0.0
        %636 = vmatpush1.msra.mxu0 %v445
        %637 = vmatprep.subr.mxu0 0.0
        %638 = vmatpush1.msra.mxu0 %v448
        %639 = vmatprep.subr.mxu0 0.0
        %640 = vmatpush1.msra.mxu0 %v451
        %641 = vmatprep.subr.mxu0 0.0
        %642 = vmatpush1.msra.mxu0 %v454
        %643 = vmatprep.subr.mxu0 0.0
        %644 = vmatpush1.msra.mxu0 %v457
        %645 = vmatprep.subr.mxu0 0.0
        %646 = vmatpush1.msra.mxu0 %v460
        %647 = vmatprep.subr.mxu0 0.0
        %648 = vmatpush1.msra.mxu0 %v463
        %649 = vmatprep.subr.mxu0 0.0
        %650 = vmatpush1.msra.mxu0 %v466
        %651 = vmatprep.subr.mxu0 0.0
        %652 = vmatpush1.msra.mxu0 %v469
        %653 = vmatprep.subr.mxu0 0.0
        %654 = vmatpush1.msra.mxu0 %v472
        %655 = vmatprep.subr.mxu0 0.0
        %656 = vmatpush1.msra.mxu0 %v475
        %657 = vmatprep.subr.mxu0 0.0
        %658 = vmatpush1.msra.mxu0 %v478
        %659 = vmatprep.subr.mxu0 0.0
        %660 = vmatpush1.msra.mxu0 %v481
        %661 = vmatprep.subr.mxu0 0.0
        %662 = vmatpush1.msra.mxu0 %v484
        %663 = vmatprep.subr.mxu0 0.0
        %664 = vmatpush1.msra.mxu0 %v487
        %665 = vmatprep.subr.mxu0 0.0
        %666 = vmatpush1.msra.mxu0 %v490
        %667 = vmatprep.subr.mxu0 0.0
        %668 = vmatpush1.msra.mxu0 %v493
        %669 = vmatprep.subr.mxu0 0.0
        %670 = vmatpush1.msra.mxu0 %v496
        %671 = vmatprep.subr.mxu0 0.0
        %672 = vmatpush1.msra.mxu0 %v499
        %673 = vmatprep.subr.mxu0 0.0
        %674 = vmatpush1.msra.mxu0 %v502
        %675 = vmatprep.subr.mxu0 0.0
        %676 = vmatpush1.msra.mxu0 %v505
        %677 = vmatprep.subr.mxu0 0.0
        %678 = vmatpush1.msra.mxu0 %v508
        %679 = vmatprep.mubr.f32.mxu0 %v406
        %680 = vmatmul.mubr.f32.gmra.mrb[0].mxu0 %v405
        %v681 = vpop.f32.mrb[0].mxu0
        %v682 = vadd.f32 %v522, %v681
        %v683 = vpop.f32.mrb[0].mxu0
        %684 = vmatprep.mubr.f32.mxu0 %v408
        %685 = vmatmul.mubr.f32.gmra.mrb[0].mxu0 %v407
        %v686 = vpop.f32.mrb[0].mxu0
        %v687 = vadd.f32 %v522, %v686
        %v688 = vpop.f32.mrb[0].mxu0
        %689 = vmatprep.mubr.f32.mxu0 %v410
        %690 = vmatmul.mubr.f32.gmra.mrb[0].mxu0 %v409
        %v691 = vpop.f32.mrb[0].mxu0
        %v692 = vadd.f32 %v522, %v691
        %v693 = vpop.f32.mrb[0].mxu0
        %694 = vmatprep.mubr.f32.mxu0 %v412
        %695 = vmatmul.mubr.f32.gmra.mrb[0].mxu0 %v411
        %v696 = vpop.f32.mrb[0].mxu0
        %v697 = vadd.f32 %v522, %v696
        %v698 = vpop.f32.mrb[0].mxu0
        %699 = vdwg.mxu0
        %v700 = vmax.f32 %v593, 0.0
        %v701 = vmax.f32 %v595, 0.0
        %v702 = vmax.f32 %v682, 0.0
        %v703 = vmax.f32 %v599, 0.0
        %v704 = vmax.f32 %v601, 0.0
        %v705 = vmax.f32 %v687, 0.0
        %v706 = vmax.f32 %v605, 0.0
        %v707 = vmax.f32 %v607, 0.0
        %v708 = vmax.f32 %v692, 0.0
        %v709 = vmax.f32 %v611, 0.0
        %v710 = vmax.f32 %v613, 0.0
        %v711 = vmax.f32 %v697, 0.0
        %v712 = vpack.c.bf16 %v703, %v700
        %v713 = vpack.c.bf16 %v704, %v701
        %v714 = vpack.c.bf16 %v705, %v702
        %v715 = vpack.c.bf16 %v709, %v706
        %v716 = vpack.c.bf16 %v710, %v707
        %v717 = vpack.c.bf16 %v711, %v708
        %v718 = vld [vmem:[#allocation8] sm:$0xff]
        %v719 = vld [vmem:[#allocation8 + $0x8] sm:$0xff]
        %v720 = vld [vmem:[#allocation8 + $0x10] sm:$0xff]
        %v721 = vld [vmem:[#allocation8 + $0x18] sm:$0xff]
        %v722 = vld [vmem:[#allocation8 + $0x20] sm:$0xff]
        %v723 = vld [vmem:[#allocation8 + $0x28] sm:$0xff]
        %v724 = vld [vmem:[#allocation8 + $0x30] sm:$0xff]
        %v725 = vld [vmem:[#allocation8 + $0x38] sm:$0xff]
        %v726 = vld [vmem:[#allocation8 + $0x40] sm:$0xff]
        %v727 = vld [vmem:[#allocation8 + $0x48] sm:$0xff]
        %v728 = vld [vmem:[#allocation8 + $0x50] sm:$0xff]
        %v729 = vld [vmem:[#allocation8 + $0x58] sm:$0xff]
        %v730 = vld [vmem:[#allocation8 + $0x60] sm:$0xff]
        %v731 = vld [vmem:[#allocation8 + $0x68] sm:$0xff]
        %v732 = vld [vmem:[#allocation8 + $0x70] sm:$0xff]
        %v733 = vld [vmem:[#allocation8 + $0x78] sm:$0xff]
        %v734 = vld [vmem:[#allocation8 + $0x80] sm:$0xff]
        %v735 = vld [vmem:[#allocation8 + $0x88] sm:$0xff]
        %v736 = vld [vmem:[#allocation8 + $0x90] sm:$0xff]
        %v737 = vld [vmem:[#allocation8 + $0x98] sm:$0xff]
        %v738 = vld [vmem:[#allocation8 + $0xa0] sm:$0xff]
        %v739 = vld [vmem:[#allocation8 + $0xa8] sm:$0xff]
        %v740 = vld [vmem:[#allocation8 + $0xb0] sm:$0xff]
        %v741 = vld [vmem:[#allocation8 + $0xb8] sm:$0xff]
        %v742 = vld [vmem:[#allocation8 + $0xc0] sm:$0xff]
        %v743 = vld [vmem:[#allocation8 + $0xc8] sm:$0xff]
        %v744 = vld [vmem:[#allocation8 + $0xd0] sm:$0xff]
        %v745 = vld [vmem:[#allocation8 + $0xd8] sm:$0xff]
        %v746 = vld [vmem:[#allocation8 + $0xe0] sm:$0xff]
        %v747 = vld [vmem:[#allocation8 + $0xe8] sm:$0xff]
        %v748 = vld [vmem:[#allocation8 + $0xf0] sm:$0xff]
        %v749 = vld [vmem:[#allocation8 + $0xf8] sm:$0xff]
        %v750 = vld [vmem:[#allocation8 + $0x100] sm:$0xff]
        %v751 = vld [vmem:[#allocation8 + $0x108] sm:$0xff]
        %v752 = vld [vmem:[#allocation8 + $0x110] sm:$0xff]
        %v753 = vld [vmem:[#allocation8 + $0x118] sm:$0xff]
        %v754 = vld [vmem:[#allocation8 + $0x120] sm:$0xff]
        %v755 = vld [vmem:[#allocation8 + $0x128] sm:$0xff]
        %v756 = vld [vmem:[#allocation8 + $0x130] sm:$0xff]
        %v757 = vld [vmem:[#allocation8 + $0x138] sm:$0xff]
        %v758 = vld [vmem:[#allocation8 + $0x140] sm:$0xff]
        %v759 = vld [vmem:[#allocation8 + $0x148] sm:$0xff]
        %v760 = vld [vmem:[#allocation8 + $0x150] sm:$0xff]
        %v761 = vld [vmem:[#allocation8 + $0x158] sm:$0xff]
        %v762 = vld [vmem:[#allocation8 + $0x160] sm:$0xff]
        %v763 = vld [vmem:[#allocation8 + $0x168] sm:$0xff]
        %v764 = vld [vmem:[#allocation8 + $0x170] sm:$0xff]
        %v765 = vld [vmem:[#allocation8 + $0x178] sm:$0xff]
        %v766 = vld [vmem:[#allocation8 + $0x180] sm:$0xff]
        %v767 = vld [vmem:[#allocation8 + $0x188] sm:$0xff]
        %v768 = vld [vmem:[#allocation8 + $0x190] sm:$0xff]
        %v769 = vld [vmem:[#allocation8 + $0x198] sm:$0xff]
        %v770 = vld [vmem:[#allocation8 + $0x1a0] sm:$0xff]
        %v771 = vld [vmem:[#allocation8 + $0x1a8] sm:$0xff]
        %v772 = vld [vmem:[#allocation8 + $0x1b0] sm:$0xff]
        %v773 = vld [vmem:[#allocation8 + $0x1b8] sm:$0xff]
        %v774 = vld [vmem:[#allocation8 + $0x1c0] sm:$0xff]
        %v775 = vld [vmem:[#allocation8 + $0x1c8] sm:$0xff]
        %v776 = vld [vmem:[#allocation8 + $0x1d0] sm:$0xff]
        %v777 = vld [vmem:[#allocation8 + $0x1d8] sm:$0xff]
        %v778 = vld [vmem:[#allocation8 + $0x1e0] sm:$0xff]
        %v779 = vld [vmem:[#allocation8 + $0x1e8] sm:$0xff]
        %v780 = vld [vmem:[#allocation8 + $0x1f0] sm:$0xff]
        %v781 = vld [vmem:[#allocation8 + $0x1f8] sm:$0xff]
        %v782 = vld [vmem:[#allocation8 + $0x200] sm:$0xff]
        %v783 = vld [vmem:[#allocation8 + $0x208] sm:$0xff]
        %v784 = vld [vmem:[#allocation8 + $0x210] sm:$0xff]
        %v785 = vld [vmem:[#allocation8 + $0x218] sm:$0xff]
        %v786 = vld [vmem:[#allocation8 + $0x220] sm:$0xff]
        %v787 = vld [vmem:[#allocation8 + $0x228] sm:$0xff]
        %v788 = vld [vmem:[#allocation8 + $0x230] sm:$0xff]
        %v789 = vld [vmem:[#allocation8 + $0x238] sm:$0xff]
        %v790 = vld [vmem:[#allocation8 + $0x240] sm:$0xff]
        %v791 = vld [vmem:[#allocation8 + $0x248] sm:$0xff]
        %v792 = vld [vmem:[#allocation8 + $0x250] sm:$0xff]
        %v793 = vld [vmem:[#allocation8 + $0x258] sm:$0xff]
        %v794 = vld [vmem:[#allocation8 + $0x260] sm:$0xff]
        %v795 = vld [vmem:[#allocation8 + $0x268] sm:$0xff]
        %v796 = vld [vmem:[#allocation8 + $0x270] sm:$0xff]
        %v797 = vld [vmem:[#allocation8 + $0x278] sm:$0xff]
        %v798 = vld [vmem:[#allocation8 + $0x280] sm:$0xff]
        %v799 = vld [vmem:[#allocation8 + $0x288] sm:$0xff]
        %v800 = vld [vmem:[#allocation8 + $0x290] sm:$0xff]
        %v801 = vld [vmem:[#allocation8 + $0x298] sm:$0xff]
        %v802 = vld [vmem:[#allocation8 + $0x2a0] sm:$0xff]
        %v803 = vld [vmem:[#allocation8 + $0x2a8] sm:$0xff]
        %v804 = vld [vmem:[#allocation8 + $0x2b0] sm:$0xff]
        %v805 = vld [vmem:[#allocation8 + $0x2b8] sm:$0xff]
        %v806 = vld [vmem:[#allocation8 + $0x2c0] sm:$0xff]
        %v807 = vld [vmem:[#allocation8 + $0x2c8] sm:$0xff]
        %v808 = vld [vmem:[#allocation8 + $0x2d0] sm:$0xff]
        %v809 = vld [vmem:[#allocation8 + $0x2d8] sm:$0xff]
        %v810 = vld [vmem:[#allocation8 + $0x2e0] sm:$0xff]
        %v811 = vld [vmem:[#allocation8 + $0x2e8] sm:$0xff]
        %v812 = vld [vmem:[#allocation8 + $0x2f0] sm:$0xff]
        %v813 = vld [vmem:[#allocation8 + $0x2f8] sm:$0xff]
        %v814 = vld [vmem:[#allocation8 + $0x300] sm:$0xff]
        %v815 = vld [vmem:[#allocation8 + $0x308] sm:$0xff]
        %v816 = vld [vmem:[#allocation8 + $0x310] sm:$0xff]
        %v817 = vld [vmem:[#allocation8 + $0x318] sm:$0xff]
        %v818 = vld [vmem:[#allocation8 + $0x320] sm:$0xff]
        %v819 = vld [vmem:[#allocation8 + $0x328] sm:$0xff]
        %v820 = vld [vmem:[#allocation8 + $0x330] sm:$0xff]
        %v821 = vld [vmem:[#allocation8 + $0x338] sm:$0xff]
        %v822 = vld [vmem:[#allocation8 + $0x340] sm:$0xff]
        %v823 = vld [vmem:[#allocation8 + $0x348] sm:$0xff]
        %v824 = vld [vmem:[#allocation8 + $0x350] sm:$0xff]
        %v825 = vld [vmem:[#allocation8 + $0x358] sm:$0xff]
        %v826 = vld [vmem:[#allocation8 + $0x360] sm:$0xff]
        %v827 = vld [vmem:[#allocation8 + $0x368] sm:$0xff]
        %v828 = vld [vmem:[#allocation8 + $0x370] sm:$0xff]
        %v829 = vld [vmem:[#allocation8 + $0x378] sm:$0xff]
        %v830 = vld [vmem:[#allocation8 + $0x380] sm:$0xff]
        %v831 = vld [vmem:[#allocation8 + $0x388] sm:$0xff]
        %v832 = vld [vmem:[#allocation8 + $0x390] sm:$0xff]
        %v833 = vld [vmem:[#allocation8 + $0x398] sm:$0xff]
        %v834 = vld [vmem:[#allocation8 + $0x3a0] sm:$0xff]
        %v835 = vld [vmem:[#allocation8 + $0x3a8] sm:$0xff]
        %v836 = vld [vmem:[#allocation8 + $0x3b0] sm:$0xff]
        %v837 = vld [vmem:[#allocation8 + $0x3b8] sm:$0xff]
        %v838 = vld [vmem:[#allocation8 + $0x3c0] sm:$0xff]
        %v839 = vld [vmem:[#allocation8 + $0x3c8] sm:$0xff]
        %v840 = vld [vmem:[#allocation8 + $0x3d0] sm:$0xff]
        %v841 = vld [vmem:[#allocation8 + $0x3d8] sm:$0xff]
        %v842 = vld [vmem:[#allocation8 + $0x3e0] sm:$0xff]
        %v843 = vld [vmem:[#allocation8 + $0x3e8] sm:$0xff]
        %v844 = vld [vmem:[#allocation8 + $0x3f0] sm:$0xff]
        %v845 = vld [vmem:[#allocation8 + $0x3f8] sm:$0xff]
        %v846 = vld [vmem:[#allocation8 + $0x400] sm:$0xff]
        %v847 = vld [vmem:[#allocation8 + $0x408] sm:$0xff]
        %v848 = vld [vmem:[#allocation8 + $0x410] sm:$0xff]
        %v849 = vld [vmem:[#allocation8 + $0x418] sm:$0xff]
        %v850 = vld [vmem:[#allocation8 + $0x420] sm:$0xff]
        %v851 = vld [vmem:[#allocation8 + $0x428] sm:$0xff]
        %v852 = vld [vmem:[#allocation8 + $0x430] sm:$0xff]
        %v853 = vld [vmem:[#allocation8 + $0x438] sm:$0xff]
        %v854 = vld [vmem:[#allocation8 + $0x440] sm:$0xff]
        %v855 = vld [vmem:[#allocation8 + $0x448] sm:$0xff]
        %v856 = vld [vmem:[#allocation8 + $0x450] sm:$0xff]
        %v857 = vld [vmem:[#allocation8 + $0x458] sm:$0xff]
        %v858 = vld [vmem:[#allocation8 + $0x460] sm:$0xff]
        %v859 = vld [vmem:[#allocation8 + $0x468] sm:$0xff]
        %v860 = vld [vmem:[#allocation8 + $0x470] sm:$0xff]
        %v861 = vld [vmem:[#allocation8 + $0x478] sm:$0xff]
        %v862 = vld [vmem:[#allocation8 + $0x480] sm:$0xff]
        %v863 = vld [vmem:[#allocation8 + $0x488] sm:$0xff]
        %v864 = vld [vmem:[#allocation8 + $0x490] sm:$0xff]
        %v865 = vld [vmem:[#allocation8 + $0x498] sm:$0xff]
        %v866 = vld [vmem:[#allocation8 + $0x4a0] sm:$0xff]
        %v867 = vld [vmem:[#allocation8 + $0x4a8] sm:$0xff]
        %v868 = vld [vmem:[#allocation8 + $0x4b0] sm:$0xff]
        %v869 = vld [vmem:[#allocation8 + $0x4b8] sm:$0xff]
        %v870 = vld [vmem:[#allocation8 + $0x4c0] sm:$0xff]
        %v871 = vld [vmem:[#allocation8 + $0x4c8] sm:$0xff]
        %v872 = vld [vmem:[#allocation8 + $0x4d0] sm:$0xff]
        %v873 = vld [vmem:[#allocation8 + $0x4d8] sm:$0xff]
        %v874 = vld [vmem:[#allocation8 + $0x4e0] sm:$0xff]
        %v875 = vld [vmem:[#allocation8 + $0x4e8] sm:$0xff]
        %v876 = vld [vmem:[#allocation8 + $0x4f0] sm:$0xff]
        %v877 = vld [vmem:[#allocation8 + $0x4f8] sm:$0xff]
        %v878 = vld [vmem:[#allocation8 + $0x500] sm:$0xff]
        %v879 = vld [vmem:[#allocation8 + $0x508] sm:$0xff]
        %v880 = vld [vmem:[#allocation8 + $0x510] sm:$0xff]
        %v881 = vld [vmem:[#allocation8 + $0x518] sm:$0xff]
        %v882 = vld [vmem:[#allocation8 + $0x520] sm:$0xff]
        %v883 = vld [vmem:[#allocation8 + $0x528] sm:$0xff]
        %v884 = vld [vmem:[#allocation8 + $0x530] sm:$0xff]
        %v885 = vld [vmem:[#allocation8 + $0x538] sm:$0xff]
        %v886 = vld [vmem:[#allocation8 + $0x540] sm:$0xff]
        %v887 = vld [vmem:[#allocation8 + $0x548] sm:$0xff]
        %v888 = vld [vmem:[#allocation8 + $0x550] sm:$0xff]
        %v889 = vld [vmem:[#allocation8 + $0x558] sm:$0xff]
        %v890 = vld [vmem:[#allocation8 + $0x560] sm:$0xff]
        %v891 = vld [vmem:[#allocation8 + $0x568] sm:$0xff]
        %v892 = vld [vmem:[#allocation8 + $0x570] sm:$0xff]
        %v893 = vld [vmem:[#allocation8 + $0x578] sm:$0xff]
        %v894 = vld [vmem:[#allocation8 + $0x580] sm:$0xff]
        %v895 = vld [vmem:[#allocation8 + $0x588] sm:$0xff]
        %v896 = vld [vmem:[#allocation8 + $0x590] sm:$0xff]
        %v897 = vld [vmem:[#allocation8 + $0x598] sm:$0xff]
        %v898 = vld [vmem:[#allocation8 + $0x5a0] sm:$0xff]
        %v899 = vld [vmem:[#allocation8 + $0x5a8] sm:$0xff]
        %v900 = vld [vmem:[#allocation8 + $0x5b0] sm:$0xff]
        %v901 = vld [vmem:[#allocation8 + $0x5b8] sm:$0xff]
        %v902 = vld [vmem:[#allocation8 + $0x5c0] sm:$0xff]
        %v903 = vld [vmem:[#allocation8 + $0x5c8] sm:$0xff]
        %v904 = vld [vmem:[#allocation8 + $0x5d0] sm:$0xff]
        %v905 = vld [vmem:[#allocation8 + $0x5d8] sm:$0xff]
        %v906 = vld [vmem:[#allocation8 + $0x5e0] sm:$0xff]
        %v907 = vld [vmem:[#allocation8 + $0x5e8] sm:$0xff]
        %v908 = vld [vmem:[#allocation8 + $0x5f0] sm:$0xff]
        %v909 = vld [vmem:[#allocation8 + $0x5f8] sm:$0xff]
        %v910 = vld [vmem:[#allocation10] sm:$0xff]
        %v912 = vlaneseq
        %v913 = vshrl.u32 %v912, 7
        %v914 = vsub.s32 0, %v913
        %v915 = vrot.slane %v910, %v914
        %v916 = vlaneseq
        %v917 = vshrl.u32 %v916, 7
        %v918 = vsub.s32 1, %v917
        %v919 = vrot.slane %v910, %v918
        %v920 = vlaneseq
        %v921 = vshrl.u32 %v920, 7
        %v922 = vsub.s32 2, %v921
        %v923 = vrot.slane %v910, %v922
        %v924 = vlaneseq
        %v925 = vshrl.u32 %v924, 7
        %v926 = vsub.s32 3, %v925
        %v927 = vrot.slane %v910, %v926
        %v928 = vlaneseq
        %v929 = vshrl.u32 %v928, 7
        %v930 = vsub.s32 4, %v929
        %v931 = vrot.slane %v910, %v930
        %v932 = vlaneseq
        %v933 = vshrl.u32 %v932, 7
        %v934 = vsub.s32 5, %v933
        %v935 = vrot.slane %v910, %v934
        %v936 = vlaneseq
        %v937 = vshrl.u32 %v936, 7
        %v938 = vsub.s32 6, %v937
        %v939 = vrot.slane %v910, %v938
        %v940 = vlaneseq
        %v941 = vshrl.u32 %v940, 7
        %v942 = vsub.s32 7, %v941
        %v943 = vrot.slane %v910, %v942
        %v1144 = vunpack.c.l.b16 %v718
        %v1145 = vunpack.c.h.b16 %v718
        %v1146 = vunpack.c.l.b16 %v719
        %v1147 = vunpack.c.h.b16 %v719
        %v1148 = vunpack.c.l.b16 %v720
        %v1149 = vunpack.c.h.b16 %v720
        %v1150 = vunpack.c.l.b16 %v721
        %v1151 = vunpack.c.h.b16 %v721
        %v1152 = vunpack.c.l.b16 %v722
        %v1153 = vunpack.c.h.b16 %v722
        %v1154 = vunpack.c.l.b16 %v723
        %v1155 = vunpack.c.h.b16 %v723
        %v1156 = vunpack.c.l.b16 %v724
        %v1157 = vunpack.c.h.b16 %v724
        %v1158 = vunpack.c.l.b16 %v725
        %v1159 = vunpack.c.h.b16 %v725
        %v1160 = vunpack.c.l.b16 %v726
        %v1161 = vunpack.c.h.b16 %v726
        %v1162 = vunpack.c.l.b16 %v727
        %v1163 = vunpack.c.h.b16 %v727
        %v1164 = vunpack.c.l.b16 %v728
        %v1165 = vunpack.c.h.b16 %v728
        %v1166 = vunpack.c.l.b16 %v729
        %v1167 = vunpack.c.h.b16 %v729
        %v1168 = vunpack.c.l.b16 %v730
        %v1169 = vunpack.c.h.b16 %v730
        %v1170 = vunpack.c.l.b16 %v731
        %v1171 = vunpack.c.h.b16 %v731
        %v1172 = vunpack.c.l.b16 %v732
        %v1173 = vunpack.c.h.b16 %v732
        %v1174 = vunpack.c.l.b16 %v733
        %v1175 = vunpack.c.h.b16 %v733
        %v1176 = vunpack.c.l.b16 %v734
        %v1177 = vunpack.c.h.b16 %v734
        %v1178 = vunpack.c.l.b16 %v735
        %v1179 = vunpack.c.h.b16 %v735
        %v1180 = vunpack.c.l.b16 %v736
        %v1181 = vunpack.c.h.b16 %v736
        %v1182 = vunpack.c.l.b16 %v737
        %v1183 = vunpack.c.h.b16 %v737
        %v1184 = vunpack.c.l.b16 %v738
        %v1185 = vunpack.c.h.b16 %v738
        %v1186 = vunpack.c.l.b16 %v739
        %v1187 = vunpack.c.h.b16 %v739
        %v1188 = vunpack.c.l.b16 %v740
        %v1189 = vunpack.c.h.b16 %v740
        %v1190 = vunpack.c.l.b16 %v741
        %v1191 = vunpack.c.h.b16 %v741
        %v1192 = vunpack.c.l.b16 %v742
        %v1193 = vunpack.c.h.b16 %v742
        %v1194 = vunpack.c.l.b16 %v743
        %v1195 = vunpack.c.h.b16 %v743
        %v1196 = vunpack.c.l.b16 %v744
        %v1197 = vunpack.c.h.b16 %v744
        %v1198 = vunpack.c.l.b16 %v745
        %v1199 = vunpack.c.h.b16 %v745
        %v1200 = vunpack.c.l.b16 %v746
        %v1201 = vunpack.c.h.b16 %v746
        %v1202 = vunpack.c.l.b16 %v747
        %v1203 = vunpack.c.h.b16 %v747
        %v1204 = vunpack.c.l.b16 %v748
        %v1205 = vunpack.c.h.b16 %v748
        %v1206 = vunpack.c.l.b16 %v749
        %v1207 = vunpack.c.h.b16 %v749
        %v1208 = vunpack.c.l.b16 %v750
        %v1209 = vunpack.c.h.b16 %v750
        %v1210 = vunpack.c.l.b16 %v751
        %v1211 = vunpack.c.h.b16 %v751
        %v1212 = vunpack.c.l.b16 %v752
        %v1213 = vunpack.c.h.b16 %v752
        %v1214 = vunpack.c.l.b16 %v753
        %v1215 = vunpack.c.h.b16 %v753
        %v1216 = vunpack.c.l.b16 %v754
        %v1217 = vunpack.c.h.b16 %v754
        %v1218 = vunpack.c.l.b16 %v755
        %v1219 = vunpack.c.h.b16 %v755
        %v1220 = vunpack.c.l.b16 %v756
        %v1221 = vunpack.c.h.b16 %v756
        %v1222 = vunpack.c.l.b16 %v757
        %v1223 = vunpack.c.h.b16 %v757
        %v1224 = vunpack.c.l.b16 %v758
        %v1225 = vunpack.c.h.b16 %v758
        %v1226 = vunpack.c.l.b16 %v759
        %v1227 = vunpack.c.h.b16 %v759
        %v1228 = vunpack.c.l.b16 %v760
        %v1229 = vunpack.c.h.b16 %v760
        %v1230 = vunpack.c.l.b16 %v761
        %v1231 = vunpack.c.h.b16 %v761
        %v1232 = vunpack.c.l.b16 %v762
        %v1233 = vunpack.c.h.b16 %v762
        %v1234 = vunpack.c.l.b16 %v763
        %v1235 = vunpack.c.h.b16 %v763
        %v1236 = vunpack.c.l.b16 %v764
        %v1237 = vunpack.c.h.b16 %v764
        %v1238 = vunpack.c.l.b16 %v765
        %v1239 = vunpack.c.h.b16 %v765
        %v1240 = vunpack.c.l.b16 %v766
        %v1241 = vunpack.c.h.b16 %v766
        %v1242 = vunpack.c.l.b16 %v767
        %v1243 = vunpack.c.h.b16 %v767
        %v1244 = vunpack.c.l.b16 %v768
        %v1245 = vunpack.c.h.b16 %v768
        %v1246 = vunpack.c.l.b16 %v769
        %v1247 = vunpack.c.h.b16 %v769
        %v1248 = vunpack.c.l.b16 %v770
        %v1249 = vunpack.c.h.b16 %v770
        %v1250 = vunpack.c.l.b16 %v771
        %v1251 = vunpack.c.h.b16 %v771
        %v1252 = vunpack.c.l.b16 %v772
        %v1253 = vunpack.c.h.b16 %v772
        %v1254 = vunpack.c.l.b16 %v773
        %v1255 = vunpack.c.h.b16 %v773
        %v1256 = vunpack.c.l.b16 %v774
        %v1257 = vunpack.c.h.b16 %v774
        %v1258 = vunpack.c.l.b16 %v775
        %v1259 = vunpack.c.h.b16 %v775
        %v1260 = vunpack.c.l.b16 %v776
        %v1261 = vunpack.c.h.b16 %v776
        %v1262 = vunpack.c.l.b16 %v777
        %v1263 = vunpack.c.h.b16 %v777
        %v1264 = vunpack.c.l.b16 %v778
        %v1265 = vunpack.c.h.b16 %v778
        %v1266 = vunpack.c.l.b16 %v779
        %v1267 = vunpack.c.h.b16 %v779
        %v1268 = vunpack.c.l.b16 %v780
        %v1269 = vunpack.c.h.b16 %v780
        %v1270 = vunpack.c.l.b16 %v781
        %v1271 = vunpack.c.h.b16 %v781
        %v1272 = vunpack.c.l.b16 %v782
        %v1273 = vunpack.c.h.b16 %v782
        %v1274 = vunpack.c.l.b16 %v783
        %v1275 = vunpack.c.h.b16 %v783
        %v1276 = vunpack.c.l.b16 %v784
        %v1277 = vunpack.c.h.b16 %v784
        %v1278 = vunpack.c.l.b16 %v785
        %v1279 = vunpack.c.h.b16 %v785
        %v1280 = vunpack.c.l.b16 %v786
        %v1281 = vunpack.c.h.b16 %v786
        %v1282 = vunpack.c.l.b16 %v787
        %v1283 = vunpack.c.h.b16 %v787
        %v1284 = vunpack.c.l.b16 %v788
        %v1285 = vunpack.c.h.b16 %v788
        %v1286 = vunpack.c.l.b16 %v789
        %v1287 = vunpack.c.h.b16 %v789
        %v1288 = vunpack.c.l.b16 %v790
        %v1289 = vunpack.c.h.b16 %v790
        %v1290 = vunpack.c.l.b16 %v791
        %v1291 = vunpack.c.h.b16 %v791
        %v1292 = vunpack.c.l.b16 %v792
        %v1293 = vunpack.c.h.b16 %v792
        %v1294 = vunpack.c.l.b16 %v793
        %v1295 = vunpack.c.h.b16 %v793
        %v1296 = vunpack.c.l.b16 %v794
        %v1297 = vunpack.c.h.b16 %v794
        %v1298 = vunpack.c.l.b16 %v795
        %v1299 = vunpack.c.h.b16 %v795
        %v1300 = vunpack.c.l.b16 %v796
        %v1301 = vunpack.c.h.b16 %v796
        %v1302 = vunpack.c.l.b16 %v797
        %v1303 = vunpack.c.h.b16 %v797
        %v1304 = vunpack.c.l.b16 %v798
        %v1305 = vunpack.c.h.b16 %v798
        %v1306 = vunpack.c.l.b16 %v799
        %v1307 = vunpack.c.h.b16 %v799
        %v1308 = vunpack.c.l.b16 %v800
        %v1309 = vunpack.c.h.b16 %v800
        %v1310 = vunpack.c.l.b16 %v801
        %v1311 = vunpack.c.h.b16 %v801
        %v1312 = vunpack.c.l.b16 %v802
        %v1313 = vunpack.c.h.b16 %v802
        %v1314 = vunpack.c.l.b16 %v803
        %v1315 = vunpack.c.h.b16 %v803
        %v1316 = vunpack.c.l.b16 %v804
        %v1317 = vunpack.c.h.b16 %v804
        %v1318 = vunpack.c.l.b16 %v805
        %v1319 = vunpack.c.h.b16 %v805
        %v1320 = vunpack.c.l.b16 %v806
        %v1321 = vunpack.c.h.b16 %v806
        %v1322 = vunpack.c.l.b16 %v807
        %v1323 = vunpack.c.h.b16 %v807
        %v1324 = vunpack.c.l.b16 %v808
        %v1325 = vunpack.c.h.b16 %v808
        %v1326 = vunpack.c.l.b16 %v809
        %v1327 = vunpack.c.h.b16 %v809
        %v1328 = vunpack.c.l.b16 %v810
        %v1329 = vunpack.c.h.b16 %v810
        %v1330 = vunpack.c.l.b16 %v811
        %v1331 = vunpack.c.h.b16 %v811
        %v1332 = vunpack.c.l.b16 %v812
        %v1333 = vunpack.c.h.b16 %v812
        %v1334 = vunpack.c.l.b16 %v813
        %v1335 = vunpack.c.h.b16 %v813
        %v1336 = vunpack.c.l.b16 %v814
        %v1337 = vunpack.c.h.b16 %v814
        %v1338 = vunpack.c.l.b16 %v815
        %v1339 = vunpack.c.h.b16 %v815
        %v1340 = vunpack.c.l.b16 %v816
        %v1341 = vunpack.c.h.b16 %v816
        %v1342 = vunpack.c.l.b16 %v817
        %v1343 = vunpack.c.h.b16 %v817
        %v1344 = vunpack.c.l.b16 %v818
        %v1345 = vunpack.c.h.b16 %v818
        %v1346 = vunpack.c.l.b16 %v819
        %v1347 = vunpack.c.h.b16 %v819
        %v1348 = vunpack.c.l.b16 %v820
        %v1349 = vunpack.c.h.b16 %v820
        %v1350 = vunpack.c.l.b16 %v821
        %v1351 = vunpack.c.h.b16 %v821
        %v1352 = vunpack.c.l.b16 %v822
        %v1353 = vunpack.c.h.b16 %v822
        %v1354 = vunpack.c.l.b16 %v823
        %v1355 = vunpack.c.h.b16 %v823
        %v1356 = vunpack.c.l.b16 %v824
        %v1357 = vunpack.c.h.b16 %v824
        %v1358 = vunpack.c.l.b16 %v825
        %v1359 = vunpack.c.h.b16 %v825
        %v1360 = vunpack.c.l.b16 %v826
        %v1361 = vunpack.c.h.b16 %v826
        %v1362 = vunpack.c.l.b16 %v827
        %v1363 = vunpack.c.h.b16 %v827
        %v1364 = vunpack.c.l.b16 %v828
        %v1365 = vunpack.c.h.b16 %v828
        %v1366 = vunpack.c.l.b16 %v829
        %v1367 = vunpack.c.h.b16 %v829
        %v1368 = vunpack.c.l.b16 %v830
        %v1369 = vunpack.c.h.b16 %v830
        %v1370 = vunpack.c.l.b16 %v831
        %v1371 = vunpack.c.h.b16 %v831
        %v1372 = vunpack.c.l.b16 %v832
        %v1373 = vunpack.c.h.b16 %v832
        %v1374 = vunpack.c.l.b16 %v833
        %v1375 = vunpack.c.h.b16 %v833
        %v1376 = vunpack.c.l.b16 %v834
        %v1377 = vunpack.c.h.b16 %v834
        %v1378 = vunpack.c.l.b16 %v835
        %v1379 = vunpack.c.h.b16 %v835
        %v1380 = vunpack.c.l.b16 %v836
        %v1381 = vunpack.c.h.b16 %v836
        %v1382 = vunpack.c.l.b16 %v837
        %v1383 = vunpack.c.h.b16 %v837
        %v1384 = vunpack.c.l.b16 %v838
        %v1385 = vunpack.c.h.b16 %v838
        %v1386 = vunpack.c.l.b16 %v839
        %v1387 = vunpack.c.h.b16 %v839
        %v1388 = vunpack.c.l.b16 %v840
        %v1389 = vunpack.c.h.b16 %v840
        %v1390 = vunpack.c.l.b16 %v841
        %v1391 = vunpack.c.h.b16 %v841
        %v1392 = vunpack.c.l.b16 %v842
        %v1393 = vunpack.c.h.b16 %v842
        %v1394 = vunpack.c.l.b16 %v843
        %v1395 = vunpack.c.h.b16 %v843
        %v1396 = vunpack.c.l.b16 %v844
        %v1397 = vunpack.c.h.b16 %v844
        %v1398 = vunpack.c.l.b16 %v845
        %v1399 = vunpack.c.h.b16 %v845
        %v1400 = vunpack.c.l.b16 %v846
        %v1401 = vunpack.c.h.b16 %v846
        %v1402 = vunpack.c.l.b16 %v847
        %v1403 = vunpack.c.h.b16 %v847
        %v1404 = vunpack.c.l.b16 %v848
        %v1405 = vunpack.c.h.b16 %v848
        %v1406 = vunpack.c.l.b16 %v849
        %v1407 = vunpack.c.h.b16 %v849
        %v1408 = vunpack.c.l.b16 %v850
        %v1409 = vunpack.c.h.b16 %v850
        %v1410 = vunpack.c.l.b16 %v851
        %v1411 = vunpack.c.h.b16 %v851
        %v1412 = vunpack.c.l.b16 %v852
        %v1413 = vunpack.c.h.b16 %v852
        %v1414 = vunpack.c.l.b16 %v853
        %v1415 = vunpack.c.h.b16 %v853
        %v1416 = vunpack.c.l.b16 %v854
        %v1417 = vunpack.c.h.b16 %v854
        %v1418 = vunpack.c.l.b16 %v855
        %v1419 = vunpack.c.h.b16 %v855
        %v1420 = vunpack.c.l.b16 %v856
        %v1421 = vunpack.c.h.b16 %v856
        %v1422 = vunpack.c.l.b16 %v857
        %v1423 = vunpack.c.h.b16 %v857
        %v1424 = vunpack.c.l.b16 %v858
        %v1425 = vunpack.c.h.b16 %v858
        %v1426 = vunpack.c.l.b16 %v859
        %v1427 = vunpack.c.h.b16 %v859
        %v1428 = vunpack.c.l.b16 %v860
        %v1429 = vunpack.c.h.b16 %v860
        %v1430 = vunpack.c.l.b16 %v861
        %v1431 = vunpack.c.h.b16 %v861
        %v1432 = vunpack.c.l.b16 %v862
        %v1433 = vunpack.c.h.b16 %v862
        %v1434 = vunpack.c.l.b16 %v863
        %v1435 = vunpack.c.h.b16 %v863
        %v1436 = vunpack.c.l.b16 %v864
        %v1437 = vunpack.c.h.b16 %v864
        %v1438 = vunpack.c.l.b16 %v865
        %v1439 = vunpack.c.h.b16 %v865
        %v1440 = vunpack.c.l.b16 %v866
        %v1441 = vunpack.c.h.b16 %v866
        %v1442 = vunpack.c.l.b16 %v867
        %v1443 = vunpack.c.h.b16 %v867
        %v1444 = vunpack.c.l.b16 %v868
        %v1445 = vunpack.c.h.b16 %v868
        %v1446 = vunpack.c.l.b16 %v869
        %v1447 = vunpack.c.h.b16 %v869
        %v1448 = vunpack.c.l.b16 %v870
        %v1449 = vunpack.c.h.b16 %v870
        %v1450 = vunpack.c.l.b16 %v871
        %v1451 = vunpack.c.h.b16 %v871
        %v1452 = vunpack.c.l.b16 %v872
        %v1453 = vunpack.c.h.b16 %v872
        %v1454 = vunpack.c.l.b16 %v873
        %v1455 = vunpack.c.h.b16 %v873
        %v1456 = vunpack.c.l.b16 %v874
        %v1457 = vunpack.c.h.b16 %v874
        %v1458 = vunpack.c.l.b16 %v875
        %v1459 = vunpack.c.h.b16 %v875
        %v1460 = vunpack.c.l.b16 %v876
        %v1461 = vunpack.c.h.b16 %v876
        %v1462 = vunpack.c.l.b16 %v877
        %v1463 = vunpack.c.h.b16 %v877
        %v1464 = vunpack.c.l.b16 %v878
        %v1465 = vunpack.c.h.b16 %v878
        %v1466 = vunpack.c.l.b16 %v879
        %v1467 = vunpack.c.h.b16 %v879
        %v1468 = vunpack.c.l.b16 %v880
        %v1469 = vunpack.c.h.b16 %v880
        %v1470 = vunpack.c.l.b16 %v881
        %v1471 = vunpack.c.h.b16 %v881
        %v1472 = vunpack.c.l.b16 %v882
        %v1473 = vunpack.c.h.b16 %v882
        %v1474 = vunpack.c.l.b16 %v883
        %v1475 = vunpack.c.h.b16 %v883
        %v1476 = vunpack.c.l.b16 %v884
        %v1477 = vunpack.c.h.b16 %v884
        %v1478 = vunpack.c.l.b16 %v885
        %v1479 = vunpack.c.h.b16 %v885
        %v1480 = vunpack.c.l.b16 %v886
        %v1481 = vunpack.c.h.b16 %v886
        %v1482 = vunpack.c.l.b16 %v887
        %v1483 = vunpack.c.h.b16 %v887
        %v1484 = vunpack.c.l.b16 %v888
        %v1485 = vunpack.c.h.b16 %v888
        %v1486 = vunpack.c.l.b16 %v889
        %v1487 = vunpack.c.h.b16 %v889
        %v1488 = vunpack.c.l.b16 %v890
        %v1489 = vunpack.c.h.b16 %v890
        %v1490 = vunpack.c.l.b16 %v891
        %v1491 = vunpack.c.h.b16 %v891
        %v1492 = vunpack.c.l.b16 %v892
        %v1493 = vunpack.c.h.b16 %v892
        %v1494 = vunpack.c.l.b16 %v893
        %v1495 = vunpack.c.h.b16 %v893
        %v1496 = vunpack.c.l.b16 %v894
        %v1497 = vunpack.c.h.b16 %v894
        %v1498 = vunpack.c.l.b16 %v895
        %v1499 = vunpack.c.h.b16 %v895
        %v1500 = vunpack.c.l.b16 %v896
        %v1501 = vunpack.c.h.b16 %v896
        %v1502 = vunpack.c.l.b16 %v897
        %v1503 = vunpack.c.h.b16 %v897
        %v1504 = vunpack.c.l.b16 %v898
        %v1505 = vunpack.c.h.b16 %v898
        %v1506 = vunpack.c.l.b16 %v899
        %v1507 = vunpack.c.h.b16 %v899
        %v1508 = vunpack.c.l.b16 %v900
        %v1509 = vunpack.c.h.b16 %v900
        %v1510 = vunpack.c.l.b16 %v901
        %v1511 = vunpack.c.h.b16 %v901
        %v1512 = vunpack.c.l.b16 %v902
        %v1513 = vunpack.c.h.b16 %v902
        %v1514 = vunpack.c.l.b16 %v903
        %v1515 = vunpack.c.h.b16 %v903
        %v1516 = vunpack.c.l.b16 %v904
        %v1517 = vunpack.c.h.b16 %v904
        %v1518 = vunpack.c.l.b16 %v905
        %v1519 = vunpack.c.h.b16 %v905
        %v1520 = vunpack.c.l.b16 %v906
        %v1521 = vunpack.c.h.b16 %v906
        %v1522 = vunpack.c.l.b16 %v907
        %v1523 = vunpack.c.h.b16 %v907
        %v1524 = vunpack.c.l.b16 %v908
        %v1525 = vunpack.c.h.b16 %v908
        %v1526 = vunpack.c.l.b16 %v909
        %v1527 = vunpack.c.h.b16 %v909
        %v1528 = vpack.c.b16 %v1152, %v1144
        %v1529 = vpack.c.b16 %v1153, %v1145
        %v1530 = vpack.c.b16 %v1154, %v1146
        %v1531 = vpack.c.b16 %v1155, %v1147
        %v1532 = vpack.c.b16 %v1156, %v1148
        %v1533 = vpack.c.b16 %v1157, %v1149
        %v1534 = vpack.c.b16 %v1158, %v1150
        %v1535 = vpack.c.b16 %v1159, %v1151
        %v1536 = vpack.c.b16 %v1168, %v1160
        %v1537 = vpack.c.b16 %v1169, %v1161
        %v1538 = vpack.c.b16 %v1170, %v1162
        %v1539 = vpack.c.b16 %v1171, %v1163
        %v1540 = vpack.c.b16 %v1172, %v1164
        %v1541 = vpack.c.b16 %v1173, %v1165
        %v1542 = vpack.c.b16 %v1174, %v1166
        %v1543 = vpack.c.b16 %v1175, %v1167
        %v1544 = vpack.c.b16 %v1184, %v1176
        %v1545 = vpack.c.b16 %v1185, %v1177
        %v1546 = vpack.c.b16 %v1186, %v1178
        %v1547 = vpack.c.b16 %v1187, %v1179
        %v1548 = vpack.c.b16 %v1188, %v1180
        %v1549 = vpack.c.b16 %v1189, %v1181
        %v1550 = vpack.c.b16 %v1190, %v1182
        %v1551 = vpack.c.b16 %v1191, %v1183
        %v1552 = vpack.c.b16 %v1200, %v1192
        %v1553 = vpack.c.b16 %v1201, %v1193
        %v1554 = vpack.c.b16 %v1202, %v1194
        %v1555 = vpack.c.b16 %v1203, %v1195
        %v1556 = vpack.c.b16 %v1204, %v1196
        %v1557 = vpack.c.b16 %v1205, %v1197
        %v1558 = vpack.c.b16 %v1206, %v1198
        %v1559 = vpack.c.b16 %v1207, %v1199
        %v1560 = vpack.c.b16 %v1216, %v1208
        %v1561 = vpack.c.b16 %v1217, %v1209
        %v1562 = vpack.c.b16 %v1218, %v1210
        %v1563 = vpack.c.b16 %v1219, %v1211
        %v1564 = vpack.c.b16 %v1220, %v1212
        %v1565 = vpack.c.b16 %v1221, %v1213
        %v1566 = vpack.c.b16 %v1222, %v1214
        %v1567 = vpack.c.b16 %v1223, %v1215
        %v1568 = vpack.c.b16 %v1232, %v1224
        %v1569 = vpack.c.b16 %v1233, %v1225
        %v1570 = vpack.c.b16 %v1234, %v1226
        %v1571 = vpack.c.b16 %v1235, %v1227
        %v1572 = vpack.c.b16 %v1236, %v1228
        %v1573 = vpack.c.b16 %v1237, %v1229
        %v1574 = vpack.c.b16 %v1238, %v1230
        %v1575 = vpack.c.b16 %v1239, %v1231
        %v1576 = vpack.c.b16 %v1248, %v1240
        %v1577 = vpack.c.b16 %v1249, %v1241
        %v1578 = vpack.c.b16 %v1250, %v1242
        %v1579 = vpack.c.b16 %v1251, %v1243
        %v1580 = vpack.c.b16 %v1252, %v1244
        %v1581 = vpack.c.b16 %v1253, %v1245
        %v1582 = vpack.c.b16 %v1254, %v1246
        %v1583 = vpack.c.b16 %v1255, %v1247
        %v1584 = vpack.c.b16 %v1264, %v1256
        %v1585 = vpack.c.b16 %v1265, %v1257
        %v1586 = vpack.c.b16 %v1266, %v1258
        %v1587 = vpack.c.b16 %v1267, %v1259
        %v1588 = vpack.c.b16 %v1268, %v1260
        %v1589 = vpack.c.b16 %v1269, %v1261
        %v1590 = vpack.c.b16 %v1270, %v1262
        %v1591 = vpack.c.b16 %v1271, %v1263
        %v1592 = vpack.c.b16 %v1280, %v1272
        %v1593 = vpack.c.b16 %v1281, %v1273
        %v1594 = vpack.c.b16 %v1282, %v1274
        %v1595 = vpack.c.b16 %v1283, %v1275
        %v1596 = vpack.c.b16 %v1284, %v1276
        %v1597 = vpack.c.b16 %v1285, %v1277
        %v1598 = vpack.c.b16 %v1286, %v1278
        %v1599 = vpack.c.b16 %v1287, %v1279
        %v1600 = vpack.c.b16 %v1296, %v1288
        %v1601 = vpack.c.b16 %v1297, %v1289
        %v1602 = vpack.c.b16 %v1298, %v1290
        %v1603 = vpack.c.b16 %v1299, %v1291
        %v1604 = vpack.c.b16 %v1300, %v1292
        %v1605 = vpack.c.b16 %v1301, %v1293
        %v1606 = vpack.c.b16 %v1302, %v1294
        %v1607 = vpack.c.b16 %v1303, %v1295
        %v1608 = vpack.c.b16 %v1312, %v1304
        %v1609 = vpack.c.b16 %v1313, %v1305
        %v1610 = vpack.c.b16 %v1314, %v1306
        %v1611 = vpack.c.b16 %v1315, %v1307
        %v1612 = vpack.c.b16 %v1316, %v1308
        %v1613 = vpack.c.b16 %v1317, %v1309
        %v1614 = vpack.c.b16 %v1318, %v1310
        %v1615 = vpack.c.b16 %v1319, %v1311
        %v1616 = vpack.c.b16 %v1328, %v1320
        %v1617 = vpack.c.b16 %v1329, %v1321
        %v1618 = vpack.c.b16 %v1330, %v1322
        %v1619 = vpack.c.b16 %v1331, %v1323
        %v1620 = vpack.c.b16 %v1332, %v1324
        %v1621 = vpack.c.b16 %v1333, %v1325
        %v1622 = vpack.c.b16 %v1334, %v1326
        %v1623 = vpack.c.b16 %v1335, %v1327
        %v1624 = vpack.c.b16 %v1344, %v1336
        %v1625 = vpack.c.b16 %v1345, %v1337
        %v1626 = vpack.c.b16 %v1346, %v1338
        %v1627 = vpack.c.b16 %v1347, %v1339
        %v1628 = vpack.c.b16 %v1348, %v1340
        %v1629 = vpack.c.b16 %v1349, %v1341
        %v1630 = vpack.c.b16 %v1350, %v1342
        %v1631 = vpack.c.b16 %v1351, %v1343
        %v1632 = vpack.c.b16 %v1360, %v1352
        %v1633 = vpack.c.b16 %v1361, %v1353
        %v1634 = vpack.c.b16 %v1362, %v1354
        %v1635 = vpack.c.b16 %v1363, %v1355
        %v1636 = vpack.c.b16 %v1364, %v1356
        %v1637 = vpack.c.b16 %v1365, %v1357
        %v1638 = vpack.c.b16 %v1366, %v1358
        %v1639 = vpack.c.b16 %v1367, %v1359
        %v1640 = vpack.c.b16 %v1376, %v1368
        %v1641 = vpack.c.b16 %v1377, %v1369
        %v1642 = vpack.c.b16 %v1378, %v1370
        %v1643 = vpack.c.b16 %v1379, %v1371
        %v1644 = vpack.c.b16 %v1380, %v1372
        %v1645 = vpack.c.b16 %v1381, %v1373
        %v1646 = vpack.c.b16 %v1382, %v1374
        %v1647 = vpack.c.b16 %v1383, %v1375
        %v1648 = vpack.c.b16 %v1392, %v1384
        %v1649 = vpack.c.b16 %v1393, %v1385
        %v1650 = vpack.c.b16 %v1394, %v1386
        %v1651 = vpack.c.b16 %v1395, %v1387
        %v1652 = vpack.c.b16 %v1396, %v1388
        %v1653 = vpack.c.b16 %v1397, %v1389
        %v1654 = vpack.c.b16 %v1398, %v1390
        %v1655 = vpack.c.b16 %v1399, %v1391
        %v1656 = vpack.c.b16 %v1408, %v1400
        %v1657 = vpack.c.b16 %v1409, %v1401
        %v1658 = vpack.c.b16 %v1410, %v1402
        %v1659 = vpack.c.b16 %v1411, %v1403
        %v1660 = vpack.c.b16 %v1412, %v1404
        %v1661 = vpack.c.b16 %v1413, %v1405
        %v1662 = vpack.c.b16 %v1414, %v1406
        %v1663 = vpack.c.b16 %v1415, %v1407
        %v1664 = vpack.c.b16 %v1424, %v1416
        %v1665 = vpack.c.b16 %v1425, %v1417
        %v1666 = vpack.c.b16 %v1426, %v1418
        %v1667 = vpack.c.b16 %v1427, %v1419
        %v1668 = vpack.c.b16 %v1428, %v1420
        %v1669 = vpack.c.b16 %v1429, %v1421
        %v1670 = vpack.c.b16 %v1430, %v1422
        %v1671 = vpack.c.b16 %v1431, %v1423
        %v1672 = vpack.c.b16 %v1440, %v1432
        %v1673 = vpack.c.b16 %v1441, %v1433
        %v1674 = vpack.c.b16 %v1442, %v1434
        %v1675 = vpack.c.b16 %v1443, %v1435
        %v1676 = vpack.c.b16 %v1444, %v1436
        %v1677 = vpack.c.b16 %v1445, %v1437
        %v1678 = vpack.c.b16 %v1446, %v1438
        %v1679 = vpack.c.b16 %v1447, %v1439
        %v1680 = vpack.c.b16 %v1456, %v1448
        %v1681 = vpack.c.b16 %v1457, %v1449
        %v1682 = vpack.c.b16 %v1458, %v1450
        %v1683 = vpack.c.b16 %v1459, %v1451
        %v1684 = vpack.c.b16 %v1460, %v1452
        %v1685 = vpack.c.b16 %v1461, %v1453
        %v1686 = vpack.c.b16 %v1462, %v1454
        %v1687 = vpack.c.b16 %v1463, %v1455
        %v1688 = vpack.c.b16 %v1472, %v1464
        %v1689 = vpack.c.b16 %v1473, %v1465
        %v1690 = vpack.c.b16 %v1474, %v1466
        %v1691 = vpack.c.b16 %v1475, %v1467
        %v1692 = vpack.c.b16 %v1476, %v1468
        %v1693 = vpack.c.b16 %v1477, %v1469
        %v1694 = vpack.c.b16 %v1478, %v1470
        %v1695 = vpack.c.b16 %v1479, %v1471
        %v1696 = vpack.c.b16 %v1488, %v1480
        %v1697 = vpack.c.b16 %v1489, %v1481
        %v1698 = vpack.c.b16 %v1490, %v1482
        %v1699 = vpack.c.b16 %v1491, %v1483
        %v1700 = vpack.c.b16 %v1492, %v1484
        %v1701 = vpack.c.b16 %v1493, %v1485
        %v1702 = vpack.c.b16 %v1494, %v1486
        %v1703 = vpack.c.b16 %v1495, %v1487
        %v1704 = vpack.c.b16 %v1504, %v1496
        %v1705 = vpack.c.b16 %v1505, %v1497
        %v1706 = vpack.c.b16 %v1506, %v1498
        %v1707 = vpack.c.b16 %v1507, %v1499
        %v1708 = vpack.c.b16 %v1508, %v1500
        %v1709 = vpack.c.b16 %v1509, %v1501
        %v1710 = vpack.c.b16 %v1510, %v1502
        %v1711 = vpack.c.b16 %v1511, %v1503
        %v1712 = vpack.c.b16 %v1520, %v1512
        %v1713 = vpack.c.b16 %v1521, %v1513
        %v1714 = vpack.c.b16 %v1522, %v1514
        %v1715 = vpack.c.b16 %v1523, %v1515
        %v1716 = vpack.c.b16 %v1524, %v1516
        %v1717 = vpack.c.b16 %v1525, %v1517
        %v1718 = vpack.c.b16 %v1526, %v1518
        %v1719 = vpack.c.b16 %v1527, %v1519
        %1912 = vmatprep.subr.bf16.mxu0 %v1529
        %1913 = vmatpush1.bf16.msra.mxu0 %v1528
        %1914 = vmatprep.subr.bf16.mxu0 %v1537
        %1915 = vmatpush1.bf16.msra.mxu0 %v1536
        %1916 = vmatprep.subr.bf16.mxu0 %v1545
        %1917 = vmatpush1.bf16.msra.mxu0 %v1544
        %1918 = vmatprep.subr.bf16.mxu0 %v1553
        %1919 = vmatpush1.bf16.msra.mxu0 %v1552
        %1920 = vmatprep.subr.bf16.mxu0 %v1561
        %1921 = vmatpush1.bf16.msra.mxu0 %v1560
        %1922 = vmatprep.subr.bf16.mxu0 %v1569
        %1923 = vmatpush1.bf16.msra.mxu0 %v1568
        %1924 = vmatprep.subr.bf16.mxu0 %v1577
        %1925 = vmatpush1.bf16.msra.mxu0 %v1576
        %1926 = vmatprep.subr.bf16.mxu0 %v1585
        %1927 = vmatpush1.bf16.msra.mxu0 %v1584
        %1928 = vmatprep.subr.bf16.mxu0 %v1593
        %1929 = vmatpush1.bf16.msra.mxu0 %v1592
        %1930 = vmatprep.subr.bf16.mxu0 %v1601
        %1931 = vmatpush1.bf16.msra.mxu0 %v1600
        %1932 = vmatprep.subr.bf16.mxu0 %v1609
        %1933 = vmatpush1.bf16.msra.mxu0 %v1608
        %1934 = vmatprep.subr.bf16.mxu0 %v1617
        %1935 = vmatpush1.bf16.msra.mxu0 %v1616
        %1936 = vmatprep.subr.bf16.mxu0 %v1625
        %1937 = vmatpush1.bf16.msra.mxu0 %v1624
        %1938 = vmatprep.subr.bf16.mxu0 %v1633
        %1939 = vmatpush1.bf16.msra.mxu0 %v1632
        %1940 = vmatprep.subr.bf16.mxu0 %v1641
        %1941 = vmatpush1.bf16.msra.mxu0 %v1640
        %1942 = vmatprep.subr.bf16.mxu0 %v1649
        %1943 = vmatpush1.bf16.msra.mxu0 %v1648
        %1944 = vmatprep.mubr.bf16.mxu0 %v713
        %1945 = vmatmul.mubr.bf16.gmra.mrb[0].mxu0 %v712
        %v1946 = vpop.f32.mrb[0].mxu0
        %v1947 = vadd.f32 %v915, %v1946
        %v1948 = vpop.f32.mrb[0].mxu0
        %v1949 = vadd.f32 %v919, %v1948
        %v1950 = vpop.f32.mrb[0].mxu0
        %v1951 = vadd.f32 %v915, %v1950
        %v1952 = vpop.f32.mrb[0].mxu0
        %v1953 = vadd.f32 %v919, %v1952
        %1954 = vmatprep.mubr.bf16.mxu0 %v716
        %1955 = vmatmul.mubr.bf16.gmra.mrb[0].mxu0 %v715
        %v1956 = vpop.f32.mrb[0].mxu0
        %v1957 = vadd.f32 %v915, %v1956
        %v1958 = vpop.f32.mrb[0].mxu0
        %v1959 = vadd.f32 %v919, %v1958
        %v1960 = vpop.f32.mrb[0].mxu0
        %v1961 = vadd.f32 %v915, %v1960
        %v1962 = vpop.f32.mrb[0].mxu0
        %v1963 = vadd.f32 %v919, %v1962
        %1964 = vdwg.mxu0
        %1965 = vmatprep.subr.bf16.mxu0 %v1657
        %1966 = vmatpush1.bf16.msra.mxu0 %v1656
        %1967 = vmatprep.subr.bf16.mxu0 %v1665
        %1968 = vmatpush1.bf16.msra.mxu0 %v1664
        %1969 = vmatprep.subr.bf16.mxu0 %v1673
        %1970 = vmatpush1.bf16.msra.mxu0 %v1672
        %1971 = vmatprep.subr.bf16.mxu0 %v1681
        %1972 = vmatpush1.bf16.msra.mxu0 %v1680
        %1973 = vmatprep.subr.bf16.mxu0 %v1689
        %1974 = vmatpush1.bf16.msra.mxu0 %v1688
        %1975 = vmatprep.subr.bf16.mxu0 %v1697
        %1976 = vmatpush1.bf16.msra.mxu0 %v1696
        %1977 = vmatprep.subr.bf16.mxu0 %v1705
        %1978 = vmatpush1.bf16.msra.mxu0 %v1704
        %1979 = vmatprep.subr.bf16.mxu0 %v1713
        %1980 = vmatpush1.bf16.msra.mxu0 %v1712
        %1981 = vmatprep.subr.bf16.mxu0 0
        %1982 = vmatpush1.bf16.msra.mxu0 0
        %1983 = vmatprep.subr.bf16.mxu0 0
        %1984 = vmatpush1.bf16.msra.mxu0 0
        %1985 = vmatprep.subr.bf16.mxu0 0
        %1986 = vmatpush1.bf16.msra.mxu0 0
        %1987 = vmatprep.subr.bf16.mxu0 0
        %1988 = vmatpush1.bf16.msra.mxu0 0
        %1989 = vmatprep.subr.bf16.mxu0 0
        %1990 = vmatpush1.bf16.msra.mxu0 0
        %1991 = vmatprep.subr.bf16.mxu0 0
        %1992 = vmatpush1.bf16.msra.mxu0 0
        %1993 = vmatprep.subr.bf16.mxu0 0
        %1994 = vmatpush1.bf16.msra.mxu0 0
        %1995 = vmatprep.subr.bf16.mxu0 0
        %1996 = vmatpush1.bf16.msra.mxu0 0
        %1997 = vmatprep.mubr.bf16.mxu0 0
        %1998 = vmatmul.mubr.bf16.gmra.mrb[0].mxu0 %v714
        %v1999 = vpop.f32.mrb[0].mxu0
        %v2000 = vadd.f32 %v1947, %v1999
        %v2001 = vpop.f32.mrb[0].mxu0
        %v2002 = vadd.f32 %v1949, %v2001
        %v2003 = vpop.f32.mrb[0].mxu0
        %v2004 = vadd.f32 %v1951, %v2003
        %v2005 = vpop.f32.mrb[0].mxu0
        %v2006 = vadd.f32 %v1953, %v2005
        %2007 = vmatprep.mubr.bf16.mxu0 0
        %2008 = vmatmul.mubr.bf16.gmra.mrb[0].mxu0 %v717
        %v2009 = vpop.f32.mrb[0].mxu0
        %v2010 = vadd.f32 %v1957, %v2009
        %v2011 = vpop.f32.mrb[0].mxu0
        %v2012 = vadd.f32 %v1959, %v2011
        %v2013 = vpop.f32.mrb[0].mxu0
        %v2014 = vadd.f32 %v1961, %v2013
        %v2015 = vpop.f32.mrb[0].mxu0
        %v2016 = vadd.f32 %v1963, %v2015
        %2017 = vdwg.mxu0
        %2018 = vmatprep.subr.bf16.mxu0 %v1531
        %2019 = vmatpush1.bf16.msra.mxu0 %v1530
        %2020 = vmatprep.subr.bf16.mxu0 %v1539
        %2021 = vmatpush1.bf16.msra.mxu0 %v1538
        %2022 = vmatprep.subr.bf16.mxu0 %v1547
        %2023 = vmatpush1.bf16.msra.mxu0 %v1546
        %2024 = vmatprep.subr.bf16.mxu0 %v1555
        %2025 = vmatpush1.bf16.msra.mxu0 %v1554
        %2026 = vmatprep.subr.bf16.mxu0 %v1563
        %2027 = vmatpush1.bf16.msra.mxu0 %v1562
        %2028 = vmatprep.subr.bf16.mxu0 %v1571
        %2029 = vmatpush1.bf16.msra.mxu0 %v1570
        %2030 = vmatprep.subr.bf16.mxu0 %v1579
        %2031 = vmatpush1.bf16.msra.mxu0 %v1578
        %2032 = vmatprep.subr.bf16.mxu0 %v1587
        %2033 = vmatpush1.bf16.msra.mxu0 %v1586
        %2034 = vmatprep.subr.bf16.mxu0 %v1595
        %2035 = vmatpush1.bf16.msra.mxu0 %v1594
        %2036 = vmatprep.subr.bf16.mxu0 %v1603
        %2037 = vmatpush1.bf16.msra.mxu0 %v1602
        %2038 = vmatprep.subr.bf16.mxu0 %v1611
        %2039 = vmatpush1.bf16.msra.mxu0 %v1610
        %2040 = vmatprep.subr.bf16.mxu0 %v1619
        %2041 = vmatpush1.bf16.msra.mxu0 %v1618
        %2042 = vmatprep.subr.bf16.mxu0 %v1627
        %2043 = vmatpush1.bf16.msra.mxu0 %v1626
        %2044 = vmatprep.subr.bf16.mxu0 %v1635
        %2045 = vmatpush1.bf16.msra.mxu0 %v1634
        %2046 = vmatprep.subr.bf16.mxu0 %v1643
        %2047 = vmatpush1.bf16.msra.mxu0 %v1642
        %2048 = vmatprep.subr.bf16.mxu0 %v1651
        %2049 = vmatpush1.bf16.msra.mxu0 %v1650
        %2050 = vmatprep.mubr.bf16.mxu0 %v713
        %2051 = vmatmul.mubr.bf16.gmra.mrb[0].mxu0 %v712
        %v2052 = vpop.f32.mrb[0].mxu0
        %v2053 = vadd.f32 %v923, %v2052
        %v2054 = vpop.f32.mrb[0].mxu0
        %v2055 = vadd.f32 %v927, %v2054
        %v2056 = vpop.f32.mrb[0].mxu0
        %v2057 = vadd.f32 %v923, %v2056
        %v2058 = vpop.f32.mrb[0].mxu0
        %v2059 = vadd.f32 %v927, %v2058
        %2060 = vmatprep.mubr.bf16.mxu0 %v716
        %2061 = vmatmul.mubr.bf16.gmra.mrb[0].mxu0 %v715
        %v2062 = vpop.f32.mrb[0].mxu0
        %v2063 = vadd.f32 %v923, %v2062
        %v2064 = vpop.f32.mrb[0].mxu0
        %v2065 = vadd.f32 %v927, %v2064
        %v2066 = vpop.f32.mrb[0].mxu0
        %v2067 = vadd.f32 %v923, %v2066
        %v2068 = vpop.f32.mrb[0].mxu0
        %v2069 = vadd.f32 %v927, %v2068
        %2070 = vdwg.mxu0
        %2071 = vmatprep.subr.bf16.mxu0 %v1659
        %2072 = vmatpush1.bf16.msra.mxu0 %v1658
        %2073 = vmatprep.subr.bf16.mxu0 %v1667
        %2074 = vmatpush1.bf16.msra.mxu0 %v1666
        %2075 = vmatprep.subr.bf16.mxu0 %v1675
        %2076 = vmatpush1.bf16.msra.mxu0 %v1674
        %2077 = vmatprep.subr.bf16.mxu0 %v1683
        %2078 = vmatpush1.bf16.msra.mxu0 %v1682
        %2079 = vmatprep.subr.bf16.mxu0 %v1691
        %2080 = vmatpush1.bf16.msra.mxu0 %v1690
        %2081 = vmatprep.subr.bf16.mxu0 %v1699
        %2082 = vmatpush1.bf16.msra.mxu0 %v1698
        %2083 = vmatprep.subr.bf16.mxu0 %v1707
        %2084 = vmatpush1.bf16.msra.mxu0 %v1706
        %2085 = vmatprep.subr.bf16.mxu0 %v1715
        %2086 = vmatpush1.bf16.msra.mxu0 %v1714
        %2087 = vmatprep.subr.bf16.mxu0 0
        %2088 = vmatpush1.bf16.msra.mxu0 0
        %2089 = vmatprep.subr.bf16.mxu0 0
        %2090 = vmatpush1.bf16.msra.mxu0 0
        %2091 = vmatprep.subr.bf16.mxu0 0
        %2092 = vmatpush1.bf16.msra.mxu0 0
        %2093 = vmatprep.subr.bf16.mxu0 0
        %2094 = vmatpush1.bf16.msra.mxu0 0
        %2095 = vmatprep.subr.bf16.mxu0 0
        %2096 = vmatpush1.bf16.msra.mxu0 0
        %2097 = vmatprep.subr.bf16.mxu0 0
        %2098 = vmatpush1.bf16.msra.mxu0 0
        %2099 = vmatprep.subr.bf16.mxu0 0
        %2100 = vmatpush1.bf16.msra.mxu0 0
        %2101 = vmatprep.subr.bf16.mxu0 0
        %2102 = vmatpush1.bf16.msra.mxu0 0
        %2103 = vmatprep.mubr.bf16.mxu0 0
        %2104 = vmatmul.mubr.bf16.gmra.mrb[0].mxu0 %v714
        %v2105 = vpop.f32.mrb[0].mxu0
        %v2106 = vadd.f32 %v2053, %v2105
        %v2107 = vpop.f32.mrb[0].mxu0
        %v2108 = vadd.f32 %v2055, %v2107
        %v2109 = vpop.f32.mrb[0].mxu0
        %v2110 = vadd.f32 %v2057, %v2109
        %v2111 = vpop.f32.mrb[0].mxu0
        %v2112 = vadd.f32 %v2059, %v2111
        %2113 = vmatprep.mubr.bf16.mxu0 0
        %2114 = vmatmul.mubr.bf16.gmra.mrb[0].mxu0 %v717
        %v2115 = vpop.f32.mrb[0].mxu0
        %v2116 = vadd.f32 %v2063, %v2115
        %v2117 = vpop.f32.mrb[0].mxu0
        %v2118 = vadd.f32 %v2065, %v2117
        %v2119 = vpop.f32.mrb[0].mxu0
        %v2120 = vadd.f32 %v2067, %v2119
        %v2121 = vpop.f32.mrb[0].mxu0
        %v2122 = vadd.f32 %v2069, %v2121
        %2123 = vdwg.mxu0
        %2124 = vmatprep.subr.bf16.mxu0 %v1533
        %2125 = vmatpush1.bf16.msra.mxu0 %v1532
        %2126 = vmatprep.subr.bf16.mxu0 %v1541
        %2127 = vmatpush1.bf16.msra.mxu0 %v1540
        %2128 = vmatprep.subr.bf16.mxu0 %v1549
        %2129 = vmatpush1.bf16.msra.mxu0 %v1548
        %2130 = vmatprep.subr.bf16.mxu0 %v1557
        %2131 = vmatpush1.bf16.msra.mxu0 %v1556
        %2132 = vmatprep.subr.bf16.mxu0 %v1565
        %2133 = vmatpush1.bf16.msra.mxu0 %v1564
        %2134 = vmatprep.subr.bf16.mxu0 %v1573
        %2135 = vmatpush1.bf16.msra.mxu0 %v1572
        %2136 = vmatprep.subr.bf16.mxu0 %v1581
        %2137 = vmatpush1.bf16.msra.mxu0 %v1580
        %2138 = vmatprep.subr.bf16.mxu0 %v1589
        %2139 = vmatpush1.bf16.msra.mxu0 %v1588
        %2140 = vmatprep.subr.bf16.mxu0 %v1597
        %2141 = vmatpush1.bf16.msra.mxu0 %v1596
        %2142 = vmatprep.subr.bf16.mxu0 %v1605
        %2143 = vmatpush1.bf16.msra.mxu0 %v1604
        %2144 = vmatprep.subr.bf16.mxu0 %v1613
        %2145 = vmatpush1.bf16.msra.mxu0 %v1612
        %2146 = vmatprep.subr.bf16.mxu0 %v1621
        %2147 = vmatpush1.bf16.msra.mxu0 %v1620
        %2148 = vmatprep.subr.bf16.mxu0 %v1629
        %2149 = vmatpush1.bf16.msra.mxu0 %v1628
        %2150 = vmatprep.subr.bf16.mxu0 %v1637
        %2151 = vmatpush1.bf16.msra.mxu0 %v1636
        %2152 = vmatprep.subr.bf16.mxu0 %v1645
        %2153 = vmatpush1.bf16.msra.mxu0 %v1644
        %2154 = vmatprep.subr.bf16.mxu0 %v1653
        %2155 = vmatpush1.bf16.msra.mxu0 %v1652
        %2156 = vmatprep.mubr.bf16.mxu0 %v713
        %2157 = vmatmul.mubr.bf16.gmra.mrb[0].mxu0 %v712
        %v2158 = vpop.f32.mrb[0].mxu0
        %v2159 = vadd.f32 %v931, %v2158
        %v2160 = vpop.f32.mrb[0].mxu0
        %v2161 = vadd.f32 %v935, %v2160
        %v2162 = vpop.f32.mrb[0].mxu0
        %v2163 = vadd.f32 %v931, %v2162
        %v2164 = vpop.f32.mrb[0].mxu0
        %v2165 = vadd.f32 %v935, %v2164
        %2166 = vmatprep.mubr.bf16.mxu0 %v716
        %2167 = vmatmul.mubr.bf16.gmra.mrb[0].mxu0 %v715
        %v2168 = vpop.f32.mrb[0].mxu0
        %v2169 = vadd.f32 %v931, %v2168
        %v2170 = vpop.f32.mrb[0].mxu0
        %v2171 = vadd.f32 %v935, %v2170
        %v2172 = vpop.f32.mrb[0].mxu0
        %v2173 = vadd.f32 %v931, %v2172
        %v2174 = vpop.f32.mrb[0].mxu0
        %v2175 = vadd.f32 %v935, %v2174
        %2176 = vdwg.mxu0
        %2177 = vmatprep.subr.bf16.mxu0 %v1661
        %2178 = vmatpush1.bf16.msra.mxu0 %v1660
        %2179 = vmatprep.subr.bf16.mxu0 %v1669
        %2180 = vmatpush1.bf16.msra.mxu0 %v1668
        %2181 = vmatprep.subr.bf16.mxu0 %v1677
        %2182 = vmatpush1.bf16.msra.mxu0 %v1676
        %2183 = vmatprep.subr.bf16.mxu0 %v1685
        %2184 = vmatpush1.bf16.msra.mxu0 %v1684
        %2185 = vmatprep.subr.bf16.mxu0 %v1693
        %2186 = vmatpush1.bf16.msra.mxu0 %v1692
        %2187 = vmatprep.subr.bf16.mxu0 %v1701
        %2188 = vmatpush1.bf16.msra.mxu0 %v1700
        %2189 = vmatprep.subr.bf16.mxu0 %v1709
        %2190 = vmatpush1.bf16.msra.mxu0 %v1708
        %2191 = vmatprep.subr.bf16.mxu0 %v1717
        %2192 = vmatpush1.bf16.msra.mxu0 %v1716
        %2193 = vmatprep.subr.bf16.mxu0 0
        %2194 = vmatpush1.bf16.msra.mxu0 0
        %2195 = vmatprep.subr.bf16.mxu0 0
        %2196 = vmatpush1.bf16.msra.mxu0 0
        %2197 = vmatprep.subr.bf16.mxu0 0
        %2198 = vmatpush1.bf16.msra.mxu0 0
        %2199 = vmatprep.subr.bf16.mxu0 0
        %2200 = vmatpush1.bf16.msra.mxu0 0
        %2201 = vmatprep.subr.bf16.mxu0 0
        %2202 = vmatpush1.bf16.msra.mxu0 0
        %2203 = vmatprep.subr.bf16.mxu0 0
        %2204 = vmatpush1.bf16.msra.mxu0 0
        %2205 = vmatprep.subr.bf16.mxu0 0
        %2206 = vmatpush1.bf16.msra.mxu0 0
        %2207 = vmatprep.subr.bf16.mxu0 0
        %2208 = vmatpush1.bf16.msra.mxu0 0
        %2209 = vmatprep.mubr.bf16.mxu0 0
        %2210 = vmatmul.mubr.bf16.gmra.mrb[0].mxu0 %v714
        %v2211 = vpop.f32.mrb[0].mxu0
        %v2212 = vadd.f32 %v2159, %v2211
        %v2213 = vpop.f32.mrb[0].mxu0
        %v2214 = vadd.f32 %v2161, %v2213
        %v2215 = vpop.f32.mrb[0].mxu0
        %v2216 = vadd.f32 %v2163, %v2215
        %v2217 = vpop.f32.mrb[0].mxu0
        %v2218 = vadd.f32 %v2165, %v2217
        %2219 = vmatprep.mubr.bf16.mxu0 0
        %2220 = vmatmul.mubr.bf16.gmra.mrb[0].mxu0 %v717
        %v2221 = vpop.f32.mrb[0].mxu0
        %v2222 = vadd.f32 %v2169, %v2221
        %v2223 = vpop.f32.mrb[0].mxu0
        %v2224 = vadd.f32 %v2171, %v2223
        %v2225 = vpop.f32.mrb[0].mxu0
        %v2226 = vadd.f32 %v2173, %v2225
        %v2227 = vpop.f32.mrb[0].mxu0
        %v2228 = vadd.f32 %v2175, %v2227
        %2229 = vdwg.mxu0
        %2230 = vmatprep.subr.bf16.mxu0 %v1535
        %2231 = vmatpush1.bf16.msra.mxu0 %v1534
        %2232 = vmatprep.subr.bf16.mxu0 %v1543
        %2233 = vmatpush1.bf16.msra.mxu0 %v1542
        %2234 = vmatprep.subr.bf16.mxu0 %v1551
        %2235 = vmatpush1.bf16.msra.mxu0 %v1550
        %2236 = vmatprep.subr.bf16.mxu0 %v1559
        %2237 = vmatpush1.bf16.msra.mxu0 %v1558
        %2238 = vmatprep.subr.bf16.mxu0 %v1567
        %2239 = vmatpush1.bf16.msra.mxu0 %v1566
        %2240 = vmatprep.subr.bf16.mxu0 %v1575
        %2241 = vmatpush1.bf16.msra.mxu0 %v1574
        %2242 = vmatprep.subr.bf16.mxu0 %v1583
        %2243 = vmatpush1.bf16.msra.mxu0 %v1582
        %2244 = vmatprep.subr.bf16.mxu0 %v1591
        %2245 = vmatpush1.bf16.msra.mxu0 %v1590
        %2246 = vmatprep.subr.bf16.mxu0 %v1599
        %2247 = vmatpush1.bf16.msra.mxu0 %v1598
        %2248 = vmatprep.subr.bf16.mxu0 %v1607
        %2249 = vmatpush1.bf16.msra.mxu0 %v1606
        %2250 = vmatprep.subr.bf16.mxu0 %v1615
        %2251 = vmatpush1.bf16.msra.mxu0 %v1614
        %2252 = vmatprep.subr.bf16.mxu0 %v1623
        %2253 = vmatpush1.bf16.msra.mxu0 %v1622
        %2254 = vmatprep.subr.bf16.mxu0 %v1631
        %2255 = vmatpush1.bf16.msra.mxu0 %v1630
        %2256 = vmatprep.subr.bf16.mxu0 %v1639
        %2257 = vmatpush1.bf16.msra.mxu0 %v1638
        %2258 = vmatprep.subr.bf16.mxu0 %v1647
        %2259 = vmatpush1.bf16.msra.mxu0 %v1646
        %2260 = vmatprep.subr.bf16.mxu0 %v1655
        %2261 = vmatpush1.bf16.msra.mxu0 %v1654
        %2262 = vmatprep.mubr.bf16.mxu0 %v713
        %2263 = vmatmul.mubr.bf16.gmra.mrb[0].mxu0 %v712
        %v2264 = vpop.f32.mrb[0].mxu0
        %v2265 = vadd.f32 %v939, %v2264
        %v2266 = vpop.f32.mrb[0].mxu0
        %v2267 = vadd.f32 %v943, %v2266
        %v2268 = vpop.f32.mrb[0].mxu0
        %v2269 = vadd.f32 %v939, %v2268
        %v2270 = vpop.f32.mrb[0].mxu0
        %v2271 = vadd.f32 %v943, %v2270
        %2272 = vmatprep.mubr.bf16.mxu0 %v716
        %2273 = vmatmul.mubr.bf16.gmra.mrb[0].mxu0 %v715
        %v2274 = vpop.f32.mrb[0].mxu0
        %v2275 = vadd.f32 %v939, %v2274
        %v2276 = vpop.f32.mrb[0].mxu0
        %v2277 = vadd.f32 %v943, %v2276
        %v2278 = vpop.f32.mrb[0].mxu0
        %v2279 = vadd.f32 %v939, %v2278
        %v2280 = vpop.f32.mrb[0].mxu0
        %v2281 = vadd.f32 %v943, %v2280
        %2282 = vdwg.mxu0
        %2283 = vmatprep.subr.bf16.mxu0 %v1663
        %2284 = vmatpush1.bf16.msra.mxu0 %v1662
        %2285 = vmatprep.subr.bf16.mxu0 %v1671
        %2286 = vmatpush1.bf16.msra.mxu0 %v1670
        %2287 = vmatprep.subr.bf16.mxu0 %v1679
        %2288 = vmatpush1.bf16.msra.mxu0 %v1678
        %2289 = vmatprep.subr.bf16.mxu0 %v1687
        %2290 = vmatpush1.bf16.msra.mxu0 %v1686
        %2291 = vmatprep.subr.bf16.mxu0 %v1695
        %2292 = vmatpush1.bf16.msra.mxu0 %v1694
        %2293 = vmatprep.subr.bf16.mxu0 %v1703
        %2294 = vmatpush1.bf16.msra.mxu0 %v1702
        %2295 = vmatprep.subr.bf16.mxu0 %v1711
        %2296 = vmatpush1.bf16.msra.mxu0 %v1710
        %2297 = vmatprep.subr.bf16.mxu0 %v1719
        %2298 = vmatpush1.bf16.msra.mxu0 %v1718
        %2299 = vmatprep.subr.bf16.mxu0 0
        %2300 = vmatpush1.bf16.msra.mxu0 0
        %2301 = vmatprep.subr.bf16.mxu0 0
        %2302 = vmatpush1.bf16.msra.mxu0 0
        %2303 = vmatprep.subr.bf16.mxu0 0
        %2304 = vmatpush1.bf16.msra.mxu0 0
        %2305 = vmatprep.subr.bf16.mxu0 0
        %2306 = vmatpush1.bf16.msra.mxu0 0
        %2307 = vmatprep.subr.bf16.mxu0 0
        %2308 = vmatpush1.bf16.msra.mxu0 0
        %2309 = vmatprep.subr.bf16.mxu0 0
        %2310 = vmatpush1.bf16.msra.mxu0 0
        %2311 = vmatprep.subr.bf16.mxu0 0
        %2312 = vmatpush1.bf16.msra.mxu0 0
        %2313 = vmatprep.subr.bf16.mxu0 0
        %2314 = vmatpush1.bf16.msra.mxu0 0
        %2315 = vmatprep.mubr.bf16.mxu0 0
        %2316 = vmatmul.mubr.bf16.gmra.mrb[0].mxu0 %v714
        %v2317 = vpop.f32.mrb[0].mxu0
        %v2318 = vadd.f32 %v2265, %v2317
        %v2319 = vpop.f32.mrb[0].mxu0
        %v2320 = vadd.f32 %v2267, %v2319
        %v2321 = vpop.f32.mrb[0].mxu0
        %v2322 = vadd.f32 %v2269, %v2321
        %v2323 = vpop.f32.mrb[0].mxu0
        %v2324 = vadd.f32 %v2271, %v2323
        %2325 = vmatprep.mubr.bf16.mxu0 0
        %2326 = vmatmul.mubr.bf16.gmra.mrb[0].mxu0 %v717
        %v2327 = vpop.f32.mrb[0].mxu0
        %v2328 = vadd.f32 %v2275, %v2327
        %v2329 = vpop.f32.mrb[0].mxu0
        %v2330 = vadd.f32 %v2277, %v2329
        %v2331 = vpop.f32.mrb[0].mxu0
        %v2332 = vadd.f32 %v2279, %v2331
        %v2333 = vpop.f32.mrb[0].mxu0
        %v2334 = vadd.f32 %v2281, %v2333
        %2335 = vdwg.mxu0
        %v2336 = vmax.f32 %v2000, 0.0
        %v2337 = vmax.f32 %v2002, 0.0
        %v2338 = vmax.f32 %v2106, 0.0
        %v2339 = vmax.f32 %v2108, 0.0
        %v2340 = vmax.f32 %v2212, 0.0
        %v2341 = vmax.f32 %v2214, 0.0
        %v2342 = vmax.f32 %v2318, 0.0
        %v2343 = vmax.f32 %v2320, 0.0
        %v2344 = vmax.f32 %v2004, 0.0
        %v2345 = vmax.f32 %v2006, 0.0
        %v2346 = vmax.f32 %v2110, 0.0
        %v2347 = vmax.f32 %v2112, 0.0
        %v2348 = vmax.f32 %v2216, 0.0
        %v2349 = vmax.f32 %v2218, 0.0
        %v2350 = vmax.f32 %v2322, 0.0
        %v2351 = vmax.f32 %v2324, 0.0
        %v2352 = vmax.f32 %v2010, 0.0
        %v2353 = vmax.f32 %v2012, 0.0
        %v2354 = vmax.f32 %v2116, 0.0
        %v2355 = vmax.f32 %v2118, 0.0
        %v2356 = vmax.f32 %v2222, 0.0
        %v2357 = vmax.f32 %v2224, 0.0
        %v2358 = vmax.f32 %v2328, 0.0
        %v2359 = vmax.f32 %v2330, 0.0
        %v2360 = vmax.f32 %v2014, 0.0
        %v2361 = vmax.f32 %v2016, 0.0
        %v2362 = vmax.f32 %v2120, 0.0
        %v2363 = vmax.f32 %v2122, 0.0
        %v2364 = vmax.f32 %v2226, 0.0
        %v2365 = vmax.f32 %v2228, 0.0
        %v2366 = vmax.f32 %v2332, 0.0
        %v2367 = vmax.f32 %v2334, 0.0
        %v2368 = vpack.c.bf16 %v2344, %v2336
        %v2369 = vpack.c.bf16 %v2345, %v2337
        %v2370 = vpack.c.bf16 %v2346, %v2338
        %v2371 = vpack.c.bf16 %v2347, %v2339
        %v2372 = vpack.c.bf16 %v2348, %v2340
        %v2373 = vpack.c.bf16 %v2349, %v2341
        %v2374 = vpack.c.bf16 %v2350, %v2342
        %v2375 = vpack.c.bf16 %v2351, %v2343
        %v2376 = vpack.c.bf16 %v2360, %v2352
        %v2377 = vpack.c.bf16 %v2361, %v2353
        %v2378 = vpack.c.bf16 %v2362, %v2354
        %v2379 = vpack.c.bf16 %v2363, %v2355
        %v2380 = vpack.c.bf16 %v2364, %v2356
        %v2381 = vpack.c.bf16 %v2365, %v2357
        %v2382 = vpack.c.bf16 %v2366, %v2358
        %v2383 = vpack.c.bf16 %v2367, %v2359
        %v2384 = vld [vmem:[%s356] sm:$0xff]
        %v2385 = vld [vmem:[%s356 + $0x8] sm:$0xff]
        %v2386 = vld [vmem:[%s356 + $0x10] sm:$0xff]
        %v2387 = vld [vmem:[%s356 + $0x18] sm:$0xff]
        %v2388 = vld [vmem:[%s356 + $0x20] sm:$0xff]
        %v2389 = vld [vmem:[%s356 + $0x28] sm:$0xff]
        %v2390 = vld [vmem:[%s356 + $0x30] sm:$0xff]
        %v2391 = vld [vmem:[%s356 + $0x38] sm:$0xff]
        %v2392 = vld [vmem:[%s356 + $0x40] sm:$0xff]
        %v2393 = vld [vmem:[%s356 + $0x48] sm:$0xff]
        %v2394 = vld [vmem:[%s356 + $0x50] sm:$0xff]
        %v2395 = vld [vmem:[%s356 + $0x58] sm:$0xff]
        %v2396 = vld [vmem:[%s356 + $0x60] sm:$0xff]
        %v2397 = vld [vmem:[%s356 + $0x68] sm:$0xff]
        %v2398 = vld [vmem:[%s356 + $0x70] sm:$0xff]
        %v2399 = vld [vmem:[%s356 + $0x78] sm:$0xff]
        %v2400 = vld [vmem:[%s356 + $0x80] sm:$0xff]
        %v2401 = vld [vmem:[%s356 + $0x88] sm:$0xff]
        %v2402 = vld [vmem:[%s356 + $0x90] sm:$0xff]
        %v2403 = vld [vmem:[%s356 + $0x98] sm:$0xff]
        %v2404 = vld [vmem:[%s356 + $0xa0] sm:$0xff]
        %v2405 = vld [vmem:[%s356 + $0xa8] sm:$0xff]
        %v2406 = vld [vmem:[%s356 + $0xb0] sm:$0xff]
        %v2407 = vld [vmem:[%s356 + $0xb8] sm:$0xff]
        %v2408 = vld [vmem:[%s356 + $0xc0] sm:$0xff]
        %v2409 = vld [vmem:[%s356 + $0xc8] sm:$0xff]
        %v2410 = vld [vmem:[%s356 + $0xd0] sm:$0xff]
        %v2411 = vld [vmem:[%s356 + $0xd8] sm:$0xff]
        %v2412 = vld [vmem:[%s356 + $0xe0] sm:$0xff]
        %v2413 = vld [vmem:[%s356 + $0xe8] sm:$0xff]
        %v2414 = vld [vmem:[%s356 + $0xf0] sm:$0xff]
        %v2415 = vld [vmem:[%s356 + $0xf8] sm:$0xff]
        %v2416 = vld [vmem:[%s356 + $0x100] sm:$0xff]
        %v2417 = vld [vmem:[%s356 + $0x108] sm:$0xff]
        %v2418 = vld [vmem:[%s356 + $0x110] sm:$0xff]
        %v2419 = vld [vmem:[%s356 + $0x118] sm:$0xff]
        %v2420 = vld [vmem:[%s356 + $0x120] sm:$0xff]
        %v2421 = vld [vmem:[%s356 + $0x128] sm:$0xff]
        %v2422 = vld [vmem:[%s356 + $0x130] sm:$0xff]
        %v2423 = vld [vmem:[%s356 + $0x138] sm:$0xff]
        %v2424 = vld [vmem:[%s356 + $0x140] sm:$0xff]
        %v2425 = vld [vmem:[%s356 + $0x148] sm:$0xff]
        %v2426 = vld [vmem:[%s356 + $0x150] sm:$0xff]
        %v2427 = vld [vmem:[%s356 + $0x158] sm:$0xff]
        %v2428 = vld [vmem:[%s356 + $0x160] sm:$0xff]
        %v2429 = vld [vmem:[%s356 + $0x168] sm:$0xff]
        %v2430 = vld [vmem:[%s356 + $0x170] sm:$0xff]
        %v2431 = vld [vmem:[%s356 + $0x178] sm:$0xff]
        %v2432 = vld [vmem:[%s356 + $0x180] sm:$0xff]
        %v2433 = vld [vmem:[%s356 + $0x188] sm:$0xff]
        %v2434 = vld [vmem:[%s356 + $0x190] sm:$0xff]
        %v2435 = vld [vmem:[%s356 + $0x198] sm:$0xff]
        %v2436 = vld [vmem:[%s356 + $0x1a0] sm:$0xff]
        %v2437 = vld [vmem:[%s356 + $0x1a8] sm:$0xff]
        %v2438 = vld [vmem:[%s356 + $0x1b0] sm:$0xff]
        %v2439 = vld [vmem:[%s356 + $0x1b8] sm:$0xff]
        %v2440 = vld [vmem:[%s356 + $0x1c0] sm:$0xff]
        %v2441 = vld [vmem:[%s356 + $0x1c8] sm:$0xff]
        %v2442 = vld [vmem:[%s356 + $0x1d0] sm:$0xff]
        %v2443 = vld [vmem:[%s356 + $0x1d8] sm:$0xff]
        %v2444 = vld [vmem:[%s356 + $0x1e0] sm:$0xff]
        %v2445 = vld [vmem:[%s356 + $0x1e8] sm:$0xff]
        %v2446 = vld [vmem:[%s356 + $0x1f0] sm:$0xff]
        %v2447 = vld [vmem:[%s356 + $0x1f8] sm:$0xff]
        %v2448 = vld [vmem:[%s356 + $0x200] sm:$0xff]
        %v2449 = vld [vmem:[%s356 + $0x208] sm:$0xff]
        %v2450 = vld [vmem:[%s356 + $0x210] sm:$0xff]
        %v2451 = vld [vmem:[%s356 + $0x218] sm:$0xff]
        %v2452 = vld [vmem:[%s356 + $0x220] sm:$0xff]
        %v2453 = vld [vmem:[%s356 + $0x228] sm:$0xff]
        %v2454 = vld [vmem:[%s356 + $0x230] sm:$0xff]
        %v2455 = vld [vmem:[%s356 + $0x238] sm:$0xff]
        %v2456 = vld [vmem:[%s356 + $0x240] sm:$0xff]
        %v2457 = vld [vmem:[%s356 + $0x248] sm:$0xff]
        %v2458 = vld [vmem:[%s356 + $0x250] sm:$0xff]
        %v2459 = vld [vmem:[%s356 + $0x258] sm:$0xff]
        %v2460 = vld [vmem:[%s356 + $0x260] sm:$0xff]
        %v2461 = vld [vmem:[%s356 + $0x268] sm:$0xff]
        %v2462 = vld [vmem:[%s356 + $0x270] sm:$0xff]
        %v2463 = vld [vmem:[%s356 + $0x278] sm:$0xff]
        %v2464 = vld [vmem:[%s356 + $0x280] sm:$0xff]
        %v2465 = vld [vmem:[%s356 + $0x288] sm:$0xff]
        %v2466 = vld [vmem:[%s356 + $0x290] sm:$0xff]
        %v2467 = vld [vmem:[%s356 + $0x298] sm:$0xff]
        %v2468 = vld [vmem:[%s356 + $0x2a0] sm:$0xff]
        %v2469 = vld [vmem:[%s356 + $0x2a8] sm:$0xff]
        %v2470 = vld [vmem:[%s356 + $0x2b0] sm:$0xff]
        %v2471 = vld [vmem:[%s356 + $0x2b8] sm:$0xff]
        %v2472 = vld [vmem:[%s356 + $0x2c0] sm:$0xff]
        %v2473 = vld [vmem:[%s356 + $0x2c8] sm:$0xff]
        %v2474 = vld [vmem:[%s356 + $0x2d0] sm:$0xff]
        %v2475 = vld [vmem:[%s356 + $0x2d8] sm:$0xff]
        %v2476 = vld [vmem:[%s356 + $0x2e0] sm:$0xff]
        %v2477 = vld [vmem:[%s356 + $0x2e8] sm:$0xff]
        %v2478 = vld [vmem:[%s356 + $0x2f0] sm:$0xff]
        %v2479 = vld [vmem:[%s356 + $0x2f8] sm:$0xff]
        %v2480 = vld [vmem:[%s356 + $0x300] sm:$0xff]
        %v2481 = vld [vmem:[%s356 + $0x308] sm:$0xff]
        %v2482 = vld [vmem:[%s356 + $0x310] sm:$0xff]
        %v2483 = vld [vmem:[%s356 + $0x318] sm:$0xff]
        %v2484 = vld [vmem:[%s356 + $0x320] sm:$0xff]
        %v2485 = vld [vmem:[%s356 + $0x328] sm:$0xff]
        %v2486 = vld [vmem:[%s356 + $0x330] sm:$0xff]
        %v2487 = vld [vmem:[%s356 + $0x338] sm:$0xff]
        %v2488 = vld [vmem:[%s356 + $0x340] sm:$0xff]
        %v2489 = vld [vmem:[%s356 + $0x348] sm:$0xff]
        %v2490 = vld [vmem:[%s356 + $0x350] sm:$0xff]
        %v2491 = vld [vmem:[%s356 + $0x358] sm:$0xff]
        %v2492 = vld [vmem:[%s356 + $0x360] sm:$0xff]
        %v2493 = vld [vmem:[%s356 + $0x368] sm:$0xff]
        %v2494 = vld [vmem:[%s356 + $0x370] sm:$0xff]
        %v2495 = vld [vmem:[%s356 + $0x378] sm:$0xff]
        %v2496 = vld [vmem:[%s356 + $0x380] sm:$0xff]
        %v2497 = vld [vmem:[%s356 + $0x388] sm:$0xff]
        %v2498 = vld [vmem:[%s356 + $0x390] sm:$0xff]
        %v2499 = vld [vmem:[%s356 + $0x398] sm:$0xff]
        %v2500 = vld [vmem:[%s356 + $0x3a0] sm:$0xff]
        %v2501 = vld [vmem:[%s356 + $0x3a8] sm:$0xff]
        %v2502 = vld [vmem:[%s356 + $0x3b0] sm:$0xff]
        %v2503 = vld [vmem:[%s356 + $0x3b8] sm:$0xff]
        %v2504 = vld [vmem:[%s356 + $0x3c0] sm:$0xff]
        %v2505 = vld [vmem:[%s356 + $0x3c8] sm:$0xff]
        %v2506 = vld [vmem:[%s356 + $0x3d0] sm:$0xff]
        %v2507 = vld [vmem:[%s356 + $0x3d8] sm:$0xff]
        %v2508 = vld [vmem:[%s356 + $0x3e0] sm:$0xff]
        %v2509 = vld [vmem:[%s356 + $0x3e8] sm:$0xff]
        %v2510 = vld [vmem:[%s356 + $0x3f0] sm:$0xff]
        %v2511 = vld [vmem:[%s356 + $0x3f8] sm:$0xff]
        %v2512 = vld [vmem:[%s356 + $0x400] sm:$0xff]
        %v2513 = vld [vmem:[%s356 + $0x408] sm:$0xff]
        %v2514 = vld [vmem:[%s356 + $0x410] sm:$0xff]
        %v2515 = vld [vmem:[%s356 + $0x418] sm:$0xff]
        %v2516 = vld [vmem:[%s356 + $0x420] sm:$0xff]
        %v2517 = vld [vmem:[%s356 + $0x428] sm:$0xff]
        %v2518 = vld [vmem:[%s356 + $0x430] sm:$0xff]
        %v2519 = vld [vmem:[%s356 + $0x438] sm:$0xff]
        %v2520 = vld [vmem:[%s356 + $0x440] sm:$0xff]
        %v2521 = vld [vmem:[%s356 + $0x448] sm:$0xff]
        %v2522 = vld [vmem:[%s356 + $0x450] sm:$0xff]
        %v2523 = vld [vmem:[%s356 + $0x458] sm:$0xff]
        %v2524 = vld [vmem:[%s356 + $0x460] sm:$0xff]
        %v2525 = vld [vmem:[%s356 + $0x468] sm:$0xff]
        %v2526 = vld [vmem:[%s356 + $0x470] sm:$0xff]
        %v2527 = vld [vmem:[%s356 + $0x478] sm:$0xff]
        %v2528 = vld [vmem:[%s356 + $0x480] sm:$0xff]
        %v2529 = vld [vmem:[%s356 + $0x488] sm:$0xff]
        %v2530 = vld [vmem:[%s356 + $0x490] sm:$0xff]
        %v2531 = vld [vmem:[%s356 + $0x498] sm:$0xff]
        %v2532 = vld [vmem:[%s356 + $0x4a0] sm:$0xff]
        %v2533 = vld [vmem:[%s356 + $0x4a8] sm:$0xff]
        %v2534 = vld [vmem:[%s356 + $0x4b0] sm:$0xff]
        %v2535 = vld [vmem:[%s356 + $0x4b8] sm:$0xff]
        %v2536 = vld [vmem:[%s356 + $0x4c0] sm:$0xff]
        %v2537 = vld [vmem:[%s356 + $0x4c8] sm:$0xff]
        %v2538 = vld [vmem:[%s356 + $0x4d0] sm:$0xff]
        %v2539 = vld [vmem:[%s356 + $0x4d8] sm:$0xff]
        %v2540 = vld [vmem:[%s356 + $0x4e0] sm:$0xff]
        %v2541 = vld [vmem:[%s356 + $0x4e8] sm:$0xff]
        %v2542 = vld [vmem:[%s356 + $0x4f0] sm:$0xff]
        %v2543 = vld [vmem:[%s356 + $0x4f8] sm:$0xff]
        %v2544 = vld [vmem:[%s356 + $0x500] sm:$0xff]
        %v2545 = vld [vmem:[%s356 + $0x508] sm:$0xff]
        %v2546 = vld [vmem:[%s356 + $0x510] sm:$0xff]
        %v2547 = vld [vmem:[%s356 + $0x518] sm:$0xff]
        %v2548 = vld [vmem:[%s356 + $0x520] sm:$0xff]
        %v2549 = vld [vmem:[%s356 + $0x528] sm:$0xff]
        %v2550 = vld [vmem:[%s356 + $0x530] sm:$0xff]
        %v2551 = vld [vmem:[%s356 + $0x538] sm:$0xff]
        %v2552 = vld [vmem:[%s356 + $0x540] sm:$0xff]
        %v2553 = vld [vmem:[%s356 + $0x548] sm:$0xff]
        %v2554 = vld [vmem:[%s356 + $0x550] sm:$0xff]
        %v2555 = vld [vmem:[%s356 + $0x558] sm:$0xff]
        %v2556 = vld [vmem:[%s356 + $0x560] sm:$0xff]
        %v2557 = vld [vmem:[%s356 + $0x568] sm:$0xff]
        %v2558 = vld [vmem:[%s356 + $0x570] sm:$0xff]
        %v2559 = vld [vmem:[%s356 + $0x578] sm:$0xff]
        %v2560 = vld [vmem:[%s356 + $0x580] sm:$0xff]
        %v2561 = vld [vmem:[%s356 + $0x588] sm:$0xff]
        %v2562 = vld [vmem:[%s356 + $0x590] sm:$0xff]
        %v2563 = vld [vmem:[%s356 + $0x598] sm:$0xff]
        %v2564 = vld [vmem:[%s356 + $0x5a0] sm:$0xff]
        %v2565 = vld [vmem:[%s356 + $0x5a8] sm:$0xff]
        %v2566 = vld [vmem:[%s356 + $0x5b0] sm:$0xff]
        %v2567 = vld [vmem:[%s356 + $0x5b8] sm:$0xff]
        %v2568 = vld [vmem:[%s356 + $0x5c0] sm:$0xff]
        %v2569 = vld [vmem:[%s356 + $0x5c8] sm:$0xff]
        %v2570 = vld [vmem:[%s356 + $0x5d0] sm:$0xff]
        %v2571 = vld [vmem:[%s356 + $0x5d8] sm:$0xff]
        %v2572 = vld [vmem:[%s356 + $0x5e0] sm:$0xff]
        %v2573 = vld [vmem:[%s356 + $0x5e8] sm:$0xff]
        %v2574 = vld [vmem:[%s356 + $0x5f0] sm:$0xff]
        %v2575 = vld [vmem:[%s356 + $0x5f8] sm:$0xff]
        %v2576 = vld [vmem:[%s356 + $0x600] sm:$0xff]
        %v2577 = vld [vmem:[%s356 + $0x608] sm:$0xff]
        %v2578 = vld [vmem:[%s356 + $0x610] sm:$0xff]
        %v2579 = vld [vmem:[%s356 + $0x618] sm:$0xff]
        %v2580 = vld [vmem:[%s356 + $0x620] sm:$0xff]
        %v2581 = vld [vmem:[%s356 + $0x628] sm:$0xff]
        %v2582 = vld [vmem:[%s356 + $0x630] sm:$0xff]
        %v2583 = vld [vmem:[%s356 + $0x638] sm:$0xff]
        %v2584 = vld [vmem:[%s356 + $0x640] sm:$0xff]
        %v2585 = vld [vmem:[%s356 + $0x648] sm:$0xff]
        %v2586 = vld [vmem:[%s356 + $0x650] sm:$0xff]
        %v2587 = vld [vmem:[%s356 + $0x658] sm:$0xff]
        %v2588 = vld [vmem:[%s356 + $0x660] sm:$0xff]
        %v2589 = vld [vmem:[%s356 + $0x668] sm:$0xff]
        %v2590 = vld [vmem:[%s356 + $0x670] sm:$0xff]
        %v2591 = vld [vmem:[%s356 + $0x678] sm:$0xff]
        %v2592 = vld [vmem:[%s356 + $0x680] sm:$0xff]
        %v2593 = vld [vmem:[%s356 + $0x688] sm:$0xff]
        %v2594 = vld [vmem:[%s356 + $0x690] sm:$0xff]
        %v2595 = vld [vmem:[%s356 + $0x698] sm:$0xff]
        %v2596 = vld [vmem:[%s356 + $0x6a0] sm:$0xff]
        %v2597 = vld [vmem:[%s356 + $0x6a8] sm:$0xff]
        %v2598 = vld [vmem:[%s356 + $0x6b0] sm:$0xff]
        %v2599 = vld [vmem:[%s356 + $0x6b8] sm:$0xff]
        %v2600 = vld [vmem:[%s356 + $0x6c0] sm:$0xff]
        %v2601 = vld [vmem:[%s356 + $0x6c8] sm:$0xff]
        %v2602 = vld [vmem:[%s356 + $0x6d0] sm:$0xff]
        %v2603 = vld [vmem:[%s356 + $0x6d8] sm:$0xff]
        %v2604 = vld [vmem:[%s356 + $0x6e0] sm:$0xff]
        %v2605 = vld [vmem:[%s356 + $0x6e8] sm:$0xff]
        %v2606 = vld [vmem:[%s356 + $0x6f0] sm:$0xff]
        %v2607 = vld [vmem:[%s356 + $0x6f8] sm:$0xff]
        %v2608 = vld [vmem:[%s356 + $0x700] sm:$0xff]
        %v2609 = vld [vmem:[%s356 + $0x708] sm:$0xff]
        %v2610 = vld [vmem:[%s356 + $0x710] sm:$0xff]
        %v2611 = vld [vmem:[%s356 + $0x718] sm:$0xff]
        %v2612 = vld [vmem:[%s356 + $0x720] sm:$0xff]
        %v2613 = vld [vmem:[%s356 + $0x728] sm:$0xff]
        %v2614 = vld [vmem:[%s356 + $0x730] sm:$0xff]
        %v2615 = vld [vmem:[%s356 + $0x738] sm:$0xff]
        %v2616 = vld [vmem:[%s356 + $0x740] sm:$0xff]
        %v2617 = vld [vmem:[%s356 + $0x748] sm:$0xff]
        %v2618 = vld [vmem:[%s356 + $0x750] sm:$0xff]
        %v2619 = vld [vmem:[%s356 + $0x758] sm:$0xff]
        %v2620 = vld [vmem:[%s356 + $0x760] sm:$0xff]
        %v2621 = vld [vmem:[%s356 + $0x768] sm:$0xff]
        %v2622 = vld [vmem:[%s356 + $0x770] sm:$0xff]
        %v2623 = vld [vmem:[%s356 + $0x778] sm:$0xff]
        %v2624 = vld [vmem:[%s356 + $0x780] sm:$0xff]
        %v2625 = vld [vmem:[%s356 + $0x788] sm:$0xff]
        %v2626 = vld [vmem:[%s356 + $0x790] sm:$0xff]
        %v2627 = vld [vmem:[%s356 + $0x798] sm:$0xff]
        %v2628 = vld [vmem:[%s356 + $0x7a0] sm:$0xff]
        %v2629 = vld [vmem:[%s356 + $0x7a8] sm:$0xff]
        %v2630 = vld [vmem:[%s356 + $0x7b0] sm:$0xff]
        %v2631 = vld [vmem:[%s356 + $0x7b8] sm:$0xff]
        %v2632 = vld [vmem:[%s356 + $0x7c0] sm:$0xff]
        %v2633 = vld [vmem:[%s356 + $0x7c8] sm:$0xff]
        %v2634 = vld [vmem:[%s356 + $0x7d0] sm:$0xff]
        %v2635 = vld [vmem:[%s356 + $0x7d8] sm:$0xff]
        %v2636 = vld [vmem:[%s356 + $0x7e0] sm:$0xff]
        %v2637 = vld [vmem:[%s356 + $0x7e8] sm:$0xff]
        %v2638 = vld [vmem:[%s356 + $0x7f0] sm:$0xff]
        %v2639 = vld [vmem:[%s356 + $0x7f8] sm:$0xff]
        %v2640 = vld [vmem:[%s356 + $0x800] sm:$0xff]
        %v2641 = vld [vmem:[%s356 + $0x808] sm:$0xff]
        %v2642 = vld [vmem:[%s356 + $0x810] sm:$0xff]
        %v2643 = vld [vmem:[%s356 + $0x818] sm:$0xff]
        %v2644 = vld [vmem:[%s356 + $0x820] sm:$0xff]
        %v2645 = vld [vmem:[%s356 + $0x828] sm:$0xff]
        %v2646 = vld [vmem:[%s356 + $0x830] sm:$0xff]
        %v2647 = vld [vmem:[%s356 + $0x838] sm:$0xff]
        %v2648 = vld [vmem:[%s356 + $0x840] sm:$0xff]
        %v2649 = vld [vmem:[%s356 + $0x848] sm:$0xff]
        %v2650 = vld [vmem:[%s356 + $0x850] sm:$0xff]
        %v2651 = vld [vmem:[%s356 + $0x858] sm:$0xff]
        %v2652 = vld [vmem:[%s356 + $0x860] sm:$0xff]
        %v2653 = vld [vmem:[%s356 + $0x868] sm:$0xff]
        %v2654 = vld [vmem:[%s356 + $0x870] sm:$0xff]
        %v2655 = vld [vmem:[%s356 + $0x878] sm:$0xff]
        %v2656 = vld [vmem:[%s356 + $0x880] sm:$0xff]
        %v2657 = vld [vmem:[%s356 + $0x888] sm:$0xff]
        %v2658 = vld [vmem:[%s356 + $0x890] sm:$0xff]
        %v2659 = vld [vmem:[%s356 + $0x898] sm:$0xff]
        %v2660 = vld [vmem:[%s356 + $0x8a0] sm:$0xff]
        %v2661 = vld [vmem:[%s356 + $0x8a8] sm:$0xff]
        %v2662 = vld [vmem:[%s356 + $0x8b0] sm:$0xff]
        %v2663 = vld [vmem:[%s356 + $0x8b8] sm:$0xff]
        %v2664 = vld [vmem:[%s356 + $0x8c0] sm:$0xff]
        %v2665 = vld [vmem:[%s356 + $0x8c8] sm:$0xff]
        %v2666 = vld [vmem:[%s356 + $0x8d0] sm:$0xff]
        %v2667 = vld [vmem:[%s356 + $0x8d8] sm:$0xff]
        %v2668 = vld [vmem:[%s356 + $0x8e0] sm:$0xff]
        %v2669 = vld [vmem:[%s356 + $0x8e8] sm:$0xff]
        %v2670 = vld [vmem:[%s356 + $0x8f0] sm:$0xff]
        %v2671 = vld [vmem:[%s356 + $0x8f8] sm:$0xff]
        %v2672 = vld [vmem:[%s356 + $0x900] sm:$0xff]
        %v2673 = vld [vmem:[%s356 + $0x908] sm:$0xff]
        %v2674 = vld [vmem:[%s356 + $0x910] sm:$0xff]
        %v2675 = vld [vmem:[%s356 + $0x918] sm:$0xff]
        %v2676 = vld [vmem:[%s356 + $0x920] sm:$0xff]
        %v2677 = vld [vmem:[%s356 + $0x928] sm:$0xff]
        %v2678 = vld [vmem:[%s356 + $0x930] sm:$0xff]
        %v2679 = vld [vmem:[%s356 + $0x938] sm:$0xff]
        %v2680 = vld [vmem:[%s356 + $0x940] sm:$0xff]
        %v2681 = vld [vmem:[%s356 + $0x948] sm:$0xff]
        %v2682 = vld [vmem:[%s356 + $0x950] sm:$0xff]
        %v2683 = vld [vmem:[%s356 + $0x958] sm:$0xff]
        %v2684 = vld [vmem:[%s356 + $0x960] sm:$0xff]
        %v2685 = vld [vmem:[%s356 + $0x968] sm:$0xff]
        %v2686 = vld [vmem:[%s356 + $0x970] sm:$0xff]
        %v2687 = vld [vmem:[%s356 + $0x978] sm:$0xff]
        %v2688 = vld [vmem:[%s356 + $0x980] sm:$0xff]
        %v2689 = vld [vmem:[%s356 + $0x988] sm:$0xff]
        %v2690 = vld [vmem:[%s356 + $0x990] sm:$0xff]
        %v2691 = vld [vmem:[%s356 + $0x998] sm:$0xff]
        %v2692 = vld [vmem:[%s356 + $0x9a0] sm:$0xff]
        %v2693 = vld [vmem:[%s356 + $0x9a8] sm:$0xff]
        %v2694 = vld [vmem:[%s356 + $0x9b0] sm:$0xff]
        %v2695 = vld [vmem:[%s356 + $0x9b8] sm:$0xff]
        %v2696 = vld [vmem:[%s356 + $0x9c0] sm:$0xff]
        %v2697 = vld [vmem:[%s356 + $0x9c8] sm:$0xff]
        %v2698 = vld [vmem:[%s356 + $0x9d0] sm:$0xff]
        %v2699 = vld [vmem:[%s356 + $0x9d8] sm:$0xff]
        %v2700 = vld [vmem:[%s356 + $0x9e0] sm:$0xff]
        %v2701 = vld [vmem:[%s356 + $0x9e8] sm:$0xff]
        %v2702 = vld [vmem:[%s356 + $0x9f0] sm:$0xff]
        %v2703 = vld [vmem:[%s356 + $0x9f8] sm:$0xff]
        %v2704 = vld [vmem:[%s356 + $0xa00] sm:$0xff]
        %v2705 = vld [vmem:[%s356 + $0xa08] sm:$0xff]
        %v2706 = vld [vmem:[%s356 + $0xa10] sm:$0xff]
        %v2707 = vld [vmem:[%s356 + $0xa18] sm:$0xff]
        %v2708 = vld [vmem:[%s356 + $0xa20] sm:$0xff]
        %v2709 = vld [vmem:[%s356 + $0xa28] sm:$0xff]
        %v2710 = vld [vmem:[%s356 + $0xa30] sm:$0xff]
        %v2711 = vld [vmem:[%s356 + $0xa38] sm:$0xff]
        %v2712 = vld [vmem:[%s356 + $0xa40] sm:$0xff]
        %v2713 = vld [vmem:[%s356 + $0xa48] sm:$0xff]
        %v2714 = vld [vmem:[%s356 + $0xa50] sm:$0xff]
        %v2715 = vld [vmem:[%s356 + $0xa58] sm:$0xff]
        %v2716 = vld [vmem:[%s356 + $0xa60] sm:$0xff]
        %v2717 = vld [vmem:[%s356 + $0xa68] sm:$0xff]
        %v2718 = vld [vmem:[%s356 + $0xa70] sm:$0xff]
        %v2719 = vld [vmem:[%s356 + $0xa78] sm:$0xff]
        %v2720 = vld [vmem:[%s356 + $0xa80] sm:$0xff]
        %v2721 = vld [vmem:[%s356 + $0xa88] sm:$0xff]
        %v2722 = vld [vmem:[%s356 + $0xa90] sm:$0xff]
        %v2723 = vld [vmem:[%s356 + $0xa98] sm:$0xff]
        %v2724 = vld [vmem:[%s356 + $0xaa0] sm:$0xff]
        %v2725 = vld [vmem:[%s356 + $0xaa8] sm:$0xff]
        %v2726 = vld [vmem:[%s356 + $0xab0] sm:$0xff]
        %v2727 = vld [vmem:[%s356 + $0xab8] sm:$0xff]
        %v2728 = vld [vmem:[%s356 + $0xac0] sm:$0xff]
        %v2729 = vld [vmem:[%s356 + $0xac8] sm:$0xff]
        %v2730 = vld [vmem:[%s356 + $0xad0] sm:$0xff]
        %v2731 = vld [vmem:[%s356 + $0xad8] sm:$0xff]
        %v2732 = vld [vmem:[%s356 + $0xae0] sm:$0xff]
        %v2733 = vld [vmem:[%s356 + $0xae8] sm:$0xff]
        %v2734 = vld [vmem:[%s356 + $0xaf0] sm:$0xff]
        %v2735 = vld [vmem:[%s356 + $0xaf8] sm:$0xff]
        %v2736 = vld [vmem:[%s356 + $0xb00] sm:$0xff]
        %v2737 = vld [vmem:[%s356 + $0xb08] sm:$0xff]
        %v2738 = vld [vmem:[%s356 + $0xb10] sm:$0xff]
        %v2739 = vld [vmem:[%s356 + $0xb18] sm:$0xff]
        %v2740 = vld [vmem:[%s356 + $0xb20] sm:$0xff]
        %v2741 = vld [vmem:[%s356 + $0xb28] sm:$0xff]
        %v2742 = vld [vmem:[%s356 + $0xb30] sm:$0xff]
        %v2743 = vld [vmem:[%s356 + $0xb38] sm:$0xff]
        %v2744 = vld [vmem:[%s356 + $0xb40] sm:$0xff]
        %v2745 = vld [vmem:[%s356 + $0xb48] sm:$0xff]
        %v2746 = vld [vmem:[%s356 + $0xb50] sm:$0xff]
        %v2747 = vld [vmem:[%s356 + $0xb58] sm:$0xff]
        %v2748 = vld [vmem:[%s356 + $0xb60] sm:$0xff]
        %v2749 = vld [vmem:[%s356 + $0xb68] sm:$0xff]
        %v2750 = vld [vmem:[%s356 + $0xb70] sm:$0xff]
        %v2751 = vld [vmem:[%s356 + $0xb78] sm:$0xff]
        %v2752 = vld [vmem:[%s356 + $0xb80] sm:$0xff]
        %v2753 = vld [vmem:[%s356 + $0xb88] sm:$0xff]
        %v2754 = vld [vmem:[%s356 + $0xb90] sm:$0xff]
        %v2755 = vld [vmem:[%s356 + $0xb98] sm:$0xff]
        %v2756 = vld [vmem:[%s356 + $0xba0] sm:$0xff]
        %v2757 = vld [vmem:[%s356 + $0xba8] sm:$0xff]
        %v2758 = vld [vmem:[%s356 + $0xbb0] sm:$0xff]
        %v2759 = vld [vmem:[%s356 + $0xbb8] sm:$0xff]
        %v2760 = vld [vmem:[%s356 + $0xbc0] sm:$0xff]
        %v2761 = vld [vmem:[%s356 + $0xbc8] sm:$0xff]
        %v2762 = vld [vmem:[%s356 + $0xbd0] sm:$0xff]
        %v2763 = vld [vmem:[%s356 + $0xbd8] sm:$0xff]
        %v2764 = vld [vmem:[%s356 + $0xbe0] sm:$0xff]
        %v2765 = vld [vmem:[%s356 + $0xbe8] sm:$0xff]
        %v2766 = vld [vmem:[%s356 + $0xbf0] sm:$0xff]
        %v2767 = vld [vmem:[%s356 + $0xbf8] sm:$0xff]
        %v2768 = vld [vmem:[%s356 + $0xc00] sm:$0xff]
        %v2769 = vld [vmem:[%s356 + $0xc08] sm:$0xff]
        %v2770 = vld [vmem:[%s356 + $0xc10] sm:$0xff]
        %v2771 = vld [vmem:[%s356 + $0xc18] sm:$0xff]
        %v2772 = vld [vmem:[%s356 + $0xc20] sm:$0xff]
        %v2773 = vld [vmem:[%s356 + $0xc28] sm:$0xff]
        %v2774 = vld [vmem:[%s356 + $0xc30] sm:$0xff]
        %v2775 = vld [vmem:[%s356 + $0xc38] sm:$0xff]
        %v2776 = vld [vmem:[%s356 + $0xc40] sm:$0xff]
        %v2777 = vld [vmem:[%s356 + $0xc48] sm:$0xff]
        %v2778 = vld [vmem:[%s356 + $0xc50] sm:$0xff]
        %v2779 = vld [vmem:[%s356 + $0xc58] sm:$0xff]
        %v2780 = vld [vmem:[%s356 + $0xc60] sm:$0xff]
        %v2781 = vld [vmem:[%s356 + $0xc68] sm:$0xff]
        %v2782 = vld [vmem:[%s356 + $0xc70] sm:$0xff]
        %v2783 = vld [vmem:[%s356 + $0xc78] sm:$0xff]
        %v2784 = vld [vmem:[%s356 + $0xc80] sm:$0xff]
        %v2785 = vld [vmem:[%s356 + $0xc88] sm:$0xff]
        %v2786 = vld [vmem:[%s356 + $0xc90] sm:$0xff]
        %v2787 = vld [vmem:[%s356 + $0xc98] sm:$0xff]
        %v2788 = vld [vmem:[%s356 + $0xca0] sm:$0xff]
        %v2789 = vld [vmem:[%s356 + $0xca8] sm:$0xff]
        %v2790 = vld [vmem:[%s356 + $0xcb0] sm:$0xff]
        %v2791 = vld [vmem:[%s356 + $0xcb8] sm:$0xff]
        %v2792 = vld [vmem:[%s356 + $0xcc0] sm:$0xff]
        %v2793 = vld [vmem:[%s356 + $0xcc8] sm:$0xff]
        %v2794 = vld [vmem:[%s356 + $0xcd0] sm:$0xff]
        %v2795 = vld [vmem:[%s356 + $0xcd8] sm:$0xff]
        %v2796 = vld [vmem:[%s356 + $0xce0] sm:$0xff]
        %v2797 = vld [vmem:[%s356 + $0xce8] sm:$0xff]
        %v2798 = vld [vmem:[%s356 + $0xcf0] sm:$0xff]
        %v2799 = vld [vmem:[%s356 + $0xcf8] sm:$0xff]
        %v2800 = vld [vmem:[%s356 + $0xd00] sm:$0xff]
        %v2801 = vld [vmem:[%s356 + $0xd08] sm:$0xff]
        %v2802 = vld [vmem:[%s356 + $0xd10] sm:$0xff]
        %v2803 = vld [vmem:[%s356 + $0xd18] sm:$0xff]
        %v2804 = vld [vmem:[%s356 + $0xd20] sm:$0xff]
        %v2805 = vld [vmem:[%s356 + $0xd28] sm:$0xff]
        %v2806 = vld [vmem:[%s356 + $0xd30] sm:$0xff]
        %v2807 = vld [vmem:[%s356 + $0xd38] sm:$0xff]
        %v2808 = vld [vmem:[%s356 + $0xd40] sm:$0xff]
        %v2809 = vld [vmem:[%s356 + $0xd48] sm:$0xff]
        %v2810 = vld [vmem:[%s356 + $0xd50] sm:$0xff]
        %v2811 = vld [vmem:[%s356 + $0xd58] sm:$0xff]
        %v2812 = vld [vmem:[%s356 + $0xd60] sm:$0xff]
        %v2813 = vld [vmem:[%s356 + $0xd68] sm:$0xff]
        %v2814 = vld [vmem:[%s356 + $0xd70] sm:$0xff]
        %v2815 = vld [vmem:[%s356 + $0xd78] sm:$0xff]
        %v2816 = vld [vmem:[%s356 + $0xd80] sm:$0xff]
        %v2817 = vld [vmem:[%s356 + $0xd88] sm:$0xff]
        %v2818 = vld [vmem:[%s356 + $0xd90] sm:$0xff]
        %v2819 = vld [vmem:[%s356 + $0xd98] sm:$0xff]
        %v2820 = vld [vmem:[%s356 + $0xda0] sm:$0xff]
        %v2821 = vld [vmem:[%s356 + $0xda8] sm:$0xff]
        %v2822 = vld [vmem:[%s356 + $0xdb0] sm:$0xff]
        %v2823 = vld [vmem:[%s356 + $0xdb8] sm:$0xff]
        %v2824 = vld [vmem:[%s356 + $0xdc0] sm:$0xff]
        %v2825 = vld [vmem:[%s356 + $0xdc8] sm:$0xff]
        %v2826 = vld [vmem:[%s356 + $0xdd0] sm:$0xff]
        %v2827 = vld [vmem:[%s356 + $0xdd8] sm:$0xff]
        %v2828 = vld [vmem:[%s356 + $0xde0] sm:$0xff]
        %v2829 = vld [vmem:[%s356 + $0xde8] sm:$0xff]
        %v2830 = vld [vmem:[%s356 + $0xdf0] sm:$0xff]
        %v2831 = vld [vmem:[%s356 + $0xdf8] sm:$0xff]
        %v2832 = vld [vmem:[%s356 + $0xe00] sm:$0xff]
        %v2833 = vld [vmem:[%s356 + $0xe08] sm:$0xff]
        %v2834 = vld [vmem:[%s356 + $0xe10] sm:$0xff]
        %v2835 = vld [vmem:[%s356 + $0xe18] sm:$0xff]
        %v2836 = vld [vmem:[%s356 + $0xe20] sm:$0xff]
        %v2837 = vld [vmem:[%s356 + $0xe28] sm:$0xff]
        %v2838 = vld [vmem:[%s356 + $0xe30] sm:$0xff]
        %v2839 = vld [vmem:[%s356 + $0xe38] sm:$0xff]
        %v2840 = vld [vmem:[%s356 + $0xe40] sm:$0xff]
        %v2841 = vld [vmem:[%s356 + $0xe48] sm:$0xff]
        %v2842 = vld [vmem:[%s356 + $0xe50] sm:$0xff]
        %v2843 = vld [vmem:[%s356 + $0xe58] sm:$0xff]
        %v2844 = vld [vmem:[%s356 + $0xe60] sm:$0xff]
        %v2845 = vld [vmem:[%s356 + $0xe68] sm:$0xff]
        %v2846 = vld [vmem:[%s356 + $0xe70] sm:$0xff]
        %v2847 = vld [vmem:[%s356 + $0xe78] sm:$0xff]
        %v2848 = vld [vmem:[%s356 + $0xe80] sm:$0xff]
        %v2849 = vld [vmem:[%s356 + $0xe88] sm:$0xff]
        %v2850 = vld [vmem:[%s356 + $0xe90] sm:$0xff]
        %v2851 = vld [vmem:[%s356 + $0xe98] sm:$0xff]
        %v2852 = vld [vmem:[%s356 + $0xea0] sm:$0xff]
        %v2853 = vld [vmem:[%s356 + $0xea8] sm:$0xff]
        %v2854 = vld [vmem:[%s356 + $0xeb0] sm:$0xff]
        %v2855 = vld [vmem:[%s356 + $0xeb8] sm:$0xff]
        %v2856 = vld [vmem:[%s356 + $0xec0] sm:$0xff]
        %v2857 = vld [vmem:[%s356 + $0xec8] sm:$0xff]
        %v2858 = vld [vmem:[%s356 + $0xed0] sm:$0xff]
        %v2859 = vld [vmem:[%s356 + $0xed8] sm:$0xff]
        %v2860 = vld [vmem:[%s356 + $0xee0] sm:$0xff]
        %v2861 = vld [vmem:[%s356 + $0xee8] sm:$0xff]
        %v2862 = vld [vmem:[%s356 + $0xef0] sm:$0xff]
        %v2863 = vld [vmem:[%s356 + $0xef8] sm:$0xff]
        %v2864 = vld [vmem:[%s356 + $0xf00] sm:$0xff]
        %v2865 = vld [vmem:[%s356 + $0xf08] sm:$0xff]
        %v2866 = vld [vmem:[%s356 + $0xf10] sm:$0xff]
        %v2867 = vld [vmem:[%s356 + $0xf18] sm:$0xff]
        %v2868 = vld [vmem:[%s356 + $0xf20] sm:$0xff]
        %v2869 = vld [vmem:[%s356 + $0xf28] sm:$0xff]
        %v2870 = vld [vmem:[%s356 + $0xf30] sm:$0xff]
        %v2871 = vld [vmem:[%s356 + $0xf38] sm:$0xff]
        %v2872 = vld [vmem:[%s356 + $0xf40] sm:$0xff]
        %v2873 = vld [vmem:[%s356 + $0xf48] sm:$0xff]
        %v2874 = vld [vmem:[%s356 + $0xf50] sm:$0xff]
        %v2875 = vld [vmem:[%s356 + $0xf58] sm:$0xff]
        %v2876 = vld [vmem:[%s356 + $0xf60] sm:$0xff]
        %v2877 = vld [vmem:[%s356 + $0xf68] sm:$0xff]
        %v2878 = vld [vmem:[%s356 + $0xf70] sm:$0xff]
        %v2879 = vld [vmem:[%s356 + $0xf78] sm:$0xff]
        %v2880 = vld [vmem:[%s356 + $0xf80] sm:$0xff]
        %v2881 = vld [vmem:[%s356 + $0xf88] sm:$0xff]
        %v2882 = vld [vmem:[%s356 + $0xf90] sm:$0xff]
        %v2883 = vld [vmem:[%s356 + $0xf98] sm:$0xff]
        %v2884 = vld [vmem:[%s356 + $0xfa0] sm:$0xff]
        %v2885 = vld [vmem:[%s356 + $0xfa8] sm:$0xff]
        %v2886 = vld [vmem:[%s356 + $0xfb0] sm:$0xff]
        %v2887 = vld [vmem:[%s356 + $0xfb8] sm:$0xff]
        %v2888 = vld [vmem:[%s356 + $0xfc0] sm:$0xff]
        %v2889 = vld [vmem:[%s356 + $0xfc8] sm:$0xff]
        %v2890 = vld [vmem:[%s356 + $0xfd0] sm:$0xff]
        %v2891 = vld [vmem:[%s356 + $0xfd8] sm:$0xff]
        %v2892 = vld [vmem:[%s356 + $0xfe0] sm:$0xff]
        %v2893 = vld [vmem:[%s356 + $0xfe8] sm:$0xff]
        %v2894 = vld [vmem:[%s356 + $0xff0] sm:$0xff]
        %v2895 = vld [vmem:[%s356 + $0xff8] sm:$0xff]
        %v2896 = vld [vmem:[%s356 + $0x1000] sm:$0xff]
        %v2897 = vld [vmem:[%s356 + $0x1008] sm:$0xff]
        %v2898 = vld [vmem:[%s356 + $0x1010] sm:$0xff]
        %v2899 = vld [vmem:[%s356 + $0x1018] sm:$0xff]
        %v2900 = vld [vmem:[%s356 + $0x1020] sm:$0xff]
        %v2901 = vld [vmem:[%s356 + $0x1028] sm:$0xff]
        %v2902 = vld [vmem:[%s356 + $0x1030] sm:$0xff]
        %v2903 = vld [vmem:[%s356 + $0x1038] sm:$0xff]
        %v2904 = vld [vmem:[%s356 + $0x1040] sm:$0xff]
        %v2905 = vld [vmem:[%s356 + $0x1048] sm:$0xff]
        %v2906 = vld [vmem:[%s356 + $0x1050] sm:$0xff]
        %v2907 = vld [vmem:[%s356 + $0x1058] sm:$0xff]
        %v2908 = vld [vmem:[%s356 + $0x1060] sm:$0xff]
        %v2909 = vld [vmem:[%s356 + $0x1068] sm:$0xff]
        %v2910 = vld [vmem:[%s356 + $0x1070] sm:$0xff]
        %v2911 = vld [vmem:[%s356 + $0x1078] sm:$0xff]
        %v2912 = vld [vmem:[%s356 + $0x1080] sm:$0xff]
        %v2913 = vld [vmem:[%s356 + $0x1088] sm:$0xff]
        %v2914 = vld [vmem:[%s356 + $0x1090] sm:$0xff]
        %v2915 = vld [vmem:[%s356 + $0x1098] sm:$0xff]
        %v2916 = vld [vmem:[%s356 + $0x10a0] sm:$0xff]
        %v2917 = vld [vmem:[%s356 + $0x10a8] sm:$0xff]
        %v2918 = vld [vmem:[%s356 + $0x10b0] sm:$0xff]
        %v2919 = vld [vmem:[%s356 + $0x10b8] sm:$0xff]
        %v2920 = vld [vmem:[%s356 + $0x10c0] sm:$0xff]
        %v2921 = vld [vmem:[%s356 + $0x10c8] sm:$0xff]
        %v2922 = vld [vmem:[%s356 + $0x10d0] sm:$0xff]
        %v2923 = vld [vmem:[%s356 + $0x10d8] sm:$0xff]
        %v2924 = vld [vmem:[%s356 + $0x10e0] sm:$0xff]
        %v2925 = vld [vmem:[%s356 + $0x10e8] sm:$0xff]
        %v2926 = vld [vmem:[%s356 + $0x10f0] sm:$0xff]
        %v2927 = vld [vmem:[%s356 + $0x10f8] sm:$0xff]
        %v2928 = vld [vmem:[%s356 + $0x1100] sm:$0xff]
        %v2929 = vld [vmem:[%s356 + $0x1108] sm:$0xff]
        %v2930 = vld [vmem:[%s356 + $0x1110] sm:$0xff]
        %v2931 = vld [vmem:[%s356 + $0x1118] sm:$0xff]
        %v2932 = vld [vmem:[%s356 + $0x1120] sm:$0xff]
        %v2933 = vld [vmem:[%s356 + $0x1128] sm:$0xff]
        %v2934 = vld [vmem:[%s356 + $0x1130] sm:$0xff]
        %v2935 = vld [vmem:[%s356 + $0x1138] sm:$0xff]
        %v2936 = vld [vmem:[%s356 + $0x1140] sm:$0xff]
        %v2937 = vld [vmem:[%s356 + $0x1148] sm:$0xff]
        %v2938 = vld [vmem:[%s356 + $0x1150] sm:$0xff]
        %v2939 = vld [vmem:[%s356 + $0x1158] sm:$0xff]
        %v2940 = vld [vmem:[%s356 + $0x1160] sm:$0xff]
        %v2941 = vld [vmem:[%s356 + $0x1168] sm:$0xff]
        %v2942 = vld [vmem:[%s356 + $0x1170] sm:$0xff]
        %v2943 = vld [vmem:[%s356 + $0x1178] sm:$0xff]
        %v2944 = vld [vmem:[%s356 + $0x1180] sm:$0xff]
        %v2945 = vld [vmem:[%s356 + $0x1188] sm:$0xff]
        %v2946 = vld [vmem:[%s356 + $0x1190] sm:$0xff]
        %v2947 = vld [vmem:[%s356 + $0x1198] sm:$0xff]
        %v2948 = vld [vmem:[%s356 + $0x11a0] sm:$0xff]
        %v2949 = vld [vmem:[%s356 + $0x11a8] sm:$0xff]
        %v2950 = vld [vmem:[%s356 + $0x11b0] sm:$0xff]
        %v2951 = vld [vmem:[%s356 + $0x11b8] sm:$0xff]
        %v2952 = vld [vmem:[%s356 + $0x11c0] sm:$0xff]
        %v2953 = vld [vmem:[%s356 + $0x11c8] sm:$0xff]
        %v2954 = vld [vmem:[%s356 + $0x11d0] sm:$0xff]
        %v2955 = vld [vmem:[%s356 + $0x11d8] sm:$0xff]
        %v2956 = vld [vmem:[%s356 + $0x11e0] sm:$0xff]
        %v2957 = vld [vmem:[%s356 + $0x11e8] sm:$0xff]
        %v2958 = vld [vmem:[%s356 + $0x11f0] sm:$0xff]
        %v2959 = vld [vmem:[%s356 + $0x11f8] sm:$0xff]
        %v2960 = vld [vmem:[%s356 + $0x1200] sm:$0xff]
        %v2961 = vld [vmem:[%s356 + $0x1208] sm:$0xff]
        %v2962 = vld [vmem:[%s356 + $0x1210] sm:$0xff]
        %v2963 = vld [vmem:[%s356 + $0x1218] sm:$0xff]
        %v2964 = vld [vmem:[%s356 + $0x1220] sm:$0xff]
        %v2965 = vld [vmem:[%s356 + $0x1228] sm:$0xff]
        %v2966 = vld [vmem:[%s356 + $0x1230] sm:$0xff]
        %v2967 = vld [vmem:[%s356 + $0x1238] sm:$0xff]
        %v2968 = vld [vmem:[%s356 + $0x1240] sm:$0xff]
        %v2969 = vld [vmem:[%s356 + $0x1248] sm:$0xff]
        %v2970 = vld [vmem:[%s356 + $0x1250] sm:$0xff]
        %v2971 = vld [vmem:[%s356 + $0x1258] sm:$0xff]
        %v2972 = vld [vmem:[%s356 + $0x1260] sm:$0xff]
        %v2973 = vld [vmem:[%s356 + $0x1268] sm:$0xff]
        %v2974 = vld [vmem:[%s356 + $0x1270] sm:$0xff]
        %v2975 = vld [vmem:[%s356 + $0x1278] sm:$0xff]
        %v2976 = vld [vmem:[%s356 + $0x1280] sm:$0xff]
        %v2977 = vld [vmem:[%s356 + $0x1288] sm:$0xff]
        %v2978 = vld [vmem:[%s356 + $0x1290] sm:$0xff]
        %v2979 = vld [vmem:[%s356 + $0x1298] sm:$0xff]
        %v2980 = vld [vmem:[%s356 + $0x12a0] sm:$0xff]
        %v2981 = vld [vmem:[%s356 + $0x12a8] sm:$0xff]
        %v2982 = vld [vmem:[%s356 + $0x12b0] sm:$0xff]
        %v2983 = vld [vmem:[%s356 + $0x12b8] sm:$0xff]
        %v2984 = vld [vmem:[%s356 + $0x12c0] sm:$0xff]
        %v2985 = vld [vmem:[%s356 + $0x12c8] sm:$0xff]
        %v2986 = vld [vmem:[%s356 + $0x12d0] sm:$0xff]
        %v2987 = vld [vmem:[%s356 + $0x12d8] sm:$0xff]
        %v2988 = vld [vmem:[%s356 + $0x12e0] sm:$0xff]
        %v2989 = vld [vmem:[%s356 + $0x12e8] sm:$0xff]
        %v2990 = vld [vmem:[%s356 + $0x12f0] sm:$0xff]
        %v2991 = vld [vmem:[%s356 + $0x12f8] sm:$0xff]
        %v2992 = vld [vmem:[%s356 + $0x1300] sm:$0xff]
        %v2993 = vld [vmem:[%s356 + $0x1308] sm:$0xff]
        %v2994 = vld [vmem:[%s356 + $0x1310] sm:$0xff]
        %v2995 = vld [vmem:[%s356 + $0x1318] sm:$0xff]
        %v2996 = vld [vmem:[%s356 + $0x1320] sm:$0xff]
        %v2997 = vld [vmem:[%s356 + $0x1328] sm:$0xff]
        %v2998 = vld [vmem:[%s356 + $0x1330] sm:$0xff]
        %v2999 = vld [vmem:[%s356 + $0x1338] sm:$0xff]
        %v3000 = vld [vmem:[%s356 + $0x1340] sm:$0xff]
        %v3001 = vld [vmem:[%s356 + $0x1348] sm:$0xff]
        %v3002 = vld [vmem:[%s356 + $0x1350] sm:$0xff]
        %v3003 = vld [vmem:[%s356 + $0x1358] sm:$0xff]
        %v3004 = vld [vmem:[%s356 + $0x1360] sm:$0xff]
        %v3005 = vld [vmem:[%s356 + $0x1368] sm:$0xff]
        %v3006 = vld [vmem:[%s356 + $0x1370] sm:$0xff]
        %v3007 = vld [vmem:[%s356 + $0x1378] sm:$0xff]
        %v3008 = vld [vmem:[%s356 + $0x1380] sm:$0xff]
        %v3009 = vld [vmem:[%s356 + $0x1388] sm:$0xff]
        %v3010 = vld [vmem:[%s356 + $0x1390] sm:$0xff]
        %v3011 = vld [vmem:[%s356 + $0x1398] sm:$0xff]
        %v3012 = vld [vmem:[%s356 + $0x13a0] sm:$0xff]
        %v3013 = vld [vmem:[%s356 + $0x13a8] sm:$0xff]
        %v3014 = vld [vmem:[%s356 + $0x13b0] sm:$0xff]
        %v3015 = vld [vmem:[%s356 + $0x13b8] sm:$0xff]
        %v3016 = vld [vmem:[%s356 + $0x13c0] sm:$0xff]
        %v3017 = vld [vmem:[%s356 + $0x13c8] sm:$0xff]
        %v3018 = vld [vmem:[%s356 + $0x13d0] sm:$0xff]
        %v3019 = vld [vmem:[%s356 + $0x13d8] sm:$0xff]
        %v3020 = vld [vmem:[%s356 + $0x13e0] sm:$0xff]
        %v3021 = vld [vmem:[%s356 + $0x13e8] sm:$0xff]
        %v3022 = vld [vmem:[%s356 + $0x13f0] sm:$0xff]
        %v3023 = vld [vmem:[%s356 + $0x13f8] sm:$0xff]
        %v3024 = vld [vmem:[%s356 + $0x1400] sm:$0xff]
        %v3025 = vld [vmem:[%s356 + $0x1408] sm:$0xff]
        %v3026 = vld [vmem:[%s356 + $0x1410] sm:$0xff]
        %v3027 = vld [vmem:[%s356 + $0x1418] sm:$0xff]
        %v3028 = vld [vmem:[%s356 + $0x1420] sm:$0xff]
        %v3029 = vld [vmem:[%s356 + $0x1428] sm:$0xff]
        %v3030 = vld [vmem:[%s356 + $0x1430] sm:$0xff]
        %v3031 = vld [vmem:[%s356 + $0x1438] sm:$0xff]
        %v3032 = vld [vmem:[%s356 + $0x1440] sm:$0xff]
        %v3033 = vld [vmem:[%s356 + $0x1448] sm:$0xff]
        %v3034 = vld [vmem:[%s356 + $0x1450] sm:$0xff]
        %v3035 = vld [vmem:[%s356 + $0x1458] sm:$0xff]
        %v3036 = vld [vmem:[%s356 + $0x1460] sm:$0xff]
        %v3037 = vld [vmem:[%s356 + $0x1468] sm:$0xff]
        %v3038 = vld [vmem:[%s356 + $0x1470] sm:$0xff]
        %v3039 = vld [vmem:[%s356 + $0x1478] sm:$0xff]
        %v3040 = vld [vmem:[%s356 + $0x1480] sm:$0xff]
        %v3041 = vld [vmem:[%s356 + $0x1488] sm:$0xff]
        %v3042 = vld [vmem:[%s356 + $0x1490] sm:$0xff]
        %v3043 = vld [vmem:[%s356 + $0x1498] sm:$0xff]
        %v3044 = vld [vmem:[%s356 + $0x14a0] sm:$0xff]
        %v3045 = vld [vmem:[%s356 + $0x14a8] sm:$0xff]
        %v3046 = vld [vmem:[%s356 + $0x14b0] sm:$0xff]
        %v3047 = vld [vmem:[%s356 + $0x14b8] sm:$0xff]
        %v3048 = vld [vmem:[%s356 + $0x14c0] sm:$0xff]
        %v3049 = vld [vmem:[%s356 + $0x14c8] sm:$0xff]
        %v3050 = vld [vmem:[%s356 + $0x14d0] sm:$0xff]
        %v3051 = vld [vmem:[%s356 + $0x14d8] sm:$0xff]
        %v3052 = vld [vmem:[%s356 + $0x14e0] sm:$0xff]
        %v3053 = vld [vmem:[%s356 + $0x14e8] sm:$0xff]
        %v3054 = vld [vmem:[%s356 + $0x14f0] sm:$0xff]
        %v3055 = vld [vmem:[%s356 + $0x14f8] sm:$0xff]
        %v3056 = vld [vmem:[%s356 + $0x1500] sm:$0xff]
        %v3057 = vld [vmem:[%s356 + $0x1508] sm:$0xff]
        %v3058 = vld [vmem:[%s356 + $0x1510] sm:$0xff]
        %v3059 = vld [vmem:[%s356 + $0x1518] sm:$0xff]
        %v3060 = vld [vmem:[%s356 + $0x1520] sm:$0xff]
        %v3061 = vld [vmem:[%s356 + $0x1528] sm:$0xff]
        %v3062 = vld [vmem:[%s356 + $0x1530] sm:$0xff]
        %v3063 = vld [vmem:[%s356 + $0x1538] sm:$0xff]
        %v3064 = vld [vmem:[%s356 + $0x1540] sm:$0xff]
        %v3065 = vld [vmem:[%s356 + $0x1548] sm:$0xff]
        %v3066 = vld [vmem:[%s356 + $0x1550] sm:$0xff]
        %v3067 = vld [vmem:[%s356 + $0x1558] sm:$0xff]
        %v3068 = vld [vmem:[%s356 + $0x1560] sm:$0xff]
        %v3069 = vld [vmem:[%s356 + $0x1568] sm:$0xff]
        %v3070 = vld [vmem:[%s356 + $0x1570] sm:$0xff]
        %v3071 = vld [vmem:[%s356 + $0x1578] sm:$0xff]
        %v3072 = vld [vmem:[%s356 + $0x1580] sm:$0xff]
        %v3073 = vld [vmem:[%s356 + $0x1588] sm:$0xff]
        %v3074 = vld [vmem:[%s356 + $0x1590] sm:$0xff]
        %v3075 = vld [vmem:[%s356 + $0x1598] sm:$0xff]
        %v3076 = vld [vmem:[%s356 + $0x15a0] sm:$0xff]
        %v3077 = vld [vmem:[%s356 + $0x15a8] sm:$0xff]
        %v3078 = vld [vmem:[%s356 + $0x15b0] sm:$0xff]
        %v3079 = vld [vmem:[%s356 + $0x15b8] sm:$0xff]
        %v3080 = vld [vmem:[%s356 + $0x15c0] sm:$0xff]
        %v3081 = vld [vmem:[%s356 + $0x15c8] sm:$0xff]
        %v3082 = vld [vmem:[%s356 + $0x15d0] sm:$0xff]
        %v3083 = vld [vmem:[%s356 + $0x15d8] sm:$0xff]
        %v3084 = vld [vmem:[%s356 + $0x15e0] sm:$0xff]
        %v3085 = vld [vmem:[%s356 + $0x15e8] sm:$0xff]
        %v3086 = vld [vmem:[%s356 + $0x15f0] sm:$0xff]
        %v3087 = vld [vmem:[%s356 + $0x15f8] sm:$0xff]
        %v3088 = vld [vmem:[%s356 + $0x1600] sm:$0xff]
        %v3089 = vld [vmem:[%s356 + $0x1608] sm:$0xff]
        %v3090 = vld [vmem:[%s356 + $0x1610] sm:$0xff]
        %v3091 = vld [vmem:[%s356 + $0x1618] sm:$0xff]
        %v3092 = vld [vmem:[%s356 + $0x1620] sm:$0xff]
        %v3093 = vld [vmem:[%s356 + $0x1628] sm:$0xff]
        %v3094 = vld [vmem:[%s356 + $0x1630] sm:$0xff]
        %v3095 = vld [vmem:[%s356 + $0x1638] sm:$0xff]
        %v3096 = vld [vmem:[%s356 + $0x1640] sm:$0xff]
        %v3097 = vld [vmem:[%s356 + $0x1648] sm:$0xff]
        %v3098 = vld [vmem:[%s356 + $0x1650] sm:$0xff]
        %v3099 = vld [vmem:[%s356 + $0x1658] sm:$0xff]
        %v3100 = vld [vmem:[%s356 + $0x1660] sm:$0xff]
        %v3101 = vld [vmem:[%s356 + $0x1668] sm:$0xff]
        %v3102 = vld [vmem:[%s356 + $0x1670] sm:$0xff]
        %v3103 = vld [vmem:[%s356 + $0x1678] sm:$0xff]
        %v3104 = vld [vmem:[%s356 + $0x1680] sm:$0xff]
        %v3105 = vld [vmem:[%s356 + $0x1688] sm:$0xff]
        %v3106 = vld [vmem:[%s356 + $0x1690] sm:$0xff]
        %v3107 = vld [vmem:[%s356 + $0x1698] sm:$0xff]
        %v3108 = vld [vmem:[%s356 + $0x16a0] sm:$0xff]
        %v3109 = vld [vmem:[%s356 + $0x16a8] sm:$0xff]
        %v3110 = vld [vmem:[%s356 + $0x16b0] sm:$0xff]
        %v3111 = vld [vmem:[%s356 + $0x16b8] sm:$0xff]
        %v3112 = vld [vmem:[%s356 + $0x16c0] sm:$0xff]
        %v3113 = vld [vmem:[%s356 + $0x16c8] sm:$0xff]
        %v3114 = vld [vmem:[%s356 + $0x16d0] sm:$0xff]
        %v3115 = vld [vmem:[%s356 + $0x16d8] sm:$0xff]
        %v3116 = vld [vmem:[%s356 + $0x16e0] sm:$0xff]
        %v3117 = vld [vmem:[%s356 + $0x16e8] sm:$0xff]
        %v3118 = vld [vmem:[%s356 + $0x16f0] sm:$0xff]
        %v3119 = vld [vmem:[%s356 + $0x16f8] sm:$0xff]
        %v3120 = vld [vmem:[%s356 + $0x1700] sm:$0xff]
        %v3121 = vld [vmem:[%s356 + $0x1708] sm:$0xff]
        %v3122 = vld [vmem:[%s356 + $0x1710] sm:$0xff]
        %v3123 = vld [vmem:[%s356 + $0x1718] sm:$0xff]
        %v3124 = vld [vmem:[%s356 + $0x1720] sm:$0xff]
        %v3125 = vld [vmem:[%s356 + $0x1728] sm:$0xff]
        %v3126 = vld [vmem:[%s356 + $0x1730] sm:$0xff]
        %v3127 = vld [vmem:[%s356 + $0x1738] sm:$0xff]
        %v3128 = vld [vmem:[%s356 + $0x1740] sm:$0xff]
        %v3129 = vld [vmem:[%s356 + $0x1748] sm:$0xff]
        %v3130 = vld [vmem:[%s356 + $0x1750] sm:$0xff]
        %v3131 = vld [vmem:[%s356 + $0x1758] sm:$0xff]
        %v3132 = vld [vmem:[%s356 + $0x1760] sm:$0xff]
        %v3133 = vld [vmem:[%s356 + $0x1768] sm:$0xff]
        %v3134 = vld [vmem:[%s356 + $0x1770] sm:$0xff]
        %v3135 = vld [vmem:[%s356 + $0x1778] sm:$0xff]
        %v3136 = vld [vmem:[%s356 + $0x1780] sm:$0xff]
        %v3137 = vld [vmem:[%s356 + $0x1788] sm:$0xff]
        %v3138 = vld [vmem:[%s356 + $0x1790] sm:$0xff]
        %v3139 = vld [vmem:[%s356 + $0x1798] sm:$0xff]
        %v3140 = vld [vmem:[%s356 + $0x17a0] sm:$0xff]
        %v3141 = vld [vmem:[%s356 + $0x17a8] sm:$0xff]
        %v3142 = vld [vmem:[%s356 + $0x17b0] sm:$0xff]
        %v3143 = vld [vmem:[%s356 + $0x17b8] sm:$0xff]
        %v3144 = vld [vmem:[%s356 + $0x17c0] sm:$0xff]
        %v3145 = vld [vmem:[%s356 + $0x17c8] sm:$0xff]
        %v3146 = vld [vmem:[%s356 + $0x17d0] sm:$0xff]
        %v3147 = vld [vmem:[%s356 + $0x17d8] sm:$0xff]
        %v3148 = vld [vmem:[%s356 + $0x17e0] sm:$0xff]
        %v3149 = vld [vmem:[%s356 + $0x17e8] sm:$0xff]
        %v3150 = vld [vmem:[%s356 + $0x17f0] sm:$0xff]
        %v3151 = vld [vmem:[%s356 + $0x17f8] sm:$0xff]
        %v3152 = vld [vmem:[%s356 + $0x1800] sm:$0xff]
        %v3153 = vld [vmem:[%s356 + $0x1808] sm:$0xff]
        %v3154 = vld [vmem:[%s356 + $0x1810] sm:$0xff]
        %v3155 = vld [vmem:[%s356 + $0x1818] sm:$0xff]
        %v3156 = vld [vmem:[%s356 + $0x1820] sm:$0xff]
        %v3157 = vld [vmem:[%s356 + $0x1828] sm:$0xff]
        %v3158 = vld [vmem:[%s356 + $0x1830] sm:$0xff]
        %v3159 = vld [vmem:[%s356 + $0x1838] sm:$0xff]
        %v3160 = vld [vmem:[%s356 + $0x1840] sm:$0xff]
        %v3161 = vld [vmem:[%s356 + $0x1848] sm:$0xff]
        %v3162 = vld [vmem:[%s356 + $0x1850] sm:$0xff]
        %v3163 = vld [vmem:[%s356 + $0x1858] sm:$0xff]
        %v3164 = vld [vmem:[%s356 + $0x1860] sm:$0xff]
        %v3165 = vld [vmem:[%s356 + $0x1868] sm:$0xff]
        %v3166 = vld [vmem:[%s356 + $0x1870] sm:$0xff]
        %v3167 = vld [vmem:[%s356 + $0x1878] sm:$0xff]
        %v3168 = vld [vmem:[%s356 + $0x1880] sm:$0xff]
        %v3169 = vld [vmem:[%s356 + $0x1888] sm:$0xff]
        %v3170 = vld [vmem:[%s356 + $0x1890] sm:$0xff]
        %v3171 = vld [vmem:[%s356 + $0x1898] sm:$0xff]
        %v3172 = vld [vmem:[%s356 + $0x18a0] sm:$0xff]
        %v3173 = vld [vmem:[%s356 + $0x18a8] sm:$0xff]
        %v3174 = vld [vmem:[%s356 + $0x18b0] sm:$0xff]
        %v3175 = vld [vmem:[%s356 + $0x18b8] sm:$0xff]
        %v3176 = vld [vmem:[%s356 + $0x18c0] sm:$0xff]
        %v3177 = vld [vmem:[%s356 + $0x18c8] sm:$0xff]
        %v3178 = vld [vmem:[%s356 + $0x18d0] sm:$0xff]
        %v3179 = vld [vmem:[%s356 + $0x18d8] sm:$0xff]
        %v3180 = vld [vmem:[%s356 + $0x18e0] sm:$0xff]
        %v3181 = vld [vmem:[%s356 + $0x18e8] sm:$0xff]
        %v3182 = vld [vmem:[%s356 + $0x18f0] sm:$0xff]
        %v3183 = vld [vmem:[%s356 + $0x18f8] sm:$0xff]
        %v3184 = vld [vmem:[%s356 + $0x1900] sm:$0xff]
        %v3185 = vld [vmem:[%s356 + $0x1908] sm:$0xff]
        %v3186 = vld [vmem:[%s356 + $0x1910] sm:$0xff]
        %v3187 = vld [vmem:[%s356 + $0x1918] sm:$0xff]
        %v3188 = vld [vmem:[%s356 + $0x1920] sm:$0xff]
        %v3189 = vld [vmem:[%s356 + $0x1928] sm:$0xff]
        %v3190 = vld [vmem:[%s356 + $0x1930] sm:$0xff]
        %v3191 = vld [vmem:[%s356 + $0x1938] sm:$0xff]
        %v3192 = vld [vmem:[%s356 + $0x1940] sm:$0xff]
        %v3193 = vld [vmem:[%s356 + $0x1948] sm:$0xff]
        %v3194 = vld [vmem:[%s356 + $0x1950] sm:$0xff]
        %v3195 = vld [vmem:[%s356 + $0x1958] sm:$0xff]
        %v3196 = vld [vmem:[%s356 + $0x1960] sm:$0xff]
        %v3197 = vld [vmem:[%s356 + $0x1968] sm:$0xff]
        %v3198 = vld [vmem:[%s356 + $0x1970] sm:$0xff]
        %v3199 = vld [vmem:[%s356 + $0x1978] sm:$0xff]
        %v3200 = vld [vmem:[%s356 + $0x1980] sm:$0xff]
        %v3201 = vld [vmem:[%s356 + $0x1988] sm:$0xff]
        %v3202 = vld [vmem:[%s356 + $0x1990] sm:$0xff]
        %v3203 = vld [vmem:[%s356 + $0x1998] sm:$0xff]
        %v3204 = vld [vmem:[%s356 + $0x19a0] sm:$0xff]
        %v3205 = vld [vmem:[%s356 + $0x19a8] sm:$0xff]
        %v3206 = vld [vmem:[%s356 + $0x19b0] sm:$0xff]
        %v3207 = vld [vmem:[%s356 + $0x19b8] sm:$0xff]
        %v3208 = vld [vmem:[%s356 + $0x19c0] sm:$0xff]
        %v3209 = vld [vmem:[%s356 + $0x19c8] sm:$0xff]
        %v3210 = vld [vmem:[%s356 + $0x19d0] sm:$0xff]
        %v3211 = vld [vmem:[%s356 + $0x19d8] sm:$0xff]
        %v3212 = vld [vmem:[%s356 + $0x19e0] sm:$0xff]
        %v3213 = vld [vmem:[%s356 + $0x19e8] sm:$0xff]
        %v3214 = vld [vmem:[%s356 + $0x19f0] sm:$0xff]
        %v3215 = vld [vmem:[%s356 + $0x19f8] sm:$0xff]
        %v3216 = vld [vmem:[%s356 + $0x1a00] sm:$0xff]
        %v3217 = vld [vmem:[%s356 + $0x1a08] sm:$0xff]
        %v3218 = vld [vmem:[%s356 + $0x1a10] sm:$0xff]
        %v3219 = vld [vmem:[%s356 + $0x1a18] sm:$0xff]
        %v3220 = vld [vmem:[%s356 + $0x1a20] sm:$0xff]
        %v3221 = vld [vmem:[%s356 + $0x1a28] sm:$0xff]
        %v3222 = vld [vmem:[%s356 + $0x1a30] sm:$0xff]
        %v3223 = vld [vmem:[%s356 + $0x1a38] sm:$0xff]
        %v3224 = vld [vmem:[%s356 + $0x1a40] sm:$0xff]
        %v3225 = vld [vmem:[%s356 + $0x1a48] sm:$0xff]
        %v3226 = vld [vmem:[%s356 + $0x1a50] sm:$0xff]
        %v3227 = vld [vmem:[%s356 + $0x1a58] sm:$0xff]
        %v3228 = vld [vmem:[%s356 + $0x1a60] sm:$0xff]
        %v3229 = vld [vmem:[%s356 + $0x1a68] sm:$0xff]
        %v3230 = vld [vmem:[%s356 + $0x1a70] sm:$0xff]
        %v3231 = vld [vmem:[%s356 + $0x1a78] sm:$0xff]
        %v3232 = vld [vmem:[%s356 + $0x1a80] sm:$0xff]
        %v3233 = vld [vmem:[%s356 + $0x1a88] sm:$0xff]
        %v3234 = vld [vmem:[%s356 + $0x1a90] sm:$0xff]
        %v3235 = vld [vmem:[%s356 + $0x1a98] sm:$0xff]
        %v3236 = vld [vmem:[%s356 + $0x1aa0] sm:$0xff]
        %v3237 = vld [vmem:[%s356 + $0x1aa8] sm:$0xff]
        %v3238 = vld [vmem:[%s356 + $0x1ab0] sm:$0xff]
        %v3239 = vld [vmem:[%s356 + $0x1ab8] sm:$0xff]
        %v3240 = vld [vmem:[%s356 + $0x1ac0] sm:$0xff]
        %v3241 = vld [vmem:[%s356 + $0x1ac8] sm:$0xff]
        %v3242 = vld [vmem:[%s356 + $0x1ad0] sm:$0xff]
        %v3243 = vld [vmem:[%s356 + $0x1ad8] sm:$0xff]
        %v3244 = vld [vmem:[%s356 + $0x1ae0] sm:$0xff]
        %v3245 = vld [vmem:[%s356 + $0x1ae8] sm:$0xff]
        %v3246 = vld [vmem:[%s356 + $0x1af0] sm:$0xff]
        %v3247 = vld [vmem:[%s356 + $0x1af8] sm:$0xff]
        %v3248 = vld [vmem:[%s356 + $0x1b00] sm:$0xff]
        %v3249 = vld [vmem:[%s356 + $0x1b08] sm:$0xff]
        %v3250 = vld [vmem:[%s356 + $0x1b10] sm:$0xff]
        %v3251 = vld [vmem:[%s356 + $0x1b18] sm:$0xff]
        %v3252 = vld [vmem:[%s356 + $0x1b20] sm:$0xff]
        %v3253 = vld [vmem:[%s356 + $0x1b28] sm:$0xff]
        %v3254 = vld [vmem:[%s356 + $0x1b30] sm:$0xff]
        %v3255 = vld [vmem:[%s356 + $0x1b38] sm:$0xff]
        %v3256 = vld [vmem:[%s356 + $0x1b40] sm:$0xff]
        %v3257 = vld [vmem:[%s356 + $0x1b48] sm:$0xff]
        %v3258 = vld [vmem:[%s356 + $0x1b50] sm:$0xff]
        %v3259 = vld [vmem:[%s356 + $0x1b58] sm:$0xff]
        %v3260 = vld [vmem:[%s356 + $0x1b60] sm:$0xff]
        %v3261 = vld [vmem:[%s356 + $0x1b68] sm:$0xff]
        %v3262 = vld [vmem:[%s356 + $0x1b70] sm:$0xff]
        %v3263 = vld [vmem:[%s356 + $0x1b78] sm:$0xff]
        %v3264 = vld [vmem:[%s356 + $0x1b80] sm:$0xff]
        %v3265 = vld [vmem:[%s356 + $0x1b88] sm:$0xff]
        %v3266 = vld [vmem:[%s356 + $0x1b90] sm:$0xff]
        %v3267 = vld [vmem:[%s356 + $0x1b98] sm:$0xff]
        %v3268 = vld [vmem:[%s356 + $0x1ba0] sm:$0xff]
        %v3269 = vld [vmem:[%s356 + $0x1ba8] sm:$0xff]
        %v3270 = vld [vmem:[%s356 + $0x1bb0] sm:$0xff]
        %v3271 = vld [vmem:[%s356 + $0x1bb8] sm:$0xff]
        %v3272 = vld [vmem:[%s356 + $0x1bc0] sm:$0xff]
        %v3273 = vld [vmem:[%s356 + $0x1bc8] sm:$0xff]
        %v3274 = vld [vmem:[%s356 + $0x1bd0] sm:$0xff]
        %v3275 = vld [vmem:[%s356 + $0x1bd8] sm:$0xff]
        %v3276 = vld [vmem:[%s356 + $0x1be0] sm:$0xff]
        %v3277 = vld [vmem:[%s356 + $0x1be8] sm:$0xff]
        %v3278 = vld [vmem:[%s356 + $0x1bf0] sm:$0xff]
        %v3279 = vld [vmem:[%s356 + $0x1bf8] sm:$0xff]
        %v3280 = vld [vmem:[%s356 + $0x1c00] sm:$0xff]
        %v3281 = vld [vmem:[%s356 + $0x1c08] sm:$0xff]
        %v3282 = vld [vmem:[%s356 + $0x1c10] sm:$0xff]
        %v3283 = vld [vmem:[%s356 + $0x1c18] sm:$0xff]
        %v3284 = vld [vmem:[%s356 + $0x1c20] sm:$0xff]
        %v3285 = vld [vmem:[%s356 + $0x1c28] sm:$0xff]
        %v3286 = vld [vmem:[%s356 + $0x1c30] sm:$0xff]
        %v3287 = vld [vmem:[%s356 + $0x1c38] sm:$0xff]
        %v3288 = vld [vmem:[%s356 + $0x1c40] sm:$0xff]
        %v3289 = vld [vmem:[%s356 + $0x1c48] sm:$0xff]
        %v3290 = vld [vmem:[%s356 + $0x1c50] sm:$0xff]
        %v3291 = vld [vmem:[%s356 + $0x1c58] sm:$0xff]
        %v3292 = vld [vmem:[%s356 + $0x1c60] sm:$0xff]
        %v3293 = vld [vmem:[%s356 + $0x1c68] sm:$0xff]
        %v3294 = vld [vmem:[%s356 + $0x1c70] sm:$0xff]
        %v3295 = vld [vmem:[%s356 + $0x1c78] sm:$0xff]
        %v3296 = vld [vmem:[%s356 + $0x1c80] sm:$0xff]
        %v3297 = vld [vmem:[%s356 + $0x1c88] sm:$0xff]
        %v3298 = vld [vmem:[%s356 + $0x1c90] sm:$0xff]
        %v3299 = vld [vmem:[%s356 + $0x1c98] sm:$0xff]
        %v3300 = vld [vmem:[%s356 + $0x1ca0] sm:$0xff]
        %v3301 = vld [vmem:[%s356 + $0x1ca8] sm:$0xff]
        %v3302 = vld [vmem:[%s356 + $0x1cb0] sm:$0xff]
        %v3303 = vld [vmem:[%s356 + $0x1cb8] sm:$0xff]
        %v3304 = vld [vmem:[%s356 + $0x1cc0] sm:$0xff]
        %v3305 = vld [vmem:[%s356 + $0x1cc8] sm:$0xff]
        %v3306 = vld [vmem:[%s356 + $0x1cd0] sm:$0xff]
        %v3307 = vld [vmem:[%s356 + $0x1cd8] sm:$0xff]
        %v3308 = vld [vmem:[%s356 + $0x1ce0] sm:$0xff]
        %v3309 = vld [vmem:[%s356 + $0x1ce8] sm:$0xff]
        %v3310 = vld [vmem:[%s356 + $0x1cf0] sm:$0xff]
        %v3311 = vld [vmem:[%s356 + $0x1cf8] sm:$0xff]
        %v3312 = vld [vmem:[%s356 + $0x1d00] sm:$0xff]
        %v3313 = vld [vmem:[%s356 + $0x1d08] sm:$0xff]
        %v3314 = vld [vmem:[%s356 + $0x1d10] sm:$0xff]
        %v3315 = vld [vmem:[%s356 + $0x1d18] sm:$0xff]
        %v3316 = vld [vmem:[%s356 + $0x1d20] sm:$0xff]
        %v3317 = vld [vmem:[%s356 + $0x1d28] sm:$0xff]
        %v3318 = vld [vmem:[%s356 + $0x1d30] sm:$0xff]
        %v3319 = vld [vmem:[%s356 + $0x1d38] sm:$0xff]
        %v3320 = vld [vmem:[%s356 + $0x1d40] sm:$0xff]
        %v3321 = vld [vmem:[%s356 + $0x1d48] sm:$0xff]
        %v3322 = vld [vmem:[%s356 + $0x1d50] sm:$0xff]
        %v3323 = vld [vmem:[%s356 + $0x1d58] sm:$0xff]
        %v3324 = vld [vmem:[%s356 + $0x1d60] sm:$0xff]
        %v3325 = vld [vmem:[%s356 + $0x1d68] sm:$0xff]
        %v3326 = vld [vmem:[%s356 + $0x1d70] sm:$0xff]
        %v3327 = vld [vmem:[%s356 + $0x1d78] sm:$0xff]
        %v3328 = vld [vmem:[%s356 + $0x1d80] sm:$0xff]
        %v3329 = vld [vmem:[%s356 + $0x1d88] sm:$0xff]
        %v3330 = vld [vmem:[%s356 + $0x1d90] sm:$0xff]
        %v3331 = vld [vmem:[%s356 + $0x1d98] sm:$0xff]
        %v3332 = vld [vmem:[%s356 + $0x1da0] sm:$0xff]
        %v3333 = vld [vmem:[%s356 + $0x1da8] sm:$0xff]
        %v3334 = vld [vmem:[%s356 + $0x1db0] sm:$0xff]
        %v3335 = vld [vmem:[%s356 + $0x1db8] sm:$0xff]
        %v3336 = vld [vmem:[%s356 + $0x1dc0] sm:$0xff]
        %v3337 = vld [vmem:[%s356 + $0x1dc8] sm:$0xff]
        %v3338 = vld [vmem:[%s356 + $0x1dd0] sm:$0xff]
        %v3339 = vld [vmem:[%s356 + $0x1dd8] sm:$0xff]
        %v3340 = vld [vmem:[%s356 + $0x1de0] sm:$0xff]
        %v3341 = vld [vmem:[%s356 + $0x1de8] sm:$0xff]
        %v3342 = vld [vmem:[%s356 + $0x1df0] sm:$0xff]
        %v3343 = vld [vmem:[%s356 + $0x1df8] sm:$0xff]
        %v3344 = vld [vmem:[%s356 + $0x1e00] sm:$0xff]
        %v3345 = vld [vmem:[%s356 + $0x1e08] sm:$0xff]
        %v3346 = vld [vmem:[%s356 + $0x1e10] sm:$0xff]
        %v3347 = vld [vmem:[%s356 + $0x1e18] sm:$0xff]
        %v3348 = vld [vmem:[%s356 + $0x1e20] sm:$0xff]
        %v3349 = vld [vmem:[%s356 + $0x1e28] sm:$0xff]
        %v3350 = vld [vmem:[%s356 + $0x1e30] sm:$0xff]
        %v3351 = vld [vmem:[%s356 + $0x1e38] sm:$0xff]
        %v3352 = vld [vmem:[%s356 + $0x1e40] sm:$0xff]
        %v3353 = vld [vmem:[%s356 + $0x1e48] sm:$0xff]
        %v3354 = vld [vmem:[%s356 + $0x1e50] sm:$0xff]
        %v3355 = vld [vmem:[%s356 + $0x1e58] sm:$0xff]
        %v3356 = vld [vmem:[%s356 + $0x1e60] sm:$0xff]
        %v3357 = vld [vmem:[%s356 + $0x1e68] sm:$0xff]
        %v3358 = vld [vmem:[%s356 + $0x1e70] sm:$0xff]
        %v3359 = vld [vmem:[%s356 + $0x1e78] sm:$0xff]
        %v3360 = vld [vmem:[%s356 + $0x1e80] sm:$0xff]
        %v3361 = vld [vmem:[%s356 + $0x1e88] sm:$0xff]
        %v3362 = vld [vmem:[%s356 + $0x1e90] sm:$0xff]
        %v3363 = vld [vmem:[%s356 + $0x1e98] sm:$0xff]
        %v3364 = vld [vmem:[%s356 + $0x1ea0] sm:$0xff]
        %v3365 = vld [vmem:[%s356 + $0x1ea8] sm:$0xff]
        %v3366 = vld [vmem:[%s356 + $0x1eb0] sm:$0xff]
        %v3367 = vld [vmem:[%s356 + $0x1eb8] sm:$0xff]
        %v3368 = vld [vmem:[%s356 + $0x1ec0] sm:$0xff]
        %v3369 = vld [vmem:[%s356 + $0x1ec8] sm:$0xff]
        %v3370 = vld [vmem:[%s356 + $0x1ed0] sm:$0xff]
        %v3371 = vld [vmem:[%s356 + $0x1ed8] sm:$0xff]
        %v3372 = vld [vmem:[%s356 + $0x1ee0] sm:$0xff]
        %v3373 = vld [vmem:[%s356 + $0x1ee8] sm:$0xff]
        %v3374 = vld [vmem:[%s356 + $0x1ef0] sm:$0xff]
        %v3375 = vld [vmem:[%s356 + $0x1ef8] sm:$0xff]
        %v3376 = vld [vmem:[%s356 + $0x1f00] sm:$0xff]
        %v3377 = vld [vmem:[%s356 + $0x1f08] sm:$0xff]
        %v3378 = vld [vmem:[%s356 + $0x1f10] sm:$0xff]
        %v3379 = vld [vmem:[%s356 + $0x1f18] sm:$0xff]
        %v3380 = vld [vmem:[%s356 + $0x1f20] sm:$0xff]
        %v3381 = vld [vmem:[%s356 + $0x1f28] sm:$0xff]
        %v3382 = vld [vmem:[%s356 + $0x1f30] sm:$0xff]
        %v3383 = vld [vmem:[%s356 + $0x1f38] sm:$0xff]
        %v3384 = vld [vmem:[%s356 + $0x1f40] sm:$0xff]
        %v3385 = vld [vmem:[%s356 + $0x1f48] sm:$0xff]
        %v3386 = vld [vmem:[%s356 + $0x1f50] sm:$0xff]
        %v3387 = vld [vmem:[%s356 + $0x1f58] sm:$0xff]
        %v3388 = vld [vmem:[%s356 + $0x1f60] sm:$0xff]
        %v3389 = vld [vmem:[%s356 + $0x1f68] sm:$0xff]
        %v3390 = vld [vmem:[%s356 + $0x1f70] sm:$0xff]
        %v3391 = vld [vmem:[%s356 + $0x1f78] sm:$0xff]
        %v3392 = vld [vmem:[%s356 + $0x1f80] sm:$0xff]
        %v3393 = vld [vmem:[%s356 + $0x1f88] sm:$0xff]
        %v3394 = vld [vmem:[%s356 + $0x1f90] sm:$0xff]
        %v3395 = vld [vmem:[%s356 + $0x1f98] sm:$0xff]
        %v3396 = vld [vmem:[%s356 + $0x1fa0] sm:$0xff]
        %v3397 = vld [vmem:[%s356 + $0x1fa8] sm:$0xff]
        %v3398 = vld [vmem:[%s356 + $0x1fb0] sm:$0xff]
        %v3399 = vld [vmem:[%s356 + $0x1fb8] sm:$0xff]
        %v3400 = vld [vmem:[%s356 + $0x1fc0] sm:$0xff]
        %v3401 = vld [vmem:[%s356 + $0x1fc8] sm:$0xff]
        %v3402 = vld [vmem:[%s356 + $0x1fd0] sm:$0xff]
        %v3403 = vld [vmem:[%s356 + $0x1fd8] sm:$0xff]
        %v3404 = vld [vmem:[%s356 + $0x1fe0] sm:$0xff]
        %v3405 = vld [vmem:[%s356 + $0x1fe8] sm:$0xff]
        %v3406 = vld [vmem:[%s356 + $0x1ff0] sm:$0xff]
        %v3407 = vld [vmem:[%s356 + $0x1ff8] sm:$0xff]
        %v3408 = vld [vmem:[%s356 + $0x2000] sm:$0xff]
        %v3409 = vld [vmem:[%s356 + $0x2008] sm:$0xff]
        %v3410 = vld [vmem:[%s356 + $0x2010] sm:$0xff]
        %v3411 = vld [vmem:[%s356 + $0x2018] sm:$0xff]
        %v3412 = vld [vmem:[%s356 + $0x2020] sm:$0xff]
        %v3413 = vld [vmem:[%s356 + $0x2028] sm:$0xff]
        %v3414 = vld [vmem:[%s356 + $0x2030] sm:$0xff]
        %v3415 = vld [vmem:[%s356 + $0x2038] sm:$0xff]
        %v3416 = vld [vmem:[%s356 + $0x2040] sm:$0xff]
        %v3417 = vld [vmem:[%s356 + $0x2048] sm:$0xff]
        %v3418 = vld [vmem:[%s356 + $0x2050] sm:$0xff]
        %v3419 = vld [vmem:[%s356 + $0x2058] sm:$0xff]
        %v3420 = vld [vmem:[%s356 + $0x2060] sm:$0xff]
        %v3421 = vld [vmem:[%s356 + $0x2068] sm:$0xff]
        %v3422 = vld [vmem:[%s356 + $0x2070] sm:$0xff]
        %v3423 = vld [vmem:[%s356 + $0x2078] sm:$0xff]
        %v3424 = vld [vmem:[%s356 + $0x2080] sm:$0xff]
        %v3425 = vld [vmem:[%s356 + $0x2088] sm:$0xff]
        %v3426 = vld [vmem:[%s356 + $0x2090] sm:$0xff]
        %v3427 = vld [vmem:[%s356 + $0x2098] sm:$0xff]
        %v3428 = vld [vmem:[%s356 + $0x20a0] sm:$0xff]
        %v3429 = vld [vmem:[%s356 + $0x20a8] sm:$0xff]
        %v3430 = vld [vmem:[%s356 + $0x20b0] sm:$0xff]
        %v3431 = vld [vmem:[%s356 + $0x20b8] sm:$0xff]
        %v3432 = vld [vmem:[%s356 + $0x20c0] sm:$0xff]
        %v3433 = vld [vmem:[%s356 + $0x20c8] sm:$0xff]
        %v3434 = vld [vmem:[%s356 + $0x20d0] sm:$0xff]
        %v3435 = vld [vmem:[%s356 + $0x20d8] sm:$0xff]
        %v3436 = vld [vmem:[%s356 + $0x20e0] sm:$0xff]
        %v3437 = vld [vmem:[%s356 + $0x20e8] sm:$0xff]
        %v3438 = vld [vmem:[%s356 + $0x20f0] sm:$0xff]
        %v3439 = vld [vmem:[%s356 + $0x20f8] sm:$0xff]
        %v3440 = vld [vmem:[%s356 + $0x2100] sm:$0xff]
        %v3441 = vld [vmem:[%s356 + $0x2108] sm:$0xff]
        %v3442 = vld [vmem:[%s356 + $0x2110] sm:$0xff]
        %v3443 = vld [vmem:[%s356 + $0x2118] sm:$0xff]
        %v3444 = vld [vmem:[%s356 + $0x2120] sm:$0xff]
        %v3445 = vld [vmem:[%s356 + $0x2128] sm:$0xff]
        %v3446 = vld [vmem:[%s356 + $0x2130] sm:$0xff]
        %v3447 = vld [vmem:[%s356 + $0x2138] sm:$0xff]
        %v3448 = vld [vmem:[%s356 + $0x2140] sm:$0xff]
        %v3449 = vld [vmem:[%s356 + $0x2148] sm:$0xff]
        %v3450 = vld [vmem:[%s356 + $0x2150] sm:$0xff]
        %v3451 = vld [vmem:[%s356 + $0x2158] sm:$0xff]
        %v3452 = vld [vmem:[%s356 + $0x2160] sm:$0xff]
        %v3453 = vld [vmem:[%s356 + $0x2168] sm:$0xff]
        %v3454 = vld [vmem:[%s356 + $0x2170] sm:$0xff]
        %v3455 = vld [vmem:[%s356 + $0x2178] sm:$0xff]
        %v3456 = vld [vmem:[%s356 + $0x2180] sm:$0xff]
        %v3457 = vld [vmem:[%s356 + $0x2188] sm:$0xff]
        %v3458 = vld [vmem:[%s356 + $0x2190] sm:$0xff]
        %v3459 = vld [vmem:[%s356 + $0x2198] sm:$0xff]
        %v3460 = vld [vmem:[%s356 + $0x21a0] sm:$0xff]
        %v3461 = vld [vmem:[%s356 + $0x21a8] sm:$0xff]
        %v3462 = vld [vmem:[%s356 + $0x21b0] sm:$0xff]
        %v3463 = vld [vmem:[%s356 + $0x21b8] sm:$0xff]
        %v3464 = vld [vmem:[%s356 + $0x21c0] sm:$0xff]
        %v3465 = vld [vmem:[%s356 + $0x21c8] sm:$0xff]
        %v3466 = vld [vmem:[%s356 + $0x21d0] sm:$0xff]
        %v3467 = vld [vmem:[%s356 + $0x21d8] sm:$0xff]
        %v3468 = vld [vmem:[%s356 + $0x21e0] sm:$0xff]
        %v3469 = vld [vmem:[%s356 + $0x21e8] sm:$0xff]
        %v3470 = vld [vmem:[%s356 + $0x21f0] sm:$0xff]
        %v3471 = vld [vmem:[%s356 + $0x21f8] sm:$0xff]
        %v3472 = vld [vmem:[%s356 + $0x2200] sm:$0xff]
        %v3473 = vld [vmem:[%s356 + $0x2208] sm:$0xff]
        %v3474 = vld [vmem:[%s356 + $0x2210] sm:$0xff]
        %v3475 = vld [vmem:[%s356 + $0x2218] sm:$0xff]
        %v3476 = vld [vmem:[%s356 + $0x2220] sm:$0xff]
        %v3477 = vld [vmem:[%s356 + $0x2228] sm:$0xff]
        %v3478 = vld [vmem:[%s356 + $0x2230] sm:$0xff]
        %v3479 = vld [vmem:[%s356 + $0x2238] sm:$0xff]
        %v3480 = vld [vmem:[%s356 + $0x2240] sm:$0xff]
        %v3481 = vld [vmem:[%s356 + $0x2248] sm:$0xff]
        %v3482 = vld [vmem:[%s356 + $0x2250] sm:$0xff]
        %v3483 = vld [vmem:[%s356 + $0x2258] sm:$0xff]
        %v3484 = vld [vmem:[%s356 + $0x2260] sm:$0xff]
        %v3485 = vld [vmem:[%s356 + $0x2268] sm:$0xff]
        %v3486 = vld [vmem:[%s356 + $0x2270] sm:$0xff]
        %v3487 = vld [vmem:[%s356 + $0x2278] sm:$0xff]
        %v3488 = vld [vmem:[%s356 + $0x2280] sm:$0xff]
        %v3489 = vld [vmem:[%s356 + $0x2288] sm:$0xff]
        %v3490 = vld [vmem:[%s356 + $0x2290] sm:$0xff]
        %v3491 = vld [vmem:[%s356 + $0x2298] sm:$0xff]
        %v3492 = vld [vmem:[%s356 + $0x22a0] sm:$0xff]
        %v3493 = vld [vmem:[%s356 + $0x22a8] sm:$0xff]
        %v3494 = vld [vmem:[%s356 + $0x22b0] sm:$0xff]
        %v3495 = vld [vmem:[%s356 + $0x22b8] sm:$0xff]
        %v3496 = vld [vmem:[%s356 + $0x22c0] sm:$0xff]
        %v3497 = vld [vmem:[%s356 + $0x22c8] sm:$0xff]
        %v3498 = vld [vmem:[%s356 + $0x22d0] sm:$0xff]
        %v3499 = vld [vmem:[%s356 + $0x22d8] sm:$0xff]
        %v3500 = vld [vmem:[%s356 + $0x22e0] sm:$0xff]
        %v3501 = vld [vmem:[%s356 + $0x22e8] sm:$0xff]
        %v3502 = vld [vmem:[%s356 + $0x22f0] sm:$0xff]
        %v3503 = vld [vmem:[%s356 + $0x22f8] sm:$0xff]
        %v3504 = vld [vmem:[%s356 + $0x2300] sm:$0xff]
        %v3505 = vld [vmem:[%s356 + $0x2308] sm:$0xff]
        %v3506 = vld [vmem:[%s356 + $0x2310] sm:$0xff]
        %v3507 = vld [vmem:[%s356 + $0x2318] sm:$0xff]
        %v3508 = vld [vmem:[%s356 + $0x2320] sm:$0xff]
        %v3509 = vld [vmem:[%s356 + $0x2328] sm:$0xff]
        %v3510 = vld [vmem:[%s356 + $0x2330] sm:$0xff]
        %v3511 = vld [vmem:[%s356 + $0x2338] sm:$0xff]
        %v3512 = vld [vmem:[%s356 + $0x2340] sm:$0xff]
        %v3513 = vld [vmem:[%s356 + $0x2348] sm:$0xff]
        %v3514 = vld [vmem:[%s356 + $0x2350] sm:$0xff]
        %v3515 = vld [vmem:[%s356 + $0x2358] sm:$0xff]
        %v3516 = vld [vmem:[%s356 + $0x2360] sm:$0xff]
        %v3517 = vld [vmem:[%s356 + $0x2368] sm:$0xff]
        %v3518 = vld [vmem:[%s356 + $0x2370] sm:$0xff]
        %v3519 = vld [vmem:[%s356 + $0x2378] sm:$0xff]
        %v3520 = vld [vmem:[%s356 + $0x2380] sm:$0xff]
        %v3521 = vld [vmem:[%s356 + $0x2388] sm:$0xff]
        %v3522 = vld [vmem:[%s356 + $0x2390] sm:$0xff]
        %v3523 = vld [vmem:[%s356 + $0x2398] sm:$0xff]
        %v3524 = vld [vmem:[%s356 + $0x23a0] sm:$0xff]
        %v3525 = vld [vmem:[%s356 + $0x23a8] sm:$0xff]
        %v3526 = vld [vmem:[%s356 + $0x23b0] sm:$0xff]
        %v3527 = vld [vmem:[%s356 + $0x23b8] sm:$0xff]
        %v3528 = vld [vmem:[%s356 + $0x23c0] sm:$0xff]
        %v3529 = vld [vmem:[%s356 + $0x23c8] sm:$0xff]
        %v3530 = vld [vmem:[%s356 + $0x23d0] sm:$0xff]
        %v3531 = vld [vmem:[%s356 + $0x23d8] sm:$0xff]
        %v3532 = vld [vmem:[%s356 + $0x23e0] sm:$0xff]
        %v3533 = vld [vmem:[%s356 + $0x23e8] sm:$0xff]
        %v3534 = vld [vmem:[%s356 + $0x23f0] sm:$0xff]
        %v3535 = vld [vmem:[%s356 + $0x23f8] sm:$0xff]
        %v3536 = vld [vmem:[%s356 + $0x2400] sm:$0xff]
        %v3537 = vld [vmem:[%s356 + $0x2408] sm:$0xff]
        %v3538 = vld [vmem:[%s356 + $0x2410] sm:$0xff]
        %v3539 = vld [vmem:[%s356 + $0x2418] sm:$0xff]
        %v3540 = vld [vmem:[%s356 + $0x2420] sm:$0xff]
        %v3541 = vld [vmem:[%s356 + $0x2428] sm:$0xff]
        %v3542 = vld [vmem:[%s356 + $0x2430] sm:$0xff]
        %v3543 = vld [vmem:[%s356 + $0x2438] sm:$0xff]
        %v3544 = vld [vmem:[%s356 + $0x2440] sm:$0xff]
        %v3545 = vld [vmem:[%s356 + $0x2448] sm:$0xff]
        %v3546 = vld [vmem:[%s356 + $0x2450] sm:$0xff]
        %v3547 = vld [vmem:[%s356 + $0x2458] sm:$0xff]
        %v3548 = vld [vmem:[%s356 + $0x2460] sm:$0xff]
        %v3549 = vld [vmem:[%s356 + $0x2468] sm:$0xff]
        %v3550 = vld [vmem:[%s356 + $0x2470] sm:$0xff]
        %v3551 = vld [vmem:[%s356 + $0x2478] sm:$0xff]
        %v3552 = vld [vmem:[%s356 + $0x2480] sm:$0xff]
        %v3553 = vld [vmem:[%s356 + $0x2488] sm:$0xff]
        %v3554 = vld [vmem:[%s356 + $0x2490] sm:$0xff]
        %v3555 = vld [vmem:[%s356 + $0x2498] sm:$0xff]
        %v3556 = vld [vmem:[%s356 + $0x24a0] sm:$0xff]
        %v3557 = vld [vmem:[%s356 + $0x24a8] sm:$0xff]
        %v3558 = vld [vmem:[%s356 + $0x24b0] sm:$0xff]
        %v3559 = vld [vmem:[%s356 + $0x24b8] sm:$0xff]
        %v3560 = vld [vmem:[%s356 + $0x24c0] sm:$0xff]
        %v3561 = vld [vmem:[%s356 + $0x24c8] sm:$0xff]
        %v3562 = vld [vmem:[%s356 + $0x24d0] sm:$0xff]
        %v3563 = vld [vmem:[%s356 + $0x24d8] sm:$0xff]
        %v3564 = vld [vmem:[%s356 + $0x24e0] sm:$0xff]
        %v3565 = vld [vmem:[%s356 + $0x24e8] sm:$0xff]
        %v3566 = vld [vmem:[%s356 + $0x24f0] sm:$0xff]
        %v3567 = vld [vmem:[%s356 + $0x24f8] sm:$0xff]
        %v3568 = vld [vmem:[%s356 + $0x2500] sm:$0xff]
        %v3569 = vld [vmem:[%s356 + $0x2508] sm:$0xff]
        %v3570 = vld [vmem:[%s356 + $0x2510] sm:$0xff]
        %v3571 = vld [vmem:[%s356 + $0x2518] sm:$0xff]
        %v3572 = vld [vmem:[%s356 + $0x2520] sm:$0xff]
        %v3573 = vld [vmem:[%s356 + $0x2528] sm:$0xff]
        %v3574 = vld [vmem:[%s356 + $0x2530] sm:$0xff]
        %v3575 = vld [vmem:[%s356 + $0x2538] sm:$0xff]
        %v3576 = vld [vmem:[%s356 + $0x2540] sm:$0xff]
        %v3577 = vld [vmem:[%s356 + $0x2548] sm:$0xff]
        %v3578 = vld [vmem:[%s356 + $0x2550] sm:$0xff]
        %v3579 = vld [vmem:[%s356 + $0x2558] sm:$0xff]
        %v3580 = vld [vmem:[%s356 + $0x2560] sm:$0xff]
        %v3581 = vld [vmem:[%s356 + $0x2568] sm:$0xff]
        %v3582 = vld [vmem:[%s356 + $0x2570] sm:$0xff]
        %v3583 = vld [vmem:[%s356 + $0x2578] sm:$0xff]
        %v3584 = vld [vmem:[%s356 + $0x2580] sm:$0xff]
        %v3585 = vld [vmem:[%s356 + $0x2588] sm:$0xff]
        %v3586 = vld [vmem:[%s356 + $0x2590] sm:$0xff]
        %v3587 = vld [vmem:[%s356 + $0x2598] sm:$0xff]
        %v3588 = vld [vmem:[%s356 + $0x25a0] sm:$0xff]
        %v3589 = vld [vmem:[%s356 + $0x25a8] sm:$0xff]
        %v3590 = vld [vmem:[%s356 + $0x25b0] sm:$0xff]
        %v3591 = vld [vmem:[%s356 + $0x25b8] sm:$0xff]
        %v3592 = vld [vmem:[%s356 + $0x25c0] sm:$0xff]
        %v3593 = vld [vmem:[%s356 + $0x25c8] sm:$0xff]
        %v3594 = vld [vmem:[%s356 + $0x25d0] sm:$0xff]
        %v3595 = vld [vmem:[%s356 + $0x25d8] sm:$0xff]
        %v3596 = vld [vmem:[%s356 + $0x25e0] sm:$0xff]
        %v3597 = vld [vmem:[%s356 + $0x25e8] sm:$0xff]
        %v3598 = vld [vmem:[%s356 + $0x25f0] sm:$0xff]
        %v3599 = vld [vmem:[%s356 + $0x25f8] sm:$0xff]
        %v3600 = vld [vmem:[%s356 + $0x2600] sm:$0xff]
        %v3601 = vld [vmem:[%s356 + $0x2608] sm:$0xff]
        %v3602 = vld [vmem:[%s356 + $0x2610] sm:$0xff]
        %v3603 = vld [vmem:[%s356 + $0x2618] sm:$0xff]
        %v3604 = vld [vmem:[%s356 + $0x2620] sm:$0xff]
        %v3605 = vld [vmem:[%s356 + $0x2628] sm:$0xff]
        %v3606 = vld [vmem:[%s356 + $0x2630] sm:$0xff]
        %v3607 = vld [vmem:[%s356 + $0x2638] sm:$0xff]
        %v3608 = vld [vmem:[%s356 + $0x2640] sm:$0xff]
        %v3609 = vld [vmem:[%s356 + $0x2648] sm:$0xff]
        %v3610 = vld [vmem:[%s356 + $0x2650] sm:$0xff]
        %v3611 = vld [vmem:[%s356 + $0x2658] sm:$0xff]
        %v3612 = vld [vmem:[%s356 + $0x2660] sm:$0xff]
        %v3613 = vld [vmem:[%s356 + $0x2668] sm:$0xff]
        %v3614 = vld [vmem:[%s356 + $0x2670] sm:$0xff]
        %v3615 = vld [vmem:[%s356 + $0x2678] sm:$0xff]
        %v3616 = vld [vmem:[%s356 + $0x2680] sm:$0xff]
        %v3617 = vld [vmem:[%s356 + $0x2688] sm:$0xff]
        %v3618 = vld [vmem:[%s356 + $0x2690] sm:$0xff]
        %v3619 = vld [vmem:[%s356 + $0x2698] sm:$0xff]
        %v3620 = vld [vmem:[%s356 + $0x26a0] sm:$0xff]
        %v3621 = vld [vmem:[%s356 + $0x26a8] sm:$0xff]
        %v3622 = vld [vmem:[%s356 + $0x26b0] sm:$0xff]
        %v3623 = vld [vmem:[%s356 + $0x26b8] sm:$0xff]
        %v3624 = vld [vmem:[%s356 + $0x26c0] sm:$0xff]
        %v3625 = vld [vmem:[%s356 + $0x26c8] sm:$0xff]
        %v3626 = vld [vmem:[%s356 + $0x26d0] sm:$0xff]
        %v3627 = vld [vmem:[%s356 + $0x26d8] sm:$0xff]
        %v3628 = vld [vmem:[%s356 + $0x26e0] sm:$0xff]
        %v3629 = vld [vmem:[%s356 + $0x26e8] sm:$0xff]
        %v3630 = vld [vmem:[%s356 + $0x26f0] sm:$0xff]
        %v3631 = vld [vmem:[%s356 + $0x26f8] sm:$0xff]
        %v3632 = vld [vmem:[%s356 + $0x2700] sm:$0xff]
        %v3633 = vld [vmem:[%s356 + $0x2708] sm:$0xff]
        %v3634 = vld [vmem:[%s356 + $0x2710] sm:$0xff]
        %v3635 = vld [vmem:[%s356 + $0x2718] sm:$0xff]
        %v3636 = vld [vmem:[%s356 + $0x2720] sm:$0xff]
        %v3637 = vld [vmem:[%s356 + $0x2728] sm:$0xff]
        %v3638 = vld [vmem:[%s356 + $0x2730] sm:$0xff]
        %v3639 = vld [vmem:[%s356 + $0x2738] sm:$0xff]
        %v3640 = vld [vmem:[%s356 + $0x2740] sm:$0xff]
        %v3641 = vld [vmem:[%s356 + $0x2748] sm:$0xff]
        %v3642 = vld [vmem:[%s356 + $0x2750] sm:$0xff]
        %v3643 = vld [vmem:[%s356 + $0x2758] sm:$0xff]
        %v3644 = vld [vmem:[%s356 + $0x2760] sm:$0xff]
        %v3645 = vld [vmem:[%s356 + $0x2768] sm:$0xff]
        %v3646 = vld [vmem:[%s356 + $0x2770] sm:$0xff]
        %v3647 = vld [vmem:[%s356 + $0x2778] sm:$0xff]
        %v3648 = vld [vmem:[%s356 + $0x2780] sm:$0xff]
        %v3649 = vld [vmem:[%s356 + $0x2788] sm:$0xff]
        %v3650 = vld [vmem:[%s356 + $0x2790] sm:$0xff]
        %v3651 = vld [vmem:[%s356 + $0x2798] sm:$0xff]
        %v3652 = vld [vmem:[%s356 + $0x27a0] sm:$0xff]
        %v3653 = vld [vmem:[%s356 + $0x27a8] sm:$0xff]
        %v3654 = vld [vmem:[%s356 + $0x27b0] sm:$0xff]
        %v3655 = vld [vmem:[%s356 + $0x27b8] sm:$0xff]
        %v3656 = vld [vmem:[%s356 + $0x27c0] sm:$0xff]
        %v3657 = vld [vmem:[%s356 + $0x27c8] sm:$0xff]
        %v3658 = vld [vmem:[%s356 + $0x27d0] sm:$0xff]
        %v3659 = vld [vmem:[%s356 + $0x27d8] sm:$0xff]
        %v3660 = vld [vmem:[%s356 + $0x27e0] sm:$0xff]
        %v3661 = vld [vmem:[%s356 + $0x27e8] sm:$0xff]
        %v3662 = vld [vmem:[%s356 + $0x27f0] sm:$0xff]
        %v3663 = vld [vmem:[%s356 + $0x27f8] sm:$0xff]
        %v3664 = vld [vmem:[%s365] sm:$0xff]
        %v3665 = vld [vmem:[%s365 + $0x8] sm:$0xff]
        %v3666 = vld [vmem:[%s365 + $0x10] sm:$0xf]
        %v3670 = vlaneseq
        %v3671 = vshrl.u32 %v3670, 7
        %v3672 = vsub.s32 0, %v3671
        %v3673 = vrot.slane %v3664, %v3672
        %v3674 = vlaneseq
        %v3675 = vshrl.u32 %v3674, 7
        %v3676 = vsub.s32 1, %v3675
        %v3677 = vrot.slane %v3664, %v3676
        %v3678 = vlaneseq
        %v3679 = vshrl.u32 %v3678, 7
        %v3680 = vsub.s32 2, %v3679
        %v3681 = vrot.slane %v3664, %v3680
        %v3682 = vlaneseq
        %v3683 = vshrl.u32 %v3682, 7
        %v3684 = vsub.s32 3, %v3683
        %v3685 = vrot.slane %v3664, %v3684
        %v3686 = vlaneseq
        %v3687 = vshrl.u32 %v3686, 7
        %v3688 = vsub.s32 4, %v3687
        %v3689 = vrot.slane %v3664, %v3688
        %v3690 = vlaneseq
        %v3691 = vshrl.u32 %v3690, 7
        %v3692 = vsub.s32 5, %v3691
        %v3693 = vrot.slane %v3664, %v3692
        %v3694 = vlaneseq
        %v3695 = vshrl.u32 %v3694, 7
        %v3696 = vsub.s32 6, %v3695
        %v3697 = vrot.slane %v3664, %v3696
        %v3698 = vlaneseq
        %v3699 = vshrl.u32 %v3698, 7
        %v3700 = vsub.s32 7, %v3699
        %v3701 = vrot.slane %v3664, %v3700
        %v3702 = vlaneseq
        %v3703 = vshrl.u32 %v3702, 7
        %v3704 = vsub.s32 0, %v3703
        %v3705 = vrot.slane %v3665, %v3704
        %v3706 = vlaneseq
        %v3707 = vshrl.u32 %v3706, 7
        %v3708 = vsub.s32 1, %v3707
        %v3709 = vrot.slane %v3665, %v3708
        %v3710 = vlaneseq
        %v3711 = vshrl.u32 %v3710, 7
        %v3712 = vsub.s32 2, %v3711
        %v3713 = vrot.slane %v3665, %v3712
        %v3714 = vlaneseq
        %v3715 = vshrl.u32 %v3714, 7
        %v3716 = vsub.s32 3, %v3715
        %v3717 = vrot.slane %v3665, %v3716
        %v3718 = vlaneseq
        %v3719 = vshrl.u32 %v3718, 7
        %v3720 = vsub.s32 4, %v3719
        %v3721 = vrot.slane %v3665, %v3720
        %v3722 = vlaneseq
        %v3723 = vshrl.u32 %v3722, 7
        %v3724 = vsub.s32 5, %v3723
        %v3725 = vrot.slane %v3665, %v3724
        %v3726 = vlaneseq
        %v3727 = vshrl.u32 %v3726, 7
        %v3728 = vsub.s32 6, %v3727
        %v3729 = vrot.slane %v3665, %v3728
        %v3730 = vlaneseq
        %v3731 = vshrl.u32 %v3730, 7
        %v3732 = vsub.s32 7, %v3731
        %v3733 = vrot.slane %v3665, %v3732
        %v3734 = vlaneseq
        %v3735 = vshrl.u32 %v3734, 7
        %v3736 = vsub.s32 0, %v3735
        %v3737 = vrot.slane %v3666, %v3736
        %v3738 = vlaneseq
        %v3739 = vshrl.u32 %v3738, 7
        %v3740 = vsub.s32 1, %v3739
        %v3741 = vrot.slane %v3666, %v3740
        %v3742 = vlaneseq
        %v3743 = vshrl.u32 %v3742, 7
        %v3744 = vsub.s32 2, %v3743
        %v3745 = vrot.slane %v3666, %v3744
        %v3746 = vlaneseq
        %v3747 = vshrl.u32 %v3746, 7
        %v3748 = vsub.s32 3, %v3747
        %v3749 = vrot.slane %v3666, %v3748
        %v5050 = vunpack.c.l.b16 %v2384
        %v5051 = vunpack.c.h.b16 %v2384
        %v5052 = vunpack.c.l.b16 %v2385
        %v5053 = vunpack.c.h.b16 %v2385
        %v5054 = vunpack.c.l.b16 %v2386
        %v5055 = vunpack.c.h.b16 %v2386
        %v5056 = vunpack.c.l.b16 %v2387
        %v5057 = vunpack.c.h.b16 %v2387
        %v5058 = vunpack.c.l.b16 %v2388
        %v5059 = vunpack.c.h.b16 %v2388
        %v5060 = vunpack.c.l.b16 %v2389
        %v5061 = vunpack.c.h.b16 %v2389
        %v5062 = vunpack.c.l.b16 %v2390
        %v5063 = vunpack.c.h.b16 %v2390
        %v5064 = vunpack.c.l.b16 %v2391
        %v5065 = vunpack.c.h.b16 %v2391
        %v5066 = vunpack.c.l.b16 %v2392
        %v5067 = vunpack.c.h.b16 %v2392
        %v5068 = vunpack.c.l.b16 %v2393
        %v5069 = vunpack.c.h.b16 %v2393
        %v5070 = vunpack.c.l.b16 %v2394
        %v5071 = vunpack.c.h.b16 %v2394
        %v5072 = vunpack.c.l.b16 %v2395
        %v5073 = vunpack.c.h.b16 %v2395
        %v5074 = vunpack.c.l.b16 %v2396
        %v5075 = vunpack.c.h.b16 %v2396
        %v5076 = vunpack.c.l.b16 %v2397
        %v5077 = vunpack.c.h.b16 %v2397
        %v5078 = vunpack.c.l.b16 %v2398
        %v5079 = vunpack.c.h.b16 %v2398
        %v5080 = vunpack.c.l.b16 %v2399
        %v5081 = vunpack.c.h.b16 %v2399
        %v5082 = vunpack.c.l.b16 %v2400
        %v5083 = vunpack.c.h.b16 %v2400
        %v5084 = vunpack.c.l.b16 %v2401
        %v5085 = vunpack.c.h.b16 %v2401
        %v5086 = vunpack.c.l.b16 %v2402
        %v5087 = vunpack.c.h.b16 %v2402
        %v5088 = vunpack.c.l.b16 %v2403
        %v5089 = vunpack.c.h.b16 %v2403
        %v5090 = vunpack.c.l.b16 %v2404
        %v5091 = vunpack.c.h.b16 %v2404
        %v5092 = vunpack.c.l.b16 %v2405
        %v5093 = vunpack.c.h.b16 %v2405
        %v5094 = vunpack.c.l.b16 %v2406
        %v5095 = vunpack.c.h.b16 %v2406
        %v5096 = vunpack.c.l.b16 %v2407
        %v5097 = vunpack.c.h.b16 %v2407
        %v5098 = vunpack.c.l.b16 %v2408
        %v5099 = vunpack.c.h.b16 %v2408
        %v5100 = vunpack.c.l.b16 %v2409
        %v5101 = vunpack.c.h.b16 %v2409
        %v5102 = vunpack.c.l.b16 %v2410
        %v5103 = vunpack.c.h.b16 %v2410
        %v5104 = vunpack.c.l.b16 %v2411
        %v5105 = vunpack.c.h.b16 %v2411
        %v5106 = vunpack.c.l.b16 %v2412
        %v5107 = vunpack.c.h.b16 %v2412
        %v5108 = vunpack.c.l.b16 %v2413
        %v5109 = vunpack.c.h.b16 %v2413
        %v5110 = vunpack.c.l.b16 %v2414
        %v5111 = vunpack.c.h.b16 %v2414
        %v5112 = vunpack.c.l.b16 %v2415
        %v5113 = vunpack.c.h.b16 %v2415
        %v5114 = vunpack.c.l.b16 %v2416
        %v5115 = vunpack.c.h.b16 %v2416
        %v5116 = vunpack.c.l.b16 %v2417
        %v5117 = vunpack.c.h.b16 %v2417
        %v5118 = vunpack.c.l.b16 %v2418
        %v5119 = vunpack.c.h.b16 %v2418
        %v5120 = vunpack.c.l.b16 %v2419
        %v5121 = vunpack.c.h.b16 %v2419
        %v5122 = vunpack.c.l.b16 %v2420
        %v5123 = vunpack.c.h.b16 %v2420
        %v5124 = vunpack.c.l.b16 %v2421
        %v5125 = vunpack.c.h.b16 %v2421
        %v5126 = vunpack.c.l.b16 %v2422
        %v5127 = vunpack.c.h.b16 %v2422
        %v5128 = vunpack.c.l.b16 %v2423
        %v5129 = vunpack.c.h.b16 %v2423
        %v5130 = vunpack.c.l.b16 %v2424
        %v5131 = vunpack.c.h.b16 %v2424
        %v5132 = vunpack.c.l.b16 %v2425
        %v5133 = vunpack.c.h.b16 %v2425
        %v5134 = vunpack.c.l.b16 %v2426
        %v5135 = vunpack.c.h.b16 %v2426
        %v5136 = vunpack.c.l.b16 %v2427
        %v5137 = vunpack.c.h.b16 %v2427
        %v5138 = vunpack.c.l.b16 %v2428
        %v5139 = vunpack.c.h.b16 %v2428
        %v5140 = vunpack.c.l.b16 %v2429
        %v5141 = vunpack.c.h.b16 %v2429
        %v5142 = vunpack.c.l.b16 %v2430
        %v5143 = vunpack.c.h.b16 %v2430
        %v5144 = vunpack.c.l.b16 %v2431
        %v5145 = vunpack.c.h.b16 %v2431
        %v5146 = vunpack.c.l.b16 %v2432
        %v5147 = vunpack.c.h.b16 %v2432
        %v5148 = vunpack.c.l.b16 %v2433
        %v5149 = vunpack.c.h.b16 %v2433
        %v5150 = vunpack.c.l.b16 %v2434
        %v5151 = vunpack.c.h.b16 %v2434
        %v5152 = vunpack.c.l.b16 %v2435
        %v5153 = vunpack.c.h.b16 %v2435
        %v5154 = vunpack.c.l.b16 %v2436
        %v5155 = vunpack.c.h.b16 %v2436
        %v5156 = vunpack.c.l.b16 %v2437
        %v5157 = vunpack.c.h.b16 %v2437
        %v5158 = vunpack.c.l.b16 %v2438
        %v5159 = vunpack.c.h.b16 %v2438
        %v5160 = vunpack.c.l.b16 %v2439
        %v5161 = vunpack.c.h.b16 %v2439
        %v5162 = vunpack.c.l.b16 %v2440
        %v5163 = vunpack.c.h.b16 %v2440
        %v5164 = vunpack.c.l.b16 %v2441
        %v5165 = vunpack.c.h.b16 %v2441
        %v5166 = vunpack.c.l.b16 %v2442
        %v5167 = vunpack.c.h.b16 %v2442
        %v5168 = vunpack.c.l.b16 %v2443
        %v5169 = vunpack.c.h.b16 %v2443
        %v5170 = vunpack.c.l.b16 %v2444
        %v5171 = vunpack.c.h.b16 %v2444
        %v5172 = vunpack.c.l.b16 %v2445
        %v5173 = vunpack.c.h.b16 %v2445
        %v5174 = vunpack.c.l.b16 %v2446
        %v5175 = vunpack.c.h.b16 %v2446
        %v5176 = vunpack.c.l.b16 %v2447
        %v5177 = vunpack.c.h.b16 %v2447
        %v5178 = vunpack.c.l.b16 %v2448
        %v5179 = vunpack.c.h.b16 %v2448
        %v5180 = vunpack.c.l.b16 %v2449
        %v5181 = vunpack.c.h.b16 %v2449
        %v5182 = vunpack.c.l.b16 %v2450
        %v5183 = vunpack.c.h.b16 %v2450
        %v5184 = vunpack.c.l.b16 %v2451
        %v5185 = vunpack.c.h.b16 %v2451
        %v5186 = vunpack.c.l.b16 %v2452
        %v5187 = vunpack.c.h.b16 %v2452
        %v5188 = vunpack.c.l.b16 %v2453
        %v5189 = vunpack.c.h.b16 %v2453
        %v5190 = vunpack.c.l.b16 %v2454
        %v5191 = vunpack.c.h.b16 %v2454
        %v5192 = vunpack.c.l.b16 %v2455
        %v5193 = vunpack.c.h.b16 %v2455
        %v5194 = vunpack.c.l.b16 %v2456
        %v5195 = vunpack.c.h.b16 %v2456
        %v5196 = vunpack.c.l.b16 %v2457
        %v5197 = vunpack.c.h.b16 %v2457
        %v5198 = vunpack.c.l.b16 %v2458
        %v5199 = vunpack.c.h.b16 %v2458
        %v5200 = vunpack.c.l.b16 %v2459
        %v5201 = vunpack.c.h.b16 %v2459
        %v5202 = vunpack.c.l.b16 %v2460
        %v5203 = vunpack.c.h.b16 %v2460
        %v5204 = vunpack.c.l.b16 %v2461
        %v5205 = vunpack.c.h.b16 %v2461
        %v5206 = vunpack.c.l.b16 %v2462
        %v5207 = vunpack.c.h.b16 %v2462
        %v5208 = vunpack.c.l.b16 %v2463
        %v5209 = vunpack.c.h.b16 %v2463
        %v5210 = vunpack.c.l.b16 %v2464
        %v5211 = vunpack.c.h.b16 %v2464
        %v5212 = vunpack.c.l.b16 %v2465
        %v5213 = vunpack.c.h.b16 %v2465
        %v5214 = vunpack.c.l.b16 %v2466
        %v5215 = vunpack.c.h.b16 %v2466
        %v5216 = vunpack.c.l.b16 %v2467
        %v5217 = vunpack.c.h.b16 %v2467
        %v5218 = vunpack.c.l.b16 %v2468
        %v5219 = vunpack.c.h.b16 %v2468
        %v5220 = vunpack.c.l.b16 %v2469
        %v5221 = vunpack.c.h.b16 %v2469
        %v5222 = vunpack.c.l.b16 %v2470
        %v5223 = vunpack.c.h.b16 %v2470
        %v5224 = vunpack.c.l.b16 %v2471
        %v5225 = vunpack.c.h.b16 %v2471
        %v5226 = vunpack.c.l.b16 %v2472
        %v5227 = vunpack.c.h.b16 %v2472
        %v5228 = vunpack.c.l.b16 %v2473
        %v5229 = vunpack.c.h.b16 %v2473
        %v5230 = vunpack.c.l.b16 %v2474
        %v5231 = vunpack.c.h.b16 %v2474
        %v5232 = vunpack.c.l.b16 %v2475
        %v5233 = vunpack.c.h.b16 %v2475
        %v5234 = vunpack.c.l.b16 %v2476
        %v5235 = vunpack.c.h.b16 %v2476
        %v5236 = vunpack.c.l.b16 %v2477
        %v5237 = vunpack.c.h.b16 %v2477
        %v5238 = vunpack.c.l.b16 %v2478
        %v5239 = vunpack.c.h.b16 %v2478
        %v5240 = vunpack.c.l.b16 %v2479
        %v5241 = vunpack.c.h.b16 %v2479
        %v5242 = vunpack.c.l.b16 %v2480
        %v5243 = vunpack.c.h.b16 %v2480
        %v5244 = vunpack.c.l.b16 %v2481
        %v5245 = vunpack.c.h.b16 %v2481
        %v5246 = vunpack.c.l.b16 %v2482
        %v5247 = vunpack.c.h.b16 %v2482
        %v5248 = vunpack.c.l.b16 %v2483
        %v5249 = vunpack.c.h.b16 %v2483
        %v5250 = vunpack.c.l.b16 %v2484
        %v5251 = vunpack.c.h.b16 %v2484
        %v5252 = vunpack.c.l.b16 %v2485
        %v5253 = vunpack.c.h.b16 %v2485
        %v5254 = vunpack.c.l.b16 %v2486
        %v5255 = vunpack.c.h.b16 %v2486
        %v5256 = vunpack.c.l.b16 %v2487
        %v5257 = vunpack.c.h.b16 %v2487
        %v5258 = vunpack.c.l.b16 %v2488
        %v5259 = vunpack.c.h.b16 %v2488
        %v5260 = vunpack.c.l.b16 %v2489
        %v5261 = vunpack.c.h.b16 %v2489
        %v5262 = vunpack.c.l.b16 %v2490
        %v5263 = vunpack.c.h.b16 %v2490
        %v5264 = vunpack.c.l.b16 %v2491
        %v5265 = vunpack.c.h.b16 %v2491
        %v5266 = vunpack.c.l.b16 %v2492
        %v5267 = vunpack.c.h.b16 %v2492
        %v5268 = vunpack.c.l.b16 %v2493
        %v5269 = vunpack.c.h.b16 %v2493
        %v5270 = vunpack.c.l.b16 %v2494
        %v5271 = vunpack.c.h.b16 %v2494
        %v5272 = vunpack.c.l.b16 %v2495
        %v5273 = vunpack.c.h.b16 %v2495
        %v5274 = vunpack.c.l.b16 %v2496
        %v5275 = vunpack.c.h.b16 %v2496
        %v5276 = vunpack.c.l.b16 %v2497
        %v5277 = vunpack.c.h.b16 %v2497
        %v5278 = vunpack.c.l.b16 %v2498
        %v5279 = vunpack.c.h.b16 %v2498
        %v5280 = vunpack.c.l.b16 %v2499
        %v5281 = vunpack.c.h.b16 %v2499
        %v5282 = vunpack.c.l.b16 %v2500
        %v5283 = vunpack.c.h.b16 %v2500
        %v5284 = vunpack.c.l.b16 %v2501
        %v5285 = vunpack.c.h.b16 %v2501
        %v5286 = vunpack.c.l.b16 %v2502
        %v5287 = vunpack.c.h.b16 %v2502
        %v5288 = vunpack.c.l.b16 %v2503
        %v5289 = vunpack.c.h.b16 %v2503
        %v5290 = vunpack.c.l.b16 %v2504
        %v5291 = vunpack.c.h.b16 %v2504
        %v5292 = vunpack.c.l.b16 %v2505
        %v5293 = vunpack.c.h.b16 %v2505
        %v5294 = vunpack.c.l.b16 %v2506
        %v5295 = vunpack.c.h.b16 %v2506
        %v5296 = vunpack.c.l.b16 %v2507
        %v5297 = vunpack.c.h.b16 %v2507
        %v5298 = vunpack.c.l.b16 %v2508
        %v5299 = vunpack.c.h.b16 %v2508
        %v5300 = vunpack.c.l.b16 %v2509
        %v5301 = vunpack.c.h.b16 %v2509
        %v5302 = vunpack.c.l.b16 %v2510
        %v5303 = vunpack.c.h.b16 %v2510
        %v5304 = vunpack.c.l.b16 %v2511
        %v5305 = vunpack.c.h.b16 %v2511
        %v5306 = vunpack.c.l.b16 %v2512
        %v5307 = vunpack.c.h.b16 %v2512
        %v5308 = vunpack.c.l.b16 %v2513
        %v5309 = vunpack.c.h.b16 %v2513
        %v5310 = vunpack.c.l.b16 %v2514
        %v5311 = vunpack.c.h.b16 %v2514
        %v5312 = vunpack.c.l.b16 %v2515
        %v5313 = vunpack.c.h.b16 %v2515
        %v5314 = vunpack.c.l.b16 %v2516
        %v5315 = vunpack.c.h.b16 %v2516
        %v5316 = vunpack.c.l.b16 %v2517
        %v5317 = vunpack.c.h.b16 %v2517
        %v5318 = vunpack.c.l.b16 %v2518
        %v5319 = vunpack.c.h.b16 %v2518
        %v5320 = vunpack.c.l.b16 %v2519
        %v5321 = vunpack.c.h.b16 %v2519
        %v5322 = vunpack.c.l.b16 %v2520
        %v5323 = vunpack.c.h.b16 %v2520
        %v5324 = vunpack.c.l.b16 %v2521
        %v5325 = vunpack.c.h.b16 %v2521
        %v5326 = vunpack.c.l.b16 %v2522
        %v5327 = vunpack.c.h.b16 %v2522
        %v5328 = vunpack.c.l.b16 %v2523
        %v5329 = vunpack.c.h.b16 %v2523
        %v5330 = vunpack.c.l.b16 %v2524
        %v5331 = vunpack.c.h.b16 %v2524
        %v5332 = vunpack.c.l.b16 %v2525
        %v5333 = vunpack.c.h.b16 %v2525
        %v5334 = vunpack.c.l.b16 %v2526
        %v5335 = vunpack.c.h.b16 %v2526
        %v5336 = vunpack.c.l.b16 %v2527
        %v5337 = vunpack.c.h.b16 %v2527
        %v5338 = vunpack.c.l.b16 %v2528
        %v5339 = vunpack.c.h.b16 %v2528
        %v5340 = vunpack.c.l.b16 %v2529
        %v5341 = vunpack.c.h.b16 %v2529
        %v5342 = vunpack.c.l.b16 %v2530
        %v5343 = vunpack.c.h.b16 %v2530
        %v5344 = vunpack.c.l.b16 %v2531
        %v5345 = vunpack.c.h.b16 %v2531
        %v5346 = vunpack.c.l.b16 %v2532
        %v5347 = vunpack.c.h.b16 %v2532
        %v5348 = vunpack.c.l.b16 %v2533
        %v5349 = vunpack.c.h.b16 %v2533
        %v5350 = vunpack.c.l.b16 %v2534
        %v5351 = vunpack.c.h.b16 %v2534
        %v5352 = vunpack.c.l.b16 %v2535
        %v5353 = vunpack.c.h.b16 %v2535
        %v5354 = vunpack.c.l.b16 %v2536
        %v5355 = vunpack.c.h.b16 %v2536
        %v5356 = vunpack.c.l.b16 %v2537
        %v5357 = vunpack.c.h.b16 %v2537
        %v5358 = vunpack.c.l.b16 %v2538
        %v5359 = vunpack.c.h.b16 %v2538
        %v5360 = vunpack.c.l.b16 %v2539
        %v5361 = vunpack.c.h.b16 %v2539
        %v5362 = vunpack.c.l.b16 %v2540
        %v5363 = vunpack.c.h.b16 %v2540
        %v5364 = vunpack.c.l.b16 %v2541
        %v5365 = vunpack.c.h.b16 %v2541
        %v5366 = vunpack.c.l.b16 %v2542
        %v5367 = vunpack.c.h.b16 %v2542
        %v5368 = vunpack.c.l.b16 %v2543
        %v5369 = vunpack.c.h.b16 %v2543
        %v5370 = vunpack.c.l.b16 %v2544
        %v5371 = vunpack.c.h.b16 %v2544
        %v5372 = vunpack.c.l.b16 %v2545
        %v5373 = vunpack.c.h.b16 %v2545
        %v5374 = vunpack.c.l.b16 %v2546
        %v5375 = vunpack.c.h.b16 %v2546
        %v5376 = vunpack.c.l.b16 %v2547
        %v5377 = vunpack.c.h.b16 %v2547
        %v5378 = vunpack.c.l.b16 %v2548
        %v5379 = vunpack.c.h.b16 %v2548
        %v5380 = vunpack.c.l.b16 %v2549
        %v5381 = vunpack.c.h.b16 %v2549
        %v5382 = vunpack.c.l.b16 %v2550
        %v5383 = vunpack.c.h.b16 %v2550
        %v5384 = vunpack.c.l.b16 %v2551
        %v5385 = vunpack.c.h.b16 %v2551
        %v5386 = vunpack.c.l.b16 %v2552
        %v5387 = vunpack.c.h.b16 %v2552
        %v5388 = vunpack.c.l.b16 %v2553
        %v5389 = vunpack.c.h.b16 %v2553
        %v5390 = vunpack.c.l.b16 %v2554
        %v5391 = vunpack.c.h.b16 %v2554
        %v5392 = vunpack.c.l.b16 %v2555
        %v5393 = vunpack.c.h.b16 %v2555
        %v5394 = vunpack.c.l.b16 %v2556
        %v5395 = vunpack.c.h.b16 %v2556
        %v5396 = vunpack.c.l.b16 %v2557
        %v5397 = vunpack.c.h.b16 %v2557
        %v5398 = vunpack.c.l.b16 %v2558
        %v5399 = vunpack.c.h.b16 %v2558
        %v5400 = vunpack.c.l.b16 %v2559
        %v5401 = vunpack.c.h.b16 %v2559
        %v5402 = vunpack.c.l.b16 %v2560
        %v5403 = vunpack.c.h.b16 %v2560
        %v5404 = vunpack.c.l.b16 %v2561
        %v5405 = vunpack.c.h.b16 %v2561
        %v5406 = vunpack.c.l.b16 %v2562
        %v5407 = vunpack.c.h.b16 %v2562
        %v5408 = vunpack.c.l.b16 %v2563
        %v5409 = vunpack.c.h.b16 %v2563
        %v5410 = vunpack.c.l.b16 %v2564
        %v5411 = vunpack.c.h.b16 %v2564
        %v5412 = vunpack.c.l.b16 %v2565
        %v5413 = vunpack.c.h.b16 %v2565
        %v5414 = vunpack.c.l.b16 %v2566
        %v5415 = vunpack.c.h.b16 %v2566
        %v5416 = vunpack.c.l.b16 %v2567
        %v5417 = vunpack.c.h.b16 %v2567
        %v5418 = vunpack.c.l.b16 %v2568
        %v5419 = vunpack.c.h.b16 %v2568
        %v5420 = vunpack.c.l.b16 %v2569
        %v5421 = vunpack.c.h.b16 %v2569
        %v5422 = vunpack.c.l.b16 %v2570
        %v5423 = vunpack.c.h.b16 %v2570
        %v5424 = vunpack.c.l.b16 %v2571
        %v5425 = vunpack.c.h.b16 %v2571
        %v5426 = vunpack.c.l.b16 %v2572
        %v5427 = vunpack.c.h.b16 %v2572
        %v5428 = vunpack.c.l.b16 %v2573
        %v5429 = vunpack.c.h.b16 %v2573
        %v5430 = vunpack.c.l.b16 %v2574
        %v5431 = vunpack.c.h.b16 %v2574
        %v5432 = vunpack.c.l.b16 %v2575
        %v5433 = vunpack.c.h.b16 %v2575
        %v5434 = vunpack.c.l.b16 %v2576
        %v5435 = vunpack.c.h.b16 %v2576
        %v5436 = vunpack.c.l.b16 %v2577
        %v5437 = vunpack.c.h.b16 %v2577
        %v5438 = vunpack.c.l.b16 %v2578
        %v5439 = vunpack.c.h.b16 %v2578
        %v5440 = vunpack.c.l.b16 %v2579
        %v5441 = vunpack.c.h.b16 %v2579
        %v5442 = vunpack.c.l.b16 %v2580
        %v5443 = vunpack.c.h.b16 %v2580
        %v5444 = vunpack.c.l.b16 %v2581
        %v5445 = vunpack.c.h.b16 %v2581
        %v5446 = vunpack.c.l.b16 %v2582
        %v5447 = vunpack.c.h.b16 %v2582
        %v5448 = vunpack.c.l.b16 %v2583
        %v5449 = vunpack.c.h.b16 %v2583
        %v5450 = vunpack.c.l.b16 %v2584
        %v5451 = vunpack.c.h.b16 %v2584
        %v5452 = vunpack.c.l.b16 %v2585
        %v5453 = vunpack.c.h.b16 %v2585
        %v5454 = vunpack.c.l.b16 %v2586
        %v5455 = vunpack.c.h.b16 %v2586
        %v5456 = vunpack.c.l.b16 %v2587
        %v5457 = vunpack.c.h.b16 %v2587
        %v5458 = vunpack.c.l.b16 %v2588
        %v5459 = vunpack.c.h.b16 %v2588
        %v5460 = vunpack.c.l.b16 %v2589
        %v5461 = vunpack.c.h.b16 %v2589
        %v5462 = vunpack.c.l.b16 %v2590
        %v5463 = vunpack.c.h.b16 %v2590
        %v5464 = vunpack.c.l.b16 %v2591
        %v5465 = vunpack.c.h.b16 %v2591
        %v5466 = vunpack.c.l.b16 %v2592
        %v5467 = vunpack.c.h.b16 %v2592
        %v5468 = vunpack.c.l.b16 %v2593
        %v5469 = vunpack.c.h.b16 %v2593
        %v5470 = vunpack.c.l.b16 %v2594
        %v5471 = vunpack.c.h.b16 %v2594
        %v5472 = vunpack.c.l.b16 %v2595
        %v5473 = vunpack.c.h.b16 %v2595
        %v5474 = vunpack.c.l.b16 %v2596
        %v5475 = vunpack.c.h.b16 %v2596
        %v5476 = vunpack.c.l.b16 %v2597
        %v5477 = vunpack.c.h.b16 %v2597
        %v5478 = vunpack.c.l.b16 %v2598
        %v5479 = vunpack.c.h.b16 %v2598
        %v5480 = vunpack.c.l.b16 %v2599
        %v5481 = vunpack.c.h.b16 %v2599
        %v5482 = vunpack.c.l.b16 %v2600
        %v5483 = vunpack.c.h.b16 %v2600
        %v5484 = vunpack.c.l.b16 %v2601
        %v5485 = vunpack.c.h.b16 %v2601
        %v5486 = vunpack.c.l.b16 %v2602
        %v5487 = vunpack.c.h.b16 %v2602
        %v5488 = vunpack.c.l.b16 %v2603
        %v5489 = vunpack.c.h.b16 %v2603
        %v5490 = vunpack.c.l.b16 %v2604
        %v5491 = vunpack.c.h.b16 %v2604
        %v5492 = vunpack.c.l.b16 %v2605
        %v5493 = vunpack.c.h.b16 %v2605
        %v5494 = vunpack.c.l.b16 %v2606
        %v5495 = vunpack.c.h.b16 %v2606
        %v5496 = vunpack.c.l.b16 %v2607
        %v5497 = vunpack.c.h.b16 %v2607
        %v5498 = vunpack.c.l.b16 %v2608
        %v5499 = vunpack.c.h.b16 %v2608
        %v5500 = vunpack.c.l.b16 %v2609
        %v5501 = vunpack.c.h.b16 %v2609
        %v5502 = vunpack.c.l.b16 %v2610
        %v5503 = vunpack.c.h.b16 %v2610
        %v5504 = vunpack.c.l.b16 %v2611
        %v5505 = vunpack.c.h.b16 %v2611
        %v5506 = vunpack.c.l.b16 %v2612
        %v5507 = vunpack.c.h.b16 %v2612
        %v5508 = vunpack.c.l.b16 %v2613
        %v5509 = vunpack.c.h.b16 %v2613
        %v5510 = vunpack.c.l.b16 %v2614
        %v5511 = vunpack.c.h.b16 %v2614
        %v5512 = vunpack.c.l.b16 %v2615
        %v5513 = vunpack.c.h.b16 %v2615
        %v5514 = vunpack.c.l.b16 %v2616
        %v5515 = vunpack.c.h.b16 %v2616
        %v5516 = vunpack.c.l.b16 %v2617
        %v5517 = vunpack.c.h.b16 %v2617
        %v5518 = vunpack.c.l.b16 %v2618
        %v5519 = vunpack.c.h.b16 %v2618
        %v5520 = vunpack.c.l.b16 %v2619
        %v5521 = vunpack.c.h.b16 %v2619
        %v5522 = vunpack.c.l.b16 %v2620
        %v5523 = vunpack.c.h.b16 %v2620
        %v5524 = vunpack.c.l.b16 %v2621
        %v5525 = vunpack.c.h.b16 %v2621
        %v5526 = vunpack.c.l.b16 %v2622
        %v5527 = vunpack.c.h.b16 %v2622
        %v5528 = vunpack.c.l.b16 %v2623
        %v5529 = vunpack.c.h.b16 %v2623
        %v5530 = vunpack.c.l.b16 %v2624
        %v5531 = vunpack.c.h.b16 %v2624
        %v5532 = vunpack.c.l.b16 %v2625
        %v5533 = vunpack.c.h.b16 %v2625
        %v5534 = vunpack.c.l.b16 %v2626
        %v5535 = vunpack.c.h.b16 %v2626
        %v5536 = vunpack.c.l.b16 %v2627
        %v5537 = vunpack.c.h.b16 %v2627
        %v5538 = vunpack.c.l.b16 %v2628
        %v5539 = vunpack.c.h.b16 %v2628
        %v5540 = vunpack.c.l.b16 %v2629
        %v5541 = vunpack.c.h.b16 %v2629
        %v5542 = vunpack.c.l.b16 %v2630
        %v5543 = vunpack.c.h.b16 %v2630
        %v5544 = vunpack.c.l.b16 %v2631
        %v5545 = vunpack.c.h.b16 %v2631
        %v5546 = vunpack.c.l.b16 %v2632
        %v5547 = vunpack.c.h.b16 %v2632
        %v5548 = vunpack.c.l.b16 %v2633
        %v5549 = vunpack.c.h.b16 %v2633
        %v5550 = vunpack.c.l.b16 %v2634
        %v5551 = vunpack.c.h.b16 %v2634
        %v5552 = vunpack.c.l.b16 %v2635
        %v5553 = vunpack.c.h.b16 %v2635
        %v5554 = vunpack.c.l.b16 %v2636
        %v5555 = vunpack.c.h.b16 %v2636
        %v5556 = vunpack.c.l.b16 %v2637
        %v5557 = vunpack.c.h.b16 %v2637
        %v5558 = vunpack.c.l.b16 %v2638
        %v5559 = vunpack.c.h.b16 %v2638
        %v5560 = vunpack.c.l.b16 %v2639
        %v5561 = vunpack.c.h.b16 %v2639
        %v5562 = vunpack.c.l.b16 %v2640
        %v5563 = vunpack.c.h.b16 %v2640
        %v5564 = vunpack.c.l.b16 %v2641
        %v5565 = vunpack.c.h.b16 %v2641
        %v5566 = vunpack.c.l.b16 %v2642
        %v5567 = vunpack.c.h.b16 %v2642
        %v5568 = vunpack.c.l.b16 %v2643
        %v5569 = vunpack.c.h.b16 %v2643
        %v5570 = vunpack.c.l.b16 %v2644
        %v5571 = vunpack.c.h.b16 %v2644
        %v5572 = vunpack.c.l.b16 %v2645
        %v5573 = vunpack.c.h.b16 %v2645
        %v5574 = vunpack.c.l.b16 %v2646
        %v5575 = vunpack.c.h.b16 %v2646
        %v5576 = vunpack.c.l.b16 %v2647
        %v5577 = vunpack.c.h.b16 %v2647
        %v5578 = vunpack.c.l.b16 %v2648
        %v5579 = vunpack.c.h.b16 %v2648
        %v5580 = vunpack.c.l.b16 %v2649
        %v5581 = vunpack.c.h.b16 %v2649
        %v5582 = vunpack.c.l.b16 %v2650
        %v5583 = vunpack.c.h.b16 %v2650
        %v5584 = vunpack.c.l.b16 %v2651
        %v5585 = vunpack.c.h.b16 %v2651
        %v5586 = vunpack.c.l.b16 %v2652
        %v5587 = vunpack.c.h.b16 %v2652
        %v5588 = vunpack.c.l.b16 %v2653
        %v5589 = vunpack.c.h.b16 %v2653
        %v5590 = vunpack.c.l.b16 %v2654
        %v5591 = vunpack.c.h.b16 %v2654
        %v5592 = vunpack.c.l.b16 %v2655
        %v5593 = vunpack.c.h.b16 %v2655
        %v5594 = vunpack.c.l.b16 %v2656
        %v5595 = vunpack.c.h.b16 %v2656
        %v5596 = vunpack.c.l.b16 %v2657
        %v5597 = vunpack.c.h.b16 %v2657
        %v5598 = vunpack.c.l.b16 %v2658
        %v5599 = vunpack.c.h.b16 %v2658
        %v5600 = vunpack.c.l.b16 %v2659
        %v5601 = vunpack.c.h.b16 %v2659
        %v5602 = vunpack.c.l.b16 %v2660
        %v5603 = vunpack.c.h.b16 %v2660
        %v5604 = vunpack.c.l.b16 %v2661
        %v5605 = vunpack.c.h.b16 %v2661
        %v5606 = vunpack.c.l.b16 %v2662
        %v5607 = vunpack.c.h.b16 %v2662
        %v5608 = vunpack.c.l.b16 %v2663
        %v5609 = vunpack.c.h.b16 %v2663
        %v5610 = vunpack.c.l.b16 %v2664
        %v5611 = vunpack.c.h.b16 %v2664
        %v5612 = vunpack.c.l.b16 %v2665
        %v5613 = vunpack.c.h.b16 %v2665
        %v5614 = vunpack.c.l.b16 %v2666
        %v5615 = vunpack.c.h.b16 %v2666
        %v5616 = vunpack.c.l.b16 %v2667
        %v5617 = vunpack.c.h.b16 %v2667
        %v5618 = vunpack.c.l.b16 %v2668
        %v5619 = vunpack.c.h.b16 %v2668
        %v5620 = vunpack.c.l.b16 %v2669
        %v5621 = vunpack.c.h.b16 %v2669
        %v5622 = vunpack.c.l.b16 %v2670
        %v5623 = vunpack.c.h.b16 %v2670
        %v5624 = vunpack.c.l.b16 %v2671
        %v5625 = vunpack.c.h.b16 %v2671
        %v5626 = vunpack.c.l.b16 %v2672
        %v5627 = vunpack.c.h.b16 %v2672
        %v5628 = vunpack.c.l.b16 %v2673
        %v5629 = vunpack.c.h.b16 %v2673
        %v5630 = vunpack.c.l.b16 %v2674
        %v5631 = vunpack.c.h.b16 %v2674
        %v5632 = vunpack.c.l.b16 %v2675
        %v5633 = vunpack.c.h.b16 %v2675
        %v5634 = vunpack.c.l.b16 %v2676
        %v5635 = vunpack.c.h.b16 %v2676
        %v5636 = vunpack.c.l.b16 %v2677
        %v5637 = vunpack.c.h.b16 %v2677
        %v5638 = vunpack.c.l.b16 %v2678
        %v5639 = vunpack.c.h.b16 %v2678
        %v5640 = vunpack.c.l.b16 %v2679
        %v5641 = vunpack.c.h.b16 %v2679
        %v5642 = vunpack.c.l.b16 %v2680
        %v5643 = vunpack.c.h.b16 %v2680
        %v5644 = vunpack.c.l.b16 %v2681
        %v5645 = vunpack.c.h.b16 %v2681
        %v5646 = vunpack.c.l.b16 %v2682
        %v5647 = vunpack.c.h.b16 %v2682
        %v5648 = vunpack.c.l.b16 %v2683
        %v5649 = vunpack.c.h.b16 %v2683
        %v5650 = vunpack.c.l.b16 %v2684
        %v5651 = vunpack.c.h.b16 %v2684
        %v5652 = vunpack.c.l.b16 %v2685
        %v5653 = vunpack.c.h.b16 %v2685
        %v5654 = vunpack.c.l.b16 %v2686
        %v5655 = vunpack.c.h.b16 %v2686
        %v5656 = vunpack.c.l.b16 %v2687
        %v5657 = vunpack.c.h.b16 %v2687
        %v5658 = vunpack.c.l.b16 %v2688
        %v5659 = vunpack.c.h.b16 %v2688
        %v5660 = vunpack.c.l.b16 %v2689
        %v5661 = vunpack.c.h.b16 %v2689
        %v5662 = vunpack.c.l.b16 %v2690
        %v5663 = vunpack.c.h.b16 %v2690
        %v5664 = vunpack.c.l.b16 %v2691
        %v5665 = vunpack.c.h.b16 %v2691
        %v5666 = vunpack.c.l.b16 %v2692
        %v5667 = vunpack.c.h.b16 %v2692
        %v5668 = vunpack.c.l.b16 %v2693
        %v5669 = vunpack.c.h.b16 %v2693
        %v5670 = vunpack.c.l.b16 %v2694
        %v5671 = vunpack.c.h.b16 %v2694
        %v5672 = vunpack.c.l.b16 %v2695
        %v5673 = vunpack.c.h.b16 %v2695
        %v5674 = vunpack.c.l.b16 %v2696
        %v5675 = vunpack.c.h.b16 %v2696
        %v5676 = vunpack.c.l.b16 %v2697
        %v5677 = vunpack.c.h.b16 %v2697
        %v5678 = vunpack.c.l.b16 %v2698
        %v5679 = vunpack.c.h.b16 %v2698
        %v5680 = vunpack.c.l.b16 %v2699
        %v5681 = vunpack.c.h.b16 %v2699
        %v5682 = vunpack.c.l.b16 %v2700
        %v5683 = vunpack.c.h.b16 %v2700
        %v5684 = vunpack.c.l.b16 %v2701
        %v5685 = vunpack.c.h.b16 %v2701
        %v5686 = vunpack.c.l.b16 %v2702
        %v5687 = vunpack.c.h.b16 %v2702
        %v5688 = vunpack.c.l.b16 %v2703
        %v5689 = vunpack.c.h.b16 %v2703
        %v5690 = vunpack.c.l.b16 %v2704
        %v5691 = vunpack.c.h.b16 %v2704
        %v5692 = vunpack.c.l.b16 %v2705
        %v5693 = vunpack.c.h.b16 %v2705
        %v5694 = vunpack.c.l.b16 %v2706
        %v5695 = vunpack.c.h.b16 %v2706
        %v5696 = vunpack.c.l.b16 %v2707
        %v5697 = vunpack.c.h.b16 %v2707
        %v5698 = vunpack.c.l.b16 %v2708
        %v5699 = vunpack.c.h.b16 %v2708
        %v5700 = vunpack.c.l.b16 %v2709
        %v5701 = vunpack.c.h.b16 %v2709
        %v5702 = vunpack.c.l.b16 %v2710
        %v5703 = vunpack.c.h.b16 %v2710
        %v5704 = vunpack.c.l.b16 %v2711
        %v5705 = vunpack.c.h.b16 %v2711
        %v5706 = vunpack.c.l.b16 %v2712
        %v5707 = vunpack.c.h.b16 %v2712
        %v5708 = vunpack.c.l.b16 %v2713
        %v5709 = vunpack.c.h.b16 %v2713
        %v5710 = vunpack.c.l.b16 %v2714
        %v5711 = vunpack.c.h.b16 %v2714
        %v5712 = vunpack.c.l.b16 %v2715
        %v5713 = vunpack.c.h.b16 %v2715
        %v5714 = vunpack.c.l.b16 %v2716
        %v5715 = vunpack.c.h.b16 %v2716
        %v5716 = vunpack.c.l.b16 %v2717
        %v5717 = vunpack.c.h.b16 %v2717
        %v5718 = vunpack.c.l.b16 %v2718
        %v5719 = vunpack.c.h.b16 %v2718
        %v5720 = vunpack.c.l.b16 %v2719
        %v5721 = vunpack.c.h.b16 %v2719
        %v5722 = vunpack.c.l.b16 %v2720
        %v5723 = vunpack.c.h.b16 %v2720
        %v5724 = vunpack.c.l.b16 %v2721
        %v5725 = vunpack.c.h.b16 %v2721
        %v5726 = vunpack.c.l.b16 %v2722
        %v5727 = vunpack.c.h.b16 %v2722
        %v5728 = vunpack.c.l.b16 %v2723
        %v5729 = vunpack.c.h.b16 %v2723
        %v5730 = vunpack.c.l.b16 %v2724
        %v5731 = vunpack.c.h.b16 %v2724
        %v5732 = vunpack.c.l.b16 %v2725
        %v5733 = vunpack.c.h.b16 %v2725
        %v5734 = vunpack.c.l.b16 %v2726
        %v5735 = vunpack.c.h.b16 %v2726
        %v5736 = vunpack.c.l.b16 %v2727
        %v5737 = vunpack.c.h.b16 %v2727
        %v5738 = vunpack.c.l.b16 %v2728
        %v5739 = vunpack.c.h.b16 %v2728
        %v5740 = vunpack.c.l.b16 %v2729
        %v5741 = vunpack.c.h.b16 %v2729
        %v5742 = vunpack.c.l.b16 %v2730
        %v5743 = vunpack.c.h.b16 %v2730
        %v5744 = vunpack.c.l.b16 %v2731
        %v5745 = vunpack.c.h.b16 %v2731
        %v5746 = vunpack.c.l.b16 %v2732
        %v5747 = vunpack.c.h.b16 %v2732
        %v5748 = vunpack.c.l.b16 %v2733
        %v5749 = vunpack.c.h.b16 %v2733
        %v5750 = vunpack.c.l.b16 %v2734
        %v5751 = vunpack.c.h.b16 %v2734
        %v5752 = vunpack.c.l.b16 %v2735
        %v5753 = vunpack.c.h.b16 %v2735
        %v5754 = vunpack.c.l.b16 %v2736
        %v5755 = vunpack.c.h.b16 %v2736
        %v5756 = vunpack.c.l.b16 %v2737
        %v5757 = vunpack.c.h.b16 %v2737
        %v5758 = vunpack.c.l.b16 %v2738
        %v5759 = vunpack.c.h.b16 %v2738
        %v5760 = vunpack.c.l.b16 %v2739
        %v5761 = vunpack.c.h.b16 %v2739
        %v5762 = vunpack.c.l.b16 %v2740
        %v5763 = vunpack.c.h.b16 %v2740
        %v5764 = vunpack.c.l.b16 %v2741
        %v5765 = vunpack.c.h.b16 %v2741
        %v5766 = vunpack.c.l.b16 %v2742
        %v5767 = vunpack.c.h.b16 %v2742
        %v5768 = vunpack.c.l.b16 %v2743
        %v5769 = vunpack.c.h.b16 %v2743
        %v5770 = vunpack.c.l.b16 %v2744
        %v5771 = vunpack.c.h.b16 %v2744
        %v5772 = vunpack.c.l.b16 %v2745
        %v5773 = vunpack.c.h.b16 %v2745
        %v5774 = vunpack.c.l.b16 %v2746
        %v5775 = vunpack.c.h.b16 %v2746
        %v5776 = vunpack.c.l.b16 %v2747
        %v5777 = vunpack.c.h.b16 %v2747
        %v5778 = vunpack.c.l.b16 %v2748
        %v5779 = vunpack.c.h.b16 %v2748
        %v5780 = vunpack.c.l.b16 %v2749
        %v5781 = vunpack.c.h.b16 %v2749
        %v5782 = vunpack.c.l.b16 %v2750
        %v5783 = vunpack.c.h.b16 %v2750
        %v5784 = vunpack.c.l.b16 %v2751
        %v5785 = vunpack.c.h.b16 %v2751
        %v5786 = vunpack.c.l.b16 %v2752
        %v5787 = vunpack.c.h.b16 %v2752
        %v5788 = vunpack.c.l.b16 %v2753
        %v5789 = vunpack.c.h.b16 %v2753
        %v5790 = vunpack.c.l.b16 %v2754
        %v5791 = vunpack.c.h.b16 %v2754
        %v5792 = vunpack.c.l.b16 %v2755
        %v5793 = vunpack.c.h.b16 %v2755
        %v5794 = vunpack.c.l.b16 %v2756
        %v5795 = vunpack.c.h.b16 %v2756
        %v5796 = vunpack.c.l.b16 %v2757
        %v5797 = vunpack.c.h.b16 %v2757
        %v5798 = vunpack.c.l.b16 %v2758
        %v5799 = vunpack.c.h.b16 %v2758
        %v5800 = vunpack.c.l.b16 %v2759
        %v5801 = vunpack.c.h.b16 %v2759
        %v5802 = vunpack.c.l.b16 %v2760
        %v5803 = vunpack.c.h.b16 %v2760
        %v5804 = vunpack.c.l.b16 %v2761
        %v5805 = vunpack.c.h.b16 %v2761
        %v5806 = vunpack.c.l.b16 %v2762
        %v5807 = vunpack.c.h.b16 %v2762
        %v5808 = vunpack.c.l.b16 %v2763
        %v5809 = vunpack.c.h.b16 %v2763
        %v5810 = vunpack.c.l.b16 %v2764
        %v5811 = vunpack.c.h.b16 %v2764
        %v5812 = vunpack.c.l.b16 %v2765
        %v5813 = vunpack.c.h.b16 %v2765
        %v5814 = vunpack.c.l.b16 %v2766
        %v5815 = vunpack.c.h.b16 %v2766
        %v5816 = vunpack.c.l.b16 %v2767
        %v5817 = vunpack.c.h.b16 %v2767
        %v5818 = vunpack.c.l.b16 %v2768
        %v5819 = vunpack.c.h.b16 %v2768
        %v5820 = vunpack.c.l.b16 %v2769
        %v5821 = vunpack.c.h.b16 %v2769
        %v5822 = vunpack.c.l.b16 %v2770
        %v5823 = vunpack.c.h.b16 %v2770
        %v5824 = vunpack.c.l.b16 %v2771
        %v5825 = vunpack.c.h.b16 %v2771
        %v5826 = vunpack.c.l.b16 %v2772
        %v5827 = vunpack.c.h.b16 %v2772
        %v5828 = vunpack.c.l.b16 %v2773
        %v5829 = vunpack.c.h.b16 %v2773
        %v5830 = vunpack.c.l.b16 %v2774
        %v5831 = vunpack.c.h.b16 %v2774
        %v5832 = vunpack.c.l.b16 %v2775
        %v5833 = vunpack.c.h.b16 %v2775
        %v5834 = vunpack.c.l.b16 %v2776
        %v5835 = vunpack.c.h.b16 %v2776
        %v5836 = vunpack.c.l.b16 %v2777
        %v5837 = vunpack.c.h.b16 %v2777
        %v5838 = vunpack.c.l.b16 %v2778
        %v5839 = vunpack.c.h.b16 %v2778
        %v5840 = vunpack.c.l.b16 %v2779
        %v5841 = vunpack.c.h.b16 %v2779
        %v5842 = vunpack.c.l.b16 %v2780
        %v5843 = vunpack.c.h.b16 %v2780
        %v5844 = vunpack.c.l.b16 %v2781
        %v5845 = vunpack.c.h.b16 %v2781
        %v5846 = vunpack.c.l.b16 %v2782
        %v5847 = vunpack.c.h.b16 %v2782
        %v5848 = vunpack.c.l.b16 %v2783
        %v5849 = vunpack.c.h.b16 %v2783
        %v5850 = vunpack.c.l.b16 %v2784
        %v5851 = vunpack.c.h.b16 %v2784
        %v5852 = vunpack.c.l.b16 %v2785
        %v5853 = vunpack.c.h.b16 %v2785
        %v5854 = vunpack.c.l.b16 %v2786
        %v5855 = vunpack.c.h.b16 %v2786
        %v5856 = vunpack.c.l.b16 %v2787
        %v5857 = vunpack.c.h.b16 %v2787
        %v5858 = vunpack.c.l.b16 %v2788
        %v5859 = vunpack.c.h.b16 %v2788
        %v5860 = vunpack.c.l.b16 %v2789
        %v5861 = vunpack.c.h.b16 %v2789
        %v5862 = vunpack.c.l.b16 %v2790
        %v5863 = vunpack.c.h.b16 %v2790
        %v5864 = vunpack.c.l.b16 %v2791
        %v5865 = vunpack.c.h.b16 %v2791
        %v5866 = vunpack.c.l.b16 %v2792
        %v5867 = vunpack.c.h.b16 %v2792
        %v5868 = vunpack.c.l.b16 %v2793
        %v5869 = vunpack.c.h.b16 %v2793
        %v5870 = vunpack.c.l.b16 %v2794
        %v5871 = vunpack.c.h.b16 %v2794
        %v5872 = vunpack.c.l.b16 %v2795
        %v5873 = vunpack.c.h.b16 %v2795
        %v5874 = vunpack.c.l.b16 %v2796
        %v5875 = vunpack.c.h.b16 %v2796
        %v5876 = vunpack.c.l.b16 %v2797
        %v5877 = vunpack.c.h.b16 %v2797
        %v5878 = vunpack.c.l.b16 %v2798
        %v5879 = vunpack.c.h.b16 %v2798
        %v5880 = vunpack.c.l.b16 %v2799
        %v5881 = vunpack.c.h.b16 %v2799
        %v5882 = vunpack.c.l.b16 %v2800
        %v5883 = vunpack.c.h.b16 %v2800
        %v5884 = vunpack.c.l.b16 %v2801
        %v5885 = vunpack.c.h.b16 %v2801
        %v5886 = vunpack.c.l.b16 %v2802
        %v5887 = vunpack.c.h.b16 %v2802
        %v5888 = vunpack.c.l.b16 %v2803
        %v5889 = vunpack.c.h.b16 %v2803
        %v5890 = vunpack.c.l.b16 %v2804
        %v5891 = vunpack.c.h.b16 %v2804
        %v5892 = vunpack.c.l.b16 %v2805
        %v5893 = vunpack.c.h.b16 %v2805
        %v5894 = vunpack.c.l.b16 %v2806
        %v5895 = vunpack.c.h.b16 %v2806
        %v5896 = vunpack.c.l.b16 %v2807
        %v5897 = vunpack.c.h.b16 %v2807
        %v5898 = vunpack.c.l.b16 %v2808
        %v5899 = vunpack.c.h.b16 %v2808
        %v5900 = vunpack.c.l.b16 %v2809
        %v5901 = vunpack.c.h.b16 %v2809
        %v5902 = vunpack.c.l.b16 %v2810
        %v5903 = vunpack.c.h.b16 %v2810
        %v5904 = vunpack.c.l.b16 %v2811
        %v5905 = vunpack.c.h.b16 %v2811
        %v5906 = vunpack.c.l.b16 %v2812
        %v5907 = vunpack.c.h.b16 %v2812
        %v5908 = vunpack.c.l.b16 %v2813
        %v5909 = vunpack.c.h.b16 %v2813
        %v5910 = vunpack.c.l.b16 %v2814
        %v5911 = vunpack.c.h.b16 %v2814
        %v5912 = vunpack.c.l.b16 %v2815
        %v5913 = vunpack.c.h.b16 %v2815
        %v5914 = vunpack.c.l.b16 %v2816
        %v5915 = vunpack.c.h.b16 %v2816
        %v5916 = vunpack.c.l.b16 %v2817
        %v5917 = vunpack.c.h.b16 %v2817
        %v5918 = vunpack.c.l.b16 %v2818
        %v5919 = vunpack.c.h.b16 %v2818
        %v5920 = vunpack.c.l.b16 %v2819
        %v5921 = vunpack.c.h.b16 %v2819
        %v5922 = vunpack.c.l.b16 %v2820
        %v5923 = vunpack.c.h.b16 %v2820
        %v5924 = vunpack.c.l.b16 %v2821
        %v5925 = vunpack.c.h.b16 %v2821
        %v5926 = vunpack.c.l.b16 %v2822
        %v5927 = vunpack.c.h.b16 %v2822
        %v5928 = vunpack.c.l.b16 %v2823
        %v5929 = vunpack.c.h.b16 %v2823
        %v5930 = vunpack.c.l.b16 %v2824
        %v5931 = vunpack.c.h.b16 %v2824
        %v5932 = vunpack.c.l.b16 %v2825
        %v5933 = vunpack.c.h.b16 %v2825
        %v5934 = vunpack.c.l.b16 %v2826
        %v5935 = vunpack.c.h.b16 %v2826
        %v5936 = vunpack.c.l.b16 %v2827
        %v5937 = vunpack.c.h.b16 %v2827
        %v5938 = vunpack.c.l.b16 %v2828
        %v5939 = vunpack.c.h.b16 %v2828
        %v5940 = vunpack.c.l.b16 %v2829
        %v5941 = vunpack.c.h.b16 %v2829
        %v5942 = vunpack.c.l.b16 %v2830
        %v5943 = vunpack.c.h.b16 %v2830
        %v5944 = vunpack.c.l.b16 %v2831
        %v5945 = vunpack.c.h.b16 %v2831
        %v5946 = vunpack.c.l.b16 %v2832
        %v5947 = vunpack.c.h.b16 %v2832
        %v5948 = vunpack.c.l.b16 %v2833
        %v5949 = vunpack.c.h.b16 %v2833
        %v5950 = vunpack.c.l.b16 %v2834
        %v5951 = vunpack.c.h.b16 %v2834
        %v5952 = vunpack.c.l.b16 %v2835
        %v5953 = vunpack.c.h.b16 %v2835
        %v5954 = vunpack.c.l.b16 %v2836
        %v5955 = vunpack.c.h.b16 %v2836
        %v5956 = vunpack.c.l.b16 %v2837
        %v5957 = vunpack.c.h.b16 %v2837
        %v5958 = vunpack.c.l.b16 %v2838
        %v5959 = vunpack.c.h.b16 %v2838
        %v5960 = vunpack.c.l.b16 %v2839
        %v5961 = vunpack.c.h.b16 %v2839
        %v5962 = vunpack.c.l.b16 %v2840
        %v5963 = vunpack.c.h.b16 %v2840
        %v5964 = vunpack.c.l.b16 %v2841
        %v5965 = vunpack.c.h.b16 %v2841
        %v5966 = vunpack.c.l.b16 %v2842
        %v5967 = vunpack.c.h.b16 %v2842
        %v5968 = vunpack.c.l.b16 %v2843
        %v5969 = vunpack.c.h.b16 %v2843
        %v5970 = vunpack.c.l.b16 %v2844
        %v5971 = vunpack.c.h.b16 %v2844
        %v5972 = vunpack.c.l.b16 %v2845
        %v5973 = vunpack.c.h.b16 %v2845
        %v5974 = vunpack.c.l.b16 %v2846
        %v5975 = vunpack.c.h.b16 %v2846
        %v5976 = vunpack.c.l.b16 %v2847
        %v5977 = vunpack.c.h.b16 %v2847
        %v5978 = vunpack.c.l.b16 %v2848
        %v5979 = vunpack.c.h.b16 %v2848
        %v5980 = vunpack.c.l.b16 %v2849
        %v5981 = vunpack.c.h.b16 %v2849
        %v5982 = vunpack.c.l.b16 %v2850
        %v5983 = vunpack.c.h.b16 %v2850
        %v5984 = vunpack.c.l.b16 %v2851
        %v5985 = vunpack.c.h.b16 %v2851
        %v5986 = vunpack.c.l.b16 %v2852
        %v5987 = vunpack.c.h.b16 %v2852
        %v5988 = vunpack.c.l.b16 %v2853
        %v5989 = vunpack.c.h.b16 %v2853
        %v5990 = vunpack.c.l.b16 %v2854
        %v5991 = vunpack.c.h.b16 %v2854
        %v5992 = vunpack.c.l.b16 %v2855
        %v5993 = vunpack.c.h.b16 %v2855
        %v5994 = vunpack.c.l.b16 %v2856
        %v5995 = vunpack.c.h.b16 %v2856
        %v5996 = vunpack.c.l.b16 %v2857
        %v5997 = vunpack.c.h.b16 %v2857
        %v5998 = vunpack.c.l.b16 %v2858
        %v5999 = vunpack.c.h.b16 %v2858
        %v6000 = vunpack.c.l.b16 %v2859
        %v6001 = vunpack.c.h.b16 %v2859
        %v6002 = vunpack.c.l.b16 %v2860
        %v6003 = vunpack.c.h.b16 %v2860
        %v6004 = vunpack.c.l.b16 %v2861
        %v6005 = vunpack.c.h.b16 %v2861
        %v6006 = vunpack.c.l.b16 %v2862
        %v6007 = vunpack.c.h.b16 %v2862
        %v6008 = vunpack.c.l.b16 %v2863
        %v6009 = vunpack.c.h.b16 %v2863
        %v6010 = vunpack.c.l.b16 %v2864
        %v6011 = vunpack.c.h.b16 %v2864
        %v6012 = vunpack.c.l.b16 %v2865
        %v6013 = vunpack.c.h.b16 %v2865
        %v6014 = vunpack.c.l.b16 %v2866
        %v6015 = vunpack.c.h.b16 %v2866
        %v6016 = vunpack.c.l.b16 %v2867
        %v6017 = vunpack.c.h.b16 %v2867
        %v6018 = vunpack.c.l.b16 %v2868
        %v6019 = vunpack.c.h.b16 %v2868
        %v6020 = vunpack.c.l.b16 %v2869
        %v6021 = vunpack.c.h.b16 %v2869
        %v6022 = vunpack.c.l.b16 %v2870
        %v6023 = vunpack.c.h.b16 %v2870
        %v6024 = vunpack.c.l.b16 %v2871
        %v6025 = vunpack.c.h.b16 %v2871
        %v6026 = vunpack.c.l.b16 %v2872
        %v6027 = vunpack.c.h.b16 %v2872
        %v6028 = vunpack.c.l.b16 %v2873
        %v6029 = vunpack.c.h.b16 %v2873
        %v6030 = vunpack.c.l.b16 %v2874
        %v6031 = vunpack.c.h.b16 %v2874
        %v6032 = vunpack.c.l.b16 %v2875
        %v6033 = vunpack.c.h.b16 %v2875
        %v6034 = vunpack.c.l.b16 %v2876
        %v6035 = vunpack.c.h.b16 %v2876
        %v6036 = vunpack.c.l.b16 %v2877
        %v6037 = vunpack.c.h.b16 %v2877
        %v6038 = vunpack.c.l.b16 %v2878
        %v6039 = vunpack.c.h.b16 %v2878
        %v6040 = vunpack.c.l.b16 %v2879
        %v6041 = vunpack.c.h.b16 %v2879
        %v6042 = vunpack.c.l.b16 %v2880
        %v6043 = vunpack.c.h.b16 %v2880
        %v6044 = vunpack.c.l.b16 %v2881
        %v6045 = vunpack.c.h.b16 %v2881
        %v6046 = vunpack.c.l.b16 %v2882
        %v6047 = vunpack.c.h.b16 %v2882
        %v6048 = vunpack.c.l.b16 %v2883
        %v6049 = vunpack.c.h.b16 %v2883
        %v6050 = vunpack.c.l.b16 %v2884
        %v6051 = vunpack.c.h.b16 %v2884
        %v6052 = vunpack.c.l.b16 %v2885
        %v6053 = vunpack.c.h.b16 %v2885
        %v6054 = vunpack.c.l.b16 %v2886
        %v6055 = vunpack.c.h.b16 %v2886
        %v6056 = vunpack.c.l.b16 %v2887
        %v6057 = vunpack.c.h.b16 %v2887
        %v6058 = vunpack.c.l.b16 %v2888
        %v6059 = vunpack.c.h.b16 %v2888
        %v6060 = vunpack.c.l.b16 %v2889
        %v6061 = vunpack.c.h.b16 %v2889
        %v6062 = vunpack.c.l.b16 %v2890
        %v6063 = vunpack.c.h.b16 %v2890
        %v6064 = vunpack.c.l.b16 %v2891
        %v6065 = vunpack.c.h.b16 %v2891
        %v6066 = vunpack.c.l.b16 %v2892
        %v6067 = vunpack.c.h.b16 %v2892
        %v6068 = vunpack.c.l.b16 %v2893
        %v6069 = vunpack.c.h.b16 %v2893
        %v6070 = vunpack.c.l.b16 %v2894
        %v6071 = vunpack.c.h.b16 %v2894
        %v6072 = vunpack.c.l.b16 %v2895
        %v6073 = vunpack.c.h.b16 %v2895
        %v6074 = vunpack.c.l.b16 %v2896
        %v6075 = vunpack.c.h.b16 %v2896
        %v6076 = vunpack.c.l.b16 %v2897
        %v6077 = vunpack.c.h.b16 %v2897
        %v6078 = vunpack.c.l.b16 %v2898
        %v6079 = vunpack.c.h.b16 %v2898
        %v6080 = vunpack.c.l.b16 %v2899
        %v6081 = vunpack.c.h.b16 %v2899
        %v6082 = vunpack.c.l.b16 %v2900
        %v6083 = vunpack.c.h.b16 %v2900
        %v6084 = vunpack.c.l.b16 %v2901
        %v6085 = vunpack.c.h.b16 %v2901
        %v6086 = vunpack.c.l.b16 %v2902
        %v6087 = vunpack.c.h.b16 %v2902
        %v6088 = vunpack.c.l.b16 %v2903
        %v6089 = vunpack.c.h.b16 %v2903
        %v6090 = vunpack.c.l.b16 %v2904
        %v6091 = vunpack.c.h.b16 %v2904
        %v6092 = vunpack.c.l.b16 %v2905
        %v6093 = vunpack.c.h.b16 %v2905
        %v6094 = vunpack.c.l.b16 %v2906
        %v6095 = vunpack.c.h.b16 %v2906
        %v6096 = vunpack.c.l.b16 %v2907
        %v6097 = vunpack.c.h.b16 %v2907
        %v6098 = vunpack.c.l.b16 %v2908
        %v6099 = vunpack.c.h.b16 %v2908
        %v6100 = vunpack.c.l.b16 %v2909
        %v6101 = vunpack.c.h.b16 %v2909
        %v6102 = vunpack.c.l.b16 %v2910
        %v6103 = vunpack.c.h.b16 %v2910
        %v6104 = vunpack.c.l.b16 %v2911
        %v6105 = vunpack.c.h.b16 %v2911
        %v6106 = vunpack.c.l.b16 %v2912
        %v6107 = vunpack.c.h.b16 %v2912
        %v6108 = vunpack.c.l.b16 %v2913
        %v6109 = vunpack.c.h.b16 %v2913
        %v6110 = vunpack.c.l.b16 %v2914
        %v6111 = vunpack.c.h.b16 %v2914
        %v6112 = vunpack.c.l.b16 %v2915
        %v6113 = vunpack.c.h.b16 %v2915
        %v6114 = vunpack.c.l.b16 %v2916
        %v6115 = vunpack.c.h.b16 %v2916
        %v6116 = vunpack.c.l.b16 %v2917
        %v6117 = vunpack.c.h.b16 %v2917
        %v6118 = vunpack.c.l.b16 %v2918
        %v6119 = vunpack.c.h.b16 %v2918
        %v6120 = vunpack.c.l.b16 %v2919
        %v6121 = vunpack.c.h.b16 %v2919
        %v6122 = vunpack.c.l.b16 %v2920
        %v6123 = vunpack.c.h.b16 %v2920
        %v6124 = vunpack.c.l.b16 %v2921
        %v6125 = vunpack.c.h.b16 %v2921
        %v6126 = vunpack.c.l.b16 %v2922
        %v6127 = vunpack.c.h.b16 %v2922
        %v6128 = vunpack.c.l.b16 %v2923
        %v6129 = vunpack.c.h.b16 %v2923
        %v6130 = vunpack.c.l.b16 %v2924
        %v6131 = vunpack.c.h.b16 %v2924
        %v6132 = vunpack.c.l.b16 %v2925
        %v6133 = vunpack.c.h.b16 %v2925
        %v6134 = vunpack.c.l.b16 %v2926
        %v6135 = vunpack.c.h.b16 %v2926
        %v6136 = vunpack.c.l.b16 %v2927
        %v6137 = vunpack.c.h.b16 %v2927
        %v6138 = vunpack.c.l.b16 %v2928
        %v6139 = vunpack.c.h.b16 %v2928
        %v6140 = vunpack.c.l.b16 %v2929
        %v6141 = vunpack.c.h.b16 %v2929
        %v6142 = vunpack.c.l.b16 %v2930
        %v6143 = vunpack.c.h.b16 %v2930
        %v6144 = vunpack.c.l.b16 %v2931
        %v6145 = vunpack.c.h.b16 %v2931
        %v6146 = vunpack.c.l.b16 %v2932
        %v6147 = vunpack.c.h.b16 %v2932
        %v6148 = vunpack.c.l.b16 %v2933
        %v6149 = vunpack.c.h.b16 %v2933
        %v6150 = vunpack.c.l.b16 %v2934
        %v6151 = vunpack.c.h.b16 %v2934
        %v6152 = vunpack.c.l.b16 %v2935
        %v6153 = vunpack.c.h.b16 %v2935
        %v6154 = vunpack.c.l.b16 %v2936
        %v6155 = vunpack.c.h.b16 %v2936
        %v6156 = vunpack.c.l.b16 %v2937
        %v6157 = vunpack.c.h.b16 %v2937
        %v6158 = vunpack.c.l.b16 %v2938
        %v6159 = vunpack.c.h.b16 %v2938
        %v6160 = vunpack.c.l.b16 %v2939
        %v6161 = vunpack.c.h.b16 %v2939
        %v6162 = vunpack.c.l.b16 %v2940
        %v6163 = vunpack.c.h.b16 %v2940
        %v6164 = vunpack.c.l.b16 %v2941
        %v6165 = vunpack.c.h.b16 %v2941
        %v6166 = vunpack.c.l.b16 %v2942
        %v6167 = vunpack.c.h.b16 %v2942
        %v6168 = vunpack.c.l.b16 %v2943
        %v6169 = vunpack.c.h.b16 %v2943
        %v6170 = vunpack.c.l.b16 %v2944
        %v6171 = vunpack.c.h.b16 %v2944
        %v6172 = vunpack.c.l.b16 %v2945
        %v6173 = vunpack.c.h.b16 %v2945
        %v6174 = vunpack.c.l.b16 %v2946
        %v6175 = vunpack.c.h.b16 %v2946
        %v6176 = vunpack.c.l.b16 %v2947
        %v6177 = vunpack.c.h.b16 %v2947
        %v6178 = vunpack.c.l.b16 %v2948
        %v6179 = vunpack.c.h.b16 %v2948
        %v6180 = vunpack.c.l.b16 %v2949
        %v6181 = vunpack.c.h.b16 %v2949
        %v6182 = vunpack.c.l.b16 %v2950
        %v6183 = vunpack.c.h.b16 %v2950
        %v6184 = vunpack.c.l.b16 %v2951
        %v6185 = vunpack.c.h.b16 %v2951
        %v6186 = vunpack.c.l.b16 %v2952
        %v6187 = vunpack.c.h.b16 %v2952
        %v6188 = vunpack.c.l.b16 %v2953
        %v6189 = vunpack.c.h.b16 %v2953
        %v6190 = vunpack.c.l.b16 %v2954
        %v6191 = vunpack.c.h.b16 %v2954
        %v6192 = vunpack.c.l.b16 %v2955
        %v6193 = vunpack.c.h.b16 %v2955
        %v6194 = vunpack.c.l.b16 %v2956
        %v6195 = vunpack.c.h.b16 %v2956
        %v6196 = vunpack.c.l.b16 %v2957
        %v6197 = vunpack.c.h.b16 %v2957
        %v6198 = vunpack.c.l.b16 %v2958
        %v6199 = vunpack.c.h.b16 %v2958
        %v6200 = vunpack.c.l.b16 %v2959
        %v6201 = vunpack.c.h.b16 %v2959
        %v6202 = vunpack.c.l.b16 %v2960
        %v6203 = vunpack.c.h.b16 %v2960
        %v6204 = vunpack.c.l.b16 %v2961
        %v6205 = vunpack.c.h.b16 %v2961
        %v6206 = vunpack.c.l.b16 %v2962
        %v6207 = vunpack.c.h.b16 %v2962
        %v6208 = vunpack.c.l.b16 %v2963
        %v6209 = vunpack.c.h.b16 %v2963
        %v6210 = vunpack.c.l.b16 %v2964
        %v6211 = vunpack.c.h.b16 %v2964
        %v6212 = vunpack.c.l.b16 %v2965
        %v6213 = vunpack.c.h.b16 %v2965
        %v6214 = vunpack.c.l.b16 %v2966
        %v6215 = vunpack.c.h.b16 %v2966
        %v6216 = vunpack.c.l.b16 %v2967
        %v6217 = vunpack.c.h.b16 %v2967
        %v6218 = vunpack.c.l.b16 %v2968
        %v6219 = vunpack.c.h.b16 %v2968
        %v6220 = vunpack.c.l.b16 %v2969
        %v6221 = vunpack.c.h.b16 %v2969
        %v6222 = vunpack.c.l.b16 %v2970
        %v6223 = vunpack.c.h.b16 %v2970
        %v6224 = vunpack.c.l.b16 %v2971
        %v6225 = vunpack.c.h.b16 %v2971
        %v6226 = vunpack.c.l.b16 %v2972
        %v6227 = vunpack.c.h.b16 %v2972
        %v6228 = vunpack.c.l.b16 %v2973
        %v6229 = vunpack.c.h.b16 %v2973
        %v6230 = vunpack.c.l.b16 %v2974
        %v6231 = vunpack.c.h.b16 %v2974
        %v6232 = vunpack.c.l.b16 %v2975
        %v6233 = vunpack.c.h.b16 %v2975
        %v6234 = vunpack.c.l.b16 %v2976
        %v6235 = vunpack.c.h.b16 %v2976
        %v6236 = vunpack.c.l.b16 %v2977
        %v6237 = vunpack.c.h.b16 %v2977
        %v6238 = vunpack.c.l.b16 %v2978
        %v6239 = vunpack.c.h.b16 %v2978
        %v6240 = vunpack.c.l.b16 %v2979
        %v6241 = vunpack.c.h.b16 %v2979
        %v6242 = vunpack.c.l.b16 %v2980
        %v6243 = vunpack.c.h.b16 %v2980
        %v6244 = vunpack.c.l.b16 %v2981
        %v6245 = vunpack.c.h.b16 %v2981
        %v6246 = vunpack.c.l.b16 %v2982
        %v6247 = vunpack.c.h.b16 %v2982
        %v6248 = vunpack.c.l.b16 %v2983
        %v6249 = vunpack.c.h.b16 %v2983
        %v6250 = vunpack.c.l.b16 %v2984
        %v6251 = vunpack.c.h.b16 %v2984
        %v6252 = vunpack.c.l.b16 %v2985
        %v6253 = vunpack.c.h.b16 %v2985
        %v6254 = vunpack.c.l.b16 %v2986
        %v6255 = vunpack.c.h.b16 %v2986
        %v6256 = vunpack.c.l.b16 %v2987
        %v6257 = vunpack.c.h.b16 %v2987
        %v6258 = vunpack.c.l.b16 %v2988
        %v6259 = vunpack.c.h.b16 %v2988
        %v6260 = vunpack.c.l.b16 %v2989
        %v6261 = vunpack.c.h.b16 %v2989
        %v6262 = vunpack.c.l.b16 %v2990
        %v6263 = vunpack.c.h.b16 %v2990
        %v6264 = vunpack.c.l.b16 %v2991
        %v6265 = vunpack.c.h.b16 %v2991
        %v6266 = vunpack.c.l.b16 %v2992
        %v6267 = vunpack.c.h.b16 %v2992
        %v6268 = vunpack.c.l.b16 %v2993
        %v6269 = vunpack.c.h.b16 %v2993
        %v6270 = vunpack.c.l.b16 %v2994
        %v6271 = vunpack.c.h.b16 %v2994
        %v6272 = vunpack.c.l.b16 %v2995
        %v6273 = vunpack.c.h.b16 %v2995
        %v6274 = vunpack.c.l.b16 %v2996
        %v6275 = vunpack.c.h.b16 %v2996
        %v6276 = vunpack.c.l.b16 %v2997
        %v6277 = vunpack.c.h.b16 %v2997
        %v6278 = vunpack.c.l.b16 %v2998
        %v6279 = vunpack.c.h.b16 %v2998
        %v6280 = vunpack.c.l.b16 %v2999
        %v6281 = vunpack.c.h.b16 %v2999
        %v6282 = vunpack.c.l.b16 %v3000
        %v6283 = vunpack.c.h.b16 %v3000
        %v6284 = vunpack.c.l.b16 %v3001
        %v6285 = vunpack.c.h.b16 %v3001
        %v6286 = vunpack.c.l.b16 %v3002
        %v6287 = vunpack.c.h.b16 %v3002
        %v6288 = vunpack.c.l.b16 %v3003
        %v6289 = vunpack.c.h.b16 %v3003
        %v6290 = vunpack.c.l.b16 %v3004
        %v6291 = vunpack.c.h.b16 %v3004
        %v6292 = vunpack.c.l.b16 %v3005
        %v6293 = vunpack.c.h.b16 %v3005
        %v6294 = vunpack.c.l.b16 %v3006
        %v6295 = vunpack.c.h.b16 %v3006
        %v6296 = vunpack.c.l.b16 %v3007
        %v6297 = vunpack.c.h.b16 %v3007
        %v6298 = vunpack.c.l.b16 %v3008
        %v6299 = vunpack.c.h.b16 %v3008
        %v6300 = vunpack.c.l.b16 %v3009
        %v6301 = vunpack.c.h.b16 %v3009
        %v6302 = vunpack.c.l.b16 %v3010
        %v6303 = vunpack.c.h.b16 %v3010
        %v6304 = vunpack.c.l.b16 %v3011
        %v6305 = vunpack.c.h.b16 %v3011
        %v6306 = vunpack.c.l.b16 %v3012
        %v6307 = vunpack.c.h.b16 %v3012
        %v6308 = vunpack.c.l.b16 %v3013
        %v6309 = vunpack.c.h.b16 %v3013
        %v6310 = vunpack.c.l.b16 %v3014
        %v6311 = vunpack.c.h.b16 %v3014
        %v6312 = vunpack.c.l.b16 %v3015
        %v6313 = vunpack.c.h.b16 %v3015
        %v6314 = vunpack.c.l.b16 %v3016
        %v6315 = vunpack.c.h.b16 %v3016
        %v6316 = vunpack.c.l.b16 %v3017
        %v6317 = vunpack.c.h.b16 %v3017
        %v6318 = vunpack.c.l.b16 %v3018
        %v6319 = vunpack.c.h.b16 %v3018
        %v6320 = vunpack.c.l.b16 %v3019
        %v6321 = vunpack.c.h.b16 %v3019
        %v6322 = vunpack.c.l.b16 %v3020
        %v6323 = vunpack.c.h.b16 %v3020
        %v6324 = vunpack.c.l.b16 %v3021
        %v6325 = vunpack.c.h.b16 %v3021
        %v6326 = vunpack.c.l.b16 %v3022
        %v6327 = vunpack.c.h.b16 %v3022
        %v6328 = vunpack.c.l.b16 %v3023
        %v6329 = vunpack.c.h.b16 %v3023
        %v6330 = vunpack.c.l.b16 %v3024
        %v6331 = vunpack.c.h.b16 %v3024
        %v6332 = vunpack.c.l.b16 %v3025
        %v6333 = vunpack.c.h.b16 %v3025
        %v6334 = vunpack.c.l.b16 %v3026
        %v6335 = vunpack.c.h.b16 %v3026
        %v6336 = vunpack.c.l.b16 %v3027
        %v6337 = vunpack.c.h.b16 %v3027
        %v6338 = vunpack.c.l.b16 %v3028
        %v6339 = vunpack.c.h.b16 %v3028
        %v6340 = vunpack.c.l.b16 %v3029
        %v6341 = vunpack.c.h.b16 %v3029
        %v6342 = vunpack.c.l.b16 %v3030
        %v6343 = vunpack.c.h.b16 %v3030
        %v6344 = vunpack.c.l.b16 %v3031
        %v6345 = vunpack.c.h.b16 %v3031
        %v6346 = vunpack.c.l.b16 %v3032
        %v6347 = vunpack.c.h.b16 %v3032
        %v6348 = vunpack.c.l.b16 %v3033
        %v6349 = vunpack.c.h.b16 %v3033
        %v6350 = vunpack.c.l.b16 %v3034
        %v6351 = vunpack.c.h.b16 %v3034
        %v6352 = vunpack.c.l.b16 %v3035
        %v6353 = vunpack.c.h.b16 %v3035
        %v6354 = vunpack.c.l.b16 %v3036
        %v6355 = vunpack.c.h.b16 %v3036
        %v6356 = vunpack.c.l.b16 %v3037
        %v6357 = vunpack.c.h.b16 %v3037
        %v6358 = vunpack.c.l.b16 %v3038
        %v6359 = vunpack.c.h.b16 %v3038
        %v6360 = vunpack.c.l.b16 %v3039
        %v6361 = vunpack.c.h.b16 %v3039
        %v6362 = vunpack.c.l.b16 %v3040
        %v6363 = vunpack.c.h.b16 %v3040
        %v6364 = vunpack.c.l.b16 %v3041
        %v6365 = vunpack.c.h.b16 %v3041
        %v6366 = vunpack.c.l.b16 %v3042
        %v6367 = vunpack.c.h.b16 %v3042
        %v6368 = vunpack.c.l.b16 %v3043
        %v6369 = vunpack.c.h.b16 %v3043
        %v6370 = vunpack.c.l.b16 %v3044
        %v6371 = vunpack.c.h.b16 %v3044
        %v6372 = vunpack.c.l.b16 %v3045
        %v6373 = vunpack.c.h.b16 %v3045
        %v6374 = vunpack.c.l.b16 %v3046
        %v6375 = vunpack.c.h.b16 %v3046
        %v6376 = vunpack.c.l.b16 %v3047
        %v6377 = vunpack.c.h.b16 %v3047
        %v6378 = vunpack.c.l.b16 %v3048
        %v6379 = vunpack.c.h.b16 %v3048
        %v6380 = vunpack.c.l.b16 %v3049
        %v6381 = vunpack.c.h.b16 %v3049
        %v6382 = vunpack.c.l.b16 %v3050
        %v6383 = vunpack.c.h.b16 %v3050
        %v6384 = vunpack.c.l.b16 %v3051
        %v6385 = vunpack.c.h.b16 %v3051
        %v6386 = vunpack.c.l.b16 %v3052
        %v6387 = vunpack.c.h.b16 %v3052
        %v6388 = vunpack.c.l.b16 %v3053
        %v6389 = vunpack.c.h.b16 %v3053
        %v6390 = vunpack.c.l.b16 %v3054
        %v6391 = vunpack.c.h.b16 %v3054
        %v6392 = vunpack.c.l.b16 %v3055
        %v6393 = vunpack.c.h.b16 %v3055
        %v6394 = vunpack.c.l.b16 %v3056
        %v6395 = vunpack.c.h.b16 %v3056
        %v6396 = vunpack.c.l.b16 %v3057
        %v6397 = vunpack.c.h.b16 %v3057
        %v6398 = vunpack.c.l.b16 %v3058
        %v6399 = vunpack.c.h.b16 %v3058
        %v6400 = vunpack.c.l.b16 %v3059
        %v6401 = vunpack.c.h.b16 %v3059
        %v6402 = vunpack.c.l.b16 %v3060
        %v6403 = vunpack.c.h.b16 %v3060
        %v6404 = vunpack.c.l.b16 %v3061
        %v6405 = vunpack.c.h.b16 %v3061
        %v6406 = vunpack.c.l.b16 %v3062
        %v6407 = vunpack.c.h.b16 %v3062
        %v6408 = vunpack.c.l.b16 %v3063
        %v6409 = vunpack.c.h.b16 %v3063
        %v6410 = vunpack.c.l.b16 %v3064
        %v6411 = vunpack.c.h.b16 %v3064
        %v6412 = vunpack.c.l.b16 %v3065
        %v6413 = vunpack.c.h.b16 %v3065
        %v6414 = vunpack.c.l.b16 %v3066
        %v6415 = vunpack.c.h.b16 %v3066
        %v6416 = vunpack.c.l.b16 %v3067
        %v6417 = vunpack.c.h.b16 %v3067
        %v6418 = vunpack.c.l.b16 %v3068
        %v6419 = vunpack.c.h.b16 %v3068
        %v6420 = vunpack.c.l.b16 %v3069
        %v6421 = vunpack.c.h.b16 %v3069
        %v6422 = vunpack.c.l.b16 %v3070
        %v6423 = vunpack.c.h.b16 %v3070
        %v6424 = vunpack.c.l.b16 %v3071
        %v6425 = vunpack.c.h.b16 %v3071
        %v6426 = vunpack.c.l.b16 %v3072
        %v6427 = vunpack.c.h.b16 %v3072
        %v6428 = vunpack.c.l.b16 %v3073
        %v6429 = vunpack.c.h.b16 %v3073
        %v6430 = vunpack.c.l.b16 %v3074
        %v6431 = vunpack.c.h.b16 %v3074
        %v6432 = vunpack.c.l.b16 %v3075
        %v6433 = vunpack.c.h.b16 %v3075
        %v6434 = vunpack.c.l.b16 %v3076
        %v6435 = vunpack.c.h.b16 %v3076
        %v6436 = vunpack.c.l.b16 %v3077
        %v6437 = vunpack.c.h.b16 %v3077
        %v6438 = vunpack.c.l.b16 %v3078
        %v6439 = vunpack.c.h.b16 %v3078
        %v6440 = vunpack.c.l.b16 %v3079
        %v6441 = vunpack.c.h.b16 %v3079
        %v6442 = vunpack.c.l.b16 %v3080
        %v6443 = vunpack.c.h.b16 %v3080
        %v6444 = vunpack.c.l.b16 %v3081
        %v6445 = vunpack.c.h.b16 %v3081
        %v6446 = vunpack.c.l.b16 %v3082
        %v6447 = vunpack.c.h.b16 %v3082
        %v6448 = vunpack.c.l.b16 %v3083
        %v6449 = vunpack.c.h.b16 %v3083
        %v6450 = vunpack.c.l.b16 %v3084
        %v6451 = vunpack.c.h.b16 %v3084
        %v6452 = vunpack.c.l.b16 %v3085
        %v6453 = vunpack.c.h.b16 %v3085
        %v6454 = vunpack.c.l.b16 %v3086
        %v6455 = vunpack.c.h.b16 %v3086
        %v6456 = vunpack.c.l.b16 %v3087
        %v6457 = vunpack.c.h.b16 %v3087
        %v6458 = vunpack.c.l.b16 %v3088
        %v6459 = vunpack.c.h.b16 %v3088
        %v6460 = vunpack.c.l.b16 %v3089
        %v6461 = vunpack.c.h.b16 %v3089
        %v6462 = vunpack.c.l.b16 %v3090
        %v6463 = vunpack.c.h.b16 %v3090
        %v6464 = vunpack.c.l.b16 %v3091
        %v6465 = vunpack.c.h.b16 %v3091
        %v6466 = vunpack.c.l.b16 %v3092
        %v6467 = vunpack.c.h.b16 %v3092
        %v6468 = vunpack.c.l.b16 %v3093
        %v6469 = vunpack.c.h.b16 %v3093
        %v6470 = vunpack.c.l.b16 %v3094
        %v6471 = vunpack.c.h.b16 %v3094
        %v6472 = vunpack.c.l.b16 %v3095
        %v6473 = vunpack.c.h.b16 %v3095
        %v6474 = vunpack.c.l.b16 %v3096
        %v6475 = vunpack.c.h.b16 %v3096
        %v6476 = vunpack.c.l.b16 %v3097
        %v6477 = vunpack.c.h.b16 %v3097
        %v6478 = vunpack.c.l.b16 %v3098
        %v6479 = vunpack.c.h.b16 %v3098
        %v6480 = vunpack.c.l.b16 %v3099
        %v6481 = vunpack.c.h.b16 %v3099
        %v6482 = vunpack.c.l.b16 %v3100
        %v6483 = vunpack.c.h.b16 %v3100
        %v6484 = vunpack.c.l.b16 %v3101
        %v6485 = vunpack.c.h.b16 %v3101
        %v6486 = vunpack.c.l.b16 %v3102
        %v6487 = vunpack.c.h.b16 %v3102
        %v6488 = vunpack.c.l.b16 %v3103
        %v6489 = vunpack.c.h.b16 %v3103
        %v6490 = vunpack.c.l.b16 %v3104
        %v6491 = vunpack.c.h.b16 %v3104
        %v6492 = vunpack.c.l.b16 %v3105
        %v6493 = vunpack.c.h.b16 %v3105
        %v6494 = vunpack.c.l.b16 %v3106
        %v6495 = vunpack.c.h.b16 %v3106
        %v6496 = vunpack.c.l.b16 %v3107
        %v6497 = vunpack.c.h.b16 %v3107
        %v6498 = vunpack.c.l.b16 %v3108
        %v6499 = vunpack.c.h.b16 %v3108
        %v6500 = vunpack.c.l.b16 %v3109
        %v6501 = vunpack.c.h.b16 %v3109
        %v6502 = vunpack.c.l.b16 %v3110
        %v6503 = vunpack.c.h.b16 %v3110
        %v6504 = vunpack.c.l.b16 %v3111
        %v6505 = vunpack.c.h.b16 %v3111
        %v6506 = vunpack.c.l.b16 %v3112
        %v6507 = vunpack.c.h.b16 %v3112
        %v6508 = vunpack.c.l.b16 %v3113
        %v6509 = vunpack.c.h.b16 %v3113
        %v6510 = vunpack.c.l.b16 %v3114
        %v6511 = vunpack.c.h.b16 %v3114
        %v6512 = vunpack.c.l.b16 %v3115
        %v6513 = vunpack.c.h.b16 %v3115
        %v6514 = vunpack.c.l.b16 %v3116
        %v6515 = vunpack.c.h.b16 %v3116
        %v6516 = vunpack.c.l.b16 %v3117
        %v6517 = vunpack.c.h.b16 %v3117
        %v6518 = vunpack.c.l.b16 %v3118
        %v6519 = vunpack.c.h.b16 %v3118
        %v6520 = vunpack.c.l.b16 %v3119
        %v6521 = vunpack.c.h.b16 %v3119
        %v6522 = vunpack.c.l.b16 %v3120
        %v6523 = vunpack.c.h.b16 %v3120
        %v6524 = vunpack.c.l.b16 %v3121
        %v6525 = vunpack.c.h.b16 %v3121
        %v6526 = vunpack.c.l.b16 %v3122
        %v6527 = vunpack.c.h.b16 %v3122
        %v6528 = vunpack.c.l.b16 %v3123
        %v6529 = vunpack.c.h.b16 %v3123
        %v6530 = vunpack.c.l.b16 %v3124
        %v6531 = vunpack.c.h.b16 %v3124
        %v6532 = vunpack.c.l.b16 %v3125
        %v6533 = vunpack.c.h.b16 %v3125
        %v6534 = vunpack.c.l.b16 %v3126
        %v6535 = vunpack.c.h.b16 %v3126
        %v6536 = vunpack.c.l.b16 %v3127
        %v6537 = vunpack.c.h.b16 %v3127
        %v6538 = vunpack.c.l.b16 %v3128
        %v6539 = vunpack.c.h.b16 %v3128
        %v6540 = vunpack.c.l.b16 %v3129
        %v6541 = vunpack.c.h.b16 %v3129
        %v6542 = vunpack.c.l.b16 %v3130
        %v6543 = vunpack.c.h.b16 %v3130
        %v6544 = vunpack.c.l.b16 %v3131
        %v6545 = vunpack.c.h.b16 %v3131
        %v6546 = vunpack.c.l.b16 %v3132
        %v6547 = vunpack.c.h.b16 %v3132
        %v6548 = vunpack.c.l.b16 %v3133
        %v6549 = vunpack.c.h.b16 %v3133
        %v6550 = vunpack.c.l.b16 %v3134
        %v6551 = vunpack.c.h.b16 %v3134
        %v6552 = vunpack.c.l.b16 %v3135
        %v6553 = vunpack.c.h.b16 %v3135
        %v6554 = vunpack.c.l.b16 %v3136
        %v6555 = vunpack.c.h.b16 %v3136
        %v6556 = vunpack.c.l.b16 %v3137
        %v6557 = vunpack.c.h.b16 %v3137
        %v6558 = vunpack.c.l.b16 %v3138
        %v6559 = vunpack.c.h.b16 %v3138
        %v6560 = vunpack.c.l.b16 %v3139
        %v6561 = vunpack.c.h.b16 %v3139
        %v6562 = vunpack.c.l.b16 %v3140
        %v6563 = vunpack.c.h.b16 %v3140
        %v6564 = vunpack.c.l.b16 %v3141
        %v6565 = vunpack.c.h.b16 %v3141
        %v6566 = vunpack.c.l.b16 %v3142
        %v6567 = vunpack.c.h.b16 %v3142
        %v6568 = vunpack.c.l.b16 %v3143
        %v6569 = vunpack.c.h.b16 %v3143
        %v6570 = vunpack.c.l.b16 %v3144
        %v6571 = vunpack.c.h.b16 %v3144
        %v6572 = vunpack.c.l.b16 %v3145
        %v6573 = vunpack.c.h.b16 %v3145
        %v6574 = vunpack.c.l.b16 %v3146
        %v6575 = vunpack.c.h.b16 %v3146
        %v6576 = vunpack.c.l.b16 %v3147
        %v6577 = vunpack.c.h.b16 %v3147
        %v6578 = vunpack.c.l.b16 %v3148
        %v6579 = vunpack.c.h.b16 %v3148
        %v6580 = vunpack.c.l.b16 %v3149
        %v6581 = vunpack.c.h.b16 %v3149
        %v6582 = vunpack.c.l.b16 %v3150
        %v6583 = vunpack.c.h.b16 %v3150
        %v6584 = vunpack.c.l.b16 %v3151
        %v6585 = vunpack.c.h.b16 %v3151
        %v6586 = vunpack.c.l.b16 %v3152
        %v6587 = vunpack.c.h.b16 %v3152
        %v6588 = vunpack.c.l.b16 %v3153
        %v6589 = vunpack.c.h.b16 %v3153
        %v6590 = vunpack.c.l.b16 %v3154
        %v6591 = vunpack.c.h.b16 %v3154
        %v6592 = vunpack.c.l.b16 %v3155
        %v6593 = vunpack.c.h.b16 %v3155
        %v6594 = vunpack.c.l.b16 %v3156
        %v6595 = vunpack.c.h.b16 %v3156
        %v6596 = vunpack.c.l.b16 %v3157
        %v6597 = vunpack.c.h.b16 %v3157
        %v6598 = vunpack.c.l.b16 %v3158
        %v6599 = vunpack.c.h.b16 %v3158
        %v6600 = vunpack.c.l.b16 %v3159
        %v6601 = vunpack.c.h.b16 %v3159
        %v6602 = vunpack.c.l.b16 %v3160
        %v6603 = vunpack.c.h.b16 %v3160
        %v6604 = vunpack.c.l.b16 %v3161
        %v6605 = vunpack.c.h.b16 %v3161
        %v6606 = vunpack.c.l.b16 %v3162
        %v6607 = vunpack.c.h.b16 %v3162
        %v6608 = vunpack.c.l.b16 %v3163
        %v6609 = vunpack.c.h.b16 %v3163
        %v6610 = vunpack.c.l.b16 %v3164
        %v6611 = vunpack.c.h.b16 %v3164
        %v6612 = vunpack.c.l.b16 %v3165
        %v6613 = vunpack.c.h.b16 %v3165
        %v6614 = vunpack.c.l.b16 %v3166
        %v6615 = vunpack.c.h.b16 %v3166
        %v6616 = vunpack.c.l.b16 %v3167
        %v6617 = vunpack.c.h.b16 %v3167
        %v6618 = vunpack.c.l.b16 %v3168
        %v6619 = vunpack.c.h.b16 %v3168
        %v6620 = vunpack.c.l.b16 %v3169
        %v6621 = vunpack.c.h.b16 %v3169
        %v6622 = vunpack.c.l.b16 %v3170
        %v6623 = vunpack.c.h.b16 %v3170
        %v6624 = vunpack.c.l.b16 %v3171
        %v6625 = vunpack.c.h.b16 %v3171
        %v6626 = vunpack.c.l.b16 %v3172
        %v6627 = vunpack.c.h.b16 %v3172
        %v6628 = vunpack.c.l.b16 %v3173
        %v6629 = vunpack.c.h.b16 %v3173
        %v6630 = vunpack.c.l.b16 %v3174
        %v6631 = vunpack.c.h.b16 %v3174
        %v6632 = vunpack.c.l.b16 %v3175
        %v6633 = vunpack.c.h.b16 %v3175
        %v6634 = vunpack.c.l.b16 %v3176
        %v6635 = vunpack.c.h.b16 %v3176
        %v6636 = vunpack.c.l.b16 %v3177
        %v6637 = vunpack.c.h.b16 %v3177
        %v6638 = vunpack.c.l.b16 %v3178
        %v6639 = vunpack.c.h.b16 %v3178
        %v6640 = vunpack.c.l.b16 %v3179
        %v6641 = vunpack.c.h.b16 %v3179
        %v6642 = vunpack.c.l.b16 %v3180
        %v6643 = vunpack.c.h.b16 %v3180
        %v6644 = vunpack.c.l.b16 %v3181
        %v6645 = vunpack.c.h.b16 %v3181
        %v6646 = vunpack.c.l.b16 %v3182
        %v6647 = vunpack.c.h.b16 %v3182
        %v6648 = vunpack.c.l.b16 %v3183
        %v6649 = vunpack.c.h.b16 %v3183
        %v6650 = vunpack.c.l.b16 %v3184
        %v6651 = vunpack.c.h.b16 %v3184
        %v6652 = vunpack.c.l.b16 %v3185
        %v6653 = vunpack.c.h.b16 %v3185
        %v6654 = vunpack.c.l.b16 %v3186
        %v6655 = vunpack.c.h.b16 %v3186
        %v6656 = vunpack.c.l.b16 %v3187
        %v6657 = vunpack.c.h.b16 %v3187
        %v6658 = vunpack.c.l.b16 %v3188
        %v6659 = vunpack.c.h.b16 %v3188
        %v6660 = vunpack.c.l.b16 %v3189
        %v6661 = vunpack.c.h.b16 %v3189
        %v6662 = vunpack.c.l.b16 %v3190
        %v6663 = vunpack.c.h.b16 %v3190
        %v6664 = vunpack.c.l.b16 %v3191
        %v6665 = vunpack.c.h.b16 %v3191
        %v6666 = vunpack.c.l.b16 %v3192
        %v6667 = vunpack.c.h.b16 %v3192
        %v6668 = vunpack.c.l.b16 %v3193
        %v6669 = vunpack.c.h.b16 %v3193
        %v6670 = vunpack.c.l.b16 %v3194
        %v6671 = vunpack.c.h.b16 %v3194
        %v6672 = vunpack.c.l.b16 %v3195
        %v6673 = vunpack.c.h.b16 %v3195
        %v6674 = vunpack.c.l.b16 %v3196
        %v6675 = vunpack.c.h.b16 %v3196
        %v6676 = vunpack.c.l.b16 %v3197
        %v6677 = vunpack.c.h.b16 %v3197
        %v6678 = vunpack.c.l.b16 %v3198
        %v6679 = vunpack.c.h.b16 %v3198
        %v6680 = vunpack.c.l.b16 %v3199
        %v6681 = vunpack.c.h.b16 %v3199
        %v6682 = vunpack.c.l.b16 %v3200
        %v6683 = vunpack.c.h.b16 %v3200
        %v6684 = vunpack.c.l.b16 %v3201
        %v6685 = vunpack.c.h.b16 %v3201
        %v6686 = vunpack.c.l.b16 %v3202
        %v6687 = vunpack.c.h.b16 %v3202
        %v6688 = vunpack.c.l.b16 %v3203
        %v6689 = vunpack.c.h.b16 %v3203
        %v6690 = vunpack.c.l.b16 %v3204
        %v6691 = vunpack.c.h.b16 %v3204
        %v6692 = vunpack.c.l.b16 %v3205
        %v6693 = vunpack.c.h.b16 %v3205
        %v6694 = vunpack.c.l.b16 %v3206
        %v6695 = vunpack.c.h.b16 %v3206
        %v6696 = vunpack.c.l.b16 %v3207
        %v6697 = vunpack.c.h.b16 %v3207
        %v6698 = vunpack.c.l.b16 %v3208
        %v6699 = vunpack.c.h.b16 %v3208
        %v6700 = vunpack.c.l.b16 %v3209
        %v6701 = vunpack.c.h.b16 %v3209
        %v6702 = vunpack.c.l.b16 %v3210
        %v6703 = vunpack.c.h.b16 %v3210
        %v6704 = vunpack.c.l.b16 %v3211
        %v6705 = vunpack.c.h.b16 %v3211
        %v6706 = vunpack.c.l.b16 %v3212
        %v6707 = vunpack.c.h.b16 %v3212
        %v6708 = vunpack.c.l.b16 %v3213
        %v6709 = vunpack.c.h.b16 %v3213
        %v6710 = vunpack.c.l.b16 %v3214
        %v6711 = vunpack.c.h.b16 %v3214
        %v6712 = vunpack.c.l.b16 %v3215
        %v6713 = vunpack.c.h.b16 %v3215
        %v6714 = vunpack.c.l.b16 %v3216
        %v6715 = vunpack.c.h.b16 %v3216
        %v6716 = vunpack.c.l.b16 %v3217
        %v6717 = vunpack.c.h.b16 %v3217
        %v6718 = vunpack.c.l.b16 %v3218
        %v6719 = vunpack.c.h.b16 %v3218
        %v6720 = vunpack.c.l.b16 %v3219
        %v6721 = vunpack.c.h.b16 %v3219
        %v6722 = vunpack.c.l.b16 %v3220
        %v6723 = vunpack.c.h.b16 %v3220
        %v6724 = vunpack.c.l.b16 %v3221
        %v6725 = vunpack.c.h.b16 %v3221
        %v6726 = vunpack.c.l.b16 %v3222
        %v6727 = vunpack.c.h.b16 %v3222
        %v6728 = vunpack.c.l.b16 %v3223
        %v6729 = vunpack.c.h.b16 %v3223
        %v6730 = vunpack.c.l.b16 %v3224
        %v6731 = vunpack.c.h.b16 %v3224
        %v6732 = vunpack.c.l.b16 %v3225
        %v6733 = vunpack.c.h.b16 %v3225
        %v6734 = vunpack.c.l.b16 %v3226
        %v6735 = vunpack.c.h.b16 %v3226
        %v6736 = vunpack.c.l.b16 %v3227
        %v6737 = vunpack.c.h.b16 %v3227
        %v6738 = vunpack.c.l.b16 %v3228
        %v6739 = vunpack.c.h.b16 %v3228
        %v6740 = vunpack.c.l.b16 %v3229
        %v6741 = vunpack.c.h.b16 %v3229
        %v6742 = vunpack.c.l.b16 %v3230
        %v6743 = vunpack.c.h.b16 %v3230
        %v6744 = vunpack.c.l.b16 %v3231
        %v6745 = vunpack.c.h.b16 %v3231
        %v6746 = vunpack.c.l.b16 %v3232
        %v6747 = vunpack.c.h.b16 %v3232
        %v6748 = vunpack.c.l.b16 %v3233
        %v6749 = vunpack.c.h.b16 %v3233
        %v6750 = vunpack.c.l.b16 %v3234
        %v6751 = vunpack.c.h.b16 %v3234
        %v6752 = vunpack.c.l.b16 %v3235
        %v6753 = vunpack.c.h.b16 %v3235
        %v6754 = vunpack.c.l.b16 %v3236
        %v6755 = vunpack.c.h.b16 %v3236
        %v6756 = vunpack.c.l.b16 %v3237
        %v6757 = vunpack.c.h.b16 %v3237
        %v6758 = vunpack.c.l.b16 %v3238
        %v6759 = vunpack.c.h.b16 %v3238
        %v6760 = vunpack.c.l.b16 %v3239
        %v6761 = vunpack.c.h.b16 %v3239
        %v6762 = vunpack.c.l.b16 %v3240
        %v6763 = vunpack.c.h.b16 %v3240
        %v6764 = vunpack.c.l.b16 %v3241
        %v6765 = vunpack.c.h.b16 %v3241
        %v6766 = vunpack.c.l.b16 %v3242
        %v6767 = vunpack.c.h.b16 %v3242
        %v6768 = vunpack.c.l.b16 %v3243
        %v6769 = vunpack.c.h.b16 %v3243
        %v6770 = vunpack.c.l.b16 %v3244
        %v6771 = vunpack.c.h.b16 %v3244
        %v6772 = vunpack.c.l.b16 %v3245
        %v6773 = vunpack.c.h.b16 %v3245
        %v6774 = vunpack.c.l.b16 %v3246
        %v6775 = vunpack.c.h.b16 %v3246
        %v6776 = vunpack.c.l.b16 %v3247
        %v6777 = vunpack.c.h.b16 %v3247
        %v6778 = vunpack.c.l.b16 %v3248
        %v6779 = vunpack.c.h.b16 %v3248
        %v6780 = vunpack.c.l.b16 %v3249
        %v6781 = vunpack.c.h.b16 %v3249
        %v6782 = vunpack.c.l.b16 %v3250
        %v6783 = vunpack.c.h.b16 %v3250
        %v6784 = vunpack.c.l.b16 %v3251
        %v6785 = vunpack.c.h.b16 %v3251
        %v6786 = vunpack.c.l.b16 %v3252
        %v6787 = vunpack.c.h.b16 %v3252
        %v6788 = vunpack.c.l.b16 %v3253
        %v6789 = vunpack.c.h.b16 %v3253
        %v6790 = vunpack.c.l.b16 %v3254
        %v6791 = vunpack.c.h.b16 %v3254
        %v6792 = vunpack.c.l.b16 %v3255
        %v6793 = vunpack.c.h.b16 %v3255
        %v6794 = vunpack.c.l.b16 %v3256
        %v6795 = vunpack.c.h.b16 %v3256
        %v6796 = vunpack.c.l.b16 %v3257
        %v6797 = vunpack.c.h.b16 %v3257
        %v6798 = vunpack.c.l.b16 %v3258
        %v6799 = vunpack.c.h.b16 %v3258
        %v6800 = vunpack.c.l.b16 %v3259
        %v6801 = vunpack.c.h.b16 %v3259
        %v6802 = vunpack.c.l.b16 %v3260
        %v6803 = vunpack.c.h.b16 %v3260
        %v6804 = vunpack.c.l.b16 %v3261
        %v6805 = vunpack.c.h.b16 %v3261
        %v6806 = vunpack.c.l.b16 %v3262
        %v6807 = vunpack.c.h.b16 %v3262
        %v6808 = vunpack.c.l.b16 %v3263
        %v6809 = vunpack.c.h.b16 %v3263
        %v6810 = vunpack.c.l.b16 %v3264
        %v6811 = vunpack.c.h.b16 %v3264
        %v6812 = vunpack.c.l.b16 %v3265
        %v6813 = vunpack.c.h.b16 %v3265
        %v6814 = vunpack.c.l.b16 %v3266
        %v6815 = vunpack.c.h.b16 %v3266
        %v6816 = vunpack.c.l.b16 %v3267
        %v6817 = vunpack.c.h.b16 %v3267
        %v6818 = vunpack.c.l.b16 %v3268
        %v6819 = vunpack.c.h.b16 %v3268
        %v6820 = vunpack.c.l.b16 %v3269
        %v6821 = vunpack.c.h.b16 %v3269
        %v6822 = vunpack.c.l.b16 %v3270
        %v6823 = vunpack.c.h.b16 %v3270
        %v6824 = vunpack.c.l.b16 %v3271
        %v6825 = vunpack.c.h.b16 %v3271
        %v6826 = vunpack.c.l.b16 %v3272
        %v6827 = vunpack.c.h.b16 %v3272
        %v6828 = vunpack.c.l.b16 %v3273
        %v6829 = vunpack.c.h.b16 %v3273
        %v6830 = vunpack.c.l.b16 %v3274
        %v6831 = vunpack.c.h.b16 %v3274
        %v6832 = vunpack.c.l.b16 %v3275
        %v6833 = vunpack.c.h.b16 %v3275
        %v6834 = vunpack.c.l.b16 %v3276
        %v6835 = vunpack.c.h.b16 %v3276
        %v6836 = vunpack.c.l.b16 %v3277
        %v6837 = vunpack.c.h.b16 %v3277
        %v6838 = vunpack.c.l.b16 %v3278
        %v6839 = vunpack.c.h.b16 %v3278
        %v6840 = vunpack.c.l.b16 %v3279
        %v6841 = vunpack.c.h.b16 %v3279
        %v6842 = vunpack.c.l.b16 %v3280
        %v6843 = vunpack.c.h.b16 %v3280
        %v6844 = vunpack.c.l.b16 %v3281
        %v6845 = vunpack.c.h.b16 %v3281
        %v6846 = vunpack.c.l.b16 %v3282
        %v6847 = vunpack.c.h.b16 %v3282
        %v6848 = vunpack.c.l.b16 %v3283
        %v6849 = vunpack.c.h.b16 %v3283
        %v6850 = vunpack.c.l.b16 %v3284
        %v6851 = vunpack.c.h.b16 %v3284
        %v6852 = vunpack.c.l.b16 %v3285
        %v6853 = vunpack.c.h.b16 %v3285
        %v6854 = vunpack.c.l.b16 %v3286
        %v6855 = vunpack.c.h.b16 %v3286
        %v6856 = vunpack.c.l.b16 %v3287
        %v6857 = vunpack.c.h.b16 %v3287
        %v6858 = vunpack.c.l.b16 %v3288
        %v6859 = vunpack.c.h.b16 %v3288
        %v6860 = vunpack.c.l.b16 %v3289
        %v6861 = vunpack.c.h.b16 %v3289
        %v6862 = vunpack.c.l.b16 %v3290
        %v6863 = vunpack.c.h.b16 %v3290
        %v6864 = vunpack.c.l.b16 %v3291
        %v6865 = vunpack.c.h.b16 %v3291
        %v6866 = vunpack.c.l.b16 %v3292
        %v6867 = vunpack.c.h.b16 %v3292
        %v6868 = vunpack.c.l.b16 %v3293
        %v6869 = vunpack.c.h.b16 %v3293
        %v6870 = vunpack.c.l.b16 %v3294
        %v6871 = vunpack.c.h.b16 %v3294
        %v6872 = vunpack.c.l.b16 %v3295
        %v6873 = vunpack.c.h.b16 %v3295
        %v6874 = vunpack.c.l.b16 %v3296
        %v6875 = vunpack.c.h.b16 %v3296
        %v6876 = vunpack.c.l.b16 %v3297
        %v6877 = vunpack.c.h.b16 %v3297
        %v6878 = vunpack.c.l.b16 %v3298
        %v6879 = vunpack.c.h.b16 %v3298
        %v6880 = vunpack.c.l.b16 %v3299
        %v6881 = vunpack.c.h.b16 %v3299
        %v6882 = vunpack.c.l.b16 %v3300
        %v6883 = vunpack.c.h.b16 %v3300
        %v6884 = vunpack.c.l.b16 %v3301
        %v6885 = vunpack.c.h.b16 %v3301
        %v6886 = vunpack.c.l.b16 %v3302
        %v6887 = vunpack.c.h.b16 %v3302
        %v6888 = vunpack.c.l.b16 %v3303
        %v6889 = vunpack.c.h.b16 %v3303
        %v6890 = vunpack.c.l.b16 %v3304
        %v6891 = vunpack.c.h.b16 %v3304
        %v6892 = vunpack.c.l.b16 %v3305
        %v6893 = vunpack.c.h.b16 %v3305
        %v6894 = vunpack.c.l.b16 %v3306
        %v6895 = vunpack.c.h.b16 %v3306
        %v6896 = vunpack.c.l.b16 %v3307
        %v6897 = vunpack.c.h.b16 %v3307
        %v6898 = vunpack.c.l.b16 %v3308
        %v6899 = vunpack.c.h.b16 %v3308
        %v6900 = vunpack.c.l.b16 %v3309
        %v6901 = vunpack.c.h.b16 %v3309
        %v6902 = vunpack.c.l.b16 %v3310
        %v6903 = vunpack.c.h.b16 %v3310
        %v6904 = vunpack.c.l.b16 %v3311
        %v6905 = vunpack.c.h.b16 %v3311
        %v6906 = vunpack.c.l.b16 %v3312
        %v6907 = vunpack.c.h.b16 %v3312
        %v6908 = vunpack.c.l.b16 %v3313
        %v6909 = vunpack.c.h.b16 %v3313
        %v6910 = vunpack.c.l.b16 %v3314
        %v6911 = vunpack.c.h.b16 %v3314
        %v6912 = vunpack.c.l.b16 %v3315
        %v6913 = vunpack.c.h.b16 %v3315
        %v6914 = vunpack.c.l.b16 %v3316
        %v6915 = vunpack.c.h.b16 %v3316
        %v6916 = vunpack.c.l.b16 %v3317
        %v6917 = vunpack.c.h.b16 %v3317
        %v6918 = vunpack.c.l.b16 %v3318
        %v6919 = vunpack.c.h.b16 %v3318
        %v6920 = vunpack.c.l.b16 %v3319
        %v6921 = vunpack.c.h.b16 %v3319
        %v6922 = vunpack.c.l.b16 %v3320
        %v6923 = vunpack.c.h.b16 %v3320
        %v6924 = vunpack.c.l.b16 %v3321
        %v6925 = vunpack.c.h.b16 %v3321
        %v6926 = vunpack.c.l.b16 %v3322
        %v6927 = vunpack.c.h.b16 %v3322
        %v6928 = vunpack.c.l.b16 %v3323
        %v6929 = vunpack.c.h.b16 %v3323
        %v6930 = vunpack.c.l.b16 %v3324
        %v6931 = vunpack.c.h.b16 %v3324
        %v6932 = vunpack.c.l.b16 %v3325
        %v6933 = vunpack.c.h.b16 %v3325
        %v6934 = vunpack.c.l.b16 %v3326
        %v6935 = vunpack.c.h.b16 %v3326
        %v6936 = vunpack.c.l.b16 %v3327
        %v6937 = vunpack.c.h.b16 %v3327
        %v6938 = vunpack.c.l.b16 %v3328
        %v6939 = vunpack.c.h.b16 %v3328
        %v6940 = vunpack.c.l.b16 %v3329
        %v6941 = vunpack.c.h.b16 %v3329
        %v6942 = vunpack.c.l.b16 %v3330
        %v6943 = vunpack.c.h.b16 %v3330
        %v6944 = vunpack.c.l.b16 %v3331
        %v6945 = vunpack.c.h.b16 %v3331
        %v6946 = vunpack.c.l.b16 %v3332
        %v6947 = vunpack.c.h.b16 %v3332
        %v6948 = vunpack.c.l.b16 %v3333
        %v6949 = vunpack.c.h.b16 %v3333
        %v6950 = vunpack.c.l.b16 %v3334
        %v6951 = vunpack.c.h.b16 %v3334
        %v6952 = vunpack.c.l.b16 %v3335
        %v6953 = vunpack.c.h.b16 %v3335
        %v6954 = vunpack.c.l.b16 %v3336
        %v6955 = vunpack.c.h.b16 %v3336
        %v6956 = vunpack.c.l.b16 %v3337
        %v6957 = vunpack.c.h.b16 %v3337
        %v6958 = vunpack.c.l.b16 %v3338
        %v6959 = vunpack.c.h.b16 %v3338
        %v6960 = vunpack.c.l.b16 %v3339
        %v6961 = vunpack.c.h.b16 %v3339
        %v6962 = vunpack.c.l.b16 %v3340
        %v6963 = vunpack.c.h.b16 %v3340
        %v6964 = vunpack.c.l.b16 %v3341
        %v6965 = vunpack.c.h.b16 %v3341
        %v6966 = vunpack.c.l.b16 %v3342
        %v6967 = vunpack.c.h.b16 %v3342
        %v6968 = vunpack.c.l.b16 %v3343
        %v6969 = vunpack.c.h.b16 %v3343
        %v6970 = vunpack.c.l.b16 %v3344
        %v6971 = vunpack.c.h.b16 %v3344
        %v6972 = vunpack.c.l.b16 %v3345
        %v6973 = vunpack.c.h.b16 %v3345
        %v6974 = vunpack.c.l.b16 %v3346
        %v6975 = vunpack.c.h.b16 %v3346
        %v6976 = vunpack.c.l.b16 %v3347
        %v6977 = vunpack.c.h.b16 %v3347
        %v6978 = vunpack.c.l.b16 %v3348
        %v6979 = vunpack.c.h.b16 %v3348
        %v6980 = vunpack.c.l.b16 %v3349
        %v6981 = vunpack.c.h.b16 %v3349
        %v6982 = vunpack.c.l.b16 %v3350
        %v6983 = vunpack.c.h.b16 %v3350
        %v6984 = vunpack.c.l.b16 %v3351
        %v6985 = vunpack.c.h.b16 %v3351
        %v6986 = vunpack.c.l.b16 %v3352
        %v6987 = vunpack.c.h.b16 %v3352
        %v6988 = vunpack.c.l.b16 %v3353
        %v6989 = vunpack.c.h.b16 %v3353
        %v6990 = vunpack.c.l.b16 %v3354
        %v6991 = vunpack.c.h.b16 %v3354
        %v6992 = vunpack.c.l.b16 %v3355
        %v6993 = vunpack.c.h.b16 %v3355
        %v6994 = vunpack.c.l.b16 %v3356
        %v6995 = vunpack.c.h.b16 %v3356
        %v6996 = vunpack.c.l.b16 %v3357
        %v6997 = vunpack.c.h.b16 %v3357
        %v6998 = vunpack.c.l.b16 %v3358
        %v6999 = vunpack.c.h.b16 %v3358
        %v7000 = vunpack.c.l.b16 %v3359
        %v7001 = vunpack.c.h.b16 %v3359
        %v7002 = vunpack.c.l.b16 %v3360
        %v7003 = vunpack.c.h.b16 %v3360
        %v7004 = vunpack.c.l.b16 %v3361
        %v7005 = vunpack.c.h.b16 %v3361
        %v7006 = vunpack.c.l.b16 %v3362
        %v7007 = vunpack.c.h.b16 %v3362
        %v7008 = vunpack.c.l.b16 %v3363
        %v7009 = vunpack.c.h.b16 %v3363
        %v7010 = vunpack.c.l.b16 %v3364
        %v7011 = vunpack.c.h.b16 %v3364
        %v7012 = vunpack.c.l.b16 %v3365
        %v7013 = vunpack.c.h.b16 %v3365
        %v7014 = vunpack.c.l.b16 %v3366
        %v7015 = vunpack.c.h.b16 %v3366
        %v7016 = vunpack.c.l.b16 %v3367
        %v7017 = vunpack.c.h.b16 %v3367
        %v7018 = vunpack.c.l.b16 %v3368
        %v7019 = vunpack.c.h.b16 %v3368
        %v7020 = vunpack.c.l.b16 %v3369
        %v7021 = vunpack.c.h.b16 %v3369
        %v7022 = vunpack.c.l.b16 %v3370
        %v7023 = vunpack.c.h.b16 %v3370
        %v7024 = vunpack.c.l.b16 %v3371
        %v7025 = vunpack.c.h.b16 %v3371
        %v7026 = vunpack.c.l.b16 %v3372
        %v7027 = vunpack.c.h.b16 %v3372
        %v7028 = vunpack.c.l.b16 %v3373
        %v7029 = vunpack.c.h.b16 %v3373
        %v7030 = vunpack.c.l.b16 %v3374
        %v7031 = vunpack.c.h.b16 %v3374
        %v7032 = vunpack.c.l.b16 %v3375
        %v7033 = vunpack.c.h.b16 %v3375
        %v7034 = vunpack.c.l.b16 %v3376
        %v7035 = vunpack.c.h.b16 %v3376
        %v7036 = vunpack.c.l.b16 %v3377
        %v7037 = vunpack.c.h.b16 %v3377
        %v7038 = vunpack.c.l.b16 %v3378
        %v7039 = vunpack.c.h.b16 %v3378
        %v7040 = vunpack.c.l.b16 %v3379
        %v7041 = vunpack.c.h.b16 %v3379
        %v7042 = vunpack.c.l.b16 %v3380
        %v7043 = vunpack.c.h.b16 %v3380
        %v7044 = vunpack.c.l.b16 %v3381
        %v7045 = vunpack.c.h.b16 %v3381
        %v7046 = vunpack.c.l.b16 %v3382
        %v7047 = vunpack.c.h.b16 %v3382
        %v7048 = vunpack.c.l.b16 %v3383
        %v7049 = vunpack.c.h.b16 %v3383
        %v7050 = vunpack.c.l.b16 %v3384
        %v7051 = vunpack.c.h.b16 %v3384
        %v7052 = vunpack.c.l.b16 %v3385
        %v7053 = vunpack.c.h.b16 %v3385
        %v7054 = vunpack.c.l.b16 %v3386
        %v7055 = vunpack.c.h.b16 %v3386
        %v7056 = vunpack.c.l.b16 %v3387
        %v7057 = vunpack.c.h.b16 %v3387
        %v7058 = vunpack.c.l.b16 %v3388
        %v7059 = vunpack.c.h.b16 %v3388
        %v7060 = vunpack.c.l.b16 %v3389
        %v7061 = vunpack.c.h.b16 %v3389
        %v7062 = vunpack.c.l.b16 %v3390
        %v7063 = vunpack.c.h.b16 %v3390
        %v7064 = vunpack.c.l.b16 %v3391
        %v7065 = vunpack.c.h.b16 %v3391
        %v7066 = vunpack.c.l.b16 %v3392
        %v7067 = vunpack.c.h.b16 %v3392
        %v7068 = vunpack.c.l.b16 %v3393
        %v7069 = vunpack.c.h.b16 %v3393
        %v7070 = vunpack.c.l.b16 %v3394
        %v7071 = vunpack.c.h.b16 %v3394
        %v7072 = vunpack.c.l.b16 %v3395
        %v7073 = vunpack.c.h.b16 %v3395
        %v7074 = vunpack.c.l.b16 %v3396
        %v7075 = vunpack.c.h.b16 %v3396
        %v7076 = vunpack.c.l.b16 %v3397
        %v7077 = vunpack.c.h.b16 %v3397
        %v7078 = vunpack.c.l.b16 %v3398
        %v7079 = vunpack.c.h.b16 %v3398
        %v7080 = vunpack.c.l.b16 %v3399
        %v7081 = vunpack.c.h.b16 %v3399
        %v7082 = vunpack.c.l.b16 %v3400
        %v7083 = vunpack.c.h.b16 %v3400
        %v7084 = vunpack.c.l.b16 %v3401
        %v7085 = vunpack.c.h.b16 %v3401
        %v7086 = vunpack.c.l.b16 %v3402
        %v7087 = vunpack.c.h.b16 %v3402
        %v7088 = vunpack.c.l.b16 %v3403
        %v7089 = vunpack.c.h.b16 %v3403
        %v7090 = vunpack.c.l.b16 %v3404
        %v7091 = vunpack.c.h.b16 %v3404
        %v7092 = vunpack.c.l.b16 %v3405
        %v7093 = vunpack.c.h.b16 %v3405
        %v7094 = vunpack.c.l.b16 %v3406
        %v7095 = vunpack.c.h.b16 %v3406
        %v7096 = vunpack.c.l.b16 %v3407
        %v7097 = vunpack.c.h.b16 %v3407
        %v7098 = vunpack.c.l.b16 %v3408
        %v7099 = vunpack.c.h.b16 %v3408
        %v7100 = vunpack.c.l.b16 %v3409
        %v7101 = vunpack.c.h.b16 %v3409
        %v7102 = vunpack.c.l.b16 %v3410
        %v7103 = vunpack.c.h.b16 %v3410
        %v7104 = vunpack.c.l.b16 %v3411
        %v7105 = vunpack.c.h.b16 %v3411
        %v7106 = vunpack.c.l.b16 %v3412
        %v7107 = vunpack.c.h.b16 %v3412
        %v7108 = vunpack.c.l.b16 %v3413
        %v7109 = vunpack.c.h.b16 %v3413
        %v7110 = vunpack.c.l.b16 %v3414
        %v7111 = vunpack.c.h.b16 %v3414
        %v7112 = vunpack.c.l.b16 %v3415
        %v7113 = vunpack.c.h.b16 %v3415
        %v7114 = vunpack.c.l.b16 %v3416
        %v7115 = vunpack.c.h.b16 %v3416
        %v7116 = vunpack.c.l.b16 %v3417
        %v7117 = vunpack.c.h.b16 %v3417
        %v7118 = vunpack.c.l.b16 %v3418
        %v7119 = vunpack.c.h.b16 %v3418
        %v7120 = vunpack.c.l.b16 %v3419
        %v7121 = vunpack.c.h.b16 %v3419
        %v7122 = vunpack.c.l.b16 %v3420
        %v7123 = vunpack.c.h.b16 %v3420
        %v7124 = vunpack.c.l.b16 %v3421
        %v7125 = vunpack.c.h.b16 %v3421
        %v7126 = vunpack.c.l.b16 %v3422
        %v7127 = vunpack.c.h.b16 %v3422
        %v7128 = vunpack.c.l.b16 %v3423
        %v7129 = vunpack.c.h.b16 %v3423
        %v7130 = vunpack.c.l.b16 %v3424
        %v7131 = vunpack.c.h.b16 %v3424
        %v7132 = vunpack.c.l.b16 %v3425
        %v7133 = vunpack.c.h.b16 %v3425
        %v7134 = vunpack.c.l.b16 %v3426
        %v7135 = vunpack.c.h.b16 %v3426
        %v7136 = vunpack.c.l.b16 %v3427
        %v7137 = vunpack.c.h.b16 %v3427
        %v7138 = vunpack.c.l.b16 %v3428
        %v7139 = vunpack.c.h.b16 %v3428
        %v7140 = vunpack.c.l.b16 %v3429
        %v7141 = vunpack.c.h.b16 %v3429
        %v7142 = vunpack.c.l.b16 %v3430
        %v7143 = vunpack.c.h.b16 %v3430
        %v7144 = vunpack.c.l.b16 %v3431
        %v7145 = vunpack.c.h.b16 %v3431
        %v7146 = vunpack.c.l.b16 %v3432
        %v7147 = vunpack.c.h.b16 %v3432
        %v7148 = vunpack.c.l.b16 %v3433
        %v7149 = vunpack.c.h.b16 %v3433
        %v7150 = vunpack.c.l.b16 %v3434
        %v7151 = vunpack.c.h.b16 %v3434
        %v7152 = vunpack.c.l.b16 %v3435
        %v7153 = vunpack.c.h.b16 %v3435
        %v7154 = vunpack.c.l.b16 %v3436
        %v7155 = vunpack.c.h.b16 %v3436
        %v7156 = vunpack.c.l.b16 %v3437
        %v7157 = vunpack.c.h.b16 %v3437
        %v7158 = vunpack.c.l.b16 %v3438
        %v7159 = vunpack.c.h.b16 %v3438
        %v7160 = vunpack.c.l.b16 %v3439
        %v7161 = vunpack.c.h.b16 %v3439
        %v7162 = vunpack.c.l.b16 %v3440
        %v7163 = vunpack.c.h.b16 %v3440
        %v7164 = vunpack.c.l.b16 %v3441
        %v7165 = vunpack.c.h.b16 %v3441
        %v7166 = vunpack.c.l.b16 %v3442
        %v7167 = vunpack.c.h.b16 %v3442
        %v7168 = vunpack.c.l.b16 %v3443
        %v7169 = vunpack.c.h.b16 %v3443
        %v7170 = vunpack.c.l.b16 %v3444
        %v7171 = vunpack.c.h.b16 %v3444
        %v7172 = vunpack.c.l.b16 %v3445
        %v7173 = vunpack.c.h.b16 %v3445
        %v7174 = vunpack.c.l.b16 %v3446
        %v7175 = vunpack.c.h.b16 %v3446
        %v7176 = vunpack.c.l.b16 %v3447
        %v7177 = vunpack.c.h.b16 %v3447
        %v7178 = vunpack.c.l.b16 %v3448
        %v7179 = vunpack.c.h.b16 %v3448
        %v7180 = vunpack.c.l.b16 %v3449
        %v7181 = vunpack.c.h.b16 %v3449
        %v7182 = vunpack.c.l.b16 %v3450
        %v7183 = vunpack.c.h.b16 %v3450
        %v7184 = vunpack.c.l.b16 %v3451
        %v7185 = vunpack.c.h.b16 %v3451
        %v7186 = vunpack.c.l.b16 %v3452
        %v7187 = vunpack.c.h.b16 %v3452
        %v7188 = vunpack.c.l.b16 %v3453
        %v7189 = vunpack.c.h.b16 %v3453
        %v7190 = vunpack.c.l.b16 %v3454
        %v7191 = vunpack.c.h.b16 %v3454
        %v7192 = vunpack.c.l.b16 %v3455
        %v7193 = vunpack.c.h.b16 %v3455
        %v7194 = vunpack.c.l.b16 %v3456
        %v7195 = vunpack.c.h.b16 %v3456
        %v7196 = vunpack.c.l.b16 %v3457
        %v7197 = vunpack.c.h.b16 %v3457
        %v7198 = vunpack.c.l.b16 %v3458
        %v7199 = vunpack.c.h.b16 %v3458
        %v7200 = vunpack.c.l.b16 %v3459
        %v7201 = vunpack.c.h.b16 %v3459
        %v7202 = vunpack.c.l.b16 %v3460
        %v7203 = vunpack.c.h.b16 %v3460
        %v7204 = vunpack.c.l.b16 %v3461
        %v7205 = vunpack.c.h.b16 %v3461
        %v7206 = vunpack.c.l.b16 %v3462
        %v7207 = vunpack.c.h.b16 %v3462
        %v7208 = vunpack.c.l.b16 %v3463
        %v7209 = vunpack.c.h.b16 %v3463
        %v7210 = vunpack.c.l.b16 %v3464
        %v7211 = vunpack.c.h.b16 %v3464
        %v7212 = vunpack.c.l.b16 %v3465
        %v7213 = vunpack.c.h.b16 %v3465
        %v7214 = vunpack.c.l.b16 %v3466
        %v7215 = vunpack.c.h.b16 %v3466
        %v7216 = vunpack.c.l.b16 %v3467
        %v7217 = vunpack.c.h.b16 %v3467
        %v7218 = vunpack.c.l.b16 %v3468
        %v7219 = vunpack.c.h.b16 %v3468
        %v7220 = vunpack.c.l.b16 %v3469
        %v7221 = vunpack.c.h.b16 %v3469
        %v7222 = vunpack.c.l.b16 %v3470
        %v7223 = vunpack.c.h.b16 %v3470
        %v7224 = vunpack.c.l.b16 %v3471
        %v7225 = vunpack.c.h.b16 %v3471
        %v7226 = vunpack.c.l.b16 %v3472
        %v7227 = vunpack.c.h.b16 %v3472
        %v7228 = vunpack.c.l.b16 %v3473
        %v7229 = vunpack.c.h.b16 %v3473
        %v7230 = vunpack.c.l.b16 %v3474
        %v7231 = vunpack.c.h.b16 %v3474
        %v7232 = vunpack.c.l.b16 %v3475
        %v7233 = vunpack.c.h.b16 %v3475
        %v7234 = vunpack.c.l.b16 %v3476
        %v7235 = vunpack.c.h.b16 %v3476
        %v7236 = vunpack.c.l.b16 %v3477
        %v7237 = vunpack.c.h.b16 %v3477
        %v7238 = vunpack.c.l.b16 %v3478
        %v7239 = vunpack.c.h.b16 %v3478
        %v7240 = vunpack.c.l.b16 %v3479
        %v7241 = vunpack.c.h.b16 %v3479
        %v7242 = vunpack.c.l.b16 %v3480
        %v7243 = vunpack.c.h.b16 %v3480
        %v7244 = vunpack.c.l.b16 %v3481
        %v7245 = vunpack.c.h.b16 %v3481
        %v7246 = vunpack.c.l.b16 %v3482
        %v7247 = vunpack.c.h.b16 %v3482
        %v7248 = vunpack.c.l.b16 %v3483
        %v7249 = vunpack.c.h.b16 %v3483
        %v7250 = vunpack.c.l.b16 %v3484
        %v7251 = vunpack.c.h.b16 %v3484
        %v7252 = vunpack.c.l.b16 %v3485
        %v7253 = vunpack.c.h.b16 %v3485
        %v7254 = vunpack.c.l.b16 %v3486
        %v7255 = vunpack.c.h.b16 %v3486
        %v7256 = vunpack.c.l.b16 %v3487
        %v7257 = vunpack.c.h.b16 %v3487
        %v7258 = vunpack.c.l.b16 %v3488
        %v7259 = vunpack.c.h.b16 %v3488
        %v7260 = vunpack.c.l.b16 %v3489
        %v7261 = vunpack.c.h.b16 %v3489
        %v7262 = vunpack.c.l.b16 %v3490
        %v7263 = vunpack.c.h.b16 %v3490
        %v7264 = vunpack.c.l.b16 %v3491
        %v7265 = vunpack.c.h.b16 %v3491
        %v7266 = vunpack.c.l.b16 %v3492
        %v7267 = vunpack.c.h.b16 %v3492
        %v7268 = vunpack.c.l.b16 %v3493
        %v7269 = vunpack.c.h.b16 %v3493
        %v7270 = vunpack.c.l.b16 %v3494
        %v7271 = vunpack.c.h.b16 %v3494
        %v7272 = vunpack.c.l.b16 %v3495
        %v7273 = vunpack.c.h.b16 %v3495
        %v7274 = vunpack.c.l.b16 %v3496
        %v7275 = vunpack.c.h.b16 %v3496
        %v7276 = vunpack.c.l.b16 %v3497
        %v7277 = vunpack.c.h.b16 %v3497
        %v7278 = vunpack.c.l.b16 %v3498
        %v7279 = vunpack.c.h.b16 %v3498
        %v7280 = vunpack.c.l.b16 %v3499
        %v7281 = vunpack.c.h.b16 %v3499
        %v7282 = vunpack.c.l.b16 %v3500
        %v7283 = vunpack.c.h.b16 %v3500
        %v7284 = vunpack.c.l.b16 %v3501
        %v7285 = vunpack.c.h.b16 %v3501
        %v7286 = vunpack.c.l.b16 %v3502
        %v7287 = vunpack.c.h.b16 %v3502
        %v7288 = vunpack.c.l.b16 %v3503
        %v7289 = vunpack.c.h.b16 %v3503
        %v7290 = vunpack.c.l.b16 %v3504
        %v7291 = vunpack.c.h.b16 %v3504
        %v7292 = vunpack.c.l.b16 %v3505
        %v7293 = vunpack.c.h.b16 %v3505
        %v7294 = vunpack.c.l.b16 %v3506
        %v7295 = vunpack.c.h.b16 %v3506
        %v7296 = vunpack.c.l.b16 %v3507
        %v7297 = vunpack.c.h.b16 %v3507
        %v7298 = vunpack.c.l.b16 %v3508
        %v7299 = vunpack.c.h.b16 %v3508
        %v7300 = vunpack.c.l.b16 %v3509
        %v7301 = vunpack.c.h.b16 %v3509
        %v7302 = vunpack.c.l.b16 %v3510
        %v7303 = vunpack.c.h.b16 %v3510
        %v7304 = vunpack.c.l.b16 %v3511
        %v7305 = vunpack.c.h.b16 %v3511
        %v7306 = vunpack.c.l.b16 %v3512
        %v7307 = vunpack.c.h.b16 %v3512
        %v7308 = vunpack.c.l.b16 %v3513
        %v7309 = vunpack.c.h.b16 %v3513
        %v7310 = vunpack.c.l.b16 %v3514
        %v7311 = vunpack.c.h.b16 %v3514
        %v7312 = vunpack.c.l.b16 %v3515
        %v7313 = vunpack.c.h.b16 %v3515
        %v7314 = vunpack.c.l.b16 %v3516
        %v7315 = vunpack.c.h.b16 %v3516
        %v7316 = vunpack.c.l.b16 %v3517
        %v7317 = vunpack.c.h.b16 %v3517
        %v7318 = vunpack.c.l.b16 %v3518
        %v7319 = vunpack.c.h.b16 %v3518
        %v7320 = vunpack.c.l.b16 %v3519
        %v7321 = vunpack.c.h.b16 %v3519
        %v7322 = vunpack.c.l.b16 %v3520
        %v7323 = vunpack.c.h.b16 %v3520
        %v7324 = vunpack.c.l.b16 %v3521
        %v7325 = vunpack.c.h.b16 %v3521
        %v7326 = vunpack.c.l.b16 %v3522
        %v7327 = vunpack.c.h.b16 %v3522
        %v7328 = vunpack.c.l.b16 %v3523
        %v7329 = vunpack.c.h.b16 %v3523
        %v7330 = vunpack.c.l.b16 %v3524
        %v7331 = vunpack.c.h.b16 %v3524
        %v7332 = vunpack.c.l.b16 %v3525
        %v7333 = vunpack.c.h.b16 %v3525
        %v7334 = vunpack.c.l.b16 %v3526
        %v7335 = vunpack.c.h.b16 %v3526
        %v7336 = vunpack.c.l.b16 %v3527
        %v7337 = vunpack.c.h.b16 %v3527
        %v7338 = vunpack.c.l.b16 %v3528
        %v7339 = vunpack.c.h.b16 %v3528
        %v7340 = vunpack.c.l.b16 %v3529
        %v7341 = vunpack.c.h.b16 %v3529
        %v7342 = vunpack.c.l.b16 %v3530
        %v7343 = vunpack.c.h.b16 %v3530
        %v7344 = vunpack.c.l.b16 %v3531
        %v7345 = vunpack.c.h.b16 %v3531
        %v7346 = vunpack.c.l.b16 %v3532
        %v7347 = vunpack.c.h.b16 %v3532
        %v7348 = vunpack.c.l.b16 %v3533
        %v7349 = vunpack.c.h.b16 %v3533
        %v7350 = vunpack.c.l.b16 %v3534
        %v7351 = vunpack.c.h.b16 %v3534
        %v7352 = vunpack.c.l.b16 %v3535
        %v7353 = vunpack.c.h.b16 %v3535
        %v7354 = vunpack.c.l.b16 %v3536
        %v7355 = vunpack.c.h.b16 %v3536
        %v7356 = vunpack.c.l.b16 %v3537
        %v7357 = vunpack.c.h.b16 %v3537
        %v7358 = vunpack.c.l.b16 %v3538
        %v7359 = vunpack.c.h.b16 %v3538
        %v7360 = vunpack.c.l.b16 %v3539
        %v7361 = vunpack.c.h.b16 %v3539
        %v7362 = vunpack.c.l.b16 %v3540
        %v7363 = vunpack.c.h.b16 %v3540
        %v7364 = vunpack.c.l.b16 %v3541
        %v7365 = vunpack.c.h.b16 %v3541
        %v7366 = vunpack.c.l.b16 %v3542
        %v7367 = vunpack.c.h.b16 %v3542
        %v7368 = vunpack.c.l.b16 %v3543
        %v7369 = vunpack.c.h.b16 %v3543
        %v7370 = vunpack.c.l.b16 %v3544
        %v7371 = vunpack.c.h.b16 %v3544
        %v7372 = vunpack.c.l.b16 %v3545
        %v7373 = vunpack.c.h.b16 %v3545
        %v7374 = vunpack.c.l.b16 %v3546
        %v7375 = vunpack.c.h.b16 %v3546
        %v7376 = vunpack.c.l.b16 %v3547
        %v7377 = vunpack.c.h.b16 %v3547
        %v7378 = vunpack.c.l.b16 %v3548
        %v7379 = vunpack.c.h.b16 %v3548
        %v7380 = vunpack.c.l.b16 %v3549
        %v7381 = vunpack.c.h.b16 %v3549
        %v7382 = vunpack.c.l.b16 %v3550
        %v7383 = vunpack.c.h.b16 %v3550
        %v7384 = vunpack.c.l.b16 %v3551
        %v7385 = vunpack.c.h.b16 %v3551
        %v7386 = vunpack.c.l.b16 %v3552
        %v7387 = vunpack.c.h.b16 %v3552
        %v7388 = vunpack.c.l.b16 %v3553
        %v7389 = vunpack.c.h.b16 %v3553
        %v7390 = vunpack.c.l.b16 %v3554
        %v7391 = vunpack.c.h.b16 %v3554
        %v7392 = vunpack.c.l.b16 %v3555
        %v7393 = vunpack.c.h.b16 %v3555
        %v7394 = vunpack.c.l.b16 %v3556
        %v7395 = vunpack.c.h.b16 %v3556
        %v7396 = vunpack.c.l.b16 %v3557
        %v7397 = vunpack.c.h.b16 %v3557
        %v7398 = vunpack.c.l.b16 %v3558
        %v7399 = vunpack.c.h.b16 %v3558
        %v7400 = vunpack.c.l.b16 %v3559
        %v7401 = vunpack.c.h.b16 %v3559
        %v7402 = vunpack.c.l.b16 %v3560
        %v7403 = vunpack.c.h.b16 %v3560
        %v7404 = vunpack.c.l.b16 %v3561
        %v7405 = vunpack.c.h.b16 %v3561
        %v7406 = vunpack.c.l.b16 %v3562
        %v7407 = vunpack.c.h.b16 %v3562
        %v7408 = vunpack.c.l.b16 %v3563
        %v7409 = vunpack.c.h.b16 %v3563
        %v7410 = vunpack.c.l.b16 %v3564
        %v7411 = vunpack.c.h.b16 %v3564
        %v7412 = vunpack.c.l.b16 %v3565
        %v7413 = vunpack.c.h.b16 %v3565
        %v7414 = vunpack.c.l.b16 %v3566
        %v7415 = vunpack.c.h.b16 %v3566
        %v7416 = vunpack.c.l.b16 %v3567
        %v7417 = vunpack.c.h.b16 %v3567
        %v7418 = vunpack.c.l.b16 %v3568
        %v7419 = vunpack.c.h.b16 %v3568
        %v7420 = vunpack.c.l.b16 %v3569
        %v7421 = vunpack.c.h.b16 %v3569
        %v7422 = vunpack.c.l.b16 %v3570
        %v7423 = vunpack.c.h.b16 %v3570
        %v7424 = vunpack.c.l.b16 %v3571
        %v7425 = vunpack.c.h.b16 %v3571
        %v7426 = vunpack.c.l.b16 %v3572
        %v7427 = vunpack.c.h.b16 %v3572
        %v7428 = vunpack.c.l.b16 %v3573
        %v7429 = vunpack.c.h.b16 %v3573
        %v7430 = vunpack.c.l.b16 %v3574
        %v7431 = vunpack.c.h.b16 %v3574
        %v7432 = vunpack.c.l.b16 %v3575
        %v7433 = vunpack.c.h.b16 %v3575
        %v7434 = vunpack.c.l.b16 %v3576
        %v7435 = vunpack.c.h.b16 %v3576
        %v7436 = vunpack.c.l.b16 %v3577
        %v7437 = vunpack.c.h.b16 %v3577
        %v7438 = vunpack.c.l.b16 %v3578
        %v7439 = vunpack.c.h.b16 %v3578
        %v7440 = vunpack.c.l.b16 %v3579
        %v7441 = vunpack.c.h.b16 %v3579
        %v7442 = vunpack.c.l.b16 %v3580
        %v7443 = vunpack.c.h.b16 %v3580
        %v7444 = vunpack.c.l.b16 %v3581
        %v7445 = vunpack.c.h.b16 %v3581
        %v7446 = vunpack.c.l.b16 %v3582
        %v7447 = vunpack.c.h.b16 %v3582
        %v7448 = vunpack.c.l.b16 %v3583
        %v7449 = vunpack.c.h.b16 %v3583
        %v7450 = vunpack.c.l.b16 %v3584
        %v7451 = vunpack.c.h.b16 %v3584
        %v7452 = vunpack.c.l.b16 %v3585
        %v7453 = vunpack.c.h.b16 %v3585
        %v7454 = vunpack.c.l.b16 %v3586
        %v7455 = vunpack.c.h.b16 %v3586
        %v7456 = vunpack.c.l.b16 %v3587
        %v7457 = vunpack.c.h.b16 %v3587
        %v7458 = vunpack.c.l.b16 %v3588
        %v7459 = vunpack.c.h.b16 %v3588
        %v7460 = vunpack.c.l.b16 %v3589
        %v7461 = vunpack.c.h.b16 %v3589
        %v7462 = vunpack.c.l.b16 %v3590
        %v7463 = vunpack.c.h.b16 %v3590
        %v7464 = vunpack.c.l.b16 %v3591
        %v7465 = vunpack.c.h.b16 %v3591
        %v7466 = vunpack.c.l.b16 %v3592
        %v7467 = vunpack.c.h.b16 %v3592
        %v7468 = vunpack.c.l.b16 %v3593
        %v7469 = vunpack.c.h.b16 %v3593
        %v7470 = vunpack.c.l.b16 %v3594
        %v7471 = vunpack.c.h.b16 %v3594
        %v7472 = vunpack.c.l.b16 %v3595
        %v7473 = vunpack.c.h.b16 %v3595
        %v7474 = vunpack.c.l.b16 %v3596
        %v7475 = vunpack.c.h.b16 %v3596
        %v7476 = vunpack.c.l.b16 %v3597
        %v7477 = vunpack.c.h.b16 %v3597
        %v7478 = vunpack.c.l.b16 %v3598
        %v7479 = vunpack.c.h.b16 %v3598
        %v7480 = vunpack.c.l.b16 %v3599
        %v7481 = vunpack.c.h.b16 %v3599
        %v7482 = vunpack.c.l.b16 %v3600
        %v7483 = vunpack.c.h.b16 %v3600
        %v7484 = vunpack.c.l.b16 %v3601
        %v7485 = vunpack.c.h.b16 %v3601
        %v7486 = vunpack.c.l.b16 %v3602
        %v7487 = vunpack.c.h.b16 %v3602
        %v7488 = vunpack.c.l.b16 %v3603
        %v7489 = vunpack.c.h.b16 %v3603
        %v7490 = vunpack.c.l.b16 %v3604
        %v7491 = vunpack.c.h.b16 %v3604
        %v7492 = vunpack.c.l.b16 %v3605
        %v7493 = vunpack.c.h.b16 %v3605
        %v7494 = vunpack.c.l.b16 %v3606
        %v7495 = vunpack.c.h.b16 %v3606
        %v7496 = vunpack.c.l.b16 %v3607
        %v7497 = vunpack.c.h.b16 %v3607
        %v7498 = vunpack.c.l.b16 %v3608
        %v7499 = vunpack.c.h.b16 %v3608
        %v7500 = vunpack.c.l.b16 %v3609
        %v7501 = vunpack.c.h.b16 %v3609
        %v7502 = vunpack.c.l.b16 %v3610
        %v7503 = vunpack.c.h.b16 %v3610
        %v7504 = vunpack.c.l.b16 %v3611
        %v7505 = vunpack.c.h.b16 %v3611
        %v7506 = vunpack.c.l.b16 %v3612
        %v7507 = vunpack.c.h.b16 %v3612
        %v7508 = vunpack.c.l.b16 %v3613
        %v7509 = vunpack.c.h.b16 %v3613
        %v7510 = vunpack.c.l.b16 %v3614
        %v7511 = vunpack.c.h.b16 %v3614
        %v7512 = vunpack.c.l.b16 %v3615
        %v7513 = vunpack.c.h.b16 %v3615
        %v7514 = vunpack.c.l.b16 %v3616
        %v7515 = vunpack.c.h.b16 %v3616
        %v7516 = vunpack.c.l.b16 %v3617
        %v7517 = vunpack.c.h.b16 %v3617
        %v7518 = vunpack.c.l.b16 %v3618
        %v7519 = vunpack.c.h.b16 %v3618
        %v7520 = vunpack.c.l.b16 %v3619
        %v7521 = vunpack.c.h.b16 %v3619
        %v7522 = vunpack.c.l.b16 %v3620
        %v7523 = vunpack.c.h.b16 %v3620
        %v7524 = vunpack.c.l.b16 %v3621
        %v7525 = vunpack.c.h.b16 %v3621
        %v7526 = vunpack.c.l.b16 %v3622
        %v7527 = vunpack.c.h.b16 %v3622
        %v7528 = vunpack.c.l.b16 %v3623
        %v7529 = vunpack.c.h.b16 %v3623
        %v7530 = vunpack.c.l.b16 %v3624
        %v7531 = vunpack.c.h.b16 %v3624
        %v7532 = vunpack.c.l.b16 %v3625
        %v7533 = vunpack.c.h.b16 %v3625
        %v7534 = vunpack.c.l.b16 %v3626
        %v7535 = vunpack.c.h.b16 %v3626
        %v7536 = vunpack.c.l.b16 %v3627
        %v7537 = vunpack.c.h.b16 %v3627
        %v7538 = vunpack.c.l.b16 %v3628
        %v7539 = vunpack.c.h.b16 %v3628
        %v7540 = vunpack.c.l.b16 %v3629
        %v7541 = vunpack.c.h.b16 %v3629
        %v7542 = vunpack.c.l.b16 %v3630
        %v7543 = vunpack.c.h.b16 %v3630
        %v7544 = vunpack.c.l.b16 %v3631
        %v7545 = vunpack.c.h.b16 %v3631
        %v7546 = vunpack.c.l.b16 %v3632
        %v7547 = vunpack.c.h.b16 %v3632
        %v7548 = vunpack.c.l.b16 %v3633
        %v7549 = vunpack.c.h.b16 %v3633
        %v7550 = vunpack.c.l.b16 %v3634
        %v7551 = vunpack.c.h.b16 %v3634
        %v7552 = vunpack.c.l.b16 %v3635
        %v7553 = vunpack.c.h.b16 %v3635
        %v7554 = vunpack.c.l.b16 %v3636
        %v7555 = vunpack.c.h.b16 %v3636
        %v7556 = vunpack.c.l.b16 %v3637
        %v7557 = vunpack.c.h.b16 %v3637
        %v7558 = vunpack.c.l.b16 %v3638
        %v7559 = vunpack.c.h.b16 %v3638
        %v7560 = vunpack.c.l.b16 %v3639
        %v7561 = vunpack.c.h.b16 %v3639
        %v7562 = vunpack.c.l.b16 %v3640
        %v7563 = vunpack.c.h.b16 %v3640
        %v7564 = vunpack.c.l.b16 %v3641
        %v7565 = vunpack.c.h.b16 %v3641
        %v7566 = vunpack.c.l.b16 %v3642
        %v7567 = vunpack.c.h.b16 %v3642
        %v7568 = vunpack.c.l.b16 %v3643
        %v7569 = vunpack.c.h.b16 %v3643
        %v7570 = vunpack.c.l.b16 %v3644
        %v7571 = vunpack.c.h.b16 %v3644
        %v7572 = vunpack.c.l.b16 %v3645
        %v7573 = vunpack.c.h.b16 %v3645
        %v7574 = vunpack.c.l.b16 %v3646
        %v7575 = vunpack.c.h.b16 %v3646
        %v7576 = vunpack.c.l.b16 %v3647
        %v7577 = vunpack.c.h.b16 %v3647
        %v7578 = vunpack.c.l.b16 %v3648
        %v7579 = vunpack.c.h.b16 %v3648
        %v7580 = vunpack.c.l.b16 %v3649
        %v7581 = vunpack.c.h.b16 %v3649
        %v7582 = vunpack.c.l.b16 %v3650
        %v7583 = vunpack.c.h.b16 %v3650
        %v7584 = vunpack.c.l.b16 %v3651
        %v7585 = vunpack.c.h.b16 %v3651
        %v7586 = vunpack.c.l.b16 %v3652
        %v7587 = vunpack.c.h.b16 %v3652
        %v7588 = vunpack.c.l.b16 %v3653
        %v7589 = vunpack.c.h.b16 %v3653
        %v7590 = vunpack.c.l.b16 %v3654
        %v7591 = vunpack.c.h.b16 %v3654
        %v7592 = vunpack.c.l.b16 %v3655
        %v7593 = vunpack.c.h.b16 %v3655
        %v7594 = vunpack.c.l.b16 %v3656
        %v7595 = vunpack.c.h.b16 %v3656
        %v7596 = vunpack.c.l.b16 %v3657
        %v7597 = vunpack.c.h.b16 %v3657
        %v7598 = vunpack.c.l.b16 %v3658
        %v7599 = vunpack.c.h.b16 %v3658
        %v7600 = vunpack.c.l.b16 %v3659
        %v7601 = vunpack.c.h.b16 %v3659
        %v7602 = vunpack.c.l.b16 %v3660
        %v7603 = vunpack.c.h.b16 %v3660
        %v7604 = vunpack.c.l.b16 %v3661
        %v7605 = vunpack.c.h.b16 %v3661
        %v7606 = vunpack.c.l.b16 %v3662
        %v7607 = vunpack.c.h.b16 %v3662
        %v7608 = vunpack.c.l.b16 %v3663
        %v7609 = vunpack.c.h.b16 %v3663
        %v7610 = vpack.c.b16 %v5070, %v5050
        %v7611 = vpack.c.b16 %v5071, %v5051
        %v7612 = vpack.c.b16 %v5072, %v5052
        %v7613 = vpack.c.b16 %v5073, %v5053
        %v7614 = vpack.c.b16 %v5074, %v5054
        %v7615 = vpack.c.b16 %v5075, %v5055
        %v7616 = vpack.c.b16 %v5076, %v5056
        %v7617 = vpack.c.b16 %v5077, %v5057
        %v7618 = vpack.c.b16 %v5078, %v5058
        %v7619 = vpack.c.b16 %v5079, %v5059
        %v7620 = vpack.c.b16 %v5080, %v5060
        %v7621 = vpack.c.b16 %v5081, %v5061
        %v7622 = vpack.c.b16 %v5082, %v5062
        %v7623 = vpack.c.b16 %v5083, %v5063
        %v7624 = vpack.c.b16 %v5084, %v5064
        %v7625 = vpack.c.b16 %v5085, %v5065
        %v7626 = vpack.c.b16 %v5086, %v5066
        %v7627 = vpack.c.b16 %v5087, %v5067
        %v7628 = vpack.c.b16 %v5088, %v5068
        %v7629 = vpack.c.b16 %v5089, %v5069
        %v7630 = vpack.c.b16 %v5110, %v5090
        %v7631 = vpack.c.b16 %v5111, %v5091
        %v7632 = vpack.c.b16 %v5112, %v5092
        %v7633 = vpack.c.b16 %v5113, %v5093
        %v7634 = vpack.c.b16 %v5114, %v5094
        %v7635 = vpack.c.b16 %v5115, %v5095
        %v7636 = vpack.c.b16 %v5116, %v5096
        %v7637 = vpack.c.b16 %v5117, %v5097
        %v7638 = vpack.c.b16 %v5118, %v5098
        %v7639 = vpack.c.b16 %v5119, %v5099
        %v7640 = vpack.c.b16 %v5120, %v5100
        %v7641 = vpack.c.b16 %v5121, %v5101
        %v7642 = vpack.c.b16 %v5122, %v5102
        %v7643 = vpack.c.b16 %v5123, %v5103
        %v7644 = vpack.c.b16 %v5124, %v5104
        %v7645 = vpack.c.b16 %v5125, %v5105
        %v7646 = vpack.c.b16 %v5126, %v5106
        %v7647 = vpack.c.b16 %v5127, %v5107
        %v7648 = vpack.c.b16 %v5128, %v5108
        %v7649 = vpack.c.b16 %v5129, %v5109
        %v7650 = vpack.c.b16 %v5150, %v5130
        %v7651 = vpack.c.b16 %v5151, %v5131
        %v7652 = vpack.c.b16 %v5152, %v5132
        %v7653 = vpack.c.b16 %v5153, %v5133
        %v7654 = vpack.c.b16 %v5154, %v5134
        %v7655 = vpack.c.b16 %v5155, %v5135
        %v7656 = vpack.c.b16 %v5156, %v5136
        %v7657 = vpack.c.b16 %v5157, %v5137
        %v7658 = vpack.c.b16 %v5158, %v5138
        %v7659 = vpack.c.b16 %v5159, %v5139
        %v7660 = vpack.c.b16 %v5160, %v5140
        %v7661 = vpack.c.b16 %v5161, %v5141
        %v7662 = vpack.c.b16 %v5162, %v5142
        %v7663 = vpack.c.b16 %v5163, %v5143
        %v7664 = vpack.c.b16 %v5164, %v5144
        %v7665 = vpack.c.b16 %v5165, %v5145
        %v7666 = vpack.c.b16 %v5166, %v5146
        %v7667 = vpack.c.b16 %v5167, %v5147
        %v7668 = vpack.c.b16 %v5168, %v5148
        %v7669 = vpack.c.b16 %v5169, %v5149
        %v7670 = vpack.c.b16 %v5190, %v5170
        %v7671 = vpack.c.b16 %v5191, %v5171
        %v7672 = vpack.c.b16 %v5192, %v5172
        %v7673 = vpack.c.b16 %v5193, %v5173
        %v7674 = vpack.c.b16 %v5194, %v5174
        %v7675 = vpack.c.b16 %v5195, %v5175
        %v7676 = vpack.c.b16 %v5196, %v5176
        %v7677 = vpack.c.b16 %v5197, %v5177
        %v7678 = vpack.c.b16 %v5198, %v5178
        %v7679 = vpack.c.b16 %v5199, %v5179
        %v7680 = vpack.c.b16 %v5200, %v5180
        %v7681 = vpack.c.b16 %v5201, %v5181
        %v7682 = vpack.c.b16 %v5202, %v5182
        %v7683 = vpack.c.b16 %v5203, %v5183
        %v7684 = vpack.c.b16 %v5204, %v5184
        %v7685 = vpack.c.b16 %v5205, %v5185
        %v7686 = vpack.c.b16 %v5206, %v5186
        %v7687 = vpack.c.b16 %v5207, %v5187
        %v7688 = vpack.c.b16 %v5208, %v5188
        %v7689 = vpack.c.b16 %v5209, %v5189
        %v7690 = vpack.c.b16 %v5230, %v5210
        %v7691 = vpack.c.b16 %v5231, %v5211
        %v7692 = vpack.c.b16 %v5232, %v5212
        %v7693 = vpack.c.b16 %v5233, %v5213
        %v7694 = vpack.c.b16 %v5234, %v5214
        %v7695 = vpack.c.b16 %v5235, %v5215
        %v7696 = vpack.c.b16 %v5236, %v5216
        %v7697 = vpack.c.b16 %v5237, %v5217
        %v7698 = vpack.c.b16 %v5238, %v5218
        %v7699 = vpack.c.b16 %v5239, %v5219
        %v7700 = vpack.c.b16 %v5240, %v5220
        %v7701 = vpack.c.b16 %v5241, %v5221
        %v7702 = vpack.c.b16 %v5242, %v5222
        %v7703 = vpack.c.b16 %v5243, %v5223
        %v7704 = vpack.c.b16 %v5244, %v5224
        %v7705 = vpack.c.b16 %v5245, %v5225
        %v7706 = vpack.c.b16 %v5246, %v5226
        %v7707 = vpack.c.b16 %v5247, %v5227
        %v7708 = vpack.c.b16 %v5248, %v5228
        %v7709 = vpack.c.b16 %v5249, %v5229
        %v7710 = vpack.c.b16 %v5270, %v5250
        %v7711 = vpack.c.b16 %v5271, %v5251
        %v7712 = vpack.c.b16 %v5272, %v5252
        %v7713 = vpack.c.b16 %v5273, %v5253
        %v7714 = vpack.c.b16 %v5274, %v5254
        %v7715 = vpack.c.b16 %v5275, %v5255
        %v7716 = vpack.c.b16 %v5276, %v5256
        %v7717 = vpack.c.b16 %v5277, %v5257
        %v7718 = vpack.c.b16 %v5278, %v5258
        %v7719 = vpack.c.b16 %v5279, %v5259
        %v7720 = vpack.c.b16 %v5280, %v5260
        %v7721 = vpack.c.b16 %v5281, %v5261
        %v7722 = vpack.c.b16 %v5282, %v5262
        %v7723 = vpack.c.b16 %v5283, %v5263
        %v7724 = vpack.c.b16 %v5284, %v5264
        %v7725 = vpack.c.b16 %v5285, %v5265
        %v7726 = vpack.c.b16 %v5286, %v5266
        %v7727 = vpack.c.b16 %v5287, %v5267
        %v7728 = vpack.c.b16 %v5288, %v5268
        %v7729 = vpack.c.b16 %v5289, %v5269
        %v7730 = vpack.c.b16 %v5310, %v5290
        %v7731 = vpack.c.b16 %v5311, %v5291
        %v7732 = vpack.c.b16 %v5312, %v5292
        %v7733 = vpack.c.b16 %v5313, %v5293
        %v7734 = vpack.c.b16 %v5314, %v5294
        %v7735 = vpack.c.b16 %v5315, %v5295
        %v7736 = vpack.c.b16 %v5316, %v5296
        %v7737 = vpack.c.b16 %v5317, %v5297
        %v7738 = vpack.c.b16 %v5318, %v5298
        %v7739 = vpack.c.b16 %v5319, %v5299
        %v7740 = vpack.c.b16 %v5320, %v5300
        %v7741 = vpack.c.b16 %v5321, %v5301
        %v7742 = vpack.c.b16 %v5322, %v5302
        %v7743 = vpack.c.b16 %v5323, %v5303
        %v7744 = vpack.c.b16 %v5324, %v5304
        %v7745 = vpack.c.b16 %v5325, %v5305
        %v7746 = vpack.c.b16 %v5326, %v5306
        %v7747 = vpack.c.b16 %v5327, %v5307
        %v7748 = vpack.c.b16 %v5328, %v5308
        %v7749 = vpack.c.b16 %v5329, %v5309
        %v7750 = vpack.c.b16 %v5350, %v5330
        %v7751 = vpack.c.b16 %v5351, %v5331
        %v7752 = vpack.c.b16 %v5352, %v5332
        %v7753 = vpack.c.b16 %v5353, %v5333
        %v7754 = vpack.c.b16 %v5354, %v5334
        %v7755 = vpack.c.b16 %v5355, %v5335
        %v7756 = vpack.c.b16 %v5356, %v5336
        %v7757 = vpack.c.b16 %v5357, %v5337
        %v7758 = vpack.c.b16 %v5358, %v5338
        %v7759 = vpack.c.b16 %v5359, %v5339
        %v7760 = vpack.c.b16 %v5360, %v5340
        %v7761 = vpack.c.b16 %v5361, %v5341
        %v7762 = vpack.c.b16 %v5362, %v5342
        %v7763 = vpack.c.b16 %v5363, %v5343
        %v7764 = vpack.c.b16 %v5364, %v5344
        %v7765 = vpack.c.b16 %v5365, %v5345
        %v7766 = vpack.c.b16 %v5366, %v5346
        %v7767 = vpack.c.b16 %v5367, %v5347
        %v7768 = vpack.c.b16 %v5368, %v5348
        %v7769 = vpack.c.b16 %v5369, %v5349
        %v7770 = vpack.c.b16 %v5390, %v5370
        %v7771 = vpack.c.b16 %v5391, %v5371
        %v7772 = vpack.c.b16 %v5392, %v5372
        %v7773 = vpack.c.b16 %v5393, %v5373
        %v7774 = vpack.c.b16 %v5394, %v5374
        %v7775 = vpack.c.b16 %v5395, %v5375
        %v7776 = vpack.c.b16 %v5396, %v5376
        %v7777 = vpack.c.b16 %v5397, %v5377
        %v7778 = vpack.c.b16 %v5398, %v5378
        %v7779 = vpack.c.b16 %v5399, %v5379
        %v7780 = vpack.c.b16 %v5400, %v5380
        %v7781 = vpack.c.b16 %v5401, %v5381
        %v7782 = vpack.c.b16 %v5402, %v5382
        %v7783 = vpack.c.b16 %v5403, %v5383
        %v7784 = vpack.c.b16 %v5404, %v5384
        %v7785 = vpack.c.b16 %v5405, %v5385
        %v7786 = vpack.c.b16 %v5406, %v5386
        %v7787 = vpack.c.b16 %v5407, %v5387
        %v7788 = vpack.c.b16 %v5408, %v5388
        %v7789 = vpack.c.b16 %v5409, %v5389
        %v7790 = vpack.c.b16 %v5430, %v5410
        %v7791 = vpack.c.b16 %v5431, %v5411
        %v7792 = vpack.c.b16 %v5432, %v5412
        %v7793 = vpack.c.b16 %v5433, %v5413
        %v7794 = vpack.c.b16 %v5434, %v5414
        %v7795 = vpack.c.b16 %v5435, %v5415
        %v7796 = vpack.c.b16 %v5436, %v5416
        %v7797 = vpack.c.b16 %v5437, %v5417
        %v7798 = vpack.c.b16 %v5438, %v5418
        %v7799 = vpack.c.b16 %v5439, %v5419
        %v7800 = vpack.c.b16 %v5440, %v5420
        %v7801 = vpack.c.b16 %v5441, %v5421
        %v7802 = vpack.c.b16 %v5442, %v5422
        %v7803 = vpack.c.b16 %v5443, %v5423
        %v7804 = vpack.c.b16 %v5444, %v5424
        %v7805 = vpack.c.b16 %v5445, %v5425
        %v7806 = vpack.c.b16 %v5446, %v5426
        %v7807 = vpack.c.b16 %v5447, %v5427
        %v7808 = vpack.c.b16 %v5448, %v5428
        %v7809 = vpack.c.b16 %v5449, %v5429
        %v7810 = vpack.c.b16 %v5470, %v5450
        %v7811 = vpack.c.b16 %v5471, %v5451
        %v7812 = vpack.c.b16 %v5472, %v5452
        %v7813 = vpack.c.b16 %v5473, %v5453
        %v7814 = vpack.c.b16 %v5474, %v5454
        %v7815 = vpack.c.b16 %v5475, %v5455
        %v7816 = vpack.c.b16 %v5476, %v5456
        %v7817 = vpack.c.b16 %v5477, %v5457
        %v7818 = vpack.c.b16 %v5478, %v5458
        %v7819 = vpack.c.b16 %v5479, %v5459
        %v7820 = vpack.c.b16 %v5480, %v5460
        %v7821 = vpack.c.b16 %v5481, %v5461
        %v7822 = vpack.c.b16 %v5482, %v5462
        %v7823 = vpack.c.b16 %v5483, %v5463
        %v7824 = vpack.c.b16 %v5484, %v5464
        %v7825 = vpack.c.b16 %v5485, %v5465
        %v7826 = vpack.c.b16 %v5486, %v5466
        %v7827 = vpack.c.b16 %v5487, %v5467
        %v7828 = vpack.c.b16 %v5488, %v5468
        %v7829 = vpack.c.b16 %v5489, %v5469
        %v7830 = vpack.c.b16 %v5510, %v5490
        %v7831 = vpack.c.b16 %v5511, %v5491
        %v7832 = vpack.c.b16 %v5512, %v5492
        %v7833 = vpack.c.b16 %v5513, %v5493
        %v7834 = vpack.c.b16 %v5514, %v5494
        %v7835 = vpack.c.b16 %v5515, %v5495
        %v7836 = vpack.c.b16 %v5516, %v5496
        %v7837 = vpack.c.b16 %v5517, %v5497
        %v7838 = vpack.c.b16 %v5518, %v5498
        %v7839 = vpack.c.b16 %v5519, %v5499
        %v7840 = vpack.c.b16 %v5520, %v5500
        %v7841 = vpack.c.b16 %v5521, %v5501
        %v7842 = vpack.c.b16 %v5522, %v5502
        %v7843 = vpack.c.b16 %v5523, %v5503
        %v7844 = vpack.c.b16 %v5524, %v5504
        %v7845 = vpack.c.b16 %v5525, %v5505
        %v7846 = vpack.c.b16 %v5526, %v5506
        %v7847 = vpack.c.b16 %v5527, %v5507
        %v7848 = vpack.c.b16 %v5528, %v5508
        %v7849 = vpack.c.b16 %v5529, %v5509
        %v7850 = vpack.c.b16 %v5550, %v5530
        %v7851 = vpack.c.b16 %v5551, %v5531
        %v7852 = vpack.c.b16 %v5552, %v5532
        %v7853 = vpack.c.b16 %v5553, %v5533
        %v7854 = vpack.c.b16 %v5554, %v5534
        %v7855 = vpack.c.b16 %v5555, %v5535
        %v7856 = vpack.c.b16 %v5556, %v5536
        %v7857 = vpack.c.b16 %v5557, %v5537
        %v7858 = vpack.c.b16 %v5558, %v5538
        %v7859 = vpack.c.b16 %v5559, %v5539
        %v7860 = vpack.c.b16 %v5560, %v5540
        %v7861 = vpack.c.b16 %v5561, %v5541
        %v7862 = vpack.c.b16 %v5562, %v5542
        %v7863 = vpack.c.b16 %v5563, %v5543
        %v7864 = vpack.c.b16 %v5564, %v5544
        %v7865 = vpack.c.b16 %v5565, %v5545
        %v7866 = vpack.c.b16 %v5566, %v5546
        %v7867 = vpack.c.b16 %v5567, %v5547
        %v7868 = vpack.c.b16 %v5568, %v5548
        %v7869 = vpack.c.b16 %v5569, %v5549
        %v7870 = vpack.c.b16 %v5590, %v5570
        %v7871 = vpack.c.b16 %v5591, %v5571
        %v7872 = vpack.c.b16 %v5592, %v5572
        %v7873 = vpack.c.b16 %v5593, %v5573
        %v7874 = vpack.c.b16 %v5594, %v5574
        %v7875 = vpack.c.b16 %v5595, %v5575
        %v7876 = vpack.c.b16 %v5596, %v5576
        %v7877 = vpack.c.b16 %v5597, %v5577
        %v7878 = vpack.c.b16 %v5598, %v5578
        %v7879 = vpack.c.b16 %v5599, %v5579
        %v7880 = vpack.c.b16 %v5600, %v5580
        %v7881 = vpack.c.b16 %v5601, %v5581
        %v7882 = vpack.c.b16 %v5602, %v5582
        %v7883 = vpack.c.b16 %v5603, %v5583
        %v7884 = vpack.c.b16 %v5604, %v5584
        %v7885 = vpack.c.b16 %v5605, %v5585
        %v7886 = vpack.c.b16 %v5606, %v5586
        %v7887 = vpack.c.b16 %v5607, %v5587
        %v7888 = vpack.c.b16 %v5608, %v5588
        %v7889 = vpack.c.b16 %v5609, %v5589
        %v7890 = vpack.c.b16 %v5630, %v5610
        %v7891 = vpack.c.b16 %v5631, %v5611
        %v7892 = vpack.c.b16 %v5632, %v5612
        %v7893 = vpack.c.b16 %v5633, %v5613
        %v7894 = vpack.c.b16 %v5634, %v5614
        %v7895 = vpack.c.b16 %v5635, %v5615
        %v7896 = vpack.c.b16 %v5636, %v5616
        %v7897 = vpack.c.b16 %v5637, %v5617
        %v7898 = vpack.c.b16 %v5638, %v5618
        %v7899 = vpack.c.b16 %v5639, %v5619
        %v7900 = vpack.c.b16 %v5640, %v5620
        %v7901 = vpack.c.b16 %v5641, %v5621
        %v7902 = vpack.c.b16 %v5642, %v5622
        %v7903 = vpack.c.b16 %v5643, %v5623
        %v7904 = vpack.c.b16 %v5644, %v5624
        %v7905 = vpack.c.b16 %v5645, %v5625
        %v7906 = vpack.c.b16 %v5646, %v5626
        %v7907 = vpack.c.b16 %v5647, %v5627
        %v7908 = vpack.c.b16 %v5648, %v5628
        %v7909 = vpack.c.b16 %v5649, %v5629
        %v7910 = vpack.c.b16 %v5670, %v5650
        %v7911 = vpack.c.b16 %v5671, %v5651
        %v7912 = vpack.c.b16 %v5672, %v5652
        %v7913 = vpack.c.b16 %v5673, %v5653
        %v7914 = vpack.c.b16 %v5674, %v5654
        %v7915 = vpack.c.b16 %v5675, %v5655
        %v7916 = vpack.c.b16 %v5676, %v5656
        %v7917 = vpack.c.b16 %v5677, %v5657
        %v7918 = vpack.c.b16 %v5678, %v5658
        %v7919 = vpack.c.b16 %v5679, %v5659
        %v7920 = vpack.c.b16 %v5680, %v5660
        %v7921 = vpack.c.b16 %v5681, %v5661
        %v7922 = vpack.c.b16 %v5682, %v5662
        %v7923 = vpack.c.b16 %v5683, %v5663
        %v7924 = vpack.c.b16 %v5684, %v5664
        %v7925 = vpack.c.b16 %v5685, %v5665
        %v7926 = vpack.c.b16 %v5686, %v5666
        %v7927 = vpack.c.b16 %v5687, %v5667
        %v7928 = vpack.c.b16 %v5688, %v5668
        %v7929 = vpack.c.b16 %v5689, %v5669
        %v7930 = vpack.c.b16 %v5710, %v5690
        %v7931 = vpack.c.b16 %v5711, %v5691
        %v7932 = vpack.c.b16 %v5712, %v5692
        %v7933 = vpack.c.b16 %v5713, %v5693
        %v7934 = vpack.c.b16 %v5714, %v5694
        %v7935 = vpack.c.b16 %v5715, %v5695
        %v7936 = vpack.c.b16 %v5716, %v5696
        %v7937 = vpack.c.b16 %v5717, %v5697
        %v7938 = vpack.c.b16 %v5718, %v5698
        %v7939 = vpack.c.b16 %v5719, %v5699
        %v7940 = vpack.c.b16 %v5720, %v5700
        %v7941 = vpack.c.b16 %v5721, %v5701
        %v7942 = vpack.c.b16 %v5722, %v5702
        %v7943 = vpack.c.b16 %v5723, %v5703
        %v7944 = vpack.c.b16 %v5724, %v5704
        %v7945 = vpack.c.b16 %v5725, %v5705
        %v7946 = vpack.c.b16 %v5726, %v5706
        %v7947 = vpack.c.b16 %v5727, %v5707
        %v7948 = vpack.c.b16 %v5728, %v5708
        %v7949 = vpack.c.b16 %v5729, %v5709
        %v7950 = vpack.c.b16 %v5750, %v5730
        %v7951 = vpack.c.b16 %v5751, %v5731
        %v7952 = vpack.c.b16 %v5752, %v5732
        %v7953 = vpack.c.b16 %v5753, %v5733
        %v7954 = vpack.c.b16 %v5754, %v5734
        %v7955 = vpack.c.b16 %v5755, %v5735
        %v7956 = vpack.c.b16 %v5756, %v5736
        %v7957 = vpack.c.b16 %v5757, %v5737
        %v7958 = vpack.c.b16 %v5758, %v5738
        %v7959 = vpack.c.b16 %v5759, %v5739
        %v7960 = vpack.c.b16 %v5760, %v5740
        %v7961 = vpack.c.b16 %v5761, %v5741
        %v7962 = vpack.c.b16 %v5762, %v5742
        %v7963 = vpack.c.b16 %v5763, %v5743
        %v7964 = vpack.c.b16 %v5764, %v5744
        %v7965 = vpack.c.b16 %v5765, %v5745
        %v7966 = vpack.c.b16 %v5766, %v5746
        %v7967 = vpack.c.b16 %v5767, %v5747
        %v7968 = vpack.c.b16 %v5768, %v5748
        %v7969 = vpack.c.b16 %v5769, %v5749
        %v7970 = vpack.c.b16 %v5790, %v5770
        %v7971 = vpack.c.b16 %v5791, %v5771
        %v7972 = vpack.c.b16 %v5792, %v5772
        %v7973 = vpack.c.b16 %v5793, %v5773
        %v7974 = vpack.c.b16 %v5794, %v5774
        %v7975 = vpack.c.b16 %v5795, %v5775
        %v7976 = vpack.c.b16 %v5796, %v5776
        %v7977 = vpack.c.b16 %v5797, %v5777
        %v7978 = vpack.c.b16 %v5798, %v5778
        %v7979 = vpack.c.b16 %v5799, %v5779
        %v7980 = vpack.c.b16 %v5800, %v5780
        %v7981 = vpack.c.b16 %v5801, %v5781
        %v7982 = vpack.c.b16 %v5802, %v5782
        %v7983 = vpack.c.b16 %v5803, %v5783
        %v7984 = vpack.c.b16 %v5804, %v5784
        %v7985 = vpack.c.b16 %v5805, %v5785
        %v7986 = vpack.c.b16 %v5806, %v5786
        %v7987 = vpack.c.b16 %v5807, %v5787
        %v7988 = vpack.c.b16 %v5808, %v5788
        %v7989 = vpack.c.b16 %v5809, %v5789
        %v7990 = vpack.c.b16 %v5830, %v5810
        %v7991 = vpack.c.b16 %v5831, %v5811
        %v7992 = vpack.c.b16 %v5832, %v5812
        %v7993 = vpack.c.b16 %v5833, %v5813
        %v7994 = vpack.c.b16 %v5834, %v5814
        %v7995 = vpack.c.b16 %v5835, %v5815
        %v7996 = vpack.c.b16 %v5836, %v5816
        %v7997 = vpack.c.b16 %v5837, %v5817
        %v7998 = vpack.c.b16 %v5838, %v5818
        %v7999 = vpack.c.b16 %v5839, %v5819
        %v8000 = vpack.c.b16 %v5840, %v5820
        %v8001 = vpack.c.b16 %v5841, %v5821
        %v8002 = vpack.c.b16 %v5842, %v5822
        %v8003 = vpack.c.b16 %v5843, %v5823
        %v8004 = vpack.c.b16 %v5844, %v5824
        %v8005 = vpack.c.b16 %v5845, %v5825
        %v8006 = vpack.c.b16 %v5846, %v5826
        %v8007 = vpack.c.b16 %v5847, %v5827
        %v8008 = vpack.c.b16 %v5848, %v5828
        %v8009 = vpack.c.b16 %v5849, %v5829
        %v8010 = vpack.c.b16 %v5870, %v5850
        %v8011 = vpack.c.b16 %v5871, %v5851
        %v8012 = vpack.c.b16 %v5872, %v5852
        %v8013 = vpack.c.b16 %v5873, %v5853
        %v8014 = vpack.c.b16 %v5874, %v5854
        %v8015 = vpack.c.b16 %v5875, %v5855
        %v8016 = vpack.c.b16 %v5876, %v5856
        %v8017 = vpack.c.b16 %v5877, %v5857
        %v8018 = vpack.c.b16 %v5878, %v5858
        %v8019 = vpack.c.b16 %v5879, %v5859
        %v8020 = vpack.c.b16 %v5880, %v5860
        %v8021 = vpack.c.b16 %v5881, %v5861
        %v8022 = vpack.c.b16 %v5882, %v5862
        %v8023 = vpack.c.b16 %v5883, %v5863
        %v8024 = vpack.c.b16 %v5884, %v5864
        %v8025 = vpack.c.b16 %v5885, %v5865
        %v8026 = vpack.c.b16 %v5886, %v5866
        %v8027 = vpack.c.b16 %v5887, %v5867
        %v8028 = vpack.c.b16 %v5888, %v5868
        %v8029 = vpack.c.b16 %v5889, %v5869
        %v8030 = vpack.c.b16 %v5910, %v5890
        %v8031 = vpack.c.b16 %v5911, %v5891
        %v8032 = vpack.c.b16 %v5912, %v5892
        %v8033 = vpack.c.b16 %v5913, %v5893
        %v8034 = vpack.c.b16 %v5914, %v5894
        %v8035 = vpack.c.b16 %v5915, %v5895
        %v8036 = vpack.c.b16 %v5916, %v5896
        %v8037 = vpack.c.b16 %v5917, %v5897
        %v8038 = vpack.c.b16 %v5918, %v5898
        %v8039 = vpack.c.b16 %v5919, %v5899
        %v8040 = vpack.c.b16 %v5920, %v5900
        %v8041 = vpack.c.b16 %v5921, %v5901
        %v8042 = vpack.c.b16 %v5922, %v5902
        %v8043 = vpack.c.b16 %v5923, %v5903
        %v8044 = vpack.c.b16 %v5924, %v5904
        %v8045 = vpack.c.b16 %v5925, %v5905
        %v8046 = vpack.c.b16 %v5926, %v5906
        %v8047 = vpack.c.b16 %v5927, %v5907
        %v8048 = vpack.c.b16 %v5928, %v5908
        %v8049 = vpack.c.b16 %v5929, %v5909
        %v8050 = vpack.c.b16 %v5950, %v5930
        %v8051 = vpack.c.b16 %v5951, %v5931
        %v8052 = vpack.c.b16 %v5952, %v5932
        %v8053 = vpack.c.b16 %v5953, %v5933
        %v8054 = vpack.c.b16 %v5954, %v5934
        %v8055 = vpack.c.b16 %v5955, %v5935
        %v8056 = vpack.c.b16 %v5956, %v5936
        %v8057 = vpack.c.b16 %v5957, %v5937
        %v8058 = vpack.c.b16 %v5958, %v5938
        %v8059 = vpack.c.b16 %v5959, %v5939
        %v8060 = vpack.c.b16 %v5960, %v5940
        %v8061 = vpack.c.b16 %v5961, %v5941
        %v8062 = vpack.c.b16 %v5962, %v5942
        %v8063 = vpack.c.b16 %v5963, %v5943
        %v8064 = vpack.c.b16 %v5964, %v5944
        %v8065 = vpack.c.b16 %v5965, %v5945
        %v8066 = vpack.c.b16 %v5966, %v5946
        %v8067 = vpack.c.b16 %v5967, %v5947
        %v8068 = vpack.c.b16 %v5968, %v5948
        %v8069 = vpack.c.b16 %v5969, %v5949
        %v8070 = vpack.c.b16 %v5990, %v5970
        %v8071 = vpack.c.b16 %v5991, %v5971
        %v8072 = vpack.c.b16 %v5992, %v5972
        %v8073 = vpack.c.b16 %v5993, %v5973
        %v8074 = vpack.c.b16 %v5994, %v5974
        %v8075 = vpack.c.b16 %v5995, %v5975
        %v8076 = vpack.c.b16 %v5996, %v5976
        %v8077 = vpack.c.b16 %v5997, %v5977
        %v8078 = vpack.c.b16 %v5998, %v5978
        %v8079 = vpack.c.b16 %v5999, %v5979
        %v8080 = vpack.c.b16 %v6000, %v5980
        %v8081 = vpack.c.b16 %v6001, %v5981
        %v8082 = vpack.c.b16 %v6002, %v5982
        %v8083 = vpack.c.b16 %v6003, %v5983
        %v8084 = vpack.c.b16 %v6004, %v5984
        %v8085 = vpack.c.b16 %v6005, %v5985
        %v8086 = vpack.c.b16 %v6006, %v5986
        %v8087 = vpack.c.b16 %v6007, %v5987
        %v8088 = vpack.c.b16 %v6008, %v5988
        %v8089 = vpack.c.b16 %v6009, %v5989
        %v8090 = vpack.c.b16 %v6030, %v6010
        %v8091 = vpack.c.b16 %v6031, %v6011
        %v8092 = vpack.c.b16 %v6032, %v6012
        %v8093 = vpack.c.b16 %v6033, %v6013
        %v8094 = vpack.c.b16 %v6034, %v6014
        %v8095 = vpack.c.b16 %v6035, %v6015
        %v8096 = vpack.c.b16 %v6036, %v6016
        %v8097 = vpack.c.b16 %v6037, %v6017
        %v8098 = vpack.c.b16 %v6038, %v6018
        %v8099 = vpack.c.b16 %v6039, %v6019
        %v8100 = vpack.c.b16 %v6040, %v6020
        %v8101 = vpack.c.b16 %v6041, %v6021
        %v8102 = vpack.c.b16 %v6042, %v6022
        %v8103 = vpack.c.b16 %v6043, %v6023
        %v8104 = vpack.c.b16 %v6044, %v6024
        %v8105 = vpack.c.b16 %v6045, %v6025
        %v8106 = vpack.c.b16 %v6046, %v6026
        %v8107 = vpack.c.b16 %v6047, %v6027
        %v8108 = vpack.c.b16 %v6048, %v6028
        %v8109 = vpack.c.b16 %v6049, %v6029
        %v8110 = vpack.c.b16 %v6070, %v6050
        %v8111 = vpack.c.b16 %v6071, %v6051
        %v8112 = vpack.c.b16 %v6072, %v6052
        %v8113 = vpack.c.b16 %v6073, %v6053
        %v8114 = vpack.c.b16 %v6074, %v6054
        %v8115 = vpack.c.b16 %v6075, %v6055
        %v8116 = vpack.c.b16 %v6076, %v6056
        %v8117 = vpack.c.b16 %v6077, %v6057
        %v8118 = vpack.c.b16 %v6078, %v6058
        %v8119 = vpack.c.b16 %v6079, %v6059
        %v8120 = vpack.c.b16 %v6080, %v6060
        %v8121 = vpack.c.b16 %v6081, %v6061
        %v8122 = vpack.c.b16 %v6082, %v6062
        %v8123 = vpack.c.b16 %v6083, %v6063
        %v8124 = vpack.c.b16 %v6084, %v6064
        %v8125 = vpack.c.b16 %v6085, %v6065
        %v8126 = vpack.c.b16 %v6086, %v6066
        %v8127 = vpack.c.b16 %v6087, %v6067
        %v8128 = vpack.c.b16 %v6088, %v6068
        %v8129 = vpack.c.b16 %v6089, %v6069
        %v8130 = vpack.c.b16 %v6110, %v6090
        %v8131 = vpack.c.b16 %v6111, %v6091
        %v8132 = vpack.c.b16 %v6112, %v6092
        %v8133 = vpack.c.b16 %v6113, %v6093
        %v8134 = vpack.c.b16 %v6114, %v6094
        %v8135 = vpack.c.b16 %v6115, %v6095
        %v8136 = vpack.c.b16 %v6116, %v6096
        %v8137 = vpack.c.b16 %v6117, %v6097
        %v8138 = vpack.c.b16 %v6118, %v6098
        %v8139 = vpack.c.b16 %v6119, %v6099
        %v8140 = vpack.c.b16 %v6120, %v6100
        %v8141 = vpack.c.b16 %v6121, %v6101
        %v8142 = vpack.c.b16 %v6122, %v6102
        %v8143 = vpack.c.b16 %v6123, %v6103
        %v8144 = vpack.c.b16 %v6124, %v6104
        %v8145 = vpack.c.b16 %v6125, %v6105
        %v8146 = vpack.c.b16 %v6126, %v6106
        %v8147 = vpack.c.b16 %v6127, %v6107
        %v8148 = vpack.c.b16 %v6128, %v6108
        %v8149 = vpack.c.b16 %v6129, %v6109
        %v8150 = vpack.c.b16 %v6150, %v6130
        %v8151 = vpack.c.b16 %v6151, %v6131
        %v8152 = vpack.c.b16 %v6152, %v6132
        %v8153 = vpack.c.b16 %v6153, %v6133
        %v8154 = vpack.c.b16 %v6154, %v6134
        %v8155 = vpack.c.b16 %v6155, %v6135
        %v8156 = vpack.c.b16 %v6156, %v6136
        %v8157 = vpack.c.b16 %v6157, %v6137
        %v8158 = vpack.c.b16 %v6158, %v6138
        %v8159 = vpack.c.b16 %v6159, %v6139
        %v8160 = vpack.c.b16 %v6160, %v6140
        %v8161 = vpack.c.b16 %v6161, %v6141
        %v8162 = vpack.c.b16 %v6162, %v6142
        %v8163 = vpack.c.b16 %v6163, %v6143
        %v8164 = vpack.c.b16 %v6164, %v6144
        %v8165 = vpack.c.b16 %v6165, %v6145
        %v8166 = vpack.c.b16 %v6166, %v6146
        %v8167 = vpack.c.b16 %v6167, %v6147
        %v8168 = vpack.c.b16 %v6168, %v6148
        %v8169 = vpack.c.b16 %v6169, %v6149
        %v8170 = vpack.c.b16 %v6190, %v6170
        %v8171 = vpack.c.b16 %v6191, %v6171
        %v8172 = vpack.c.b16 %v6192, %v6172
        %v8173 = vpack.c.b16 %v6193, %v6173
        %v8174 = vpack.c.b16 %v6194, %v6174
        %v8175 = vpack.c.b16 %v6195, %v6175
        %v8176 = vpack.c.b16 %v6196, %v6176
        %v8177 = vpack.c.b16 %v6197, %v6177
        %v8178 = vpack.c.b16 %v6198, %v6178
        %v8179 = vpack.c.b16 %v6199, %v6179
        %v8180 = vpack.c.b16 %v6200, %v6180
        %v8181 = vpack.c.b16 %v6201, %v6181
        %v8182 = vpack.c.b16 %v6202, %v6182
        %v8183 = vpack.c.b16 %v6203, %v6183
        %v8184 = vpack.c.b16 %v6204, %v6184
        %v8185 = vpack.c.b16 %v6205, %v6185
        %v8186 = vpack.c.b16 %v6206, %v6186
        %v8187 = vpack.c.b16 %v6207, %v6187
        %v8188 = vpack.c.b16 %v6208, %v6188
        %v8189 = vpack.c.b16 %v6209, %v6189
        %v8190 = vpack.c.b16 %v6230, %v6210
        %v8191 = vpack.c.b16 %v6231, %v6211
        %v8192 = vpack.c.b16 %v6232, %v6212
        %v8193 = vpack.c.b16 %v6233, %v6213
        %v8194 = vpack.c.b16 %v6234, %v6214
        %v8195 = vpack.c.b16 %v6235, %v6215
        %v8196 = vpack.c.b16 %v6236, %v6216
        %v8197 = vpack.c.b16 %v6237, %v6217
        %v8198 = vpack.c.b16 %v6238, %v6218
        %v8199 = vpack.c.b16 %v6239, %v6219
        %v8200 = vpack.c.b16 %v6240, %v6220
        %v8201 = vpack.c.b16 %v6241, %v6221
        %v8202 = vpack.c.b16 %v6242, %v6222
        %v8203 = vpack.c.b16 %v6243, %v6223
        %v8204 = vpack.c.b16 %v6244, %v6224
        %v8205 = vpack.c.b16 %v6245, %v6225
        %v8206 = vpack.c.b16 %v6246, %v6226
        %v8207 = vpack.c.b16 %v6247, %v6227
        %v8208 = vpack.c.b16 %v6248, %v6228
        %v8209 = vpack.c.b16 %v6249, %v6229
        %v8210 = vpack.c.b16 %v6270, %v6250
        %v8211 = vpack.c.b16 %v6271, %v6251
        %v8212 = vpack.c.b16 %v6272, %v6252
        %v8213 = vpack.c.b16 %v6273, %v6253
        %v8214 = vpack.c.b16 %v6274, %v6254
        %v8215 = vpack.c.b16 %v6275, %v6255
        %v8216 = vpack.c.b16 %v6276, %v6256
        %v8217 = vpack.c.b16 %v6277, %v6257
        %v8218 = vpack.c.b16 %v6278, %v6258
        %v8219 = vpack.c.b16 %v6279, %v6259
        %v8220 = vpack.c.b16 %v6280, %v6260
        %v8221 = vpack.c.b16 %v6281, %v6261
        %v8222 = vpack.c.b16 %v6282, %v6262
        %v8223 = vpack.c.b16 %v6283, %v6263
        %v8224 = vpack.c.b16 %v6284, %v6264
        %v8225 = vpack.c.b16 %v6285, %v6265
        %v8226 = vpack.c.b16 %v6286, %v6266
        %v8227 = vpack.c.b16 %v6287, %v6267
        %v8228 = vpack.c.b16 %v6288, %v6268
        %v8229 = vpack.c.b16 %v6289, %v6269
        %v8230 = vpack.c.b16 %v6310, %v6290
        %v8231 = vpack.c.b16 %v6311, %v6291
        %v8232 = vpack.c.b16 %v6312, %v6292
        %v8233 = vpack.c.b16 %v6313, %v6293
        %v8234 = vpack.c.b16 %v6314, %v6294
        %v8235 = vpack.c.b16 %v6315, %v6295
        %v8236 = vpack.c.b16 %v6316, %v6296
        %v8237 = vpack.c.b16 %v6317, %v6297
        %v8238 = vpack.c.b16 %v6318, %v6298
        %v8239 = vpack.c.b16 %v6319, %v6299
        %v8240 = vpack.c.b16 %v6320, %v6300
        %v8241 = vpack.c.b16 %v6321, %v6301
        %v8242 = vpack.c.b16 %v6322, %v6302
        %v8243 = vpack.c.b16 %v6323, %v6303
        %v8244 = vpack.c.b16 %v6324, %v6304
        %v8245 = vpack.c.b16 %v6325, %v6305
        %v8246 = vpack.c.b16 %v6326, %v6306
        %v8247 = vpack.c.b16 %v6327, %v6307
        %v8248 = vpack.c.b16 %v6328, %v6308
        %v8249 = vpack.c.b16 %v6329, %v6309
        %v8250 = vpack.c.b16 %v6350, %v6330
        %v8251 = vpack.c.b16 %v6351, %v6331
        %v8252 = vpack.c.b16 %v6352, %v6332
        %v8253 = vpack.c.b16 %v6353, %v6333
        %v8254 = vpack.c.b16 %v6354, %v6334
        %v8255 = vpack.c.b16 %v6355, %v6335
        %v8256 = vpack.c.b16 %v6356, %v6336
        %v8257 = vpack.c.b16 %v6357, %v6337
        %v8258 = vpack.c.b16 %v6358, %v6338
        %v8259 = vpack.c.b16 %v6359, %v6339
        %v8260 = vpack.c.b16 %v6360, %v6340
        %v8261 = vpack.c.b16 %v6361, %v6341
        %v8262 = vpack.c.b16 %v6362, %v6342
        %v8263 = vpack.c.b16 %v6363, %v6343
        %v8264 = vpack.c.b16 %v6364, %v6344
        %v8265 = vpack.c.b16 %v6365, %v6345
        %v8266 = vpack.c.b16 %v6366, %v6346
        %v8267 = vpack.c.b16 %v6367, %v6347
        %v8268 = vpack.c.b16 %v6368, %v6348
        %v8269 = vpack.c.b16 %v6369, %v6349
        %v8270 = vpack.c.b16 %v6390, %v6370
        %v8271 = vpack.c.b16 %v6391, %v6371
        %v8272 = vpack.c.b16 %v6392, %v6372
        %v8273 = vpack.c.b16 %v6393, %v6373
        %v8274 = vpack.c.b16 %v6394, %v6374
        %v8275 = vpack.c.b16 %v6395, %v6375
        %v8276 = vpack.c.b16 %v6396, %v6376
        %v8277 = vpack.c.b16 %v6397, %v6377
        %v8278 = vpack.c.b16 %v6398, %v6378
        %v8279 = vpack.c.b16 %v6399, %v6379
        %v8280 = vpack.c.b16 %v6400, %v6380
        %v8281 = vpack.c.b16 %v6401, %v6381
        %v8282 = vpack.c.b16 %v6402, %v6382
        %v8283 = vpack.c.b16 %v6403, %v6383
        %v8284 = vpack.c.b16 %v6404, %v6384
        %v8285 = vpack.c.b16 %v6405, %v6385
        %v8286 = vpack.c.b16 %v6406, %v6386
        %v8287 = vpack.c.b16 %v6407, %v6387
        %v8288 = vpack.c.b16 %v6408, %v6388
        %v8289 = vpack.c.b16 %v6409, %v6389
        %v8290 = vpack.c.b16 %v6430, %v6410
        %v8291 = vpack.c.b16 %v6431, %v6411
        %v8292 = vpack.c.b16 %v6432, %v6412
        %v8293 = vpack.c.b16 %v6433, %v6413
        %v8294 = vpack.c.b16 %v6434, %v6414
        %v8295 = vpack.c.b16 %v6435, %v6415
        %v8296 = vpack.c.b16 %v6436, %v6416
        %v8297 = vpack.c.b16 %v6437, %v6417
        %v8298 = vpack.c.b16 %v6438, %v6418
        %v8299 = vpack.c.b16 %v6439, %v6419
        %v8300 = vpack.c.b16 %v6440, %v6420
        %v8301 = vpack.c.b16 %v6441, %v6421
        %v8302 = vpack.c.b16 %v6442, %v6422
        %v8303 = vpack.c.b16 %v6443, %v6423
        %v8304 = vpack.c.b16 %v6444, %v6424
        %v8305 = vpack.c.b16 %v6445, %v6425
        %v8306 = vpack.c.b16 %v6446, %v6426
        %v8307 = vpack.c.b16 %v6447, %v6427
        %v8308 = vpack.c.b16 %v6448, %v6428
        %v8309 = vpack.c.b16 %v6449, %v6429
        %v8310 = vpack.c.b16 %v6470, %v6450
        %v8311 = vpack.c.b16 %v6471, %v6451
        %v8312 = vpack.c.b16 %v6472, %v6452
        %v8313 = vpack.c.b16 %v6473, %v6453
        %v8314 = vpack.c.b16 %v6474, %v6454
        %v8315 = vpack.c.b16 %v6475, %v6455
        %v8316 = vpack.c.b16 %v6476, %v6456
        %v8317 = vpack.c.b16 %v6477, %v6457
        %v8318 = vpack.c.b16 %v6478, %v6458
        %v8319 = vpack.c.b16 %v6479, %v6459
        %v8320 = vpack.c.b16 %v6480, %v6460
        %v8321 = vpack.c.b16 %v6481, %v6461
        %v8322 = vpack.c.b16 %v6482, %v6462
        %v8323 = vpack.c.b16 %v6483, %v6463
        %v8324 = vpack.c.b16 %v6484, %v6464
        %v8325 = vpack.c.b16 %v6485, %v6465
        %v8326 = vpack.c.b16 %v6486, %v6466
        %v8327 = vpack.c.b16 %v6487, %v6467
        %v8328 = vpack.c.b16 %v6488, %v6468
        %v8329 = vpack.c.b16 %v6489, %v6469
        %v8330 = vpack.c.b16 %v6510, %v6490
        %v8331 = vpack.c.b16 %v6511, %v6491
        %v8332 = vpack.c.b16 %v6512, %v6492
        %v8333 = vpack.c.b16 %v6513, %v6493
        %v8334 = vpack.c.b16 %v6514, %v6494
        %v8335 = vpack.c.b16 %v6515, %v6495
        %v8336 = vpack.c.b16 %v6516, %v6496
        %v8337 = vpack.c.b16 %v6517, %v6497
        %v8338 = vpack.c.b16 %v6518, %v6498
        %v8339 = vpack.c.b16 %v6519, %v6499
        %v8340 = vpack.c.b16 %v6520, %v6500
        %v8341 = vpack.c.b16 %v6521, %v6501
        %v8342 = vpack.c.b16 %v6522, %v6502
        %v8343 = vpack.c.b16 %v6523, %v6503
        %v8344 = vpack.c.b16 %v6524, %v6504
        %v8345 = vpack.c.b16 %v6525, %v6505
        %v8346 = vpack.c.b16 %v6526, %v6506
        %v8347 = vpack.c.b16 %v6527, %v6507
        %v8348 = vpack.c.b16 %v6528, %v6508
        %v8349 = vpack.c.b16 %v6529, %v6509
        %v8350 = vpack.c.b16 %v6550, %v6530
        %v8351 = vpack.c.b16 %v6551, %v6531
        %v8352 = vpack.c.b16 %v6552, %v6532
        %v8353 = vpack.c.b16 %v6553, %v6533
        %v8354 = vpack.c.b16 %v6554, %v6534
        %v8355 = vpack.c.b16 %v6555, %v6535
        %v8356 = vpack.c.b16 %v6556, %v6536
        %v8357 = vpack.c.b16 %v6557, %v6537
        %v8358 = vpack.c.b16 %v6558, %v6538
        %v8359 = vpack.c.b16 %v6559, %v6539
        %v8360 = vpack.c.b16 %v6560, %v6540
        %v8361 = vpack.c.b16 %v6561, %v6541
        %v8362 = vpack.c.b16 %v6562, %v6542
        %v8363 = vpack.c.b16 %v6563, %v6543
        %v8364 = vpack.c.b16 %v6564, %v6544
        %v8365 = vpack.c.b16 %v6565, %v6545
        %v8366 = vpack.c.b16 %v6566, %v6546
        %v8367 = vpack.c.b16 %v6567, %v6547
        %v8368 = vpack.c.b16 %v6568, %v6548
        %v8369 = vpack.c.b16 %v6569, %v6549
        %v8370 = vpack.c.b16 %v6590, %v6570
        %v8371 = vpack.c.b16 %v6591, %v6571
        %v8372 = vpack.c.b16 %v6592, %v6572
        %v8373 = vpack.c.b16 %v6593, %v6573
        %v8374 = vpack.c.b16 %v6594, %v6574
        %v8375 = vpack.c.b16 %v6595, %v6575
        %v8376 = vpack.c.b16 %v6596, %v6576
        %v8377 = vpack.c.b16 %v6597, %v6577
        %v8378 = vpack.c.b16 %v6598, %v6578
        %v8379 = vpack.c.b16 %v6599, %v6579
        %v8380 = vpack.c.b16 %v6600, %v6580
        %v8381 = vpack.c.b16 %v6601, %v6581
        %v8382 = vpack.c.b16 %v6602, %v6582
        %v8383 = vpack.c.b16 %v6603, %v6583
        %v8384 = vpack.c.b16 %v6604, %v6584
        %v8385 = vpack.c.b16 %v6605, %v6585
        %v8386 = vpack.c.b16 %v6606, %v6586
        %v8387 = vpack.c.b16 %v6607, %v6587
        %v8388 = vpack.c.b16 %v6608, %v6588
        %v8389 = vpack.c.b16 %v6609, %v6589
        %v8390 = vpack.c.b16 %v6630, %v6610
        %v8391 = vpack.c.b16 %v6631, %v6611
        %v8392 = vpack.c.b16 %v6632, %v6612
        %v8393 = vpack.c.b16 %v6633, %v6613
        %v8394 = vpack.c.b16 %v6634, %v6614
        %v8395 = vpack.c.b16 %v6635, %v6615
        %v8396 = vpack.c.b16 %v6636, %v6616
        %v8397 = vpack.c.b16 %v6637, %v6617
        %v8398 = vpack.c.b16 %v6638, %v6618
        %v8399 = vpack.c.b16 %v6639, %v6619
        %v8400 = vpack.c.b16 %v6640, %v6620
        %v8401 = vpack.c.b16 %v6641, %v6621
        %v8402 = vpack.c.b16 %v6642, %v6622
        %v8403 = vpack.c.b16 %v6643, %v6623
        %v8404 = vpack.c.b16 %v6644, %v6624
        %v8405 = vpack.c.b16 %v6645, %v6625
        %v8406 = vpack.c.b16 %v6646, %v6626
        %v8407 = vpack.c.b16 %v6647, %v6627
        %v8408 = vpack.c.b16 %v6648, %v6628
        %v8409 = vpack.c.b16 %v6649, %v6629
        %v8410 = vpack.c.b16 %v6670, %v6650
        %v8411 = vpack.c.b16 %v6671, %v6651
        %v8412 = vpack.c.b16 %v6672, %v6652
        %v8413 = vpack.c.b16 %v6673, %v6653
        %v8414 = vpack.c.b16 %v6674, %v6654
        %v8415 = vpack.c.b16 %v6675, %v6655
        %v8416 = vpack.c.b16 %v6676, %v6656
        %v8417 = vpack.c.b16 %v6677, %v6657
        %v8418 = vpack.c.b16 %v6678, %v6658
        %v8419 = vpack.c.b16 %v6679, %v6659
        %v8420 = vpack.c.b16 %v6680, %v6660
        %v8421 = vpack.c.b16 %v6681, %v6661
        %v8422 = vpack.c.b16 %v6682, %v6662
        %v8423 = vpack.c.b16 %v6683, %v6663
        %v8424 = vpack.c.b16 %v6684, %v6664
        %v8425 = vpack.c.b16 %v6685, %v6665
        %v8426 = vpack.c.b16 %v6686, %v6666
        %v8427 = vpack.c.b16 %v6687, %v6667
        %v8428 = vpack.c.b16 %v6688, %v6668
        %v8429 = vpack.c.b16 %v6689, %v6669
        %v8430 = vpack.c.b16 %v6710, %v6690
        %v8431 = vpack.c.b16 %v6711, %v6691
        %v8432 = vpack.c.b16 %v6712, %v6692
        %v8433 = vpack.c.b16 %v6713, %v6693
        %v8434 = vpack.c.b16 %v6714, %v6694
        %v8435 = vpack.c.b16 %v6715, %v6695
        %v8436 = vpack.c.b16 %v6716, %v6696
        %v8437 = vpack.c.b16 %v6717, %v6697
        %v8438 = vpack.c.b16 %v6718, %v6698
        %v8439 = vpack.c.b16 %v6719, %v6699
        %v8440 = vpack.c.b16 %v6720, %v6700
        %v8441 = vpack.c.b16 %v6721, %v6701
        %v8442 = vpack.c.b16 %v6722, %v6702
        %v8443 = vpack.c.b16 %v6723, %v6703
        %v8444 = vpack.c.b16 %v6724, %v6704
        %v8445 = vpack.c.b16 %v6725, %v6705
        %v8446 = vpack.c.b16 %v6726, %v6706
        %v8447 = vpack.c.b16 %v6727, %v6707
        %v8448 = vpack.c.b16 %v6728, %v6708
        %v8449 = vpack.c.b16 %v6729, %v6709
        %v8450 = vpack.c.b16 %v6750, %v6730
        %v8451 = vpack.c.b16 %v6751, %v6731
        %v8452 = vpack.c.b16 %v6752, %v6732
        %v8453 = vpack.c.b16 %v6753, %v6733
        %v8454 = vpack.c.b16 %v6754, %v6734
        %v8455 = vpack.c.b16 %v6755, %v6735
        %v8456 = vpack.c.b16 %v6756, %v6736
        %v8457 = vpack.c.b16 %v6757, %v6737
        %v8458 = vpack.c.b16 %v6758, %v6738
        %v8459 = vpack.c.b16 %v6759, %v6739
        %v8460 = vpack.c.b16 %v6760, %v6740
        %v8461 = vpack.c.b16 %v6761, %v6741
        %v8462 = vpack.c.b16 %v6762, %v6742
        %v8463 = vpack.c.b16 %v6763, %v6743
        %v8464 = vpack.c.b16 %v6764, %v6744
        %v8465 = vpack.c.b16 %v6765, %v6745
        %v8466 = vpack.c.b16 %v6766, %v6746
        %v8467 = vpack.c.b16 %v6767, %v6747
        %v8468 = vpack.c.b16 %v6768, %v6748
        %v8469 = vpack.c.b16 %v6769, %v6749
        %v8470 = vpack.c.b16 %v6790, %v6770
        %v8471 = vpack.c.b16 %v6791, %v6771
        %v8472 = vpack.c.b16 %v6792, %v6772
        %v8473 = vpack.c.b16 %v6793, %v6773
        %v8474 = vpack.c.b16 %v6794, %v6774
        %v8475 = vpack.c.b16 %v6795, %v6775
        %v8476 = vpack.c.b16 %v6796, %v6776
        %v8477 = vpack.c.b16 %v6797, %v6777
        %v8478 = vpack.c.b16 %v6798, %v6778
        %v8479 = vpack.c.b16 %v6799, %v6779
        %v8480 = vpack.c.b16 %v6800, %v6780
        %v8481 = vpack.c.b16 %v6801, %v6781
        %v8482 = vpack.c.b16 %v6802, %v6782
        %v8483 = vpack.c.b16 %v6803, %v6783
        %v8484 = vpack.c.b16 %v6804, %v6784
        %v8485 = vpack.c.b16 %v6805, %v6785
        %v8486 = vpack.c.b16 %v6806, %v6786
        %v8487 = vpack.c.b16 %v6807, %v6787
        %v8488 = vpack.c.b16 %v6808, %v6788
        %v8489 = vpack.c.b16 %v6809, %v6789
        %v8490 = vpack.c.b16 %v6830, %v6810
        %v8491 = vpack.c.b16 %v6831, %v6811
        %v8492 = vpack.c.b16 %v6832, %v6812
        %v8493 = vpack.c.b16 %v6833, %v6813
        %v8494 = vpack.c.b16 %v6834, %v6814
        %v8495 = vpack.c.b16 %v6835, %v6815
        %v8496 = vpack.c.b16 %v6836, %v6816
        %v8497 = vpack.c.b16 %v6837, %v6817
        %v8498 = vpack.c.b16 %v6838, %v6818
        %v8499 = vpack.c.b16 %v6839, %v6819
        %v8500 = vpack.c.b16 %v6840, %v6820
        %v8501 = vpack.c.b16 %v6841, %v6821
        %v8502 = vpack.c.b16 %v6842, %v6822
        %v8503 = vpack.c.b16 %v6843, %v6823
        %v8504 = vpack.c.b16 %v6844, %v6824
        %v8505 = vpack.c.b16 %v6845, %v6825
        %v8506 = vpack.c.b16 %v6846, %v6826
        %v8507 = vpack.c.b16 %v6847, %v6827
        %v8508 = vpack.c.b16 %v6848, %v6828
        %v8509 = vpack.c.b16 %v6849, %v6829
        %v8510 = vpack.c.b16 %v6870, %v6850
        %v8511 = vpack.c.b16 %v6871, %v6851
        %v8512 = vpack.c.b16 %v6872, %v6852
        %v8513 = vpack.c.b16 %v6873, %v6853
        %v8514 = vpack.c.b16 %v6874, %v6854
        %v8515 = vpack.c.b16 %v6875, %v6855
        %v8516 = vpack.c.b16 %v6876, %v6856
        %v8517 = vpack.c.b16 %v6877, %v6857
        %v8518 = vpack.c.b16 %v6878, %v6858
        %v8519 = vpack.c.b16 %v6879, %v6859
        %v8520 = vpack.c.b16 %v6880, %v6860
        %v8521 = vpack.c.b16 %v6881, %v6861
        %v8522 = vpack.c.b16 %v6882, %v6862
        %v8523 = vpack.c.b16 %v6883, %v6863
        %v8524 = vpack.c.b16 %v6884, %v6864
        %v8525 = vpack.c.b16 %v6885, %v6865
        %v8526 = vpack.c.b16 %v6886, %v6866
        %v8527 = vpack.c.b16 %v6887, %v6867
        %v8528 = vpack.c.b16 %v6888, %v6868
        %v8529 = vpack.c.b16 %v6889, %v6869
        %v8530 = vpack.c.b16 %v6910, %v6890
        %v8531 = vpack.c.b16 %v6911, %v6891
        %v8532 = vpack.c.b16 %v6912, %v6892
        %v8533 = vpack.c.b16 %v6913, %v6893
        %v8534 = vpack.c.b16 %v6914, %v6894
        %v8535 = vpack.c.b16 %v6915, %v6895
        %v8536 = vpack.c.b16 %v6916, %v6896
        %v8537 = vpack.c.b16 %v6917, %v6897
        %v8538 = vpack.c.b16 %v6918, %v6898
        %v8539 = vpack.c.b16 %v6919, %v6899
        %v8540 = vpack.c.b16 %v6920, %v6900
        %v8541 = vpack.c.b16 %v6921, %v6901
        %v8542 = vpack.c.b16 %v6922, %v6902
        %v8543 = vpack.c.b16 %v6923, %v6903
        %v8544 = vpack.c.b16 %v6924, %v6904
        %v8545 = vpack.c.b16 %v6925, %v6905
        %v8546 = vpack.c.b16 %v6926, %v6906
        %v8547 = vpack.c.b16 %v6927, %v6907
        %v8548 = vpack.c.b16 %v6928, %v6908
        %v8549 = vpack.c.b16 %v6929, %v6909
        %v8550 = vpack.c.b16 %v6950, %v6930
        %v8551 = vpack.c.b16 %v6951, %v6931
        %v8552 = vpack.c.b16 %v6952, %v6932
        %v8553 = vpack.c.b16 %v6953, %v6933
        %v8554 = vpack.c.b16 %v6954, %v6934
        %v8555 = vpack.c.b16 %v6955, %v6935
        %v8556 = vpack.c.b16 %v6956, %v6936
        %v8557 = vpack.c.b16 %v6957, %v6937
        %v8558 = vpack.c.b16 %v6958, %v6938
        %v8559 = vpack.c.b16 %v6959, %v6939
        %v8560 = vpack.c.b16 %v6960, %v6940
        %v8561 = vpack.c.b16 %v6961, %v6941
        %v8562 = vpack.c.b16 %v6962, %v6942
        %v8563 = vpack.c.b16 %v6963, %v6943
        %v8564 = vpack.c.b16 %v6964, %v6944
        %v8565 = vpack.c.b16 %v6965, %v6945
        %v8566 = vpack.c.b16 %v6966, %v6946
        %v8567 = vpack.c.b16 %v6967, %v6947
        %v8568 = vpack.c.b16 %v6968, %v6948
        %v8569 = vpack.c.b16 %v6969, %v6949
        %v8570 = vpack.c.b16 %v6990, %v6970
        %v8571 = vpack.c.b16 %v6991, %v6971
        %v8572 = vpack.c.b16 %v6992, %v6972
        %v8573 = vpack.c.b16 %v6993, %v6973
        %v8574 = vpack.c.b16 %v6994, %v6974
        %v8575 = vpack.c.b16 %v6995, %v6975
        %v8576 = vpack.c.b16 %v6996, %v6976
        %v8577 = vpack.c.b16 %v6997, %v6977
        %v8578 = vpack.c.b16 %v6998, %v6978
        %v8579 = vpack.c.b16 %v6999, %v6979
        %v8580 = vpack.c.b16 %v7000, %v6980
        %v8581 = vpack.c.b16 %v7001, %v6981
        %v8582 = vpack.c.b16 %v7002, %v6982
        %v8583 = vpack.c.b16 %v7003, %v6983
        %v8584 = vpack.c.b16 %v7004, %v6984
        %v8585 = vpack.c.b16 %v7005, %v6985
        %v8586 = vpack.c.b16 %v7006, %v6986
        %v8587 = vpack.c.b16 %v7007, %v6987
        %v8588 = vpack.c.b16 %v7008, %v6988
        %v8589 = vpack.c.b16 %v7009, %v6989
        %v8590 = vpack.c.b16 %v7030, %v7010
        %v8591 = vpack.c.b16 %v7031, %v7011
        %v8592 = vpack.c.b16 %v7032, %v7012
        %v8593 = vpack.c.b16 %v7033, %v7013
        %v8594 = vpack.c.b16 %v7034, %v7014
        %v8595 = vpack.c.b16 %v7035, %v7015
        %v8596 = vpack.c.b16 %v7036, %v7016
        %v8597 = vpack.c.b16 %v7037, %v7017
        %v8598 = vpack.c.b16 %v7038, %v7018
        %v8599 = vpack.c.b16 %v7039, %v7019
        %v8600 = vpack.c.b16 %v7040, %v7020
        %v8601 = vpack.c.b16 %v7041, %v7021
        %v8602 = vpack.c.b16 %v7042, %v7022
        %v8603 = vpack.c.b16 %v7043, %v7023
        %v8604 = vpack.c.b16 %v7044, %v7024
        %v8605 = vpack.c.b16 %v7045, %v7025
        %v8606 = vpack.c.b16 %v7046, %v7026
        %v8607 = vpack.c.b16 %v7047, %v7027
        %v8608 = vpack.c.b16 %v7048, %v7028
        %v8609 = vpack.c.b16 %v7049, %v7029
        %v8610 = vpack.c.b16 %v7070, %v7050
        %v8611 = vpack.c.b16 %v7071, %v7051
        %v8612 = vpack.c.b16 %v7072, %v7052
        %v8613 = vpack.c.b16 %v7073, %v7053
        %v8614 = vpack.c.b16 %v7074, %v7054
        %v8615 = vpack.c.b16 %v7075, %v7055
        %v8616 = vpack.c.b16 %v7076, %v7056
        %v8617 = vpack.c.b16 %v7077, %v7057
        %v8618 = vpack.c.b16 %v7078, %v7058
        %v8619 = vpack.c.b16 %v7079, %v7059
        %v8620 = vpack.c.b16 %v7080, %v7060
        %v8621 = vpack.c.b16 %v7081, %v7061
        %v8622 = vpack.c.b16 %v7082, %v7062
        %v8623 = vpack.c.b16 %v7083, %v7063
        %v8624 = vpack.c.b16 %v7084, %v7064
        %v8625 = vpack.c.b16 %v7085, %v7065
        %v8626 = vpack.c.b16 %v7086, %v7066
        %v8627 = vpack.c.b16 %v7087, %v7067
        %v8628 = vpack.c.b16 %v7088, %v7068
        %v8629 = vpack.c.b16 %v7089, %v7069
        %v8630 = vpack.c.b16 %v7110, %v7090
        %v8631 = vpack.c.b16 %v7111, %v7091
        %v8632 = vpack.c.b16 %v7112, %v7092
        %v8633 = vpack.c.b16 %v7113, %v7093
        %v8634 = vpack.c.b16 %v7114, %v7094
        %v8635 = vpack.c.b16 %v7115, %v7095
        %v8636 = vpack.c.b16 %v7116, %v7096
        %v8637 = vpack.c.b16 %v7117, %v7097
        %v8638 = vpack.c.b16 %v7118, %v7098
        %v8639 = vpack.c.b16 %v7119, %v7099
        %v8640 = vpack.c.b16 %v7120, %v7100
        %v8641 = vpack.c.b16 %v7121, %v7101
        %v8642 = vpack.c.b16 %v7122, %v7102
        %v8643 = vpack.c.b16 %v7123, %v7103
        %v8644 = vpack.c.b16 %v7124, %v7104
        %v8645 = vpack.c.b16 %v7125, %v7105
        %v8646 = vpack.c.b16 %v7126, %v7106
        %v8647 = vpack.c.b16 %v7127, %v7107
        %v8648 = vpack.c.b16 %v7128, %v7108
        %v8649 = vpack.c.b16 %v7129, %v7109
        %v8650 = vpack.c.b16 %v7150, %v7130
        %v8651 = vpack.c.b16 %v7151, %v7131
        %v8652 = vpack.c.b16 %v7152, %v7132
        %v8653 = vpack.c.b16 %v7153, %v7133
        %v8654 = vpack.c.b16 %v7154, %v7134
        %v8655 = vpack.c.b16 %v7155, %v7135
        %v8656 = vpack.c.b16 %v7156, %v7136
        %v8657 = vpack.c.b16 %v7157, %v7137
        %v8658 = vpack.c.b16 %v7158, %v7138
        %v8659 = vpack.c.b16 %v7159, %v7139
        %v8660 = vpack.c.b16 %v7160, %v7140
        %v8661 = vpack.c.b16 %v7161, %v7141
        %v8662 = vpack.c.b16 %v7162, %v7142
        %v8663 = vpack.c.b16 %v7163, %v7143
        %v8664 = vpack.c.b16 %v7164, %v7144
        %v8665 = vpack.c.b16 %v7165, %v7145
        %v8666 = vpack.c.b16 %v7166, %v7146
        %v8667 = vpack.c.b16 %v7167, %v7147
        %v8668 = vpack.c.b16 %v7168, %v7148
        %v8669 = vpack.c.b16 %v7169, %v7149
        %v8670 = vpack.c.b16 %v7190, %v7170
        %v8671 = vpack.c.b16 %v7191, %v7171
        %v8672 = vpack.c.b16 %v7192, %v7172
        %v8673 = vpack.c.b16 %v7193, %v7173
        %v8674 = vpack.c.b16 %v7194, %v7174
        %v8675 = vpack.c.b16 %v7195, %v7175
        %v8676 = vpack.c.b16 %v7196, %v7176
        %v8677 = vpack.c.b16 %v7197, %v7177
        %v8678 = vpack.c.b16 %v7198, %v7178
        %v8679 = vpack.c.b16 %v7199, %v7179
        %v8680 = vpack.c.b16 %v7200, %v7180
        %v8681 = vpack.c.b16 %v7201, %v7181
        %v8682 = vpack.c.b16 %v7202, %v7182
        %v8683 = vpack.c.b16 %v7203, %v7183
        %v8684 = vpack.c.b16 %v7204, %v7184
        %v8685 = vpack.c.b16 %v7205, %v7185
        %v8686 = vpack.c.b16 %v7206, %v7186
        %v8687 = vpack.c.b16 %v7207, %v7187
        %v8688 = vpack.c.b16 %v7208, %v7188
        %v8689 = vpack.c.b16 %v7209, %v7189
        %v8690 = vpack.c.b16 %v7230, %v7210
        %v8691 = vpack.c.b16 %v7231, %v7211
        %v8692 = vpack.c.b16 %v7232, %v7212
        %v8693 = vpack.c.b16 %v7233, %v7213
        %v8694 = vpack.c.b16 %v7234, %v7214
        %v8695 = vpack.c.b16 %v7235, %v7215
        %v8696 = vpack.c.b16 %v7236, %v7216
        %v8697 = vpack.c.b16 %v7237, %v7217
        %v8698 = vpack.c.b16 %v7238, %v7218
        %v8699 = vpack.c.b16 %v7239, %v7219
        %v8700 = vpack.c.b16 %v7240, %v7220
        %v8701 = vpack.c.b16 %v7241, %v7221
        %v8702 = vpack.c.b16 %v7242, %v7222
        %v8703 = vpack.c.b16 %v7243, %v7223
        %v8704 = vpack.c.b16 %v7244, %v7224
        %v8705 = vpack.c.b16 %v7245, %v7225
        %v8706 = vpack.c.b16 %v7246, %v7226
        %v8707 = vpack.c.b16 %v7247, %v7227
        %v8708 = vpack.c.b16 %v7248, %v7228
        %v8709 = vpack.c.b16 %v7249, %v7229
        %v8710 = vpack.c.b16 %v7270, %v7250
        %v8711 = vpack.c.b16 %v7271, %v7251
        %v8712 = vpack.c.b16 %v7272, %v7252
        %v8713 = vpack.c.b16 %v7273, %v7253
        %v8714 = vpack.c.b16 %v7274, %v7254
        %v8715 = vpack.c.b16 %v7275, %v7255
        %v8716 = vpack.c.b16 %v7276, %v7256
        %v8717 = vpack.c.b16 %v7277, %v7257
        %v8718 = vpack.c.b16 %v7278, %v7258
        %v8719 = vpack.c.b16 %v7279, %v7259
        %v8720 = vpack.c.b16 %v7280, %v7260
        %v8721 = vpack.c.b16 %v7281, %v7261
        %v8722 = vpack.c.b16 %v7282, %v7262
        %v8723 = vpack.c.b16 %v7283, %v7263
        %v8724 = vpack.c.b16 %v7284, %v7264
        %v8725 = vpack.c.b16 %v7285, %v7265
        %v8726 = vpack.c.b16 %v7286, %v7266
        %v8727 = vpack.c.b16 %v7287, %v7267
        %v8728 = vpack.c.b16 %v7288, %v7268
        %v8729 = vpack.c.b16 %v7289, %v7269
        %v8730 = vpack.c.b16 %v7310, %v7290
        %v8731 = vpack.c.b16 %v7311, %v7291
        %v8732 = vpack.c.b16 %v7312, %v7292
        %v8733 = vpack.c.b16 %v7313, %v7293
        %v8734 = vpack.c.b16 %v7314, %v7294
        %v8735 = vpack.c.b16 %v7315, %v7295
        %v8736 = vpack.c.b16 %v7316, %v7296
        %v8737 = vpack.c.b16 %v7317, %v7297
        %v8738 = vpack.c.b16 %v7318, %v7298
        %v8739 = vpack.c.b16 %v7319, %v7299
        %v8740 = vpack.c.b16 %v7320, %v7300
        %v8741 = vpack.c.b16 %v7321, %v7301
        %v8742 = vpack.c.b16 %v7322, %v7302
        %v8743 = vpack.c.b16 %v7323, %v7303
        %v8744 = vpack.c.b16 %v7324, %v7304
        %v8745 = vpack.c.b16 %v7325, %v7305
        %v8746 = vpack.c.b16 %v7326, %v7306
        %v8747 = vpack.c.b16 %v7327, %v7307
        %v8748 = vpack.c.b16 %v7328, %v7308
        %v8749 = vpack.c.b16 %v7329, %v7309
        %v8750 = vpack.c.b16 %v7350, %v7330
        %v8751 = vpack.c.b16 %v7351, %v7331
        %v8752 = vpack.c.b16 %v7352, %v7332
        %v8753 = vpack.c.b16 %v7353, %v7333
        %v8754 = vpack.c.b16 %v7354, %v7334
        %v8755 = vpack.c.b16 %v7355, %v7335
        %v8756 = vpack.c.b16 %v7356, %v7336
        %v8757 = vpack.c.b16 %v7357, %v7337
        %v8758 = vpack.c.b16 %v7358, %v7338
        %v8759 = vpack.c.b16 %v7359, %v7339
        %v8760 = vpack.c.b16 %v7360, %v7340
        %v8761 = vpack.c.b16 %v7361, %v7341
        %v8762 = vpack.c.b16 %v7362, %v7342
        %v8763 = vpack.c.b16 %v7363, %v7343
        %v8764 = vpack.c.b16 %v7364, %v7344
        %v8765 = vpack.c.b16 %v7365, %v7345
        %v8766 = vpack.c.b16 %v7366, %v7346
        %v8767 = vpack.c.b16 %v7367, %v7347
        %v8768 = vpack.c.b16 %v7368, %v7348
        %v8769 = vpack.c.b16 %v7369, %v7349
        %v8770 = vpack.c.b16 %v7390, %v7370
        %v8771 = vpack.c.b16 %v7391, %v7371
        %v8772 = vpack.c.b16 %v7392, %v7372
        %v8773 = vpack.c.b16 %v7393, %v7373
        %v8774 = vpack.c.b16 %v7394, %v7374
        %v8775 = vpack.c.b16 %v7395, %v7375
        %v8776 = vpack.c.b16 %v7396, %v7376
        %v8777 = vpack.c.b16 %v7397, %v7377
        %v8778 = vpack.c.b16 %v7398, %v7378
        %v8779 = vpack.c.b16 %v7399, %v7379
        %v8780 = vpack.c.b16 %v7400, %v7380
        %v8781 = vpack.c.b16 %v7401, %v7381
        %v8782 = vpack.c.b16 %v7402, %v7382
        %v8783 = vpack.c.b16 %v7403, %v7383
        %v8784 = vpack.c.b16 %v7404, %v7384
        %v8785 = vpack.c.b16 %v7405, %v7385
        %v8786 = vpack.c.b16 %v7406, %v7386
        %v8787 = vpack.c.b16 %v7407, %v7387
        %v8788 = vpack.c.b16 %v7408, %v7388
        %v8789 = vpack.c.b16 %v7409, %v7389
        %v8790 = vpack.c.b16 %v7430, %v7410
        %v8791 = vpack.c.b16 %v7431, %v7411
        %v8792 = vpack.c.b16 %v7432, %v7412
        %v8793 = vpack.c.b16 %v7433, %v7413
        %v8794 = vpack.c.b16 %v7434, %v7414
        %v8795 = vpack.c.b16 %v7435, %v7415
        %v8796 = vpack.c.b16 %v7436, %v7416
        %v8797 = vpack.c.b16 %v7437, %v7417
        %v8798 = vpack.c.b16 %v7438, %v7418
        %v8799 = vpack.c.b16 %v7439, %v7419
        %v8800 = vpack.c.b16 %v7440, %v7420
        %v8801 = vpack.c.b16 %v7441, %v7421
        %v8802 = vpack.c.b16 %v7442, %v7422
        %v8803 = vpack.c.b16 %v7443, %v7423
        %v8804 = vpack.c.b16 %v7444, %v7424
        %v8805 = vpack.c.b16 %v7445, %v7425
        %v8806 = vpack.c.b16 %v7446, %v7426
        %v8807 = vpack.c.b16 %v7447, %v7427
        %v8808 = vpack.c.b16 %v7448, %v7428
        %v8809 = vpack.c.b16 %v7449, %v7429
        %v8810 = vpack.c.b16 %v7470, %v7450
        %v8811 = vpack.c.b16 %v7471, %v7451
        %v8812 = vpack.c.b16 %v7472, %v7452
        %v8813 = vpack.c.b16 %v7473, %v7453
        %v8814 = vpack.c.b16 %v7474, %v7454
        %v8815 = vpack.c.b16 %v7475, %v7455
        %v8816 = vpack.c.b16 %v7476, %v7456
        %v8817 = vpack.c.b16 %v7477, %v7457
        %v8818 = vpack.c.b16 %v7478, %v7458
        %v8819 = vpack.c.b16 %v7479, %v7459
        %v8820 = vpack.c.b16 %v7480, %v7460
        %v8821 = vpack.c.b16 %v7481, %v7461
        %v8822 = vpack.c.b16 %v7482, %v7462
        %v8823 = vpack.c.b16 %v7483, %v7463
        %v8824 = vpack.c.b16 %v7484, %v7464
        %v8825 = vpack.c.b16 %v7485, %v7465
        %v8826 = vpack.c.b16 %v7486, %v7466
        %v8827 = vpack.c.b16 %v7487, %v7467
        %v8828 = vpack.c.b16 %v7488, %v7468
        %v8829 = vpack.c.b16 %v7489, %v7469
        %v8830 = vpack.c.b16 %v7510, %v7490
        %v8831 = vpack.c.b16 %v7511, %v7491
        %v8832 = vpack.c.b16 %v7512, %v7492
        %v8833 = vpack.c.b16 %v7513, %v7493
        %v8834 = vpack.c.b16 %v7514, %v7494
        %v8835 = vpack.c.b16 %v7515, %v7495
        %v8836 = vpack.c.b16 %v7516, %v7496
        %v8837 = vpack.c.b16 %v7517, %v7497
        %v8838 = vpack.c.b16 %v7518, %v7498
        %v8839 = vpack.c.b16 %v7519, %v7499
        %v8840 = vpack.c.b16 %v7520, %v7500
        %v8841 = vpack.c.b16 %v7521, %v7501
        %v8842 = vpack.c.b16 %v7522, %v7502
        %v8843 = vpack.c.b16 %v7523, %v7503
        %v8844 = vpack.c.b16 %v7524, %v7504
        %v8845 = vpack.c.b16 %v7525, %v7505
        %v8846 = vpack.c.b16 %v7526, %v7506
        %v8847 = vpack.c.b16 %v7527, %v7507
        %v8848 = vpack.c.b16 %v7528, %v7508
        %v8849 = vpack.c.b16 %v7529, %v7509
        %v8850 = vpack.c.b16 %v7550, %v7530
        %v8851 = vpack.c.b16 %v7551, %v7531
        %v8852 = vpack.c.b16 %v7552, %v7532
        %v8853 = vpack.c.b16 %v7553, %v7533
        %v8854 = vpack.c.b16 %v7554, %v7534
        %v8855 = vpack.c.b16 %v7555, %v7535
        %v8856 = vpack.c.b16 %v7556, %v7536
        %v8857 = vpack.c.b16 %v7557, %v7537
        %v8858 = vpack.c.b16 %v7558, %v7538
        %v8859 = vpack.c.b16 %v7559, %v7539
        %v8860 = vpack.c.b16 %v7560, %v7540
        %v8861 = vpack.c.b16 %v7561, %v7541
        %v8862 = vpack.c.b16 %v7562, %v7542
        %v8863 = vpack.c.b16 %v7563, %v7543
        %v8864 = vpack.c.b16 %v7564, %v7544
        %v8865 = vpack.c.b16 %v7565, %v7545
        %v8866 = vpack.c.b16 %v7566, %v7546
        %v8867 = vpack.c.b16 %v7567, %v7547
        %v8868 = vpack.c.b16 %v7568, %v7548
        %v8869 = vpack.c.b16 %v7569, %v7549
        %v8870 = vpack.c.b16 %v7590, %v7570
        %v8871 = vpack.c.b16 %v7591, %v7571
        %v8872 = vpack.c.b16 %v7592, %v7572
        %v8873 = vpack.c.b16 %v7593, %v7573
        %v8874 = vpack.c.b16 %v7594, %v7574
        %v8875 = vpack.c.b16 %v7595, %v7575
        %v8876 = vpack.c.b16 %v7596, %v7576
        %v8877 = vpack.c.b16 %v7597, %v7577
        %v8878 = vpack.c.b16 %v7598, %v7578
        %v8879 = vpack.c.b16 %v7599, %v7579
        %v8880 = vpack.c.b16 %v7600, %v7580
        %v8881 = vpack.c.b16 %v7601, %v7581
        %v8882 = vpack.c.b16 %v7602, %v7582
        %v8883 = vpack.c.b16 %v7603, %v7583
        %v8884 = vpack.c.b16 %v7604, %v7584
        %v8885 = vpack.c.b16 %v7605, %v7585
        %v8886 = vpack.c.b16 %v7606, %v7586
        %v8887 = vpack.c.b16 %v7607, %v7587
        %v8888 = vpack.c.b16 %v7608, %v7588
        %v8889 = vpack.c.b16 %v7609, %v7589
        %10170 = vmatprep.subr.bf16.mxu0 %v7611
        %10171 = vmatpush1.bf16.msra.mxu0 %v7610
        %10172 = vmatprep.subr.bf16.mxu0 %v7631
        %10173 = vmatpush1.bf16.msra.mxu0 %v7630
        %10174 = vmatprep.subr.bf16.mxu0 %v7651
        %10175 = vmatpush1.bf16.msra.mxu0 %v7650
        %10176 = vmatprep.subr.bf16.mxu0 %v7671
        %10177 = vmatpush1.bf16.msra.mxu0 %v7670
        %10178 = vmatprep.subr.bf16.mxu0 %v7691
        %10179 = vmatpush1.bf16.msra.mxu0 %v7690
        %10180 = vmatprep.subr.bf16.mxu0 %v7711
        %10181 = vmatpush1.bf16.msra.mxu0 %v7710
        %10182 = vmatprep.subr.bf16.mxu0 %v7731
        %10183 = vmatpush1.bf16.msra.mxu0 %v7730
        %10184 = vmatprep.subr.bf16.mxu0 %v7751
        %10185 = vmatpush1.bf16.msra.mxu0 %v7750
        %10186 = vmatprep.subr.bf16.mxu0 %v7771
        %10187 = vmatpush1.bf16.msra.mxu0 %v7770
        %10188 = vmatprep.subr.bf16.mxu0 %v7791
        %10189 = vmatpush1.bf16.msra.mxu0 %v7790
        %10190 = vmatprep.subr.bf16.mxu0 %v7811
        %10191 = vmatpush1.bf16.msra.mxu0 %v7810
        %10192 = vmatprep.subr.bf16.mxu0 %v7831
        %10193 = vmatpush1.bf16.msra.mxu0 %v7830
        %10194 = vmatprep.subr.bf16.mxu0 %v7851
        %10195 = vmatpush1.bf16.msra.mxu0 %v7850
        %10196 = vmatprep.subr.bf16.mxu0 %v7871
        %10197 = vmatpush1.bf16.msra.mxu0 %v7870
        %10198 = vmatprep.subr.bf16.mxu0 %v7891
        %10199 = vmatpush1.bf16.msra.mxu0 %v7890
        %10200 = vmatprep.subr.bf16.mxu0 %v7911
        %10201 = vmatpush1.bf16.msra.mxu0 %v7910
        %10202 = vmatprep.mubr.bf16.mxu0 %v2369
        %10203 = vmatmul.mubr.bf16.gmra.mrb[0].mxu0 %v2368
        %v10204 = vpop.f32.mrb[0].mxu0
        %v10205 = vadd.f32 %v3673, %v10204
        %v10206 = vpop.f32.mrb[0].mxu0
        %v10207 = vadd.f32 %v3677, %v10206
        %v10208 = vpop.f32.mrb[0].mxu0
        %v10209 = vadd.f32 %v3673, %v10208
        %v10210 = vpop.f32.mrb[0].mxu0
        %v10211 = vadd.f32 %v3677, %v10210
        %10212 = vmatprep.mubr.bf16.mxu0 %v2377
        %10213 = vmatmul.mubr.bf16.gmra.mrb[0].mxu0 %v2376
        %v10214 = vpop.f32.mrb[0].mxu0
        %v10215 = vadd.f32 %v3673, %v10214
        %v10216 = vpop.f32.mrb[0].mxu0
        %v10217 = vadd.f32 %v3677, %v10216
        %v10218 = vpop.f32.mrb[0].mxu0
        %v10219 = vadd.f32 %v3673, %v10218
        %v10220 = vpop.f32.mrb[0].mxu0
        %v10221 = vadd.f32 %v3677, %v10220
        %10222 = vdwg.mxu0
        %10223 = vmatprep.subr.bf16.mxu0 %v7931
        %10224 = vmatpush1.bf16.msra.mxu0 %v7930
        %10225 = vmatprep.subr.bf16.mxu0 %v7951
        %10226 = vmatpush1.bf16.msra.mxu0 %v7950
        %10227 = vmatprep.subr.bf16.mxu0 %v7971
        %10228 = vmatpush1.bf16.msra.mxu0 %v7970
        %10229 = vmatprep.subr.bf16.mxu0 %v7991
        %10230 = vmatpush1.bf16.msra.mxu0 %v7990
        %10231 = vmatprep.subr.bf16.mxu0 %v8011
        %10232 = vmatpush1.bf16.msra.mxu0 %v8010
        %10233 = vmatprep.subr.bf16.mxu0 %v8031
        %10234 = vmatpush1.bf16.msra.mxu0 %v8030
        %10235 = vmatprep.subr.bf16.mxu0 %v8051
        %10236 = vmatpush1.bf16.msra.mxu0 %v8050
        %10237 = vmatprep.subr.bf16.mxu0 %v8071
        %10238 = vmatpush1.bf16.msra.mxu0 %v8070
        %10239 = vmatprep.subr.bf16.mxu0 %v8091
        %10240 = vmatpush1.bf16.msra.mxu0 %v8090
        %10241 = vmatprep.subr.bf16.mxu0 %v8111
        %10242 = vmatpush1.bf16.msra.mxu0 %v8110
        %10243 = vmatprep.subr.bf16.mxu0 %v8131
        %10244 = vmatpush1.bf16.msra.mxu0 %v8130
        %10245 = vmatprep.subr.bf16.mxu0 %v8151
        %10246 = vmatpush1.bf16.msra.mxu0 %v8150
        %10247 = vmatprep.subr.bf16.mxu0 %v8171
        %10248 = vmatpush1.bf16.msra.mxu0 %v8170
        %10249 = vmatprep.subr.bf16.mxu0 %v8191
        %10250 = vmatpush1.bf16.msra.mxu0 %v8190
        %10251 = vmatprep.subr.bf16.mxu0 %v8211
        %10252 = vmatpush1.bf16.msra.mxu0 %v8210
        %10253 = vmatprep.subr.bf16.mxu0 %v8231
        %10254 = vmatpush1.bf16.msra.mxu0 %v8230
        %10255 = vmatprep.mubr.bf16.mxu0 %v2371
        %10256 = vmatmul.mubr.bf16.gmra.mrb[0].mxu0 %v2370
        %v10257 = vpop.f32.mrb[0].mxu0
        %v10258 = vadd.f32 %v10205, %v10257
        %v10259 = vpop.f32.mrb[0].mxu0
        %v10260 = vadd.f32 %v10207, %v10259
        %v10261 = vpop.f32.mrb[0].mxu0
        %v10262 = vadd.f32 %v10209, %v10261
        %v10263 = vpop.f32.mrb[0].mxu0
        %v10264 = vadd.f32 %v10211, %v10263
        %10265 = vmatprep.mubr.bf16.mxu0 %v2379
        %10266 = vmatmul.mubr.bf16.gmra.mrb[0].mxu0 %v2378
        %v10267 = vpop.f32.mrb[0].mxu0
        %v10268 = vadd.f32 %v10215, %v10267
        %v10269 = vpop.f32.mrb[0].mxu0
        %v10270 = vadd.f32 %v10217, %v10269
        %v10271 = vpop.f32.mrb[0].mxu0
        %v10272 = vadd.f32 %v10219, %v10271
        %v10273 = vpop.f32.mrb[0].mxu0
        %v10274 = vadd.f32 %v10221, %v10273
        %10275 = vdwg.mxu0
        %10276 = vmatprep.subr.bf16.mxu0 %v8251
        %10277 = vmatpush1.bf16.msra.mxu0 %v8250
        %10278 = vmatprep.subr.bf16.mxu0 %v8271
        %10279 = vmatpush1.bf16.msra.mxu0 %v8270
        %10280 = vmatprep.subr.bf16.mxu0 %v8291
        %10281 = vmatpush1.bf16.msra.mxu0 %v8290
        %10282 = vmatprep.subr.bf16.mxu0 %v8311
        %10283 = vmatpush1.bf16.msra.mxu0 %v8310
        %10284 = vmatprep.subr.bf16.mxu0 %v8331
        %10285 = vmatpush1.bf16.msra.mxu0 %v8330
        %10286 = vmatprep.subr.bf16.mxu0 %v8351
        %10287 = vmatpush1.bf16.msra.mxu0 %v8350
        %10288 = vmatprep.subr.bf16.mxu0 %v8371
        %10289 = vmatpush1.bf16.msra.mxu0 %v8370
        %10290 = vmatprep.subr.bf16.mxu0 %v8391
        %10291 = vmatpush1.bf16.msra.mxu0 %v8390
        %10292 = vmatprep.subr.bf16.mxu0 %v8411
        %10293 = vmatpush1.bf16.msra.mxu0 %v8410
        %10294 = vmatprep.subr.bf16.mxu0 %v8431
        %10295 = vmatpush1.bf16.msra.mxu0 %v8430
        %10296 = vmatprep.subr.bf16.mxu0 %v8451
        %10297 = vmatpush1.bf16.msra.mxu0 %v8450
        %10298 = vmatprep.subr.bf16.mxu0 %v8471
        %10299 = vmatpush1.bf16.msra.mxu0 %v8470
        %10300 = vmatprep.subr.bf16.mxu0 %v8491
        %10301 = vmatpush1.bf16.msra.mxu0 %v8490
        %10302 = vmatprep.subr.bf16.mxu0 %v8511
        %10303 = vmatpush1.bf16.msra.mxu0 %v8510
        %10304 = vmatprep.subr.bf16.mxu0 %v8531
        %10305 = vmatpush1.bf16.msra.mxu0 %v8530
        %10306 = vmatprep.subr.bf16.mxu0 %v8551
        %10307 = vmatpush1.bf16.msra.mxu0 %v8550
        %10308 = vmatprep.mubr.bf16.mxu0 %v2373
        %10309 = vmatmul.mubr.bf16.gmra.mrb[0].mxu0 %v2372
        %v10310 = vpop.f32.mrb[0].mxu0
        %v10311 = vadd.f32 %v10258, %v10310
        %v10312 = vpop.f32.mrb[0].mxu0
        %v10313 = vadd.f32 %v10260, %v10312
        %v10314 = vpop.f32.mrb[0].mxu0
        %v10315 = vadd.f32 %v10262, %v10314
        %v10316 = vpop.f32.mrb[0].mxu0
        %v10317 = vadd.f32 %v10264, %v10316
        %10318 = vmatprep.mubr.bf16.mxu0 %v2381
        %10319 = vmatmul.mubr.bf16.gmra.mrb[0].mxu0 %v2380
        %v10320 = vpop.f32.mrb[0].mxu0
        %v10321 = vadd.f32 %v10268, %v10320
        %v10322 = vpop.f32.mrb[0].mxu0
        %v10323 = vadd.f32 %v10270, %v10322
        %v10324 = vpop.f32.mrb[0].mxu0
        %v10325 = vadd.f32 %v10272, %v10324
        %v10326 = vpop.f32.mrb[0].mxu0
        %v10327 = vadd.f32 %v10274, %v10326
        %10328 = vdwg.mxu0
        %10329 = vmatprep.subr.bf16.mxu0 %v8571
        %10330 = vmatpush1.bf16.msra.mxu0 %v8570
        %10331 = vmatprep.subr.bf16.mxu0 %v8591
        %10332 = vmatpush1.bf16.msra.mxu0 %v8590
        %10333 = vmatprep.subr.bf16.mxu0 %v8611
        %10334 = vmatpush1.bf16.msra.mxu0 %v8610
        %10335 = vmatprep.subr.bf16.mxu0 %v8631
        %10336 = vmatpush1.bf16.msra.mxu0 %v8630
        %10337 = vmatprep.subr.bf16.mxu0 %v8651
        %10338 = vmatpush1.bf16.msra.mxu0 %v8650
        %10339 = vmatprep.subr.bf16.mxu0 %v8671
        %10340 = vmatpush1.bf16.msra.mxu0 %v8670
        %10341 = vmatprep.subr.bf16.mxu0 %v8691
        %10342 = vmatpush1.bf16.msra.mxu0 %v8690
        %10343 = vmatprep.subr.bf16.mxu0 %v8711
        %10344 = vmatpush1.bf16.msra.mxu0 %v8710
        %10345 = vmatprep.subr.bf16.mxu0 %v8731
        %10346 = vmatpush1.bf16.msra.mxu0 %v8730
        %10347 = vmatprep.subr.bf16.mxu0 %v8751
        %10348 = vmatpush1.bf16.msra.mxu0 %v8750
        %10349 = vmatprep.subr.bf16.mxu0 %v8771
        %10350 = vmatpush1.bf16.msra.mxu0 %v8770
        %10351 = vmatprep.subr.bf16.mxu0 %v8791
        %10352 = vmatpush1.bf16.msra.mxu0 %v8790
        %10353 = vmatprep.subr.bf16.mxu0 %v8811
        %10354 = vmatpush1.bf16.msra.mxu0 %v8810
        %10355 = vmatprep.subr.bf16.mxu0 %v8831
        %10356 = vmatpush1.bf16.msra.mxu0 %v8830
        %10357 = vmatprep.subr.bf16.mxu0 %v8851
        %10358 = vmatpush1.bf16.msra.mxu0 %v8850
        %10359 = vmatprep.subr.bf16.mxu0 %v8871
        %10360 = vmatpush1.bf16.msra.mxu0 %v8870
        %10361 = vmatprep.mubr.bf16.mxu0 %v2375
        %10362 = vmatmul.mubr.bf16.gmra.mrb[0].mxu0 %v2374
        %v10363 = vpop.f32.mrb[0].mxu0
        %v10364 = vadd.f32 %v10311, %v10363
        %v10365 = vpop.f32.mrb[0].mxu0
        %v10366 = vadd.f32 %v10313, %v10365
        %v10367 = vpop.f32.mrb[0].mxu0
        %v10368 = vadd.f32 %v10315, %v10367
        %v10369 = vpop.f32.mrb[0].mxu0
        %v10370 = vadd.f32 %v10317, %v10369
        %10371 = vmatprep.mubr.bf16.mxu0 %v2383
        %10372 = vmatmul.mubr.bf16.gmra.mrb[0].mxu0 %v2382
        %v10373 = vpop.f32.mrb[0].mxu0
        %v10374 = vadd.f32 %v10321, %v10373
        %v10375 = vpop.f32.mrb[0].mxu0
        %v10376 = vadd.f32 %v10323, %v10375
        %v10377 = vpop.f32.mrb[0].mxu0
        %v10378 = vadd.f32 %v10325, %v10377
        %v10379 = vpop.f32.mrb[0].mxu0
        %v10380 = vadd.f32 %v10327, %v10379
        %10381 = vdwg.mxu0
        %10382 = vmatprep.subr.bf16.mxu0 %v7613
        %10383 = vmatpush1.bf16.msra.mxu0 %v7612
        %10384 = vmatprep.subr.bf16.mxu0 %v7633
        %10385 = vmatpush1.bf16.msra.mxu0 %v7632
        %10386 = vmatprep.subr.bf16.mxu0 %v7653
        %10387 = vmatpush1.bf16.msra.mxu0 %v7652
        %10388 = vmatprep.subr.bf16.mxu0 %v7673
        %10389 = vmatpush1.bf16.msra.mxu0 %v7672
        %10390 = vmatprep.subr.bf16.mxu0 %v7693
        %10391 = vmatpush1.bf16.msra.mxu0 %v7692
        %10392 = vmatprep.subr.bf16.mxu0 %v7713
        %10393 = vmatpush1.bf16.msra.mxu0 %v7712
        %10394 = vmatprep.subr.bf16.mxu0 %v7733
        %10395 = vmatpush1.bf16.msra.mxu0 %v7732
        %10396 = vmatprep.subr.bf16.mxu0 %v7753
        %10397 = vmatpush1.bf16.msra.mxu0 %v7752
        %10398 = vmatprep.subr.bf16.mxu0 %v7773
        %10399 = vmatpush1.bf16.msra.mxu0 %v7772
        %10400 = vmatprep.subr.bf16.mxu0 %v7793
        %10401 = vmatpush1.bf16.msra.mxu0 %v7792
        %10402 = vmatprep.subr.bf16.mxu0 %v7813
        %10403 = vmatpush1.bf16.msra.mxu0 %v7812
        %10404 = vmatprep.subr.bf16.mxu0 %v7833
        %10405 = vmatpush1.bf16.msra.mxu0 %v7832
        %10406 = vmatprep.subr.bf16.mxu0 %v7853
        %10407 = vmatpush1.bf16.msra.mxu0 %v7852
        %10408 = vmatprep.subr.bf16.mxu0 %v7873
        %10409 = vmatpush1.bf16.msra.mxu0 %v7872
        %10410 = vmatprep.subr.bf16.mxu0 %v7893
        %10411 = vmatpush1.bf16.msra.mxu0 %v7892
        %10412 = vmatprep.subr.bf16.mxu0 %v7913
        %10413 = vmatpush1.bf16.msra.mxu0 %v7912
        %10414 = vmatprep.mubr.bf16.mxu0 %v2369
        %10415 = vmatmul.mubr.bf16.gmra.mrb[0].mxu0 %v2368
        %v10416 = vpop.f32.mrb[0].mxu0
        %v10417 = vadd.f32 %v3681, %v10416
        %v10418 = vpop.f32.mrb[0].mxu0
        %v10419 = vadd.f32 %v3685, %v10418
        %v10420 = vpop.f32.mrb[0].mxu0
        %v10421 = vadd.f32 %v3681, %v10420
        %v10422 = vpop.f32.mrb[0].mxu0
        %v10423 = vadd.f32 %v3685, %v10422
        %10424 = vmatprep.mubr.bf16.mxu0 %v2377
        %10425 = vmatmul.mubr.bf16.gmra.mrb[0].mxu0 %v2376
        %v10426 = vpop.f32.mrb[0].mxu0
        %v10427 = vadd.f32 %v3681, %v10426
        %v10428 = vpop.f32.mrb[0].mxu0
        %v10429 = vadd.f32 %v3685, %v10428
        %v10430 = vpop.f32.mrb[0].mxu0
        %v10431 = vadd.f32 %v3681, %v10430
        %v10432 = vpop.f32.mrb[0].mxu0
        %v10433 = vadd.f32 %v3685, %v10432
        %10434 = vdwg.mxu0
        %10435 = vmatprep.subr.bf16.mxu0 %v7933
        %10436 = vmatpush1.bf16.msra.mxu0 %v7932
        %10437 = vmatprep.subr.bf16.mxu0 %v7953
        %10438 = vmatpush1.bf16.msra.mxu0 %v7952
        %10439 = vmatprep.subr.bf16.mxu0 %v7973
        %10440 = vmatpush1.bf16.msra.mxu0 %v7972
        %10441 = vmatprep.subr.bf16.mxu0 %v7993
        %10442 = vmatpush1.bf16.msra.mxu0 %v7992
        %10443 = vmatprep.subr.bf16.mxu0 %v8013
        %10444 = vmatpush1.bf16.msra.mxu0 %v8012
        %10445 = vmatprep.subr.bf16.mxu0 %v8033
        %10446 = vmatpush1.bf16.msra.mxu0 %v8032
        %10447 = vmatprep.subr.bf16.mxu0 %v8053
        %10448 = vmatpush1.bf16.msra.mxu0 %v8052
        %10449 = vmatprep.subr.bf16.mxu0 %v8073
        %10450 = vmatpush1.bf16.msra.mxu0 %v8072
        %10451 = vmatprep.subr.bf16.mxu0 %v8093
        %10452 = vmatpush1.bf16.msra.mxu0 %v8092
        %10453 = vmatprep.subr.bf16.mxu0 %v8113
        %10454 = vmatpush1.bf16.msra.mxu0 %v8112
        %10455 = vmatprep.subr.bf16.mxu0 %v8133
        %10456 = vmatpush1.bf16.msra.mxu0 %v8132
        %10457 = vmatprep.subr.bf16.mxu0 %v8153
        %10458 = vmatpush1.bf16.msra.mxu0 %v8152
        %10459 = vmatprep.subr.bf16.mxu0 %v8173
        %10460 = vmatpush1.bf16.msra.mxu0 %v8172
        %10461 = vmatprep.subr.bf16.mxu0 %v8193
        %10462 = vmatpush1.bf16.msra.mxu0 %v8192
        %10463 = vmatprep.subr.bf16.mxu0 %v8213
        %10464 = vmatpush1.bf16.msra.mxu0 %v8212
        %10465 = vmatprep.subr.bf16.mxu0 %v8233
        %10466 = vmatpush1.bf16.msra.mxu0 %v8232
        %10467 = vmatprep.mubr.bf16.mxu0 %v2371
        %10468 = vmatmul.mubr.bf16.gmra.mrb[0].mxu0 %v2370
        %v10469 = vpop.f32.mrb[0].mxu0
        %v10470 = vadd.f32 %v10417, %v10469
        %v10471 = vpop.f32.mrb[0].mxu0
        %v10472 = vadd.f32 %v10419, %v10471
        %v10473 = vpop.f32.mrb[0].mxu0
        %v10474 = vadd.f32 %v10421, %v10473
        %v10475 = vpop.f32.mrb[0].mxu0
        %v10476 = vadd.f32 %v10423, %v10475
        %10477 = vmatprep.mubr.bf16.mxu0 %v2379
        %10478 = vmatmul.mubr.bf16.gmra.mrb[0].mxu0 %v2378
        %v10479 = vpop.f32.mrb[0].mxu0
        %v10480 = vadd.f32 %v10427, %v10479
        %v10481 = vpop.f32.mrb[0].mxu0
        %v10482 = vadd.f32 %v10429, %v10481
        %v10483 = vpop.f32.mrb[0].mxu0
        %v10484 = vadd.f32 %v10431, %v10483
        %v10485 = vpop.f32.mrb[0].mxu0
        %v10486 = vadd.f32 %v10433, %v10485
        %10487 = vdwg.mxu0
        %10488 = vmatprep.subr.bf16.mxu0 %v8253
        %10489 = vmatpush1.bf16.msra.mxu0 %v8252
        %10490 = vmatprep.subr.bf16.mxu0 %v8273
        %10491 = vmatpush1.bf16.msra.mxu0 %v8272
        %10492 = vmatprep.subr.bf16.mxu0 %v8293
        %10493 = vmatpush1.bf16.msra.mxu0 %v8292
        %10494 = vmatprep.subr.bf16.mxu0 %v8313
        %10495 = vmatpush1.bf16.msra.mxu0 %v8312
        %10496 = vmatprep.subr.bf16.mxu0 %v8333
        %10497 = vmatpush1.bf16.msra.mxu0 %v8332
        %10498 = vmatprep.subr.bf16.mxu0 %v8353
        %10499 = vmatpush1.bf16.msra.mxu0 %v8352
        %10500 = vmatprep.subr.bf16.mxu0 %v8373
        %10501 = vmatpush1.bf16.msra.mxu0 %v8372
        %10502 = vmatprep.subr.bf16.mxu0 %v8393
        %10503 = vmatpush1.bf16.msra.mxu0 %v8392
        %10504 = vmatprep.subr.bf16.mxu0 %v8413
        %10505 = vmatpush1.bf16.msra.mxu0 %v8412
        %10506 = vmatprep.subr.bf16.mxu0 %v8433
        %10507 = vmatpush1.bf16.msra.mxu0 %v8432
        %10508 = vmatprep.subr.bf16.mxu0 %v8453
        %10509 = vmatpush1.bf16.msra.mxu0 %v8452
        %10510 = vmatprep.subr.bf16.mxu0 %v8473
        %10511 = vmatpush1.bf16.msra.mxu0 %v8472
        %10512 = vmatprep.subr.bf16.mxu0 %v8493
        %10513 = vmatpush1.bf16.msra.mxu0 %v8492
        %10514 = vmatprep.subr.bf16.mxu0 %v8513
        %10515 = vmatpush1.bf16.msra.mxu0 %v8512
        %10516 = vmatprep.subr.bf16.mxu0 %v8533
        %10517 = vmatpush1.bf16.msra.mxu0 %v8532
        %10518 = vmatprep.subr.bf16.mxu0 %v8553
        %10519 = vmatpush1.bf16.msra.mxu0 %v8552
        %10520 = vmatprep.mubr.bf16.mxu0 %v2373
        %10521 = vmatmul.mubr.bf16.gmra.mrb[0].mxu0 %v2372
        %v10522 = vpop.f32.mrb[0].mxu0
        %v10523 = vadd.f32 %v10470, %v10522
        %v10524 = vpop.f32.mrb[0].mxu0
        %v10525 = vadd.f32 %v10472, %v10524
        %v10526 = vpop.f32.mrb[0].mxu0
        %v10527 = vadd.f32 %v10474, %v10526
        %v10528 = vpop.f32.mrb[0].mxu0
        %v10529 = vadd.f32 %v10476, %v10528
        %10530 = vmatprep.mubr.bf16.mxu0 %v2381
        %10531 = vmatmul.mubr.bf16.gmra.mrb[0].mxu0 %v2380
        %v10532 = vpop.f32.mrb[0].mxu0
        %v10533 = vadd.f32 %v10480, %v10532
        %v10534 = vpop.f32.mrb[0].mxu0
        %v10535 = vadd.f32 %v10482, %v10534
        %v10536 = vpop.f32.mrb[0].mxu0
        %v10537 = vadd.f32 %v10484, %v10536
        %v10538 = vpop.f32.mrb[0].mxu0
        %v10539 = vadd.f32 %v10486, %v10538
        %10540 = vdwg.mxu0
        %10541 = vmatprep.subr.bf16.mxu0 %v8573
        %10542 = vmatpush1.bf16.msra.mxu0 %v8572
        %10543 = vmatprep.subr.bf16.mxu0 %v8593
        %10544 = vmatpush1.bf16.msra.mxu0 %v8592
        %10545 = vmatprep.subr.bf16.mxu0 %v8613
        %10546 = vmatpush1.bf16.msra.mxu0 %v8612
        %10547 = vmatprep.subr.bf16.mxu0 %v8633
        %10548 = vmatpush1.bf16.msra.mxu0 %v8632
        %10549 = vmatprep.subr.bf16.mxu0 %v8653
        %10550 = vmatpush1.bf16.msra.mxu0 %v8652
        %10551 = vmatprep.subr.bf16.mxu0 %v8673
        %10552 = vmatpush1.bf16.msra.mxu0 %v8672
        %10553 = vmatprep.subr.bf16.mxu0 %v8693
        %10554 = vmatpush1.bf16.msra.mxu0 %v8692
        %10555 = vmatprep.subr.bf16.mxu0 %v8713
        %10556 = vmatpush1.bf16.msra.mxu0 %v8712
        %10557 = vmatprep.subr.bf16.mxu0 %v8733
        %10558 = vmatpush1.bf16.msra.mxu0 %v8732
        %10559 = vmatprep.subr.bf16.mxu0 %v8753
        %10560 = vmatpush1.bf16.msra.mxu0 %v8752
        %10561 = vmatprep.subr.bf16.mxu0 %v8773
        %10562 = vmatpush1.bf16.msra.mxu0 %v8772
        %10563 = vmatprep.subr.bf16.mxu0 %v8793
        %10564 = vmatpush1.bf16.msra.mxu0 %v8792
        %10565 = vmatprep.subr.bf16.mxu0 %v8813
        %10566 = vmatpush1.bf16.msra.mxu0 %v8812
        %10567 = vmatprep.subr.bf16.mxu0 %v8833
        %10568 = vmatpush1.bf16.msra.mxu0 %v8832
        %10569 = vmatprep.subr.bf16.mxu0 %v8853
        %10570 = vmatpush1.bf16.msra.mxu0 %v8852
        %10571 = vmatprep.subr.bf16.mxu0 %v8873
        %10572 = vmatpush1.bf16.msra.mxu0 %v8872
        %10573 = vmatprep.mubr.bf16.mxu0 %v2375
        %10574 = vmatmul.mubr.bf16.gmra.mrb[0].mxu0 %v2374
        %v10575 = vpop.f32.mrb[0].mxu0
        %v10576 = vadd.f32 %v10523, %v10575
        %v10577 = vpop.f32.mrb[0].mxu0
        %v10578 = vadd.f32 %v10525, %v10577
        %v10579 = vpop.f32.mrb[0].mxu0
        %v10580 = vadd.f32 %v10527, %v10579
        %v10581 = vpop.f32.mrb[0].mxu0
        %v10582 = vadd.f32 %v10529, %v10581
        %10583 = vmatprep.mubr.bf16.mxu0 %v2383
        %10584 = vmatmul.mubr.bf16.gmra.mrb[0].mxu0 %v2382
        %v10585 = vpop.f32.mrb[0].mxu0
        %v10586 = vadd.f32 %v10533, %v10585
        %v10587 = vpop.f32.mrb[0].mxu0
        %v10588 = vadd.f32 %v10535, %v10587
        %v10589 = vpop.f32.mrb[0].mxu0
        %v10590 = vadd.f32 %v10537, %v10589
        %v10591 = vpop.f32.mrb[0].mxu0
        %v10592 = vadd.f32 %v10539, %v10591
        %10593 = vdwg.mxu0
        %10594 = vmatprep.subr.bf16.mxu0 %v7615
        %10595 = vmatpush1.bf16.msra.mxu0 %v7614
        %10596 = vmatprep.subr.bf16.mxu0 %v7635
        %10597 = vmatpush1.bf16.msra.mxu0 %v7634
        %10598 = vmatprep.subr.bf16.mxu0 %v7655
        %10599 = vmatpush1.bf16.msra.mxu0 %v7654
        %10600 = vmatprep.subr.bf16.mxu0 %v7675
        %10601 = vmatpush1.bf16.msra.mxu0 %v7674
        %10602 = vmatprep.subr.bf16.mxu0 %v7695
        %10603 = vmatpush1.bf16.msra.mxu0 %v7694
        %10604 = vmatprep.subr.bf16.mxu0 %v7715
        %10605 = vmatpush1.bf16.msra.mxu0 %v7714
        %10606 = vmatprep.subr.bf16.mxu0 %v7735
        %10607 = vmatpush1.bf16.msra.mxu0 %v7734
        %10608 = vmatprep.subr.bf16.mxu0 %v7755
        %10609 = vmatpush1.bf16.msra.mxu0 %v7754
        %10610 = vmatprep.subr.bf16.mxu0 %v7775
        %10611 = vmatpush1.bf16.msra.mxu0 %v7774
        %10612 = vmatprep.subr.bf16.mxu0 %v7795
        %10613 = vmatpush1.bf16.msra.mxu0 %v7794
        %10614 = vmatprep.subr.bf16.mxu0 %v7815
        %10615 = vmatpush1.bf16.msra.mxu0 %v7814
        %10616 = vmatprep.subr.bf16.mxu0 %v7835
        %10617 = vmatpush1.bf16.msra.mxu0 %v7834
        %10618 = vmatprep.subr.bf16.mxu0 %v7855
        %10619 = vmatpush1.bf16.msra.mxu0 %v7854
        %10620 = vmatprep.subr.bf16.mxu0 %v7875
        %10621 = vmatpush1.bf16.msra.mxu0 %v7874
        %10622 = vmatprep.subr.bf16.mxu0 %v7895
        %10623 = vmatpush1.bf16.msra.mxu0 %v7894
        %10624 = vmatprep.subr.bf16.mxu0 %v7915
        %10625 = vmatpush1.bf16.msra.mxu0 %v7914
        %10626 = vmatprep.mubr.bf16.mxu0 %v2369
        %10627 = vmatmul.mubr.bf16.gmra.mrb[0].mxu0 %v2368
        %v10628 = vpop.f32.mrb[0].mxu0
        %v10629 = vadd.f32 %v3689, %v10628
        %v10630 = vpop.f32.mrb[0].mxu0
        %v10631 = vadd.f32 %v3693, %v10630
        %v10632 = vpop.f32.mrb[0].mxu0
        %v10633 = vadd.f32 %v3689, %v10632
        %v10634 = vpop.f32.mrb[0].mxu0
        %v10635 = vadd.f32 %v3693, %v10634
        %10636 = vmatprep.mubr.bf16.mxu0 %v2377
        %10637 = vmatmul.mubr.bf16.gmra.mrb[0].mxu0 %v2376
        %v10638 = vpop.f32.mrb[0].mxu0
        %v10639 = vadd.f32 %v3689, %v10638
        %v10640 = vpop.f32.mrb[0].mxu0
        %v10641 = vadd.f32 %v3693, %v10640
        %v10642 = vpop.f32.mrb[0].mxu0
        %v10643 = vadd.f32 %v3689, %v10642
        %v10644 = vpop.f32.mrb[0].mxu0
        %v10645 = vadd.f32 %v3693, %v10644
        %10646 = vdwg.mxu0
        %10647 = vmatprep.subr.bf16.mxu0 %v7935
        %10648 = vmatpush1.bf16.msra.mxu0 %v7934
        %10649 = vmatprep.subr.bf16.mxu0 %v7955
        %10650 = vmatpush1.bf16.msra.mxu0 %v7954
        %10651 = vmatprep.subr.bf16.mxu0 %v7975
        %10652 = vmatpush1.bf16.msra.mxu0 %v7974
        %10653 = vmatprep.subr.bf16.mxu0 %v7995
        %10654 = vmatpush1.bf16.msra.mxu0 %v7994
        %10655 = vmatprep.subr.bf16.mxu0 %v8015
        %10656 = vmatpush1.bf16.msra.mxu0 %v8014
        %10657 = vmatprep.subr.bf16.mxu0 %v8035
        %10658 = vmatpush1.bf16.msra.mxu0 %v8034
        %10659 = vmatprep.subr.bf16.mxu0 %v8055
        %10660 = vmatpush1.bf16.msra.mxu0 %v8054
        %10661 = vmatprep.subr.bf16.mxu0 %v8075
        %10662 = vmatpush1.bf16.msra.mxu0 %v8074
        %10663 = vmatprep.subr.bf16.mxu0 %v8095
        %10664 = vmatpush1.bf16.msra.mxu0 %v8094
        %10665 = vmatprep.subr.bf16.mxu0 %v8115
        %10666 = vmatpush1.bf16.msra.mxu0 %v8114
        %10667 = vmatprep.subr.bf16.mxu0 %v8135
        %10668 = vmatpush1.bf16.msra.mxu0 %v8134
        %10669 = vmatprep.subr.bf16.mxu0 %v8155
        %10670 = vmatpush1.bf16.msra.mxu0 %v8154
        %10671 = vmatprep.subr.bf16.mxu0 %v8175
        %10672 = vmatpush1.bf16.msra.mxu0 %v8174
        %10673 = vmatprep.subr.bf16.mxu0 %v8195
        %10674 = vmatpush1.bf16.msra.mxu0 %v8194
        %10675 = vmatprep.subr.bf16.mxu0 %v8215
        %10676 = vmatpush1.bf16.msra.mxu0 %v8214
        %10677 = vmatprep.subr.bf16.mxu0 %v8235
        %10678 = vmatpush1.bf16.msra.mxu0 %v8234
        %10679 = vmatprep.mubr.bf16.mxu0 %v2371
        %10680 = vmatmul.mubr.bf16.gmra.mrb[0].mxu0 %v2370
        %v10681 = vpop.f32.mrb[0].mxu0
        %v10682 = vadd.f32 %v10629, %v10681
        %v10683 = vpop.f32.mrb[0].mxu0
        %v10684 = vadd.f32 %v10631, %v10683
        %v10685 = vpop.f32.mrb[0].mxu0
        %v10686 = vadd.f32 %v10633, %v10685
        %v10687 = vpop.f32.mrb[0].mxu0
        %v10688 = vadd.f32 %v10635, %v10687
        %10689 = vmatprep.mubr.bf16.mxu0 %v2379
        %10690 = vmatmul.mubr.bf16.gmra.mrb[0].mxu0 %v2378
        %v10691 = vpop.f32.mrb[0].mxu0
        %v10692 = vadd.f32 %v10639, %v10691
        %v10693 = vpop.f32.mrb[0].mxu0
        %v10694 = vadd.f32 %v10641, %v10693
        %v10695 = vpop.f32.mrb[0].mxu0
        %v10696 = vadd.f32 %v10643, %v10695
        %v10697 = vpop.f32.mrb[0].mxu0
        %v10698 = vadd.f32 %v10645, %v10697
        %10699 = vdwg.mxu0
        %10700 = vmatprep.subr.bf16.mxu0 %v8255
        %10701 = vmatpush1.bf16.msra.mxu0 %v8254
        %10702 = vmatprep.subr.bf16.mxu0 %v8275
        %10703 = vmatpush1.bf16.msra.mxu0 %v8274
        %10704 = vmatprep.subr.bf16.mxu0 %v8295
        %10705 = vmatpush1.bf16.msra.mxu0 %v8294
        %10706 = vmatprep.subr.bf16.mxu0 %v8315
        %10707 = vmatpush1.bf16.msra.mxu0 %v8314
        %10708 = vmatprep.subr.bf16.mxu0 %v8335
        %10709 = vmatpush1.bf16.msra.mxu0 %v8334
        %10710 = vmatprep.subr.bf16.mxu0 %v8355
        %10711 = vmatpush1.bf16.msra.mxu0 %v8354
        %10712 = vmatprep.subr.bf16.mxu0 %v8375
        %10713 = vmatpush1.bf16.msra.mxu0 %v8374
        %10714 = vmatprep.subr.bf16.mxu0 %v8395
        %10715 = vmatpush1.bf16.msra.mxu0 %v8394
        %10716 = vmatprep.subr.bf16.mxu0 %v8415
        %10717 = vmatpush1.bf16.msra.mxu0 %v8414
        %10718 = vmatprep.subr.bf16.mxu0 %v8435
        %10719 = vmatpush1.bf16.msra.mxu0 %v8434
        %10720 = vmatprep.subr.bf16.mxu0 %v8455
        %10721 = vmatpush1.bf16.msra.mxu0 %v8454
        %10722 = vmatprep.subr.bf16.mxu0 %v8475
        %10723 = vmatpush1.bf16.msra.mxu0 %v8474
        %10724 = vmatprep.subr.bf16.mxu0 %v8495
        %10725 = vmatpush1.bf16.msra.mxu0 %v8494
        %10726 = vmatprep.subr.bf16.mxu0 %v8515
        %10727 = vmatpush1.bf16.msra.mxu0 %v8514
        %10728 = vmatprep.subr.bf16.mxu0 %v8535
        %10729 = vmatpush1.bf16.msra.mxu0 %v8534
        %10730 = vmatprep.subr.bf16.mxu0 %v8555
        %10731 = vmatpush1.bf16.msra.mxu0 %v8554
        %10732 = vmatprep.mubr.bf16.mxu0 %v2373
        %10733 = vmatmul.mubr.bf16.gmra.mrb[0].mxu0 %v2372
        %v10734 = vpop.f32.mrb[0].mxu0
        %v10735 = vadd.f32 %v10682, %v10734
        %v10736 = vpop.f32.mrb[0].mxu0
        %v10737 = vadd.f32 %v10684, %v10736
        %v10738 = vpop.f32.mrb[0].mxu0
        %v10739 = vadd.f32 %v10686, %v10738
        %v10740 = vpop.f32.mrb[0].mxu0
        %v10741 = vadd.f32 %v10688, %v10740
        %10742 = vmatprep.mubr.bf16.mxu0 %v2381
        %10743 = vmatmul.mubr.bf16.gmra.mrb[0].mxu0 %v2380
        %v10744 = vpop.f32.mrb[0].mxu0
        %v10745 = vadd.f32 %v10692, %v10744
        %v10746 = vpop.f32.mrb[0].mxu0
        %v10747 = vadd.f32 %v10694, %v10746
        %v10748 = vpop.f32.mrb[0].mxu0
        %v10749 = vadd.f32 %v10696, %v10748
        %v10750 = vpop.f32.mrb[0].mxu0
        %v10751 = vadd.f32 %v10698, %v10750
        %10752 = vdwg.mxu0
        %10753 = vmatprep.subr.bf16.mxu0 %v8575
        %10754 = vmatpush1.bf16.msra.mxu0 %v8574
        %10755 = vmatprep.subr.bf16.mxu0 %v8595
        %10756 = vmatpush1.bf16.msra.mxu0 %v8594
        %10757 = vmatprep.subr.bf16.mxu0 %v8615
        %10758 = vmatpush1.bf16.msra.mxu0 %v8614
        %10759 = vmatprep.subr.bf16.mxu0 %v8635
        %10760 = vmatpush1.bf16.msra.mxu0 %v8634
        %10761 = vmatprep.subr.bf16.mxu0 %v8655
        %10762 = vmatpush1.bf16.msra.mxu0 %v8654
        %10763 = vmatprep.subr.bf16.mxu0 %v8675
        %10764 = vmatpush1.bf16.msra.mxu0 %v8674
        %10765 = vmatprep.subr.bf16.mxu0 %v8695
        %10766 = vmatpush1.bf16.msra.mxu0 %v8694
        %10767 = vmatprep.subr.bf16.mxu0 %v8715
        %10768 = vmatpush1.bf16.msra.mxu0 %v8714
        %10769 = vmatprep.subr.bf16.mxu0 %v8735
        %10770 = vmatpush1.bf16.msra.mxu0 %v8734
        %10771 = vmatprep.subr.bf16.mxu0 %v8755
        %10772 = vmatpush1.bf16.msra.mxu0 %v8754
        %10773 = vmatprep.subr.bf16.mxu0 %v8775
        %10774 = vmatpush1.bf16.msra.mxu0 %v8774
        %10775 = vmatprep.subr.bf16.mxu0 %v8795
        %10776 = vmatpush1.bf16.msra.mxu0 %v8794
        %10777 = vmatprep.subr.bf16.mxu0 %v8815
        %10778 = vmatpush1.bf16.msra.mxu0 %v8814
        %10779 = vmatprep.subr.bf16.mxu0 %v8835
        %10780 = vmatpush1.bf16.msra.mxu0 %v8834
        %10781 = vmatprep.subr.bf16.mxu0 %v8855
        %10782 = vmatpush1.bf16.msra.mxu0 %v8854
        %10783 = vmatprep.subr.bf16.mxu0 %v8875
        %10784 = vmatpush1.bf16.msra.mxu0 %v8874
        %10785 = vmatprep.mubr.bf16.mxu0 %v2375
        %10786 = vmatmul.mubr.bf16.gmra.mrb[0].mxu0 %v2374
        %v10787 = vpop.f32.mrb[0].mxu0
        %v10788 = vadd.f32 %v10735, %v10787
        %v10789 = vpop.f32.mrb[0].mxu0
        %v10790 = vadd.f32 %v10737, %v10789
        %v10791 = vpop.f32.mrb[0].mxu0
        %v10792 = vadd.f32 %v10739, %v10791
        %v10793 = vpop.f32.mrb[0].mxu0
        %v10794 = vadd.f32 %v10741, %v10793
        %10795 = vmatprep.mubr.bf16.mxu0 %v2383
        %10796 = vmatmul.mubr.bf16.gmra.mrb[0].mxu0 %v2382
        %v10797 = vpop.f32.mrb[0].mxu0
        %v10798 = vadd.f32 %v10745, %v10797
        %v10799 = vpop.f32.mrb[0].mxu0
        %v10800 = vadd.f32 %v10747, %v10799
        %v10801 = vpop.f32.mrb[0].mxu0
        %v10802 = vadd.f32 %v10749, %v10801
        %v10803 = vpop.f32.mrb[0].mxu0
        %v10804 = vadd.f32 %v10751, %v10803
        %10805 = vdwg.mxu0
        %10806 = vmatprep.subr.bf16.mxu0 %v7617
        %10807 = vmatpush1.bf16.msra.mxu0 %v7616
        %10808 = vmatprep.subr.bf16.mxu0 %v7637
        %10809 = vmatpush1.bf16.msra.mxu0 %v7636
        %10810 = vmatprep.subr.bf16.mxu0 %v7657
        %10811 = vmatpush1.bf16.msra.mxu0 %v7656
        %10812 = vmatprep.subr.bf16.mxu0 %v7677
        %10813 = vmatpush1.bf16.msra.mxu0 %v7676
        %10814 = vmatprep.subr.bf16.mxu0 %v7697
        %10815 = vmatpush1.bf16.msra.mxu0 %v7696
        %10816 = vmatprep.subr.bf16.mxu0 %v7717
        %10817 = vmatpush1.bf16.msra.mxu0 %v7716
        %10818 = vmatprep.subr.bf16.mxu0 %v7737
        %10819 = vmatpush1.bf16.msra.mxu0 %v7736
        %10820 = vmatprep.subr.bf16.mxu0 %v7757
        %10821 = vmatpush1.bf16.msra.mxu0 %v7756
        %10822 = vmatprep.subr.bf16.mxu0 %v7777
        %10823 = vmatpush1.bf16.msra.mxu0 %v7776
        %10824 = vmatprep.subr.bf16.mxu0 %v7797
        %10825 = vmatpush1.bf16.msra.mxu0 %v7796
        %10826 = vmatprep.subr.bf16.mxu0 %v7817
        %10827 = vmatpush1.bf16.msra.mxu0 %v7816
        %10828 = vmatprep.subr.bf16.mxu0 %v7837
        %10829 = vmatpush1.bf16.msra.mxu0 %v7836
        %10830 = vmatprep.subr.bf16.mxu0 %v7857
        %10831 = vmatpush1.bf16.msra.mxu0 %v7856
        %10832 = vmatprep.subr.bf16.mxu0 %v7877
        %10833 = vmatpush1.bf16.msra.mxu0 %v7876
        %10834 = vmatprep.subr.bf16.mxu0 %v7897
        %10835 = vmatpush1.bf16.msra.mxu0 %v7896
        %10836 = vmatprep.subr.bf16.mxu0 %v7917
        %10837 = vmatpush1.bf16.msra.mxu0 %v7916
        %10838 = vmatprep.mubr.bf16.mxu0 %v2369
        %10839 = vmatmul.mubr.bf16.gmra.mrb[0].mxu0 %v2368
        %v10840 = vpop.f32.mrb[0].mxu0
        %v10841 = vadd.f32 %v3697, %v10840
        %v10842 = vpop.f32.mrb[0].mxu0
        %v10843 = vadd.f32 %v3701, %v10842
        %v10844 = vpop.f32.mrb[0].mxu0
        %v10845 = vadd.f32 %v3697, %v10844
        %v10846 = vpop.f32.mrb[0].mxu0
        %v10847 = vadd.f32 %v3701, %v10846
        %10848 = vmatprep.mubr.bf16.mxu0 %v2377
        %10849 = vmatmul.mubr.bf16.gmra.mrb[0].mxu0 %v2376
        %v10850 = vpop.f32.mrb[0].mxu0
        %v10851 = vadd.f32 %v3697, %v10850
        %v10852 = vpop.f32.mrb[0].mxu0
        %v10853 = vadd.f32 %v3701, %v10852
        %v10854 = vpop.f32.mrb[0].mxu0
        %v10855 = vadd.f32 %v3697, %v10854
        %v10856 = vpop.f32.mrb[0].mxu0
        %v10857 = vadd.f32 %v3701, %v10856
        %10858 = vdwg.mxu0
        %10859 = vmatprep.subr.bf16.mxu0 %v7937
        %10860 = vmatpush1.bf16.msra.mxu0 %v7936
        %10861 = vmatprep.subr.bf16.mxu0 %v7957
        %10862 = vmatpush1.bf16.msra.mxu0 %v7956
        %10863 = vmatprep.subr.bf16.mxu0 %v7977
        %10864 = vmatpush1.bf16.msra.mxu0 %v7976
        %10865 = vmatprep.subr.bf16.mxu0 %v7997
        %10866 = vmatpush1.bf16.msra.mxu0 %v7996
        %10867 = vmatprep.subr.bf16.mxu0 %v8017
        %10868 = vmatpush1.bf16.msra.mxu0 %v8016
        %10869 = vmatprep.subr.bf16.mxu0 %v8037
        %10870 = vmatpush1.bf16.msra.mxu0 %v8036
        %10871 = vmatprep.subr.bf16.mxu0 %v8057
        %10872 = vmatpush1.bf16.msra.mxu0 %v8056
        %10873 = vmatprep.subr.bf16.mxu0 %v8077
        %10874 = vmatpush1.bf16.msra.mxu0 %v8076
        %10875 = vmatprep.subr.bf16.mxu0 %v8097
        %10876 = vmatpush1.bf16.msra.mxu0 %v8096
        %10877 = vmatprep.subr.bf16.mxu0 %v8117
        %10878 = vmatpush1.bf16.msra.mxu0 %v8116
        %10879 = vmatprep.subr.bf16.mxu0 %v8137
        %10880 = vmatpush1.bf16.msra.mxu0 %v8136
        %10881 = vmatprep.subr.bf16.mxu0 %v8157
        %10882 = vmatpush1.bf16.msra.mxu0 %v8156
        %10883 = vmatprep.subr.bf16.mxu0 %v8177
        %10884 = vmatpush1.bf16.msra.mxu0 %v8176
        %10885 = vmatprep.subr.bf16.mxu0 %v8197
        %10886 = vmatpush1.bf16.msra.mxu0 %v8196
        %10887 = vmatprep.subr.bf16.mxu0 %v8217
        %10888 = vmatpush1.bf16.msra.mxu0 %v8216
        %10889 = vmatprep.subr.bf16.mxu0 %v8237
        %10890 = vmatpush1.bf16.msra.mxu0 %v8236
        %10891 = vmatprep.mubr.bf16.mxu0 %v2371
        %10892 = vmatmul.mubr.bf16.gmra.mrb[0].mxu0 %v2370
        %v10893 = vpop.f32.mrb[0].mxu0
        %v10894 = vadd.f32 %v10841, %v10893
        %v10895 = vpop.f32.mrb[0].mxu0
        %v10896 = vadd.f32 %v10843, %v10895
        %v10897 = vpop.f32.mrb[0].mxu0
        %v10898 = vadd.f32 %v10845, %v10897
        %v10899 = vpop.f32.mrb[0].mxu0
        %v10900 = vadd.f32 %v10847, %v10899
        %10901 = vmatprep.mubr.bf16.mxu0 %v2379
        %10902 = vmatmul.mubr.bf16.gmra.mrb[0].mxu0 %v2378
        %v10903 = vpop.f32.mrb[0].mxu0
        %v10904 = vadd.f32 %v10851, %v10903
        %v10905 = vpop.f32.mrb[0].mxu0
        %v10906 = vadd.f32 %v10853, %v10905
        %v10907 = vpop.f32.mrb[0].mxu0
        %v10908 = vadd.f32 %v10855, %v10907
        %v10909 = vpop.f32.mrb[0].mxu0
        %v10910 = vadd.f32 %v10857, %v10909
        %10911 = vdwg.mxu0
        %10912 = vmatprep.subr.bf16.mxu0 %v8257
        %10913 = vmatpush1.bf16.msra.mxu0 %v8256
        %10914 = vmatprep.subr.bf16.mxu0 %v8277
        %10915 = vmatpush1.bf16.msra.mxu0 %v8276
        %10916 = vmatprep.subr.bf16.mxu0 %v8297
        %10917 = vmatpush1.bf16.msra.mxu0 %v8296
        %10918 = vmatprep.subr.bf16.mxu0 %v8317
        %10919 = vmatpush1.bf16.msra.mxu0 %v8316
        %10920 = vmatprep.subr.bf16.mxu0 %v8337
        %10921 = vmatpush1.bf16.msra.mxu0 %v8336
        %10922 = vmatprep.subr.bf16.mxu0 %v8357
        %10923 = vmatpush1.bf16.msra.mxu0 %v8356
        %10924 = vmatprep.subr.bf16.mxu0 %v8377
        %10925 = vmatpush1.bf16.msra.mxu0 %v8376
        %10926 = vmatprep.subr.bf16.mxu0 %v8397
        %10927 = vmatpush1.bf16.msra.mxu0 %v8396
        %10928 = vmatprep.subr.bf16.mxu0 %v8417
        %10929 = vmatpush1.bf16.msra.mxu0 %v8416
        %10930 = vmatprep.subr.bf16.mxu0 %v8437
        %10931 = vmatpush1.bf16.msra.mxu0 %v8436
        %10932 = vmatprep.subr.bf16.mxu0 %v8457
        %10933 = vmatpush1.bf16.msra.mxu0 %v8456
        %10934 = vmatprep.subr.bf16.mxu0 %v8477
        %10935 = vmatpush1.bf16.msra.mxu0 %v8476
        %10936 = vmatprep.subr.bf16.mxu0 %v8497
        %10937 = vmatpush1.bf16.msra.mxu0 %v8496
        %10938 = vmatprep.subr.bf16.mxu0 %v8517
        %10939 = vmatpush1.bf16.msra.mxu0 %v8516
        %10940 = vmatprep.subr.bf16.mxu0 %v8537
        %10941 = vmatpush1.bf16.msra.mxu0 %v8536
        %10942 = vmatprep.subr.bf16.mxu0 %v8557
        %10943 = vmatpush1.bf16.msra.mxu0 %v8556
        %10944 = vmatprep.mubr.bf16.mxu0 %v2373
        %10945 = vmatmul.mubr.bf16.gmra.mrb[0].mxu0 %v2372
        %v10946 = vpop.f32.mrb[0].mxu0
        %v10947 = vadd.f32 %v10894, %v10946
        %v10948 = vpop.f32.mrb[0].mxu0
        %v10949 = vadd.f32 %v10896, %v10948
        %v10950 = vpop.f32.mrb[0].mxu0
        %v10951 = vadd.f32 %v10898, %v10950
        %v10952 = vpop.f32.mrb[0].mxu0
        %v10953 = vadd.f32 %v10900, %v10952
        %10954 = vmatprep.mubr.bf16.mxu0 %v2381
        %10955 = vmatmul.mubr.bf16.gmra.mrb[0].mxu0 %v2380
        %v10956 = vpop.f32.mrb[0].mxu0
        %v10957 = vadd.f32 %v10904, %v10956
        %v10958 = vpop.f32.mrb[0].mxu0
        %v10959 = vadd.f32 %v10906, %v10958
        %v10960 = vpop.f32.mrb[0].mxu0
        %v10961 = vadd.f32 %v10908, %v10960
        %v10962 = vpop.f32.mrb[0].mxu0
        %v10963 = vadd.f32 %v10910, %v10962
        %10964 = vdwg.mxu0
        %10965 = vmatprep.subr.bf16.mxu0 %v8577
        %10966 = vmatpush1.bf16.msra.mxu0 %v8576
        %10967 = vmatprep.subr.bf16.mxu0 %v8597
        %10968 = vmatpush1.bf16.msra.mxu0 %v8596
        %10969 = vmatprep.subr.bf16.mxu0 %v8617
        %10970 = vmatpush1.bf16.msra.mxu0 %v8616
        %10971 = vmatprep.subr.bf16.mxu0 %v8637
        %10972 = vmatpush1.bf16.msra.mxu0 %v8636
        %10973 = vmatprep.subr.bf16.mxu0 %v8657
        %10974 = vmatpush1.bf16.msra.mxu0 %v8656
        %10975 = vmatprep.subr.bf16.mxu0 %v8677
        %10976 = vmatpush1.bf16.msra.mxu0 %v8676
        %10977 = vmatprep.subr.bf16.mxu0 %v8697
        %10978 = vmatpush1.bf16.msra.mxu0 %v8696
        %10979 = vmatprep.subr.bf16.mxu0 %v8717
        %10980 = vmatpush1.bf16.msra.mxu0 %v8716
        %10981 = vmatprep.subr.bf16.mxu0 %v8737
        %10982 = vmatpush1.bf16.msra.mxu0 %v8736
        %10983 = vmatprep.subr.bf16.mxu0 %v8757
        %10984 = vmatpush1.bf16.msra.mxu0 %v8756
        %10985 = vmatprep.subr.bf16.mxu0 %v8777
        %10986 = vmatpush1.bf16.msra.mxu0 %v8776
        %10987 = vmatprep.subr.bf16.mxu0 %v8797
        %10988 = vmatpush1.bf16.msra.mxu0 %v8796
        %10989 = vmatprep.subr.bf16.mxu0 %v8817
        %10990 = vmatpush1.bf16.msra.mxu0 %v8816
        %10991 = vmatprep.subr.bf16.mxu0 %v8837
        %10992 = vmatpush1.bf16.msra.mxu0 %v8836
        %10993 = vmatprep.subr.bf16.mxu0 %v8857
        %10994 = vmatpush1.bf16.msra.mxu0 %v8856
        %10995 = vmatprep.subr.bf16.mxu0 %v8877
        %10996 = vmatpush1.bf16.msra.mxu0 %v8876
        %10997 = vmatprep.mubr.bf16.mxu0 %v2375
        %10998 = vmatmul.mubr.bf16.gmra.mrb[0].mxu0 %v2374
        %v10999 = vpop.f32.mrb[0].mxu0
        %v11000 = vadd.f32 %v10947, %v10999
        %v11001 = vpop.f32.mrb[0].mxu0
        %v11002 = vadd.f32 %v10949, %v11001
        %v11003 = vpop.f32.mrb[0].mxu0
        %v11004 = vadd.f32 %v10951, %v11003
        %v11005 = vpop.f32.mrb[0].mxu0
        %v11006 = vadd.f32 %v10953, %v11005
        %11007 = vmatprep.mubr.bf16.mxu0 %v2383
        %11008 = vmatmul.mubr.bf16.gmra.mrb[0].mxu0 %v2382
        %v11009 = vpop.f32.mrb[0].mxu0
        %v11010 = vadd.f32 %v10957, %v11009
        %v11011 = vpop.f32.mrb[0].mxu0
        %v11012 = vadd.f32 %v10959, %v11011
        %v11013 = vpop.f32.mrb[0].mxu0
        %v11014 = vadd.f32 %v10961, %v11013
        %v11015 = vpop.f32.mrb[0].mxu0
        %v11016 = vadd.f32 %v10963, %v11015
        %11017 = vdwg.mxu0
        %11018 = vmatprep.subr.bf16.mxu0 %v7619
        %11019 = vmatpush1.bf16.msra.mxu0 %v7618
        %11020 = vmatprep.subr.bf16.mxu0 %v7639
        %11021 = vmatpush1.bf16.msra.mxu0 %v7638
        %11022 = vmatprep.subr.bf16.mxu0 %v7659
        %11023 = vmatpush1.bf16.msra.mxu0 %v7658
        %11024 = vmatprep.subr.bf16.mxu0 %v7679
        %11025 = vmatpush1.bf16.msra.mxu0 %v7678
        %11026 = vmatprep.subr.bf16.mxu0 %v7699
        %11027 = vmatpush1.bf16.msra.mxu0 %v7698
        %11028 = vmatprep.subr.bf16.mxu0 %v7719
        %11029 = vmatpush1.bf16.msra.mxu0 %v7718
        %11030 = vmatprep.subr.bf16.mxu0 %v7739
        %11031 = vmatpush1.bf16.msra.mxu0 %v7738
        %11032 = vmatprep.subr.bf16.mxu0 %v7759
        %11033 = vmatpush1.bf16.msra.mxu0 %v7758
        %11034 = vmatprep.subr.bf16.mxu0 %v7779
        %11035 = vmatpush1.bf16.msra.mxu0 %v7778
        %11036 = vmatprep.subr.bf16.mxu0 %v7799
        %11037 = vmatpush1.bf16.msra.mxu0 %v7798
        %11038 = vmatprep.subr.bf16.mxu0 %v7819
        %11039 = vmatpush1.bf16.msra.mxu0 %v7818
        %11040 = vmatprep.subr.bf16.mxu0 %v7839
        %11041 = vmatpush1.bf16.msra.mxu0 %v7838
        %11042 = vmatprep.subr.bf16.mxu0 %v7859
        %11043 = vmatpush1.bf16.msra.mxu0 %v7858
        %11044 = vmatprep.subr.bf16.mxu0 %v7879
        %11045 = vmatpush1.bf16.msra.mxu0 %v7878
        %11046 = vmatprep.subr.bf16.mxu0 %v7899
        %11047 = vmatpush1.bf16.msra.mxu0 %v7898
        %11048 = vmatprep.subr.bf16.mxu0 %v7919
        %11049 = vmatpush1.bf16.msra.mxu0 %v7918
        %11050 = vmatprep.mubr.bf16.mxu0 %v2369
        %11051 = vmatmul.mubr.bf16.gmra.mrb[0].mxu0 %v2368
        %v11052 = vpop.f32.mrb[0].mxu0
        %v11053 = vadd.f32 %v3705, %v11052
        %v11054 = vpop.f32.mrb[0].mxu0
        %v11055 = vadd.f32 %v3709, %v11054
        %v11056 = vpop.f32.mrb[0].mxu0
        %v11057 = vadd.f32 %v3705, %v11056
        %v11058 = vpop.f32.mrb[0].mxu0
        %v11059 = vadd.f32 %v3709, %v11058
        %11060 = vmatprep.mubr.bf16.mxu0 %v2377
        %11061 = vmatmul.mubr.bf16.gmra.mrb[0].mxu0 %v2376
        %v11062 = vpop.f32.mrb[0].mxu0
        %v11063 = vadd.f32 %v3705, %v11062
        %v11064 = vpop.f32.mrb[0].mxu0
        %v11065 = vadd.f32 %v3709, %v11064
        %v11066 = vpop.f32.mrb[0].mxu0
        %v11067 = vadd.f32 %v3705, %v11066
        %v11068 = vpop.f32.mrb[0].mxu0
        %v11069 = vadd.f32 %v3709, %v11068
        %11070 = vdwg.mxu0
        %11071 = vmatprep.subr.bf16.mxu0 %v7939
        %11072 = vmatpush1.bf16.msra.mxu0 %v7938
        %11073 = vmatprep.subr.bf16.mxu0 %v7959
        %11074 = vmatpush1.bf16.msra.mxu0 %v7958
        %11075 = vmatprep.subr.bf16.mxu0 %v7979
        %11076 = vmatpush1.bf16.msra.mxu0 %v7978
        %11077 = vmatprep.subr.bf16.mxu0 %v7999
        %11078 = vmatpush1.bf16.msra.mxu0 %v7998
        %11079 = vmatprep.subr.bf16.mxu0 %v8019
        %11080 = vmatpush1.bf16.msra.mxu0 %v8018
        %11081 = vmatprep.subr.bf16.mxu0 %v8039
        %11082 = vmatpush1.bf16.msra.mxu0 %v8038
        %11083 = vmatprep.subr.bf16.mxu0 %v8059
        %11084 = vmatpush1.bf16.msra.mxu0 %v8058
        %11085 = vmatprep.subr.bf16.mxu0 %v8079
        %11086 = vmatpush1.bf16.msra.mxu0 %v8078
        %11087 = vmatprep.subr.bf16.mxu0 %v8099
        %11088 = vmatpush1.bf16.msra.mxu0 %v8098
        %11089 = vmatprep.subr.bf16.mxu0 %v8119
        %11090 = vmatpush1.bf16.msra.mxu0 %v8118
        %11091 = vmatprep.subr.bf16.mxu0 %v8139
        %11092 = vmatpush1.bf16.msra.mxu0 %v8138
        %11093 = vmatprep.subr.bf16.mxu0 %v8159
        %11094 = vmatpush1.bf16.msra.mxu0 %v8158
        %11095 = vmatprep.subr.bf16.mxu0 %v8179
        %11096 = vmatpush1.bf16.msra.mxu0 %v8178
        %11097 = vmatprep.subr.bf16.mxu0 %v8199
        %11098 = vmatpush1.bf16.msra.mxu0 %v8198
        %11099 = vmatprep.subr.bf16.mxu0 %v8219
        %11100 = vmatpush1.bf16.msra.mxu0 %v8218
        %11101 = vmatprep.subr.bf16.mxu0 %v8239
        %11102 = vmatpush1.bf16.msra.mxu0 %v8238
        %11103 = vmatprep.mubr.bf16.mxu0 %v2371
        %11104 = vmatmul.mubr.bf16.gmra.mrb[0].mxu0 %v2370
        %v11105 = vpop.f32.mrb[0].mxu0
        %v11106 = vadd.f32 %v11053, %v11105
        %v11107 = vpop.f32.mrb[0].mxu0
        %v11108 = vadd.f32 %v11055, %v11107
        %v11109 = vpop.f32.mrb[0].mxu0
        %v11110 = vadd.f32 %v11057, %v11109
        %v11111 = vpop.f32.mrb[0].mxu0
        %v11112 = vadd.f32 %v11059, %v11111
        %11113 = vmatprep.mubr.bf16.mxu0 %v2379
        %11114 = vmatmul.mubr.bf16.gmra.mrb[0].mxu0 %v2378
        %v11115 = vpop.f32.mrb[0].mxu0
        %v11116 = vadd.f32 %v11063, %v11115
        %v11117 = vpop.f32.mrb[0].mxu0
        %v11118 = vadd.f32 %v11065, %v11117
        %v11119 = vpop.f32.mrb[0].mxu0
        %v11120 = vadd.f32 %v11067, %v11119
        %v11121 = vpop.f32.mrb[0].mxu0
        %v11122 = vadd.f32 %v11069, %v11121
        %11123 = vdwg.mxu0
        %11124 = vmatprep.subr.bf16.mxu0 %v8259
        %11125 = vmatpush1.bf16.msra.mxu0 %v8258
        %11126 = vmatprep.subr.bf16.mxu0 %v8279
        %11127 = vmatpush1.bf16.msra.mxu0 %v8278
        %11128 = vmatprep.subr.bf16.mxu0 %v8299
        %11129 = vmatpush1.bf16.msra.mxu0 %v8298
        %11130 = vmatprep.subr.bf16.mxu0 %v8319
        %11131 = vmatpush1.bf16.msra.mxu0 %v8318
        %11132 = vmatprep.subr.bf16.mxu0 %v8339
        %11133 = vmatpush1.bf16.msra.mxu0 %v8338
        %11134 = vmatprep.subr.bf16.mxu0 %v8359
        %11135 = vmatpush1.bf16.msra.mxu0 %v8358
        %11136 = vmatprep.subr.bf16.mxu0 %v8379
        %11137 = vmatpush1.bf16.msra.mxu0 %v8378
        %11138 = vmatprep.subr.bf16.mxu0 %v8399
        %11139 = vmatpush1.bf16.msra.mxu0 %v8398
        %11140 = vmatprep.subr.bf16.mxu0 %v8419
        %11141 = vmatpush1.bf16.msra.mxu0 %v8418
        %11142 = vmatprep.subr.bf16.mxu0 %v8439
        %11143 = vmatpush1.bf16.msra.mxu0 %v8438
        %11144 = vmatprep.subr.bf16.mxu0 %v8459
        %11145 = vmatpush1.bf16.msra.mxu0 %v8458
        %11146 = vmatprep.subr.bf16.mxu0 %v8479
        %11147 = vmatpush1.bf16.msra.mxu0 %v8478
        %11148 = vmatprep.subr.bf16.mxu0 %v8499
        %11149 = vmatpush1.bf16.msra.mxu0 %v8498
        %11150 = vmatprep.subr.bf16.mxu0 %v8519
        %11151 = vmatpush1.bf16.msra.mxu0 %v8518
        %11152 = vmatprep.subr.bf16.mxu0 %v8539
        %11153 = vmatpush1.bf16.msra.mxu0 %v8538
        %11154 = vmatprep.subr.bf16.mxu0 %v8559
        %11155 = vmatpush1.bf16.msra.mxu0 %v8558
        %11156 = vmatprep.mubr.bf16.mxu0 %v2373
        %11157 = vmatmul.mubr.bf16.gmra.mrb[0].mxu0 %v2372
        %v11158 = vpop.f32.mrb[0].mxu0
        %v11159 = vadd.f32 %v11106, %v11158
        %v11160 = vpop.f32.mrb[0].mxu0
        %v11161 = vadd.f32 %v11108, %v11160
        %v11162 = vpop.f32.mrb[0].mxu0
        %v11163 = vadd.f32 %v11110, %v11162
        %v11164 = vpop.f32.mrb[0].mxu0
        %v11165 = vadd.f32 %v11112, %v11164
        %11166 = vmatprep.mubr.bf16.mxu0 %v2381
        %11167 = vmatmul.mubr.bf16.gmra.mrb[0].mxu0 %v2380
        %v11168 = vpop.f32.mrb[0].mxu0
        %v11169 = vadd.f32 %v11116, %v11168
        %v11170 = vpop.f32.mrb[0].mxu0
        %v11171 = vadd.f32 %v11118, %v11170
        %v11172 = vpop.f32.mrb[0].mxu0
        %v11173 = vadd.f32 %v11120, %v11172
        %v11174 = vpop.f32.mrb[0].mxu0
        %v11175 = vadd.f32 %v11122, %v11174
        %11176 = vdwg.mxu0
        %11177 = vmatprep.subr.bf16.mxu0 %v8579
        %11178 = vmatpush1.bf16.msra.mxu0 %v8578
        %11179 = vmatprep.subr.bf16.mxu0 %v8599
        %11180 = vmatpush1.bf16.msra.mxu0 %v8598
        %11181 = vmatprep.subr.bf16.mxu0 %v8619
        %11182 = vmatpush1.bf16.msra.mxu0 %v8618
        %11183 = vmatprep.subr.bf16.mxu0 %v8639
        %11184 = vmatpush1.bf16.msra.mxu0 %v8638
        %11185 = vmatprep.subr.bf16.mxu0 %v8659
        %11186 = vmatpush1.bf16.msra.mxu0 %v8658
        %11187 = vmatprep.subr.bf16.mxu0 %v8679
        %11188 = vmatpush1.bf16.msra.mxu0 %v8678
        %11189 = vmatprep.subr.bf16.mxu0 %v8699
        %11190 = vmatpush1.bf16.msra.mxu0 %v8698
        %11191 = vmatprep.subr.bf16.mxu0 %v8719
        %11192 = vmatpush1.bf16.msra.mxu0 %v8718
        %11193 = vmatprep.subr.bf16.mxu0 %v8739
        %11194 = vmatpush1.bf16.msra.mxu0 %v8738
        %11195 = vmatprep.subr.bf16.mxu0 %v8759
        %11196 = vmatpush1.bf16.msra.mxu0 %v8758
        %11197 = vmatprep.subr.bf16.mxu0 %v8779
        %11198 = vmatpush1.bf16.msra.mxu0 %v8778
        %11199 = vmatprep.subr.bf16.mxu0 %v8799
        %11200 = vmatpush1.bf16.msra.mxu0 %v8798
        %11201 = vmatprep.subr.bf16.mxu0 %v8819
        %11202 = vmatpush1.bf16.msra.mxu0 %v8818
        %11203 = vmatprep.subr.bf16.mxu0 %v8839
        %11204 = vmatpush1.bf16.msra.mxu0 %v8838
        %11205 = vmatprep.subr.bf16.mxu0 %v8859
        %11206 = vmatpush1.bf16.msra.mxu0 %v8858
        %11207 = vmatprep.subr.bf16.mxu0 %v8879
        %11208 = vmatpush1.bf16.msra.mxu0 %v8878
        %11209 = vmatprep.mubr.bf16.mxu0 %v2375
        %11210 = vmatmul.mubr.bf16.gmra.mrb[0].mxu0 %v2374
        %v11211 = vpop.f32.mrb[0].mxu0
        %v11212 = vadd.f32 %v11159, %v11211
        %v11213 = vpop.f32.mrb[0].mxu0
        %v11214 = vadd.f32 %v11161, %v11213
        %v11215 = vpop.f32.mrb[0].mxu0
        %v11216 = vadd.f32 %v11163, %v11215
        %v11217 = vpop.f32.mrb[0].mxu0
        %v11218 = vadd.f32 %v11165, %v11217
        %11219 = vmatprep.mubr.bf16.mxu0 %v2383
        %11220 = vmatmul.mubr.bf16.gmra.mrb[0].mxu0 %v2382
        %v11221 = vpop.f32.mrb[0].mxu0
        %v11222 = vadd.f32 %v11169, %v11221
        %v11223 = vpop.f32.mrb[0].mxu0
        %v11224 = vadd.f32 %v11171, %v11223
        %v11225 = vpop.f32.mrb[0].mxu0
        %v11226 = vadd.f32 %v11173, %v11225
        %v11227 = vpop.f32.mrb[0].mxu0
        %v11228 = vadd.f32 %v11175, %v11227
        %11229 = vdwg.mxu0
        %11230 = vmatprep.subr.bf16.mxu0 %v7621
        %11231 = vmatpush1.bf16.msra.mxu0 %v7620
        %11232 = vmatprep.subr.bf16.mxu0 %v7641
        %11233 = vmatpush1.bf16.msra.mxu0 %v7640
        %11234 = vmatprep.subr.bf16.mxu0 %v7661
        %11235 = vmatpush1.bf16.msra.mxu0 %v7660
        %11236 = vmatprep.subr.bf16.mxu0 %v7681
        %11237 = vmatpush1.bf16.msra.mxu0 %v7680
        %11238 = vmatprep.subr.bf16.mxu0 %v7701
        %11239 = vmatpush1.bf16.msra.mxu0 %v7700
        %11240 = vmatprep.subr.bf16.mxu0 %v7721
        %11241 = vmatpush1.bf16.msra.mxu0 %v7720
        %11242 = vmatprep.subr.bf16.mxu0 %v7741
        %11243 = vmatpush1.bf16.msra.mxu0 %v7740
        %11244 = vmatprep.subr.bf16.mxu0 %v7761
        %11245 = vmatpush1.bf16.msra.mxu0 %v7760
        %11246 = vmatprep.subr.bf16.mxu0 %v7781
        %11247 = vmatpush1.bf16.msra.mxu0 %v7780
        %11248 = vmatprep.subr.bf16.mxu0 %v7801
        %11249 = vmatpush1.bf16.msra.mxu0 %v7800
        %11250 = vmatprep.subr.bf16.mxu0 %v7821
        %11251 = vmatpush1.bf16.msra.mxu0 %v7820
        %11252 = vmatprep.subr.bf16.mxu0 %v7841
        %11253 = vmatpush1.bf16.msra.mxu0 %v7840
        %11254 = vmatprep.subr.bf16.mxu0 %v7861
        %11255 = vmatpush1.bf16.msra.mxu0 %v7860
        %11256 = vmatprep.subr.bf16.mxu0 %v7881
        %11257 = vmatpush1.bf16.msra.mxu0 %v7880
        %11258 = vmatprep.subr.bf16.mxu0 %v7901
        %11259 = vmatpush1.bf16.msra.mxu0 %v7900
        %11260 = vmatprep.subr.bf16.mxu0 %v7921
        %11261 = vmatpush1.bf16.msra.mxu0 %v7920
        %11262 = vmatprep.mubr.bf16.mxu0 %v2369
        %11263 = vmatmul.mubr.bf16.gmra.mrb[0].mxu0 %v2368
        %v11264 = vpop.f32.mrb[0].mxu0
        %v11265 = vadd.f32 %v3713, %v11264
        %v11266 = vpop.f32.mrb[0].mxu0
        %v11267 = vadd.f32 %v3717, %v11266
        %v11268 = vpop.f32.mrb[0].mxu0
        %v11269 = vadd.f32 %v3713, %v11268
        %v11270 = vpop.f32.mrb[0].mxu0
        %v11271 = vadd.f32 %v3717, %v11270
        %11272 = vmatprep.mubr.bf16.mxu0 %v2377
        %11273 = vmatmul.mubr.bf16.gmra.mrb[0].mxu0 %v2376
        %v11274 = vpop.f32.mrb[0].mxu0
        %v11275 = vadd.f32 %v3713, %v11274
        %v11276 = vpop.f32.mrb[0].mxu0
        %v11277 = vadd.f32 %v3717, %v11276
        %v11278 = vpop.f32.mrb[0].mxu0
        %v11279 = vadd.f32 %v3713, %v11278
        %v11280 = vpop.f32.mrb[0].mxu0
        %v11281 = vadd.f32 %v3717, %v11280
        %11282 = vdwg.mxu0
        %11283 = vmatprep.subr.bf16.mxu0 %v7941
        %11284 = vmatpush1.bf16.msra.mxu0 %v7940
        %11285 = vmatprep.subr.bf16.mxu0 %v7961
        %11286 = vmatpush1.bf16.msra.mxu0 %v7960
        %11287 = vmatprep.subr.bf16.mxu0 %v7981
        %11288 = vmatpush1.bf16.msra.mxu0 %v7980
        %11289 = vmatprep.subr.bf16.mxu0 %v8001
        %11290 = vmatpush1.bf16.msra.mxu0 %v8000
        %11291 = vmatprep.subr.bf16.mxu0 %v8021
        %11292 = vmatpush1.bf16.msra.mxu0 %v8020
        %11293 = vmatprep.subr.bf16.mxu0 %v8041
        %11294 = vmatpush1.bf16.msra.mxu0 %v8040
        %11295 = vmatprep.subr.bf16.mxu0 %v8061
        %11296 = vmatpush1.bf16.msra.mxu0 %v8060
        %11297 = vmatprep.subr.bf16.mxu0 %v8081
        %11298 = vmatpush1.bf16.msra.mxu0 %v8080
        %11299 = vmatprep.subr.bf16.mxu0 %v8101
        %11300 = vmatpush1.bf16.msra.mxu0 %v8100
        %11301 = vmatprep.subr.bf16.mxu0 %v8121
        %11302 = vmatpush1.bf16.msra.mxu0 %v8120
        %11303 = vmatprep.subr.bf16.mxu0 %v8141
        %11304 = vmatpush1.bf16.msra.mxu0 %v8140
        %11305 = vmatprep.subr.bf16.mxu0 %v8161
        %11306 = vmatpush1.bf16.msra.mxu0 %v8160
        %11307 = vmatprep.subr.bf16.mxu0 %v8181
        %11308 = vmatpush1.bf16.msra.mxu0 %v8180
        %11309 = vmatprep.subr.bf16.mxu0 %v8201
        %11310 = vmatpush1.bf16.msra.mxu0 %v8200
        %11311 = vmatprep.subr.bf16.mxu0 %v8221
        %11312 = vmatpush1.bf16.msra.mxu0 %v8220
        %11313 = vmatprep.subr.bf16.mxu0 %v8241
        %11314 = vmatpush1.bf16.msra.mxu0 %v8240
        %11315 = vmatprep.mubr.bf16.mxu0 %v2371
        %11316 = vmatmul.mubr.bf16.gmra.mrb[0].mxu0 %v2370
        %v11317 = vpop.f32.mrb[0].mxu0
        %v11318 = vadd.f32 %v11265, %v11317
        %v11319 = vpop.f32.mrb[0].mxu0
        %v11320 = vadd.f32 %v11267, %v11319
        %v11321 = vpop.f32.mrb[0].mxu0
        %v11322 = vadd.f32 %v11269, %v11321
        %v11323 = vpop.f32.mrb[0].mxu0
        %v11324 = vadd.f32 %v11271, %v11323
        %11325 = vmatprep.mubr.bf16.mxu0 %v2379
        %11326 = vmatmul.mubr.bf16.gmra.mrb[0].mxu0 %v2378
        %v11327 = vpop.f32.mrb[0].mxu0
        %v11328 = vadd.f32 %v11275, %v11327
        %v11329 = vpop.f32.mrb[0].mxu0
        %v11330 = vadd.f32 %v11277, %v11329
        %v11331 = vpop.f32.mrb[0].mxu0
        %v11332 = vadd.f32 %v11279, %v11331
        %v11333 = vpop.f32.mrb[0].mxu0
        %v11334 = vadd.f32 %v11281, %v11333
        %11335 = vdwg.mxu0
        %11336 = vmatprep.subr.bf16.mxu0 %v8261
        %11337 = vmatpush1.bf16.msra.mxu0 %v8260
        %11338 = vmatprep.subr.bf16.mxu0 %v8281
        %11339 = vmatpush1.bf16.msra.mxu0 %v8280
        %11340 = vmatprep.subr.bf16.mxu0 %v8301
        %11341 = vmatpush1.bf16.msra.mxu0 %v8300
        %11342 = vmatprep.subr.bf16.mxu0 %v8321
        %11343 = vmatpush1.bf16.msra.mxu0 %v8320
        %11344 = vmatprep.subr.bf16.mxu0 %v8341
        %11345 = vmatpush1.bf16.msra.mxu0 %v8340
        %11346 = vmatprep.subr.bf16.mxu0 %v8361
        %11347 = vmatpush1.bf16.msra.mxu0 %v8360
        %11348 = vmatprep.subr.bf16.mxu0 %v8381
        %11349 = vmatpush1.bf16.msra.mxu0 %v8380
        %11350 = vmatprep.subr.bf16.mxu0 %v8401
        %11351 = vmatpush1.bf16.msra.mxu0 %v8400
        %11352 = vmatprep.subr.bf16.mxu0 %v8421
        %11353 = vmatpush1.bf16.msra.mxu0 %v8420
        %11354 = vmatprep.subr.bf16.mxu0 %v8441
        %11355 = vmatpush1.bf16.msra.mxu0 %v8440
        %11356 = vmatprep.subr.bf16.mxu0 %v8461
        %11357 = vmatpush1.bf16.msra.mxu0 %v8460
        %11358 = vmatprep.subr.bf16.mxu0 %v8481
        %11359 = vmatpush1.bf16.msra.mxu0 %v8480
        %11360 = vmatprep.subr.bf16.mxu0 %v8501
        %11361 = vmatpush1.bf16.msra.mxu0 %v8500
        %11362 = vmatprep.subr.bf16.mxu0 %v8521
        %11363 = vmatpush1.bf16.msra.mxu0 %v8520
        %11364 = vmatprep.subr.bf16.mxu0 %v8541
        %11365 = vmatpush1.bf16.msra.mxu0 %v8540
        %11366 = vmatprep.subr.bf16.mxu0 %v8561
        %11367 = vmatpush1.bf16.msra.mxu0 %v8560
        %11368 = vmatprep.mubr.bf16.mxu0 %v2373
        %11369 = vmatmul.mubr.bf16.gmra.mrb[0].mxu0 %v2372
        %v11370 = vpop.f32.mrb[0].mxu0
        %v11371 = vadd.f32 %v11318, %v11370
        %v11372 = vpop.f32.mrb[0].mxu0
        %v11373 = vadd.f32 %v11320, %v11372
        %v11374 = vpop.f32.mrb[0].mxu0
        %v11375 = vadd.f32 %v11322, %v11374
        %v11376 = vpop.f32.mrb[0].mxu0
        %v11377 = vadd.f32 %v11324, %v11376
        %11378 = vmatprep.mubr.bf16.mxu0 %v2381
        %11379 = vmatmul.mubr.bf16.gmra.mrb[0].mxu0 %v2380
        %v11380 = vpop.f32.mrb[0].mxu0
        %v11381 = vadd.f32 %v11328, %v11380
        %v11382 = vpop.f32.mrb[0].mxu0
        %v11383 = vadd.f32 %v11330, %v11382
        %v11384 = vpop.f32.mrb[0].mxu0
        %v11385 = vadd.f32 %v11332, %v11384
        %v11386 = vpop.f32.mrb[0].mxu0
        %v11387 = vadd.f32 %v11334, %v11386
        %11388 = vdwg.mxu0
        %11389 = vmatprep.subr.bf16.mxu0 %v8581
        %11390 = vmatpush1.bf16.msra.mxu0 %v8580
        %11391 = vmatprep.subr.bf16.mxu0 %v8601
        %11392 = vmatpush1.bf16.msra.mxu0 %v8600
        %11393 = vmatprep.subr.bf16.mxu0 %v8621
        %11394 = vmatpush1.bf16.msra.mxu0 %v8620
        %11395 = vmatprep.subr.bf16.mxu0 %v8641
        %11396 = vmatpush1.bf16.msra.mxu0 %v8640
        %11397 = vmatprep.subr.bf16.mxu0 %v8661
        %11398 = vmatpush1.bf16.msra.mxu0 %v8660
        %11399 = vmatprep.subr.bf16.mxu0 %v8681
        %11400 = vmatpush1.bf16.msra.mxu0 %v8680
        %11401 = vmatprep.subr.bf16.mxu0 %v8701
        %11402 = vmatpush1.bf16.msra.mxu0 %v8700
        %11403 = vmatprep.subr.bf16.mxu0 %v8721
        %11404 = vmatpush1.bf16.msra.mxu0 %v8720
        %11405 = vmatprep.subr.bf16.mxu0 %v8741
        %11406 = vmatpush1.bf16.msra.mxu0 %v8740
        %11407 = vmatprep.subr.bf16.mxu0 %v8761
        %11408 = vmatpush1.bf16.msra.mxu0 %v8760
        %11409 = vmatprep.subr.bf16.mxu0 %v8781
        %11410 = vmatpush1.bf16.msra.mxu0 %v8780
        %11411 = vmatprep.subr.bf16.mxu0 %v8801
        %11412 = vmatpush1.bf16.msra.mxu0 %v8800
        %11413 = vmatprep.subr.bf16.mxu0 %v8821
        %11414 = vmatpush1.bf16.msra.mxu0 %v8820
        %11415 = vmatprep.subr.bf16.mxu0 %v8841
        %11416 = vmatpush1.bf16.msra.mxu0 %v8840
        %11417 = vmatprep.subr.bf16.mxu0 %v8861
        %11418 = vmatpush1.bf16.msra.mxu0 %v8860
        %11419 = vmatprep.subr.bf16.mxu0 %v8881
        %11420 = vmatpush1.bf16.msra.mxu0 %v8880
        %11421 = vmatprep.mubr.bf16.mxu0 %v2375
        %11422 = vmatmul.mubr.bf16.gmra.mrb[0].mxu0 %v2374
        %v11423 = vpop.f32.mrb[0].mxu0
        %v11424 = vadd.f32 %v11371, %v11423
        %v11425 = vpop.f32.mrb[0].mxu0
        %v11426 = vadd.f32 %v11373, %v11425
        %v11427 = vpop.f32.mrb[0].mxu0
        %v11428 = vadd.f32 %v11375, %v11427
        %v11429 = vpop.f32.mrb[0].mxu0
        %v11430 = vadd.f32 %v11377, %v11429
        %11431 = vmatprep.mubr.bf16.mxu0 %v2383
        %11432 = vmatmul.mubr.bf16.gmra.mrb[0].mxu0 %v2382
        %v11433 = vpop.f32.mrb[0].mxu0
        %v11434 = vadd.f32 %v11381, %v11433
        %v11435 = vpop.f32.mrb[0].mxu0
        %v11436 = vadd.f32 %v11383, %v11435
        %v11437 = vpop.f32.mrb[0].mxu0
        %v11438 = vadd.f32 %v11385, %v11437
        %v11439 = vpop.f32.mrb[0].mxu0
        %v11440 = vadd.f32 %v11387, %v11439
        %11441 = vdwg.mxu0
        %11442 = vmatprep.subr.bf16.mxu0 %v7623
        %11443 = vmatpush1.bf16.msra.mxu0 %v7622
        %11444 = vmatprep.subr.bf16.mxu0 %v7643
        %11445 = vmatpush1.bf16.msra.mxu0 %v7642
        %11446 = vmatprep.subr.bf16.mxu0 %v7663
        %11447 = vmatpush1.bf16.msra.mxu0 %v7662
        %11448 = vmatprep.subr.bf16.mxu0 %v7683
        %11449 = vmatpush1.bf16.msra.mxu0 %v7682
        %11450 = vmatprep.subr.bf16.mxu0 %v7703
        %11451 = vmatpush1.bf16.msra.mxu0 %v7702
        %11452 = vmatprep.subr.bf16.mxu0 %v7723
        %11453 = vmatpush1.bf16.msra.mxu0 %v7722
        %11454 = vmatprep.subr.bf16.mxu0 %v7743
        %11455 = vmatpush1.bf16.msra.mxu0 %v7742
        %11456 = vmatprep.subr.bf16.mxu0 %v7763
        %11457 = vmatpush1.bf16.msra.mxu0 %v7762
        %11458 = vmatprep.subr.bf16.mxu0 %v7783
        %11459 = vmatpush1.bf16.msra.mxu0 %v7782
        %11460 = vmatprep.subr.bf16.mxu0 %v7803
        %11461 = vmatpush1.bf16.msra.mxu0 %v7802
        %11462 = vmatprep.subr.bf16.mxu0 %v7823
        %11463 = vmatpush1.bf16.msra.mxu0 %v7822
        %11464 = vmatprep.subr.bf16.mxu0 %v7843
        %11465 = vmatpush1.bf16.msra.mxu0 %v7842
        %11466 = vmatprep.subr.bf16.mxu0 %v7863
        %11467 = vmatpush1.bf16.msra.mxu0 %v7862
        %11468 = vmatprep.subr.bf16.mxu0 %v7883
        %11469 = vmatpush1.bf16.msra.mxu0 %v7882
        %11470 = vmatprep.subr.bf16.mxu0 %v7903
        %11471 = vmatpush1.bf16.msra.mxu0 %v7902
        %11472 = vmatprep.subr.bf16.mxu0 %v7923
        %11473 = vmatpush1.bf16.msra.mxu0 %v7922
        %11474 = vmatprep.mubr.bf16.mxu0 %v2369
        %11475 = vmatmul.mubr.bf16.gmra.mrb[0].mxu0 %v2368
        %v11476 = vpop.f32.mrb[0].mxu0
        %v11477 = vadd.f32 %v3721, %v11476
        %v11478 = vpop.f32.mrb[0].mxu0
        %v11479 = vadd.f32 %v3725, %v11478
        %v11480 = vpop.f32.mrb[0].mxu0
        %v11481 = vadd.f32 %v3721, %v11480
        %v11482 = vpop.f32.mrb[0].mxu0
        %v11483 = vadd.f32 %v3725, %v11482
        %11484 = vmatprep.mubr.bf16.mxu0 %v2377
        %11485 = vmatmul.mubr.bf16.gmra.mrb[0].mxu0 %v2376
        %v11486 = vpop.f32.mrb[0].mxu0
        %v11487 = vadd.f32 %v3721, %v11486
        %v11488 = vpop.f32.mrb[0].mxu0
        %v11489 = vadd.f32 %v3725, %v11488
        %v11490 = vpop.f32.mrb[0].mxu0
        %v11491 = vadd.f32 %v3721, %v11490
        %v11492 = vpop.f32.mrb[0].mxu0
        %v11493 = vadd.f32 %v3725, %v11492
        %11494 = vdwg.mxu0
        %11495 = vmatprep.subr.bf16.mxu0 %v7943
        %11496 = vmatpush1.bf16.msra.mxu0 %v7942
        %11497 = vmatprep.subr.bf16.mxu0 %v7963
        %11498 = vmatpush1.bf16.msra.mxu0 %v7962
        %11499 = vmatprep.subr.bf16.mxu0 %v7983
        %11500 = vmatpush1.bf16.msra.mxu0 %v7982
        %11501 = vmatprep.subr.bf16.mxu0 %v8003
        %11502 = vmatpush1.bf16.msra.mxu0 %v8002
        %11503 = vmatprep.subr.bf16.mxu0 %v8023
        %11504 = vmatpush1.bf16.msra.mxu0 %v8022
        %11505 = vmatprep.subr.bf16.mxu0 %v8043
        %11506 = vmatpush1.bf16.msra.mxu0 %v8042
        %11507 = vmatprep.subr.bf16.mxu0 %v8063
        %11508 = vmatpush1.bf16.msra.mxu0 %v8062
        %11509 = vmatprep.subr.bf16.mxu0 %v8083
        %11510 = vmatpush1.bf16.msra.mxu0 %v8082
        %11511 = vmatprep.subr.bf16.mxu0 %v8103
        %11512 = vmatpush1.bf16.msra.mxu0 %v8102
        %11513 = vmatprep.subr.bf16.mxu0 %v8123
        %11514 = vmatpush1.bf16.msra.mxu0 %v8122
        %11515 = vmatprep.subr.bf16.mxu0 %v8143
        %11516 = vmatpush1.bf16.msra.mxu0 %v8142
        %11517 = vmatprep.subr.bf16.mxu0 %v8163
        %11518 = vmatpush1.bf16.msra.mxu0 %v8162
        %11519 = vmatprep.subr.bf16.mxu0 %v8183
        %11520 = vmatpush1.bf16.msra.mxu0 %v8182
        %11521 = vmatprep.subr.bf16.mxu0 %v8203
        %11522 = vmatpush1.bf16.msra.mxu0 %v8202
        %11523 = vmatprep.subr.bf16.mxu0 %v8223
        %11524 = vmatpush1.bf16.msra.mxu0 %v8222
        %11525 = vmatprep.subr.bf16.mxu0 %v8243
        %11526 = vmatpush1.bf16.msra.mxu0 %v8242
        %11527 = vmatprep.mubr.bf16.mxu0 %v2371
        %11528 = vmatmul.mubr.bf16.gmra.mrb[0].mxu0 %v2370
        %v11529 = vpop.f32.mrb[0].mxu0
        %v11530 = vadd.f32 %v11477, %v11529
        %v11531 = vpop.f32.mrb[0].mxu0
        %v11532 = vadd.f32 %v11479, %v11531
        %v11533 = vpop.f32.mrb[0].mxu0
        %v11534 = vadd.f32 %v11481, %v11533
        %v11535 = vpop.f32.mrb[0].mxu0
        %v11536 = vadd.f32 %v11483, %v11535
        %11537 = vmatprep.mubr.bf16.mxu0 %v2379
        %11538 = vmatmul.mubr.bf16.gmra.mrb[0].mxu0 %v2378
        %v11539 = vpop.f32.mrb[0].mxu0
        %v11540 = vadd.f32 %v11487, %v11539
        %v11541 = vpop.f32.mrb[0].mxu0
        %v11542 = vadd.f32 %v11489, %v11541
        %v11543 = vpop.f32.mrb[0].mxu0
        %v11544 = vadd.f32 %v11491, %v11543
        %v11545 = vpop.f32.mrb[0].mxu0
        %v11546 = vadd.f32 %v11493, %v11545
        %11547 = vdwg.mxu0
        %11548 = vmatprep.subr.bf16.mxu0 %v8263
        %11549 = vmatpush1.bf16.msra.mxu0 %v8262
        %11550 = vmatprep.subr.bf16.mxu0 %v8283
        %11551 = vmatpush1.bf16.msra.mxu0 %v8282
        %11552 = vmatprep.subr.bf16.mxu0 %v8303
        %11553 = vmatpush1.bf16.msra.mxu0 %v8302
        %11554 = vmatprep.subr.bf16.mxu0 %v8323
        %11555 = vmatpush1.bf16.msra.mxu0 %v8322
        %11556 = vmatprep.subr.bf16.mxu0 %v8343
        %11557 = vmatpush1.bf16.msra.mxu0 %v8342
        %11558 = vmatprep.subr.bf16.mxu0 %v8363
        %11559 = vmatpush1.bf16.msra.mxu0 %v8362
        %11560 = vmatprep.subr.bf16.mxu0 %v8383
        %11561 = vmatpush1.bf16.msra.mxu0 %v8382
        %11562 = vmatprep.subr.bf16.mxu0 %v8403
        %11563 = vmatpush1.bf16.msra.mxu0 %v8402
        %11564 = vmatprep.subr.bf16.mxu0 %v8423
        %11565 = vmatpush1.bf16.msra.mxu0 %v8422
        %11566 = vmatprep.subr.bf16.mxu0 %v8443
        %11567 = vmatpush1.bf16.msra.mxu0 %v8442
        %11568 = vmatprep.subr.bf16.mxu0 %v8463
        %11569 = vmatpush1.bf16.msra.mxu0 %v8462
        %11570 = vmatprep.subr.bf16.mxu0 %v8483
        %11571 = vmatpush1.bf16.msra.mxu0 %v8482
        %11572 = vmatprep.subr.bf16.mxu0 %v8503
        %11573 = vmatpush1.bf16.msra.mxu0 %v8502
        %11574 = vmatprep.subr.bf16.mxu0 %v8523
        %11575 = vmatpush1.bf16.msra.mxu0 %v8522
        %11576 = vmatprep.subr.bf16.mxu0 %v8543
        %11577 = vmatpush1.bf16.msra.mxu0 %v8542
        %11578 = vmatprep.subr.bf16.mxu0 %v8563
        %11579 = vmatpush1.bf16.msra.mxu0 %v8562
        %11580 = vmatprep.mubr.bf16.mxu0 %v2373
        %11581 = vmatmul.mubr.bf16.gmra.mrb[0].mxu0 %v2372
        %v11582 = vpop.f32.mrb[0].mxu0
        %v11583 = vadd.f32 %v11530, %v11582
        %v11584 = vpop.f32.mrb[0].mxu0
        %v11585 = vadd.f32 %v11532, %v11584
        %v11586 = vpop.f32.mrb[0].mxu0
        %v11587 = vadd.f32 %v11534, %v11586
        %v11588 = vpop.f32.mrb[0].mxu0
        %v11589 = vadd.f32 %v11536, %v11588
        %11590 = vmatprep.mubr.bf16.mxu0 %v2381
        %11591 = vmatmul.mubr.bf16.gmra.mrb[0].mxu0 %v2380
        %v11592 = vpop.f32.mrb[0].mxu0
        %v11593 = vadd.f32 %v11540, %v11592
        %v11594 = vpop.f32.mrb[0].mxu0
        %v11595 = vadd.f32 %v11542, %v11594
        %v11596 = vpop.f32.mrb[0].mxu0
        %v11597 = vadd.f32 %v11544, %v11596
        %v11598 = vpop.f32.mrb[0].mxu0
        %v11599 = vadd.f32 %v11546, %v11598
        %11600 = vdwg.mxu0
        %11601 = vmatprep.subr.bf16.mxu0 %v8583
        %11602 = vmatpush1.bf16.msra.mxu0 %v8582
        %11603 = vmatprep.subr.bf16.mxu0 %v8603
        %11604 = vmatpush1.bf16.msra.mxu0 %v8602
        %11605 = vmatprep.subr.bf16.mxu0 %v8623
        %11606 = vmatpush1.bf16.msra.mxu0 %v8622
        %11607 = vmatprep.subr.bf16.mxu0 %v8643
        %11608 = vmatpush1.bf16.msra.mxu0 %v8642
        %11609 = vmatprep.subr.bf16.mxu0 %v8663
        %11610 = vmatpush1.bf16.msra.mxu0 %v8662
        %11611 = vmatprep.subr.bf16.mxu0 %v8683
        %11612 = vmatpush1.bf16.msra.mxu0 %v8682
        %11613 = vmatprep.subr.bf16.mxu0 %v8703
        %11614 = vmatpush1.bf16.msra.mxu0 %v8702
        %11615 = vmatprep.subr.bf16.mxu0 %v8723
        %11616 = vmatpush1.bf16.msra.mxu0 %v8722
        %11617 = vmatprep.subr.bf16.mxu0 %v8743
        %11618 = vmatpush1.bf16.msra.mxu0 %v8742
        %11619 = vmatprep.subr.bf16.mxu0 %v8763
        %11620 = vmatpush1.bf16.msra.mxu0 %v8762
        %11621 = vmatprep.subr.bf16.mxu0 %v8783
        %11622 = vmatpush1.bf16.msra.mxu0 %v8782
        %11623 = vmatprep.subr.bf16.mxu0 %v8803
        %11624 = vmatpush1.bf16.msra.mxu0 %v8802
        %11625 = vmatprep.subr.bf16.mxu0 %v8823
        %11626 = vmatpush1.bf16.msra.mxu0 %v8822
        %11627 = vmatprep.subr.bf16.mxu0 %v8843
        %11628 = vmatpush1.bf16.msra.mxu0 %v8842
        %11629 = vmatprep.subr.bf16.mxu0 %v8863
        %11630 = vmatpush1.bf16.msra.mxu0 %v8862
        %11631 = vmatprep.subr.bf16.mxu0 %v8883
        %11632 = vmatpush1.bf16.msra.mxu0 %v8882
        %11633 = vmatprep.mubr.bf16.mxu0 %v2375
        %11634 = vmatmul.mubr.bf16.gmra.mrb[0].mxu0 %v2374
        %v11635 = vpop.f32.mrb[0].mxu0
        %v11636 = vadd.f32 %v11583, %v11635
        %v11637 = vpop.f32.mrb[0].mxu0
        %v11638 = vadd.f32 %v11585, %v11637
        %v11639 = vpop.f32.mrb[0].mxu0
        %v11640 = vadd.f32 %v11587, %v11639
        %v11641 = vpop.f32.mrb[0].mxu0
        %v11642 = vadd.f32 %v11589, %v11641
        %11643 = vmatprep.mubr.bf16.mxu0 %v2383
        %11644 = vmatmul.mubr.bf16.gmra.mrb[0].mxu0 %v2382
        %v11645 = vpop.f32.mrb[0].mxu0
        %v11646 = vadd.f32 %v11593, %v11645
        %v11647 = vpop.f32.mrb[0].mxu0
        %v11648 = vadd.f32 %v11595, %v11647
        %v11649 = vpop.f32.mrb[0].mxu0
        %v11650 = vadd.f32 %v11597, %v11649
        %v11651 = vpop.f32.mrb[0].mxu0
        %v11652 = vadd.f32 %v11599, %v11651
        %11653 = vdwg.mxu0
        %11654 = vmatprep.subr.bf16.mxu0 %v7625
        %11655 = vmatpush1.bf16.msra.mxu0 %v7624
        %11656 = vmatprep.subr.bf16.mxu0 %v7645
        %11657 = vmatpush1.bf16.msra.mxu0 %v7644
        %11658 = vmatprep.subr.bf16.mxu0 %v7665
        %11659 = vmatpush1.bf16.msra.mxu0 %v7664
        %11660 = vmatprep.subr.bf16.mxu0 %v7685
        %11661 = vmatpush1.bf16.msra.mxu0 %v7684
        %11662 = vmatprep.subr.bf16.mxu0 %v7705
        %11663 = vmatpush1.bf16.msra.mxu0 %v7704
        %11664 = vmatprep.subr.bf16.mxu0 %v7725
        %11665 = vmatpush1.bf16.msra.mxu0 %v7724
        %11666 = vmatprep.subr.bf16.mxu0 %v7745
        %11667 = vmatpush1.bf16.msra.mxu0 %v7744
        %11668 = vmatprep.subr.bf16.mxu0 %v7765
        %11669 = vmatpush1.bf16.msra.mxu0 %v7764
        %11670 = vmatprep.subr.bf16.mxu0 %v7785
        %11671 = vmatpush1.bf16.msra.mxu0 %v7784
        %11672 = vmatprep.subr.bf16.mxu0 %v7805
        %11673 = vmatpush1.bf16.msra.mxu0 %v7804
        %11674 = vmatprep.subr.bf16.mxu0 %v7825
        %11675 = vmatpush1.bf16.msra.mxu0 %v7824
        %11676 = vmatprep.subr.bf16.mxu0 %v7845
        %11677 = vmatpush1.bf16.msra.mxu0 %v7844
        %11678 = vmatprep.subr.bf16.mxu0 %v7865
        %11679 = vmatpush1.bf16.msra.mxu0 %v7864
        %11680 = vmatprep.subr.bf16.mxu0 %v7885
        %11681 = vmatpush1.bf16.msra.mxu0 %v7884
        %11682 = vmatprep.subr.bf16.mxu0 %v7905
        %11683 = vmatpush1.bf16.msra.mxu0 %v7904
        %11684 = vmatprep.subr.bf16.mxu0 %v7925
        %11685 = vmatpush1.bf16.msra.mxu0 %v7924
        %11686 = vmatprep.mubr.bf16.mxu0 %v2369
        %11687 = vmatmul.mubr.bf16.gmra.mrb[0].mxu0 %v2368
        %v11688 = vpop.f32.mrb[0].mxu0
        %v11689 = vadd.f32 %v3729, %v11688
        %v11690 = vpop.f32.mrb[0].mxu0
        %v11691 = vadd.f32 %v3733, %v11690
        %v11692 = vpop.f32.mrb[0].mxu0
        %v11693 = vadd.f32 %v3729, %v11692
        %v11694 = vpop.f32.mrb[0].mxu0
        %v11695 = vadd.f32 %v3733, %v11694
        %11696 = vmatprep.mubr.bf16.mxu0 %v2377
        %11697 = vmatmul.mubr.bf16.gmra.mrb[0].mxu0 %v2376
        %v11698 = vpop.f32.mrb[0].mxu0
        %v11699 = vadd.f32 %v3729, %v11698
        %v11700 = vpop.f32.mrb[0].mxu0
        %v11701 = vadd.f32 %v3733, %v11700
        %v11702 = vpop.f32.mrb[0].mxu0
        %v11703 = vadd.f32 %v3729, %v11702
        %v11704 = vpop.f32.mrb[0].mxu0
        %v11705 = vadd.f32 %v3733, %v11704
        %11706 = vdwg.mxu0
        %11707 = vmatprep.subr.bf16.mxu0 %v7945
        %11708 = vmatpush1.bf16.msra.mxu0 %v7944
        %11709 = vmatprep.subr.bf16.mxu0 %v7965
        %11710 = vmatpush1.bf16.msra.mxu0 %v7964
        %11711 = vmatprep.subr.bf16.mxu0 %v7985
        %11712 = vmatpush1.bf16.msra.mxu0 %v7984
        %11713 = vmatprep.subr.bf16.mxu0 %v8005
        %11714 = vmatpush1.bf16.msra.mxu0 %v8004
        %11715 = vmatprep.subr.bf16.mxu0 %v8025
        %11716 = vmatpush1.bf16.msra.mxu0 %v8024
        %11717 = vmatprep.subr.bf16.mxu0 %v8045
        %11718 = vmatpush1.bf16.msra.mxu0 %v8044
        %11719 = vmatprep.subr.bf16.mxu0 %v8065
        %11720 = vmatpush1.bf16.msra.mxu0 %v8064
        %11721 = vmatprep.subr.bf16.mxu0 %v8085
        %11722 = vmatpush1.bf16.msra.mxu0 %v8084
        %11723 = vmatprep.subr.bf16.mxu0 %v8105
        %11724 = vmatpush1.bf16.msra.mxu0 %v8104
        %11725 = vmatprep.subr.bf16.mxu0 %v8125
        %11726 = vmatpush1.bf16.msra.mxu0 %v8124
        %11727 = vmatprep.subr.bf16.mxu0 %v8145
        %11728 = vmatpush1.bf16.msra.mxu0 %v8144
        %11729 = vmatprep.subr.bf16.mxu0 %v8165
        %11730 = vmatpush1.bf16.msra.mxu0 %v8164
        %11731 = vmatprep.subr.bf16.mxu0 %v8185
        %11732 = vmatpush1.bf16.msra.mxu0 %v8184
        %11733 = vmatprep.subr.bf16.mxu0 %v8205
        %11734 = vmatpush1.bf16.msra.mxu0 %v8204
        %11735 = vmatprep.subr.bf16.mxu0 %v8225
        %11736 = vmatpush1.bf16.msra.mxu0 %v8224
        %11737 = vmatprep.subr.bf16.mxu0 %v8245
        %11738 = vmatpush1.bf16.msra.mxu0 %v8244
        %11739 = vmatprep.mubr.bf16.mxu0 %v2371
        %11740 = vmatmul.mubr.bf16.gmra.mrb[0].mxu0 %v2370
        %v11741 = vpop.f32.mrb[0].mxu0
        %v11742 = vadd.f32 %v11689, %v11741
        %v11743 = vpop.f32.mrb[0].mxu0
        %v11744 = vadd.f32 %v11691, %v11743
        %v11745 = vpop.f32.mrb[0].mxu0
        %v11746 = vadd.f32 %v11693, %v11745
        %v11747 = vpop.f32.mrb[0].mxu0
        %v11748 = vadd.f32 %v11695, %v11747
        %11749 = vmatprep.mubr.bf16.mxu0 %v2379
        %11750 = vmatmul.mubr.bf16.gmra.mrb[0].mxu0 %v2378
        %v11751 = vpop.f32.mrb[0].mxu0
        %v11752 = vadd.f32 %v11699, %v11751
        %v11753 = vpop.f32.mrb[0].mxu0
        %v11754 = vadd.f32 %v11701, %v11753
        %v11755 = vpop.f32.mrb[0].mxu0
        %v11756 = vadd.f32 %v11703, %v11755
        %v11757 = vpop.f32.mrb[0].mxu0
        %v11758 = vadd.f32 %v11705, %v11757
        %11759 = vdwg.mxu0
        %11760 = vmatprep.subr.bf16.mxu0 %v8265
        %11761 = vmatpush1.bf16.msra.mxu0 %v8264
        %11762 = vmatprep.subr.bf16.mxu0 %v8285
        %11763 = vmatpush1.bf16.msra.mxu0 %v8284
        %11764 = vmatprep.subr.bf16.mxu0 %v8305
        %11765 = vmatpush1.bf16.msra.mxu0 %v8304
        %11766 = vmatprep.subr.bf16.mxu0 %v8325
        %11767 = vmatpush1.bf16.msra.mxu0 %v8324
        %11768 = vmatprep.subr.bf16.mxu0 %v8345
        %11769 = vmatpush1.bf16.msra.mxu0 %v8344
        %11770 = vmatprep.subr.bf16.mxu0 %v8365
        %11771 = vmatpush1.bf16.msra.mxu0 %v8364
        %11772 = vmatprep.subr.bf16.mxu0 %v8385
        %11773 = vmatpush1.bf16.msra.mxu0 %v8384
        %11774 = vmatprep.subr.bf16.mxu0 %v8405
        %11775 = vmatpush1.bf16.msra.mxu0 %v8404
        %11776 = vmatprep.subr.bf16.mxu0 %v8425
        %11777 = vmatpush1.bf16.msra.mxu0 %v8424
        %11778 = vmatprep.subr.bf16.mxu0 %v8445
        %11779 = vmatpush1.bf16.msra.mxu0 %v8444
        %11780 = vmatprep.subr.bf16.mxu0 %v8465
        %11781 = vmatpush1.bf16.msra.mxu0 %v8464
        %11782 = vmatprep.subr.bf16.mxu0 %v8485
        %11783 = vmatpush1.bf16.msra.mxu0 %v8484
        %11784 = vmatprep.subr.bf16.mxu0 %v8505
        %11785 = vmatpush1.bf16.msra.mxu0 %v8504
        %11786 = vmatprep.subr.bf16.mxu0 %v8525
        %11787 = vmatpush1.bf16.msra.mxu0 %v8524
        %11788 = vmatprep.subr.bf16.mxu0 %v8545
        %11789 = vmatpush1.bf16.msra.mxu0 %v8544
        %11790 = vmatprep.subr.bf16.mxu0 %v8565
        %11791 = vmatpush1.bf16.msra.mxu0 %v8564
        %11792 = vmatprep.mubr.bf16.mxu0 %v2373
        %11793 = vmatmul.mubr.bf16.gmra.mrb[0].mxu0 %v2372
        %v11794 = vpop.f32.mrb[0].mxu0
        %v11795 = vadd.f32 %v11742, %v11794
        %v11796 = vpop.f32.mrb[0].mxu0
        %v11797 = vadd.f32 %v11744, %v11796
        %v11798 = vpop.f32.mrb[0].mxu0
        %v11799 = vadd.f32 %v11746, %v11798
        %v11800 = vpop.f32.mrb[0].mxu0
        %v11801 = vadd.f32 %v11748, %v11800
        %11802 = vmatprep.mubr.bf16.mxu0 %v2381
        %11803 = vmatmul.mubr.bf16.gmra.mrb[0].mxu0 %v2380
        %v11804 = vpop.f32.mrb[0].mxu0
        %v11805 = vadd.f32 %v11752, %v11804
        %v11806 = vpop.f32.mrb[0].mxu0
        %v11807 = vadd.f32 %v11754, %v11806
        %v11808 = vpop.f32.mrb[0].mxu0
        %v11809 = vadd.f32 %v11756, %v11808
        %v11810 = vpop.f32.mrb[0].mxu0
        %v11811 = vadd.f32 %v11758, %v11810
        %11812 = vdwg.mxu0
        %11813 = vmatprep.subr.bf16.mxu0 %v8585
        %11814 = vmatpush1.bf16.msra.mxu0 %v8584
        %11815 = vmatprep.subr.bf16.mxu0 %v8605
        %11816 = vmatpush1.bf16.msra.mxu0 %v8604
        %11817 = vmatprep.subr.bf16.mxu0 %v8625
        %11818 = vmatpush1.bf16.msra.mxu0 %v8624
        %11819 = vmatprep.subr.bf16.mxu0 %v8645
        %11820 = vmatpush1.bf16.msra.mxu0 %v8644
        %11821 = vmatprep.subr.bf16.mxu0 %v8665
        %11822 = vmatpush1.bf16.msra.mxu0 %v8664
        %11823 = vmatprep.subr.bf16.mxu0 %v8685
        %11824 = vmatpush1.bf16.msra.mxu0 %v8684
        %11825 = vmatprep.subr.bf16.mxu0 %v8705
        %11826 = vmatpush1.bf16.msra.mxu0 %v8704
        %11827 = vmatprep.subr.bf16.mxu0 %v8725
        %11828 = vmatpush1.bf16.msra.mxu0 %v8724
        %11829 = vmatprep.subr.bf16.mxu0 %v8745
        %11830 = vmatpush1.bf16.msra.mxu0 %v8744
        %11831 = vmatprep.subr.bf16.mxu0 %v8765
        %11832 = vmatpush1.bf16.msra.mxu0 %v8764
        %11833 = vmatprep.subr.bf16.mxu0 %v8785
        %11834 = vmatpush1.bf16.msra.mxu0 %v8784
        %11835 = vmatprep.subr.bf16.mxu0 %v8805
        %11836 = vmatpush1.bf16.msra.mxu0 %v8804
        %11837 = vmatprep.subr.bf16.mxu0 %v8825
        %11838 = vmatpush1.bf16.msra.mxu0 %v8824
        %11839 = vmatprep.subr.bf16.mxu0 %v8845
        %11840 = vmatpush1.bf16.msra.mxu0 %v8844
        %11841 = vmatprep.subr.bf16.mxu0 %v8865
        %11842 = vmatpush1.bf16.msra.mxu0 %v8864
        %11843 = vmatprep.subr.bf16.mxu0 %v8885
        %11844 = vmatpush1.bf16.msra.mxu0 %v8884
        %11845 = vmatprep.mubr.bf16.mxu0 %v2375
        %11846 = vmatmul.mubr.bf16.gmra.mrb[0].mxu0 %v2374
        %v11847 = vpop.f32.mrb[0].mxu0
        %v11848 = vadd.f32 %v11795, %v11847
        %v11849 = vpop.f32.mrb[0].mxu0
        %v11850 = vadd.f32 %v11797, %v11849
        %v11851 = vpop.f32.mrb[0].mxu0
        %v11852 = vadd.f32 %v11799, %v11851
        %v11853 = vpop.f32.mrb[0].mxu0
        %v11854 = vadd.f32 %v11801, %v11853
        %11855 = vmatprep.mubr.bf16.mxu0 %v2383
        %11856 = vmatmul.mubr.bf16.gmra.mrb[0].mxu0 %v2382
        %v11857 = vpop.f32.mrb[0].mxu0
        %v11858 = vadd.f32 %v11805, %v11857
        %v11859 = vpop.f32.mrb[0].mxu0
        %v11860 = vadd.f32 %v11807, %v11859
        %v11861 = vpop.f32.mrb[0].mxu0
        %v11862 = vadd.f32 %v11809, %v11861
        %v11863 = vpop.f32.mrb[0].mxu0
        %v11864 = vadd.f32 %v11811, %v11863
        %11865 = vdwg.mxu0
        %11866 = vmatprep.subr.bf16.mxu0 %v7627
        %11867 = vmatpush1.bf16.msra.mxu0 %v7626
        %11868 = vmatprep.subr.bf16.mxu0 %v7647
        %11869 = vmatpush1.bf16.msra.mxu0 %v7646
        %11870 = vmatprep.subr.bf16.mxu0 %v7667
        %11871 = vmatpush1.bf16.msra.mxu0 %v7666
        %11872 = vmatprep.subr.bf16.mxu0 %v7687
        %11873 = vmatpush1.bf16.msra.mxu0 %v7686
        %11874 = vmatprep.subr.bf16.mxu0 %v7707
        %11875 = vmatpush1.bf16.msra.mxu0 %v7706
        %11876 = vmatprep.subr.bf16.mxu0 %v7727
        %11877 = vmatpush1.bf16.msra.mxu0 %v7726
        %11878 = vmatprep.subr.bf16.mxu0 %v7747
        %11879 = vmatpush1.bf16.msra.mxu0 %v7746
        %11880 = vmatprep.subr.bf16.mxu0 %v7767
        %11881 = vmatpush1.bf16.msra.mxu0 %v7766
        %11882 = vmatprep.subr.bf16.mxu0 %v7787
        %11883 = vmatpush1.bf16.msra.mxu0 %v7786
        %11884 = vmatprep.subr.bf16.mxu0 %v7807
        %11885 = vmatpush1.bf16.msra.mxu0 %v7806
        %11886 = vmatprep.subr.bf16.mxu0 %v7827
        %11887 = vmatpush1.bf16.msra.mxu0 %v7826
        %11888 = vmatprep.subr.bf16.mxu0 %v7847
        %11889 = vmatpush1.bf16.msra.mxu0 %v7846
        %11890 = vmatprep.subr.bf16.mxu0 %v7867
        %11891 = vmatpush1.bf16.msra.mxu0 %v7866
        %11892 = vmatprep.subr.bf16.mxu0 %v7887
        %11893 = vmatpush1.bf16.msra.mxu0 %v7886
        %11894 = vmatprep.subr.bf16.mxu0 %v7907
        %11895 = vmatpush1.bf16.msra.mxu0 %v7906
        %11896 = vmatprep.subr.bf16.mxu0 %v7927
        %11897 = vmatpush1.bf16.msra.mxu0 %v7926
        %11898 = vmatprep.mubr.bf16.mxu0 %v2369
        %11899 = vmatmul.mubr.bf16.gmra.mrb[0].mxu0 %v2368
        %v11900 = vpop.f32.mrb[0].mxu0
        %v11901 = vadd.f32 %v3737, %v11900
        %v11902 = vpop.f32.mrb[0].mxu0
        %v11903 = vadd.f32 %v3741, %v11902
        %v11904 = vpop.f32.mrb[0].mxu0
        %v11905 = vadd.f32 %v3737, %v11904
        %v11906 = vpop.f32.mrb[0].mxu0
        %v11907 = vadd.f32 %v3741, %v11906
        %11908 = vmatprep.mubr.bf16.mxu0 %v2377
        %11909 = vmatmul.mubr.bf16.gmra.mrb[0].mxu0 %v2376
        %v11910 = vpop.f32.mrb[0].mxu0
        %v11911 = vadd.f32 %v3737, %v11910
        %v11912 = vpop.f32.mrb[0].mxu0
        %v11913 = vadd.f32 %v3741, %v11912
        %v11914 = vpop.f32.mrb[0].mxu0
        %v11915 = vadd.f32 %v3737, %v11914
        %v11916 = vpop.f32.mrb[0].mxu0
        %v11917 = vadd.f32 %v3741, %v11916
        %11918 = vdwg.mxu0
        %11919 = vmatprep.subr.bf16.mxu0 %v7947
        %11920 = vmatpush1.bf16.msra.mxu0 %v7946
        %11921 = vmatprep.subr.bf16.mxu0 %v7967
        %11922 = vmatpush1.bf16.msra.mxu0 %v7966
        %11923 = vmatprep.subr.bf16.mxu0 %v7987
        %11924 = vmatpush1.bf16.msra.mxu0 %v7986
        %11925 = vmatprep.subr.bf16.mxu0 %v8007
        %11926 = vmatpush1.bf16.msra.mxu0 %v8006
        %11927 = vmatprep.subr.bf16.mxu0 %v8027
        %11928 = vmatpush1.bf16.msra.mxu0 %v8026
        %11929 = vmatprep.subr.bf16.mxu0 %v8047
        %11930 = vmatpush1.bf16.msra.mxu0 %v8046
        %11931 = vmatprep.subr.bf16.mxu0 %v8067
        %11932 = vmatpush1.bf16.msra.mxu0 %v8066
        %11933 = vmatprep.subr.bf16.mxu0 %v8087
        %11934 = vmatpush1.bf16.msra.mxu0 %v8086
        %11935 = vmatprep.subr.bf16.mxu0 %v8107
        %11936 = vmatpush1.bf16.msra.mxu0 %v8106
        %11937 = vmatprep.subr.bf16.mxu0 %v8127
        %11938 = vmatpush1.bf16.msra.mxu0 %v8126
        %11939 = vmatprep.subr.bf16.mxu0 %v8147
        %11940 = vmatpush1.bf16.msra.mxu0 %v8146
        %11941 = vmatprep.subr.bf16.mxu0 %v8167
        %11942 = vmatpush1.bf16.msra.mxu0 %v8166
        %11943 = vmatprep.subr.bf16.mxu0 %v8187
        %11944 = vmatpush1.bf16.msra.mxu0 %v8186
        %11945 = vmatprep.subr.bf16.mxu0 %v8207
        %11946 = vmatpush1.bf16.msra.mxu0 %v8206
        %11947 = vmatprep.subr.bf16.mxu0 %v8227
        %11948 = vmatpush1.bf16.msra.mxu0 %v8226
        %11949 = vmatprep.subr.bf16.mxu0 %v8247
        %11950 = vmatpush1.bf16.msra.mxu0 %v8246
        %11951 = vmatprep.mubr.bf16.mxu0 %v2371
        %11952 = vmatmul.mubr.bf16.gmra.mrb[0].mxu0 %v2370
        %v11953 = vpop.f32.mrb[0].mxu0
        %v11954 = vadd.f32 %v11901, %v11953
        %v11955 = vpop.f32.mrb[0].mxu0
        %v11956 = vadd.f32 %v11903, %v11955
        %v11957 = vpop.f32.mrb[0].mxu0
        %v11958 = vadd.f32 %v11905, %v11957
        %v11959 = vpop.f32.mrb[0].mxu0
        %v11960 = vadd.f32 %v11907, %v11959
        %11961 = vmatprep.mubr.bf16.mxu0 %v2379
        %11962 = vmatmul.mubr.bf16.gmra.mrb[0].mxu0 %v2378
        %v11963 = vpop.f32.mrb[0].mxu0
        %v11964 = vadd.f32 %v11911, %v11963
        %v11965 = vpop.f32.mrb[0].mxu0
        %v11966 = vadd.f32 %v11913, %v11965
        %v11967 = vpop.f32.mrb[0].mxu0
        %v11968 = vadd.f32 %v11915, %v11967
        %v11969 = vpop.f32.mrb[0].mxu0
        %v11970 = vadd.f32 %v11917, %v11969
        %11971 = vdwg.mxu0
        %11972 = vmatprep.subr.bf16.mxu0 %v8267
        %11973 = vmatpush1.bf16.msra.mxu0 %v8266
        %11974 = vmatprep.subr.bf16.mxu0 %v8287
        %11975 = vmatpush1.bf16.msra.mxu0 %v8286
        %11976 = vmatprep.subr.bf16.mxu0 %v8307
        %11977 = vmatpush1.bf16.msra.mxu0 %v8306
        %11978 = vmatprep.subr.bf16.mxu0 %v8327
        %11979 = vmatpush1.bf16.msra.mxu0 %v8326
        %11980 = vmatprep.subr.bf16.mxu0 %v8347
        %11981 = vmatpush1.bf16.msra.mxu0 %v8346
        %11982 = vmatprep.subr.bf16.mxu0 %v8367
        %11983 = vmatpush1.bf16.msra.mxu0 %v8366
        %11984 = vmatprep.subr.bf16.mxu0 %v8387
        %11985 = vmatpush1.bf16.msra.mxu0 %v8386
        %11986 = vmatprep.subr.bf16.mxu0 %v8407
        %11987 = vmatpush1.bf16.msra.mxu0 %v8406
        %11988 = vmatprep.subr.bf16.mxu0 %v8427
        %11989 = vmatpush1.bf16.msra.mxu0 %v8426
        %11990 = vmatprep.subr.bf16.mxu0 %v8447
        %11991 = vmatpush1.bf16.msra.mxu0 %v8446
        %11992 = vmatprep.subr.bf16.mxu0 %v8467
        %11993 = vmatpush1.bf16.msra.mxu0 %v8466
        %11994 = vmatprep.subr.bf16.mxu0 %v8487
        %11995 = vmatpush1.bf16.msra.mxu0 %v8486
        %11996 = vmatprep.subr.bf16.mxu0 %v8507
        %11997 = vmatpush1.bf16.msra.mxu0 %v8506
        %11998 = vmatprep.subr.bf16.mxu0 %v8527
        %11999 = vmatpush1.bf16.msra.mxu0 %v8526
        %12000 = vmatprep.subr.bf16.mxu0 %v8547
        %12001 = vmatpush1.bf16.msra.mxu0 %v8546
        %12002 = vmatprep.subr.bf16.mxu0 %v8567
        %12003 = vmatpush1.bf16.msra.mxu0 %v8566
        %12004 = vmatprep.mubr.bf16.mxu0 %v2373
        %12005 = vmatmul.mubr.bf16.gmra.mrb[0].mxu0 %v2372
        %v12006 = vpop.f32.mrb[0].mxu0
        %v12007 = vadd.f32 %v11954, %v12006
        %v12008 = vpop.f32.mrb[0].mxu0
        %v12009 = vadd.f32 %v11956, %v12008
        %v12010 = vpop.f32.mrb[0].mxu0
        %v12011 = vadd.f32 %v11958, %v12010
        %v12012 = vpop.f32.mrb[0].mxu0
        %v12013 = vadd.f32 %v11960, %v12012
        %12014 = vmatprep.mubr.bf16.mxu0 %v2381
        %12015 = vmatmul.mubr.bf16.gmra.mrb[0].mxu0 %v2380
        %v12016 = vpop.f32.mrb[0].mxu0
        %v12017 = vadd.f32 %v11964, %v12016
        %v12018 = vpop.f32.mrb[0].mxu0
        %v12019 = vadd.f32 %v11966, %v12018
        %v12020 = vpop.f32.mrb[0].mxu0
        %v12021 = vadd.f32 %v11968, %v12020
        %v12022 = vpop.f32.mrb[0].mxu0
        %v12023 = vadd.f32 %v11970, %v12022
        %12024 = vdwg.mxu0
        %12025 = vmatprep.subr.bf16.mxu0 %v8587
        %12026 = vmatpush1.bf16.msra.mxu0 %v8586
        %12027 = vmatprep.subr.bf16.mxu0 %v8607
        %12028 = vmatpush1.bf16.msra.mxu0 %v8606
        %12029 = vmatprep.subr.bf16.mxu0 %v8627
        %12030 = vmatpush1.bf16.msra.mxu0 %v8626
        %12031 = vmatprep.subr.bf16.mxu0 %v8647
        %12032 = vmatpush1.bf16.msra.mxu0 %v8646
        %12033 = vmatprep.subr.bf16.mxu0 %v8667
        %12034 = vmatpush1.bf16.msra.mxu0 %v8666
        %12035 = vmatprep.subr.bf16.mxu0 %v8687
        %12036 = vmatpush1.bf16.msra.mxu0 %v8686
        %12037 = vmatprep.subr.bf16.mxu0 %v8707
        %12038 = vmatpush1.bf16.msra.mxu0 %v8706
        %12039 = vmatprep.subr.bf16.mxu0 %v8727
        %12040 = vmatpush1.bf16.msra.mxu0 %v8726
        %12041 = vmatprep.subr.bf16.mxu0 %v8747
        %12042 = vmatpush1.bf16.msra.mxu0 %v8746
        %12043 = vmatprep.subr.bf16.mxu0 %v8767
        %12044 = vmatpush1.bf16.msra.mxu0 %v8766
        %12045 = vmatprep.subr.bf16.mxu0 %v8787
        %12046 = vmatpush1.bf16.msra.mxu0 %v8786
        %12047 = vmatprep.subr.bf16.mxu0 %v8807
        %12048 = vmatpush1.bf16.msra.mxu0 %v8806
        %12049 = vmatprep.subr.bf16.mxu0 %v8827
        %12050 = vmatpush1.bf16.msra.mxu0 %v8826
        %12051 = vmatprep.subr.bf16.mxu0 %v8847
        %12052 = vmatpush1.bf16.msra.mxu0 %v8846
        %12053 = vmatprep.subr.bf16.mxu0 %v8867
        %12054 = vmatpush1.bf16.msra.mxu0 %v8866
        %12055 = vmatprep.subr.bf16.mxu0 %v8887
        %12056 = vmatpush1.bf16.msra.mxu0 %v8886
        %12057 = vmatprep.mubr.bf16.mxu0 %v2375
        %12058 = vmatmul.mubr.bf16.gmra.mrb[0].mxu0 %v2374
        %v12059 = vpop.f32.mrb[0].mxu0
        %v12060 = vadd.f32 %v12007, %v12059
        %v12061 = vpop.f32.mrb[0].mxu0
        %v12062 = vadd.f32 %v12009, %v12061
        %v12063 = vpop.f32.mrb[0].mxu0
        %v12064 = vadd.f32 %v12011, %v12063
        %v12065 = vpop.f32.mrb[0].mxu0
        %v12066 = vadd.f32 %v12013, %v12065
        %12067 = vmatprep.mubr.bf16.mxu0 %v2383
        %12068 = vmatmul.mubr.bf16.gmra.mrb[0].mxu0 %v2382
        %v12069 = vpop.f32.mrb[0].mxu0
        %v12070 = vadd.f32 %v12017, %v12069
        %v12071 = vpop.f32.mrb[0].mxu0
        %v12072 = vadd.f32 %v12019, %v12071
        %v12073 = vpop.f32.mrb[0].mxu0
        %v12074 = vadd.f32 %v12021, %v12073
        %v12075 = vpop.f32.mrb[0].mxu0
        %v12076 = vadd.f32 %v12023, %v12075
        %12077 = vdwg.mxu0
        %12078 = vmatprep.subr.bf16.mxu0 %v7629
        %12079 = vmatpush1.bf16.msra.mxu0 %v7628
        %12080 = vmatprep.subr.bf16.mxu0 %v7649
        %12081 = vmatpush1.bf16.msra.mxu0 %v7648
        %12082 = vmatprep.subr.bf16.mxu0 %v7669
        %12083 = vmatpush1.bf16.msra.mxu0 %v7668
        %12084 = vmatprep.subr.bf16.mxu0 %v7689
        %12085 = vmatpush1.bf16.msra.mxu0 %v7688
        %12086 = vmatprep.subr.bf16.mxu0 %v7709
        %12087 = vmatpush1.bf16.msra.mxu0 %v7708
        %12088 = vmatprep.subr.bf16.mxu0 %v7729
        %12089 = vmatpush1.bf16.msra.mxu0 %v7728
        %12090 = vmatprep.subr.bf16.mxu0 %v7749
        %12091 = vmatpush1.bf16.msra.mxu0 %v7748
        %12092 = vmatprep.subr.bf16.mxu0 %v7769
        %12093 = vmatpush1.bf16.msra.mxu0 %v7768
        %12094 = vmatprep.subr.bf16.mxu0 %v7789
        %12095 = vmatpush1.bf16.msra.mxu0 %v7788
        %12096 = vmatprep.subr.bf16.mxu0 %v7809
        %12097 = vmatpush1.bf16.msra.mxu0 %v7808
        %12098 = vmatprep.subr.bf16.mxu0 %v7829
        %12099 = vmatpush1.bf16.msra.mxu0 %v7828
        %12100 = vmatprep.subr.bf16.mxu0 %v7849
        %12101 = vmatpush1.bf16.msra.mxu0 %v7848
        %12102 = vmatprep.subr.bf16.mxu0 %v7869
        %12103 = vmatpush1.bf16.msra.mxu0 %v7868
        %12104 = vmatprep.subr.bf16.mxu0 %v7889
        %12105 = vmatpush1.bf16.msra.mxu0 %v7888
        %12106 = vmatprep.subr.bf16.mxu0 %v7909
        %12107 = vmatpush1.bf16.msra.mxu0 %v7908
        %12108 = vmatprep.subr.bf16.mxu0 %v7929
        %12109 = vmatpush1.bf16.msra.mxu0 %v7928
        %12110 = vmatprep.mubr.bf16.mxu0 %v2369
        %12111 = vmatmul.mubr.bf16.gmra.mrb[0].mxu0 %v2368
        %v12112 = vpop.f32.mrb[0].mxu0
        %v12113 = vadd.f32 %v3745, %v12112
        %v12114 = vpop.f32.mrb[0].mxu0
        %v12115 = vadd.f32 %v3749, %v12114
        %v12116 = vpop.f32.mrb[0].mxu0
        %v12117 = vadd.f32 %v3745, %v12116
        %v12118 = vpop.f32.mrb[0].mxu0
        %v12119 = vadd.f32 %v3749, %v12118
        %12120 = vmatprep.mubr.bf16.mxu0 %v2377
        %12121 = vmatmul.mubr.bf16.gmra.mrb[0].mxu0 %v2376
        %v12122 = vpop.f32.mrb[0].mxu0
        %v12123 = vadd.f32 %v3745, %v12122
        %v12124 = vpop.f32.mrb[0].mxu0
        %v12125 = vadd.f32 %v3749, %v12124
        %v12126 = vpop.f32.mrb[0].mxu0
        %v12127 = vadd.f32 %v3745, %v12126
        %v12128 = vpop.f32.mrb[0].mxu0
        %v12129 = vadd.f32 %v3749, %v12128
        %12130 = vdwg.mxu0
        %12131 = vmatprep.subr.bf16.mxu0 %v7949
        %12132 = vmatpush1.bf16.msra.mxu0 %v7948
        %12133 = vmatprep.subr.bf16.mxu0 %v7969
        %12134 = vmatpush1.bf16.msra.mxu0 %v7968
        %12135 = vmatprep.subr.bf16.mxu0 %v7989
        %12136 = vmatpush1.bf16.msra.mxu0 %v7988
        %12137 = vmatprep.subr.bf16.mxu0 %v8009
        %12138 = vmatpush1.bf16.msra.mxu0 %v8008
        %12139 = vmatprep.subr.bf16.mxu0 %v8029
        %12140 = vmatpush1.bf16.msra.mxu0 %v8028
        %12141 = vmatprep.subr.bf16.mxu0 %v8049
        %12142 = vmatpush1.bf16.msra.mxu0 %v8048
        %12143 = vmatprep.subr.bf16.mxu0 %v8069
        %12144 = vmatpush1.bf16.msra.mxu0 %v8068
        %12145 = vmatprep.subr.bf16.mxu0 %v8089
        %12146 = vmatpush1.bf16.msra.mxu0 %v8088
        %12147 = vmatprep.subr.bf16.mxu0 %v8109
        %12148 = vmatpush1.bf16.msra.mxu0 %v8108
        %12149 = vmatprep.subr.bf16.mxu0 %v8129
        %12150 = vmatpush1.bf16.msra.mxu0 %v8128
        %12151 = vmatprep.subr.bf16.mxu0 %v8149
        %12152 = vmatpush1.bf16.msra.mxu0 %v8148
        %12153 = vmatprep.subr.bf16.mxu0 %v8169
        %12154 = vmatpush1.bf16.msra.mxu0 %v8168
        %12155 = vmatprep.subr.bf16.mxu0 %v8189
        %12156 = vmatpush1.bf16.msra.mxu0 %v8188
        %12157 = vmatprep.subr.bf16.mxu0 %v8209
        %12158 = vmatpush1.bf16.msra.mxu0 %v8208
        %12159 = vmatprep.subr.bf16.mxu0 %v8229
        %12160 = vmatpush1.bf16.msra.mxu0 %v8228
        %12161 = vmatprep.subr.bf16.mxu0 %v8249
        %12162 = vmatpush1.bf16.msra.mxu0 %v8248
        %12163 = vmatprep.mubr.bf16.mxu0 %v2371
        %12164 = vmatmul.mubr.bf16.gmra.mrb[0].mxu0 %v2370
        %v12165 = vpop.f32.mrb[0].mxu0
        %v12166 = vadd.f32 %v12113, %v12165
        %v12167 = vpop.f32.mrb[0].mxu0
        %v12168 = vadd.f32 %v12115, %v12167
        %v12169 = vpop.f32.mrb[0].mxu0
        %v12170 = vadd.f32 %v12117, %v12169
        %v12171 = vpop.f32.mrb[0].mxu0
        %v12172 = vadd.f32 %v12119, %v12171
        %12173 = vmatprep.mubr.bf16.mxu0 %v2379
        %12174 = vmatmul.mubr.bf16.gmra.mrb[0].mxu0 %v2378
        %v12175 = vpop.f32.mrb[0].mxu0
        %v12176 = vadd.f32 %v12123, %v12175
        %v12177 = vpop.f32.mrb[0].mxu0
        %v12178 = vadd.f32 %v12125, %v12177
        %v12179 = vpop.f32.mrb[0].mxu0
        %v12180 = vadd.f32 %v12127, %v12179
        %v12181 = vpop.f32.mrb[0].mxu0
        %v12182 = vadd.f32 %v12129, %v12181
        %12183 = vdwg.mxu0
        %12184 = vmatprep.subr.bf16.mxu0 %v8269
        %12185 = vmatpush1.bf16.msra.mxu0 %v8268
        %12186 = vmatprep.subr.bf16.mxu0 %v8289
        %12187 = vmatpush1.bf16.msra.mxu0 %v8288
        %12188 = vmatprep.subr.bf16.mxu0 %v8309
        %12189 = vmatpush1.bf16.msra.mxu0 %v8308
        %12190 = vmatprep.subr.bf16.mxu0 %v8329
        %12191 = vmatpush1.bf16.msra.mxu0 %v8328
        %12192 = vmatprep.subr.bf16.mxu0 %v8349
        %12193 = vmatpush1.bf16.msra.mxu0 %v8348
        %12194 = vmatprep.subr.bf16.mxu0 %v8369
        %12195 = vmatpush1.bf16.msra.mxu0 %v8368
        %12196 = vmatprep.subr.bf16.mxu0 %v8389
        %12197 = vmatpush1.bf16.msra.mxu0 %v8388
        %12198 = vmatprep.subr.bf16.mxu0 %v8409
        %12199 = vmatpush1.bf16.msra.mxu0 %v8408
        %12200 = vmatprep.subr.bf16.mxu0 %v8429
        %12201 = vmatpush1.bf16.msra.mxu0 %v8428
        %12202 = vmatprep.subr.bf16.mxu0 %v8449
        %12203 = vmatpush1.bf16.msra.mxu0 %v8448
        %12204 = vmatprep.subr.bf16.mxu0 %v8469
        %12205 = vmatpush1.bf16.msra.mxu0 %v8468
        %12206 = vmatprep.subr.bf16.mxu0 %v8489
        %12207 = vmatpush1.bf16.msra.mxu0 %v8488
        %12208 = vmatprep.subr.bf16.mxu0 %v8509
        %12209 = vmatpush1.bf16.msra.mxu0 %v8508
        %12210 = vmatprep.subr.bf16.mxu0 %v8529
        %12211 = vmatpush1.bf16.msra.mxu0 %v8528
        %12212 = vmatprep.subr.bf16.mxu0 %v8549
        %12213 = vmatpush1.bf16.msra.mxu0 %v8548
        %12214 = vmatprep.subr.bf16.mxu0 %v8569
        %12215 = vmatpush1.bf16.msra.mxu0 %v8568
        %12216 = vmatprep.mubr.bf16.mxu0 %v2373
        %12217 = vmatmul.mubr.bf16.gmra.mrb[0].mxu0 %v2372
        %v12218 = vpop.f32.mrb[0].mxu0
        %v12219 = vadd.f32 %v12166, %v12218
        %v12220 = vpop.f32.mrb[0].mxu0
        %v12221 = vadd.f32 %v12168, %v12220
        %v12222 = vpop.f32.mrb[0].mxu0
        %v12223 = vadd.f32 %v12170, %v12222
        %v12224 = vpop.f32.mrb[0].mxu0
        %v12225 = vadd.f32 %v12172, %v12224
        %12226 = vmatprep.mubr.bf16.mxu0 %v2381
        %12227 = vmatmul.mubr.bf16.gmra.mrb[0].mxu0 %v2380
        %v12228 = vpop.f32.mrb[0].mxu0
        %v12229 = vadd.f32 %v12176, %v12228
        %v12230 = vpop.f32.mrb[0].mxu0
        %v12231 = vadd.f32 %v12178, %v12230
        %v12232 = vpop.f32.mrb[0].mxu0
        %v12233 = vadd.f32 %v12180, %v12232
        %v12234 = vpop.f32.mrb[0].mxu0
        %v12235 = vadd.f32 %v12182, %v12234
        %12236 = vdwg.mxu0
        %12237 = vmatprep.subr.bf16.mxu0 %v8589
        %12238 = vmatpush1.bf16.msra.mxu0 %v8588
        %12239 = vmatprep.subr.bf16.mxu0 %v8609
        %12240 = vmatpush1.bf16.msra.mxu0 %v8608
        %12241 = vmatprep.subr.bf16.mxu0 %v8629
        %12242 = vmatpush1.bf16.msra.mxu0 %v8628
        %12243 = vmatprep.subr.bf16.mxu0 %v8649
        %12244 = vmatpush1.bf16.msra.mxu0 %v8648
        %12245 = vmatprep.subr.bf16.mxu0 %v8669
        %12246 = vmatpush1.bf16.msra.mxu0 %v8668
        %12247 = vmatprep.subr.bf16.mxu0 %v8689
        %12248 = vmatpush1.bf16.msra.mxu0 %v8688
        %12249 = vmatprep.subr.bf16.mxu0 %v8709
        %12250 = vmatpush1.bf16.msra.mxu0 %v8708
        %12251 = vmatprep.subr.bf16.mxu0 %v8729
        %12252 = vmatpush1.bf16.msra.mxu0 %v8728
        %12253 = vmatprep.subr.bf16.mxu0 %v8749
        %12254 = vmatpush1.bf16.msra.mxu0 %v8748
        %12255 = vmatprep.subr.bf16.mxu0 %v8769
        %12256 = vmatpush1.bf16.msra.mxu0 %v8768
        %12257 = vmatprep.subr.bf16.mxu0 %v8789
        %12258 = vmatpush1.bf16.msra.mxu0 %v8788
        %12259 = vmatprep.subr.bf16.mxu0 %v8809
        %12260 = vmatpush1.bf16.msra.mxu0 %v8808
        %12261 = vmatprep.subr.bf16.mxu0 %v8829
        %12262 = vmatpush1.bf16.msra.mxu0 %v8828
        %12263 = vmatprep.subr.bf16.mxu0 %v8849
        %12264 = vmatpush1.bf16.msra.mxu0 %v8848
        %12265 = vmatprep.subr.bf16.mxu0 %v8869
        %12266 = vmatpush1.bf16.msra.mxu0 %v8868
        %12267 = vmatprep.subr.bf16.mxu0 %v8889
        %12268 = vmatpush1.bf16.msra.mxu0 %v8888
        %12269 = vmatprep.mubr.bf16.mxu0 %v2375
        %12270 = vmatmul.mubr.bf16.gmra.mrb[0].mxu0 %v2374
        %v12271 = vpop.f32.mrb[0].mxu0
        %v12272 = vadd.f32 %v12219, %v12271
        %v12273 = vpop.f32.mrb[0].mxu0
        %v12274 = vadd.f32 %v12221, %v12273
        %v12275 = vpop.f32.mrb[0].mxu0
        %v12276 = vadd.f32 %v12223, %v12275
        %v12277 = vpop.f32.mrb[0].mxu0
        %v12278 = vadd.f32 %v12225, %v12277
        %12279 = vmatprep.mubr.bf16.mxu0 %v2383
        %12280 = vmatmul.mubr.bf16.gmra.mrb[0].mxu0 %v2382
        %v12281 = vpop.f32.mrb[0].mxu0
        %v12282 = vadd.f32 %v12229, %v12281
        %v12283 = vpop.f32.mrb[0].mxu0
        %v12284 = vadd.f32 %v12231, %v12283
        %v12285 = vpop.f32.mrb[0].mxu0
        %v12286 = vadd.f32 %v12233, %v12285
        %v12287 = vpop.f32.mrb[0].mxu0
        %v12288 = vadd.f32 %v12235, %v12287
        %12289 = vdwg.mxu0
        %12290 = vst [vmem:[%s400] sm:$0xff] %v10364
        %12291 = vst [vmem:[%s400 + $0x8] sm:$0xff] %v10366
        %12292 = vst [vmem:[%s400 + $0x10] sm:$0xff] %v10576
        %12293 = vst [vmem:[%s400 + $0x18] sm:$0xff] %v10578
        %12294 = vst [vmem:[%s400 + $0x20] sm:$0xff] %v10788
        %12295 = vst [vmem:[%s400 + $0x28] sm:$0xff] %v10790
        %12296 = vst [vmem:[%s400 + $0x30] sm:$0xff] %v11000
        %12297 = vst [vmem:[%s400 + $0x38] sm:$0xff] %v11002
        %12298 = vst [vmem:[%s400 + $0x40] sm:$0xff] %v11212
        %12299 = vst [vmem:[%s400 + $0x48] sm:$0xff] %v11214
        %12300 = vst [vmem:[%s400 + $0x50] sm:$0xff] %v11424
        %12301 = vst [vmem:[%s400 + $0x58] sm:$0xff] %v11426
        %12302 = vst [vmem:[%s400 + $0x60] sm:$0xff] %v11636
        %12303 = vst [vmem:[%s400 + $0x68] sm:$0xff] %v11638
        %12304 = vst [vmem:[%s400 + $0x70] sm:$0xff] %v11848
        %12305 = vst [vmem:[%s400 + $0x78] sm:$0xff] %v11850
        %12306 = vst [vmem:[%s400 + $0x80] sm:$0xff] %v12060
        %12307 = vst [vmem:[%s400 + $0x88] sm:$0xff] %v12062
        %12308 = vst [vmem:[%s400 + $0x90] sm:$0xff] %v12272
        %12309 = vst [vmem:[%s400 + $0x98] sm:$0xff] %v12274
        %12310 = vst [vmem:[%s400 + $0xa0] sm:$0xff] %v10368
        %12311 = vst [vmem:[%s400 + $0xa8] sm:$0xff] %v10370
        %12312 = vst [vmem:[%s400 + $0xb0] sm:$0xff] %v10580
        %12313 = vst [vmem:[%s400 + $0xb8] sm:$0xff] %v10582
        %12314 = vst [vmem:[%s400 + $0xc0] sm:$0xff] %v10792
        %12315 = vst [vmem:[%s400 + $0xc8] sm:$0xff] %v10794
        %12316 = vst [vmem:[%s400 + $0xd0] sm:$0xff] %v11004
        %12317 = vst [vmem:[%s400 + $0xd8] sm:$0xff] %v11006
        %12318 = vst [vmem:[%s400 + $0xe0] sm:$0xff] %v11216
        %12319 = vst [vmem:[%s400 + $0xe8] sm:$0xff] %v11218
        %12320 = vst [vmem:[%s400 + $0xf0] sm:$0xff] %v11428
        %12321 = vst [vmem:[%s400 + $0xf8] sm:$0xff] %v11430
        %12322 = vst [vmem:[%s400 + $0x100] sm:$0xff] %v11640
        %12323 = vst [vmem:[%s400 + $0x108] sm:$0xff] %v11642
        %12324 = vst [vmem:[%s400 + $0x110] sm:$0xff] %v11852
        %12325 = vst [vmem:[%s400 + $0x118] sm:$0xff] %v11854
        %12326 = vst [vmem:[%s400 + $0x120] sm:$0xff] %v12064
        %12327 = vst [vmem:[%s400 + $0x128] sm:$0xff] %v12066
        %12328 = vst [vmem:[%s400 + $0x130] sm:$0xff] %v12276
        %12329 = vst [vmem:[%s400 + $0x138] sm:$0xff] %v12278
        %12330 = vst [vmem:[%s400 + $0x140] sm:$0xff] %v10374
        %12331 = vst [vmem:[%s400 + $0x148] sm:$0xff] %v10376
        %12332 = vst [vmem:[%s400 + $0x150] sm:$0xff] %v10586
        %12333 = vst [vmem:[%s400 + $0x158] sm:$0xff] %v10588
        %12334 = vst [vmem:[%s400 + $0x160] sm:$0xff] %v10798
        %12335 = vst [vmem:[%s400 + $0x168] sm:$0xff] %v10800
        %12336 = vst [vmem:[%s400 + $0x170] sm:$0xff] %v11010
        %12337 = vst [vmem:[%s400 + $0x178] sm:$0xff] %v11012
        %12338 = vst [vmem:[%s400 + $0x180] sm:$0xff] %v11222
        %12339 = vst [vmem:[%s400 + $0x188] sm:$0xff] %v11224
        %12340 = vst [vmem:[%s400 + $0x190] sm:$0xff] %v11434
        %12341 = vst [vmem:[%s400 + $0x198] sm:$0xff] %v11436
        %12342 = vst [vmem:[%s400 + $0x1a0] sm:$0xff] %v11646
        %12343 = vst [vmem:[%s400 + $0x1a8] sm:$0xff] %v11648
        %12344 = vst [vmem:[%s400 + $0x1b0] sm:$0xff] %v11858
        %12345 = vst [vmem:[%s400 + $0x1b8] sm:$0xff] %v11860
        %12346 = vst [vmem:[%s400 + $0x1c0] sm:$0xff] %v12070
        %12347 = vst [vmem:[%s400 + $0x1c8] sm:$0xff] %v12072
        %12348 = vst [vmem:[%s400 + $0x1d0] sm:$0xff] %v12282
        %12349 = vst [vmem:[%s400 + $0x1d8] sm:$0xff] %v12284
        %12350 = vst [vmem:[%s400 + $0x1e0] sm:$0xff] %v10378
        %12351 = vst [vmem:[%s400 + $0x1e8] sm:$0xff] %v10380
        %12352 = vst [vmem:[%s400 + $0x1f0] sm:$0xff] %v10590
        %12353 = vst [vmem:[%s400 + $0x1f8] sm:$0xff] %v10592
        %12354 = vst [vmem:[%s400 + $0x200] sm:$0xff] %v10802
        %12355 = vst [vmem:[%s400 + $0x208] sm:$0xff] %v10804
        %12356 = vst [vmem:[%s400 + $0x210] sm:$0xff] %v11014
        %12357 = vst [vmem:[%s400 + $0x218] sm:$0xff] %v11016
        %12358 = vst [vmem:[%s400 + $0x220] sm:$0xff] %v11226
        %12359 = vst [vmem:[%s400 + $0x228] sm:$0xff] %v11228
        %12360 = vst [vmem:[%s400 + $0x230] sm:$0xff] %v11438
        %12361 = vst [vmem:[%s400 + $0x238] sm:$0xff] %v11440
        %12362 = vst [vmem:[%s400 + $0x240] sm:$0xff] %v11650
        %12363 = vst [vmem:[%s400 + $0x248] sm:$0xff] %v11652
        %12364 = vst [vmem:[%s400 + $0x250] sm:$0xff] %v11862
        %12365 = vst [vmem:[%s400 + $0x258] sm:$0xff] %v11864
        %12366 = vst [vmem:[%s400 + $0x260] sm:$0xff] %v12074
        %12367 = vst [vmem:[%s400 + $0x268] sm:$0xff] %v12076
        %12368 = vst [vmem:[%s400 + $0x270] sm:$0xff] %v12286
        %12369 = vst [vmem:[%s400 + $0x278] sm:$0xff] %v12288
        %s12370 = sand.u32 %s192, 1
        %s12371 = scalar_lea.sflag [#allocation4], %s12370
        %s12372 = sand.u32 %s192, 1
        %s12373 = smul.addr %s12372, 640
        %s12374 = scalar_lea.vmem [#allocation14], %s12373
        // Predicated region
        $region77: #{tpu_custom_call.1} parent=47 // pred_check
          %p12375 = pneg %p202
        $region78: #{tpu_custom_call.1} parent=47 // pred_check_branch
          %12377 = sbr.rel (%p12375) target = $region80
        $region79: #{tpu_custom_call.1} parent=47 // pred_region
          %s12378 = smul.u32 20, %s27
          %s12380 = ssub.s32 10240, 10240
          %12381 = vsyncadd %s12371, %s12380
          %s12382 = smul.addr %s12378, 128
          %s12383 = scalar_lea.hbm %s7, %s12382
          %s12384 = sshll.u32 %s12374, 4
          %s12385 = int_to_ptr.vmem [resolvable:$true] %s12384
          %12390 = dma.vmem_to_hbm [thread:$0]  %s12385, 10240, %s12383, %s12371, 2560, 5120, 160
        $region80: #{tpu_custom_call.1} parent=47 // pred_fallthru
          _
      $region48: #{tpu_custom_call.1} parent=5 // pred_fallthru
        _
      %p12391 = scmp.le.s32.totalorder 2, %s22
      // Predicated region
      $region81: #{tpu_custom_call.1} parent=5 // pred_check
        %p12392 = pneg %p12391
      $region82: #{tpu_custom_call.1} parent=5 // pred_check_branch
        %12394 = sbr.rel (%p12392) target = $region84
      $region83: #{tpu_custom_call.1} parent=5 // pred_region
        %s12395 = ssub.s32 %s22, 2
        // Predicated region
        $region85: #{tpu_custom_call.1} parent=83 // pred_check
          %p12396 = pneg %p208
        $region86: #{tpu_custom_call.1} parent=83 // pred_check_branch
          %12398 = sbr.rel (%p12396) target = $region88
        $region87: #{tpu_custom_call.1} parent=83 // pred_region
          %s12399 = sand.u32 %s193, 1
          %s12400 = scalar_lea.sflag [#allocation4], %s12399
          %s12401 = sand.u32 %s193, 1
          %s12402 = smul.addr %s12401, 640
          %s12403 = scalar_lea.vmem [#allocation14], %s12402
          %12404 = dma.done %s12400, 10240
        $region88: #{tpu_custom_call.1} parent=83 // pred_fallthru
          _
      $region84: #{tpu_custom_call.1} parent=5 // pred_fallthru
        _
    $region6: #{tpu_custom_call.1} parent=1 // loop_footer
      %s26 = sadd.s32 1, %s22
    $region7: #{tpu_custom_call.1} parent=1 // loop_footer_branch
      %21 = sbr.rel target = $region3
    $region8: #{tpu_custom_call.1} parent=1 // loop_exit
      _
    %12405 = vsyncpa [#allocation3], 1
    %s12406 = scalar_lea.sflag [#allocation3], 1
    %12407 = vsyncpa %s12406, 1
    %12408 = vsyncpa [#allocation6], 1
    %12409 = vsyncpa [#allocation9], 1
    %12410 = vsyncpa [#allocation12], 1
    %s12411 = scalar_lea.sflag [#allocation12], 1
    %12412 = vsyncpa %s12411, 1
    %12413 = vsyncpa [#allocation4], 1
    %s12414 = scalar_lea.sflag [#allocation4], 1
    %12415 = vsyncpa %s12414, 1

</llo_original>
